<compile_context>
chip_gen: v7x
topology: tpu7x:2x2x1
jax: 0.10.0
libtpu: 0.0.40
codegen_flags: <defaults>
</compile_context>

<pallas_src>
import functools

import jax
import jax.numpy as jnp
from jax.experimental import pallas as pl
from jax.experimental.pallas import tpu as pltpu


_BN_EPS = 1e-5
_ACT_DTYPE = jnp.bfloat16          # trunk activation dtype (f32 accumulation in-kernel)
_LAYER_STRIDES = (1, 2, 2, 2)


def _round_up(x, m):
    return ((x + m - 1) // m) * m


def _pad_rows(x2d, rows):
    pad = rows - x2d.shape[0]
    if pad == 0:
        return x2d
    return jnp.pad(x2d, ((0, pad), (0, 0)))


def _detect_multi_tc():
    # v4/v5p (megacore) and v7x (2 TCs/chip) want >=2 "parallel" row tiles per grid so
    # both TensorCores are used; v5e/v6e (1 TC) prefer the largest tile (fewest grid steps).
    try:
        kind = jax.devices()[0].device_kind.lower()
    except Exception:
        return False
    return any(tag in kind for tag in ("v7", "7x", "v4", "v5p"))


_MULTI_TC = _detect_multi_tc()


# ----------------------------------------------------------------------------
# Pallas kernels
# ----------------------------------------------------------------------------
def _matmul_epilogue_kernel(lhs_ref, rhs_ref, shift_ref, *rest, relu, has_res):
    """out = act( lhs @ rhs + shift [+ residual] ); BN scale already folded into rhs."""
    if has_res:
        res_ref, o_ref = rest
    else:
        (o_ref,) = rest
    acc = jnp.dot(lhs_ref[...], rhs_ref[...], preferred_element_type=jnp.float32)
    y = acc + shift_ref[...]
    if has_res:
        y = y + res_ref[...].astype(jnp.float32)
    if relu:
        y = jnp.maximum(y, 0.0)
    o_ref[...] = y.astype(o_ref.dtype)


def _max3_kernel(a_ref, b_ref, c_ref, o_ref):
    o_ref[...] = jnp.maximum(jnp.maximum(a_ref[...], b_ref[...]), c_ref[...])


def _avgpool_fc_kernel(x_ref, w_ref, b_ref, o_ref):
    # x: (N, HW, C) -> spatial mean (f32) -> (N, C) @ (C, nc) + bias, all in one kernel.
    pooled = jnp.mean(x_ref[...].astype(jnp.float32), axis=1)          # (N, C)
    o_ref[...] = jnp.dot(pooled, w_ref[...],
                         preferred_element_type=jnp.float32) + b_ref[...]


# ----------------------------------------------------------------------------
# Fused conv matmul wrapper
# ----------------------------------------------------------------------------
def fused_matmul_shift(lhs, rhs, shift, residual=None, relu=False, out_dtype=_ACT_DTYPE):
    """out[R, Cout] = act( lhs @ rhs + shift [+ residual] ), one K-covering matmul/step.

    lhs: (R, K) bf16, rhs: (K, Cout) bf16 (BN scale folded in), shift: (Cout,) f32.
    1-D "parallel" row grid; K covered in a single MXU step (no K axis / accumulator
    scratch).  rhs/shift index_maps are constant so they are not re-fetched per step.
    """
    R, K = lhs.shape
    Cout = rhs.shape[1]

    # Defensive contracting-dim alignment (only the 7x7/Cin=3 stem has K=147).
    Kp = _round_up(K, 8)
    if Kp != K:
        lhs = jnp.pad(lhs, ((0, 0), (0, Kp - K)))
        rhs = jnp.pad(rhs, ((0, Kp - K), (0, 0)))

    # Row tile: keep the f32 accumulator <= ~128 KiB of vregs (tm*Cout*4B); on
    # multi-TC chips ensure >=2 row tiles, on single-TC chips use the largest tile.
    tm_max = min(512, max(8, (32768 // max(Cout, 1)) // 8 * 8))
    if _MULTI_TC and R > 8:
        tm = min(tm_max, _round_up(-(-R // 2), 8))
    else:
        tm = min(tm_max, _round_up(R, 8))
    Rp = _round_up(R, tm)

    lhs = _pad_rows(lhs, Rp)
    has_res = residual is not None
    in_specs = [pl.BlockSpec((tm, Kp), lambda i: (i, 0)),
                pl.BlockSpec((Kp, Cout), lambda i: (0, 0)),    # constant across grid
                pl.BlockSpec((1, Cout), lambda i: (0, 0))]     # constant across grid
    args = [lhs, rhs, shift.reshape(1, Cout).astype(jnp.float32)]
    if has_res:
        in_specs.append(pl.BlockSpec((tm, Cout), lambda i: (i, 0)))
        args.append(_pad_rows(residual, Rp))

    kern = functools.partial(_matmul_epilogue_kernel, relu=relu, has_res=has_res)
    out = pl.pallas_call(
        kern,
        out_shape=jax.ShapeDtypeStruct((Rp, Cout), out_dtype),
        grid_spec=pltpu.PrefetchScalarGridSpec(
            num_scalar_prefetch=0,
            grid=(Rp // tm,),
            in_specs=in_specs,
            out_specs=pl.BlockSpec((tm, Cout), lambda i: (i, 0))),
        compiler_params=pltpu.CompilerParams(
            dimension_semantics=("parallel",),
            # blocks are well under 1 MiB double-buffered; 32 MiB is safe on every
            # generation (v5e/v6e 128 MiB physical, v7x 64 MiB physical).
            vmem_limit_bytes=32 * 1024 * 1024),
    )(*args)
    return out[:R] if Rp != R else out


# ----------------------------------------------------------------------------
# Layer building blocks (XLA slicing glue + fused Pallas compute)
# ----------------------------------------------------------------------------
def _im2col(x_nhwc, kh, kw, stride, padding):
    """(N,H,W,Cin) -> ((N*Ho*Wo, kh*kw*Cin) slab, Ho, Wo); tap-major (kh, kw, Cin) order."""
    N, H, W, Cin = x_nhwc.shape
    Ho = (H + 2 * padding - kh) // stride + 1
    Wo = (W + 2 * padding - kw) // stride + 1
    xp = jnp.pad(x_nhwc, ((0, 0), (padding, padding), (padding, padding), (0, 0)))
    taps = []
    for di in range(kh):
        for dj in range(kw):
            sl = jax.lax.slice(
                xp, (0, di, dj, 0),
                (N, di + (Ho - 1) * stride + 1, dj + (Wo - 1) * stride + 1, Cin),
                (1, stride, stride, 1))
            taps.append(sl.reshape(N * Ho * Wo, Cin))
    lhs = taps[0] if len(taps) == 1 else jnp.concatenate(taps, axis=-1)
    return lhs, Ho, Wo


def _fold_bn_into_weight(w_oihw, bn_params):
    """Fold inference-BN scale into the conv weight (f32); return ((K, Cout) w2d, shift)."""
    gamma, beta, mean, var = bn_params
    scale = gamma * jax.lax.rsqrt(var + _BN_EPS)            # (Cout,)
    shift = beta - mean * scale                             # (Cout,)
    cout, cin, kh, kw = w_oihw.shape
    w = w_oihw.astype(jnp.float32) * scale[:, None, None, None]
    # (Cout, Cin, kh, kw) -> (kh, kw, Cin, Cout) -> (kh*kw*Cin, Cout): matches tap order.
    w2d = jnp.transpose(w, (2, 3, 1, 0)).reshape(kh * kw * cin, cout)
    return w2d, shift


def conv_bn(x_nhwc, w_oihw, bn_params, stride, padding, relu,
            residual_nhwc=None, extra=None):
    """Conv2d(no bias)+BN(inference) [+fused 1x1-downsample branch] [+residual] [+ReLU].

    `extra = (lhs2d, w2d_f32, shift)` is concatenated along K so the downsample branch
    rides the same single MXU matmul (its shift folded into the combined shift).
    """
    N, H, W, Cin = x_nhwc.shape
    Cout, _, kh, kw = w_oihw.shape
    w2d, shift = _fold_bn_into_weight(w_oihw, bn_params)
    lhs, Ho, Wo = _im2col(x_nhwc.astype(_ACT_DTYPE), kh, kw, stride, padding)
    if extra is not None:
        e_lhs, e_w2d, e_shift = extra
        lhs = jnp.concatenate([lhs, e_lhs.astype(_ACT_DTYPE)], axis=-1)
        w2d = jnp.concatenate([w2d, e_w2d], axis=0)
        shift = shift + e_shift
    res2d = None
    if residual_nhwc is not None:
        res2d = residual_nhwc.astype(_ACT_DTYPE).reshape(N * Ho * Wo, Cout)
    y = fused_matmul_shift(lhs, w2d.astype(_ACT_DTYPE), shift,
                           residual=res2d, relu=relu)
    return y.reshape(N, Ho, Wo, Cout)


def _elementwise_max3(arrs):
    """Elementwise max of 3 equal-shape arrays via one lane-dense Pallas kernel."""
    shape = arrs[0].shape
    total = 1
    for s in shape:
        total *= s
    if total % 128 == 0:        # lane-dense slab: avoids masked stores when C < 128
        rows, cols = total // 128, 128
    else:
        rows, cols = total // shape[-1], shape[-1]
    flat = [a.reshape(rows, cols) for a in arrs]
    tr = min(512, _round_up(rows, 8))
    rows_p = _round_up(rows, tr)
    flat = [_pad_rows(a, rows_p) for a in flat]
    out = pl.pallas_call(
        _max3_kernel,
        out_shape=jax.ShapeDtypeStruct((rows_p, cols), arrs[0].dtype),
        grid_spec=pltpu.PrefetchScalarGridSpec(
            num_scalar_prefetch=0,
            grid=(rows_p // tr,),
            in_specs=[pl.BlockSpec((tr, cols), lambda i: (i, 0))] * 3,
            out_specs=pl.BlockSpec((tr, cols), lambda i: (i, 0))),
        compiler_params=pltpu.CompilerParams(dimension_semantics=("parallel",)),
    )(*flat)
    if rows_p != rows:
        out = out[:rows]
    return out.reshape(shape)


def maxpool_3x3_s2_p1(x_nhwc):
    """3x3 stride-2 pad-1 max pool, separable: horizontal 3-max then vertical 3-max."""
    N, H, W, C = x_nhwc.shape
    Ho = (H + 2 - 3) // 2 + 1
    Wo = (W + 2 - 3) // 2 + 1
    neg = float(jnp.finfo(x_nhwc.dtype).min)
    xp = jnp.pad(x_nhwc, ((0, 0), (1, 1), (1, 1), (0, 0)), constant_values=neg)
    Hp = H + 2
    # pass 1: max over 3 W-shifted stride-2 views -> (N, Hp, Wo, C)
    cols = [jax.lax.slice(xp, (0, 0, dj, 0),
                          (N, Hp, dj + 2 * (Wo - 1) + 1, C), (1, 1, 2, 1))
            for dj in range(3)]
    h = _elementwise_max3(cols)
    # pass 2: max over 3 H-shifted stride-2 views -> (N, Ho, Wo, C)
    rows = [jax.lax.slice(h, (0, di, 0, 0),
                          (N, di + 2 * (Ho - 1) + 1, Wo, C), (1, 2, 1, 1))
            for di in range(3)]
    return _elementwise_max3(rows)


def avgpool_fc(x_nhwc, fc_w, fc_b):
    """Fused global average pool + flatten + Linear(C -> num_classes) + bias (f32)."""
    N, H, W, C = x_nhwc.shape
    nc = fc_w.shape[0]
    x3 = x_nhwc.reshape(N, H * W, C)
    wt = jnp.transpose(fc_w).astype(jnp.float32)            # (C, nc)
    return pl.pallas_call(
        _avgpool_fc_kernel,
        out_shape=jax.ShapeDtypeStruct((N, nc), jnp.float32),
        grid_spec=pltpu.PrefetchScalarGridSpec(
            num_scalar_prefetch=0,
            grid=(1,),
            in_specs=[pl.BlockSpec((N, H * W, C), lambda i: (0, 0, 0)),
                      pl.BlockSpec((C, nc), lambda i: (0, 0)),
                      pl.BlockSpec((1, nc), lambda i: (0, 0))],
            out_specs=pl.BlockSpec((N, nc), lambda i: (0, 0))),
    )(x3, wt, fc_b.reshape(1, nc).astype(jnp.float32))


def basic_block(x, blk, stride):
    out1 = conv_bn(x, blk['conv1'], blk['bn1'], stride=stride, padding=1, relu=True)
    if 'downsample_conv' in blk:
        # 1x1 stride-s downsample conv+BN fused into conv2's matmul as extra K columns;
        # no separate identity pallas_call / identity HBM round trip.
        ds_w2d, ds_shift = _fold_bn_into_weight(blk['downsample_conv'],
                                                blk['downsample_bn'])
        xs = x[:, ::stride, ::stride, :]
        e_lhs = xs.reshape(-1, xs.shape[-1])
        return conv_bn(out1, blk['conv2'], blk['bn2'], stride=1, padding=1, relu=True,
                       extra=(e_lhs, ds_w2d, ds_shift))
    # identity residual added in the conv2 epilogue (still a single kernel per conv)
    return conv_bn(out1, blk['conv2'], blk['bn2'], stride=1, padding=1, relu=True,
                   residual_nhwc=x)


# ----------------------------------------------------------------------------
# Full forward (mirrors ResNet.forward)
# ----------------------------------------------------------------------------
def resnet_forward(params, x_nchw):
    x = jnp.transpose(x_nchw, (0, 2, 3, 1))                  # NCHW -> NHWC
    x = conv_bn(x, params['conv1'], params['bn1'],
                stride=2, padding=3, relu=True)               # conv1 + bn1 + relu fused
    x = maxpool_3x3_s2_p1(x)                                  # separable maxpool
    for li, name in enumerate(('layer1', 'layer2', 'layer3', 'layer4')):
        for bi, blk in enumerate(params[name]):
            stride = _LAYER_STRIDES[li] if bi == 0 else 1
            x = basic_block(x, blk, stride)
    w, b = params['fc']
    return avgpool_fc(x, w, b)                                # avgpool + flatten + fc fused


# ----------------------------------------------------------------------------
# Deterministic synthetic parameter initialization (ResNet-18 topology)
# ----------------------------------------------------------------------------
def _conv_init(key, cout, cin, kh, kw):
    fan = cin * kh * kw
    return jax.random.normal(key, (cout, cin, kh, kw), jnp.float32) * (2.0 / fan) ** 0.5


def _bn_init(key, c):
    k1, k2, k3 = jax.random.split(key, 3)
    gamma = 1.0 + 0.1 * jax.random.normal(k1, (c,), jnp.float32)
    beta = 0.1 * jax.random.normal(k2, (c,), jnp.float32)
    running_mean = 0.1 * jax.random.normal(k3, (c,), jnp.float32)
    running_var = jnp.ones((c,), jnp.float32)
    return (gamma, beta, running_mean, running_var)


def _make_layer(key, in_ch, out_ch, num_blocks, stride):
    blocks = []
    for i in range(num_blocks):
        ks = jax.random.split(jax.random.fold_in(key, i), 6)
        cin = in_ch if i == 0 else out_ch
        blk = {
            'conv1': _conv_init(ks[0], out_ch, cin, 3, 3),
            'bn1': _bn_init(ks[1], out_ch),
            'conv2': _conv_init(ks[2], out_ch, out_ch, 3, 3),
            'bn2': _bn_init(ks[3], out_ch),
        }
        if i == 0 and (stride != 1 or in_ch != out_ch):
            blk['downsample_conv'] = _conv_init(ks[4], out_ch, in_ch, 1, 1)
            blk['downsample_bn'] = _bn_init(ks[5], out_ch)
        blocks.append(blk)
    return blocks


def init_params(key, base=16, in_ch=3, num_classes=5, layers=(2, 2, 2, 2)):
    # ResNet-18 topology with a reduced base width (torchvision uses base=64).
    ks = jax.random.split(key, 8)
    params = {
        'conv1': _conv_init(ks[0], base, in_ch, 7, 7),
        'bn1': _bn_init(ks[1], base),
    }
    widths = [base, base * 2, base * 4, base * 8]
    in_c = base
    for li in range(4):
        params[f'layer{li + 1}'] = _make_layer(ks[2 + li], in_c, widths[li],
                                               layers[li], _LAYER_STRIDES[li])
        in_c = widths[li]
    wk, bk = jax.random.split(ks[6])
    params['fc'] = (
        jax.random.normal(wk, (num_classes, in_c), jnp.float32) / jnp.sqrt(float(in_c)),
        0.01 * jax.random.normal(bk, (num_classes,), jnp.float32),
    )
    return params


if __name__ == "__main__":
    key = jax.random.PRNGKey(0)
    params = init_params(key, base=16, in_ch=3, num_classes=5)

    x = jax.random.normal(jax.random.fold_in(key, 999), (2, 3, 64, 64), jnp.float32)

    fwd = jax.jit(resnet_forward)
    y = jax.block_until_ready(fwd(params, x))
    assert y.shape == (2, 5), y.shape
    assert bool(jnp.all(jnp.isfinite(y)))
    print("KERNEL_OK")
</pallas_src>

<mosaic_0001>
module attributes {stable_mosaic.version = 11 : i64} {
  func.func @_matmul_epilogue_kernel(%arg0: i32, %arg1: memref<512x152xbf16, #tpu.memory_space<vmem>>, %arg2: memref<152x16xbf16, #tpu.memory_space<vmem>>, %arg3: memref<1x16xf32, #tpu.memory_space<vmem>>, %arg4: memref<512x16xbf16, #tpu.memory_space<vmem>>) attributes {dimension_semantics = [#tpu.dimension_semantics<parallel>], iteration_bounds = array<i64: 4>, scalar_prefetch = 0 : i64, scratch_operands = 0 : i64, tpu.core_type = #tpu.core_type<tc>, window_params = [{transform_indices = @transform_0, window_bounds = array<i64: 512, 152>}, {pipeline_mode = #tpu.pipeline_mode<synchronous>, transform_indices = @transform_1, window_bounds = array<i64: 152, 16>}, {pipeline_mode = #tpu.pipeline_mode<synchronous>, transform_indices = @transform_2, window_bounds = array<i64: 1, 16>}, {transform_indices = @transform_3, window_bounds = array<i64: 512, 16>}]} {
    %c0 = arith.constant 0 : index
    %c0_0 = arith.constant 0 : index
    %0 = vector.load %arg1[%c0, %c0_0] : memref<512x152xbf16, #tpu.memory_space<vmem>>, vector<512x152xbf16>
    %c0_1 = arith.constant 0 : index
    %c0_2 = arith.constant 0 : index
    %1 = vector.load %arg2[%c0_1, %c0_2] : memref<152x16xbf16, #tpu.memory_space<vmem>>, vector<152x16xbf16>
    %cst = arith.constant dense<0.000000e+00> : vector<512x16xf32>
    %2 = tpu.matmul %0, %1, %cst {dimension_numbers = #tpu.dot_dimension_numbers<[1], [0], [0], [1], [0, 0, 1, 1], [], []>} : vector<512x152xbf16>, vector<152x16xbf16>, vector<512x16xf32> -> vector<512x16xf32>
    %c0_3 = arith.constant 0 : index
    %c0_4 = arith.constant 0 : index
    %3 = vector.load %arg3[%c0_3, %c0_4] : memref<1x16xf32, #tpu.memory_space<vmem>>, vector<1x16xf32>
    %4 = vector.broadcast %3 : vector<1x16xf32> to vector<512x16xf32>
    %5 = arith.addf %2, %4 : vector<512x16xf32>
    %cst_5 = arith.constant 0.000000e+00 : f32
    %6 = vector.broadcast %cst_5 : f32 to vector<512x16xf32>
    %7 = arith.maximumf %5, %6 : vector<512x16xf32>
    %8 = arith.truncf %7 : vector<512x16xf32> to vector<512x16xbf16>
    %c0_6 = arith.constant 0 : index
    %c0_7 = arith.constant 0 : index
    %9 = vector.load %arg4[%c0_6, %c0_7] : memref<512x16xbf16, #tpu.memory_space<vmem>>, vector<512x16xbf16>
    tpu.vector_store %arg4[%c0_6, %c0_7], %8 {strides = array<i32>} : memref<512x16xbf16, #tpu.memory_space<vmem>>, vector<512x16xbf16>,
    return
  }
  func.func @transform_0(%arg0: i32) -> (i32, i32) {
    %c0_i32 = arith.constant 0 : i32
    %c0_i32_0 = arith.constant 0 : i32
    return %arg0, %c0_i32 : i32, i32
  }
  func.func @transform_1(%arg0: i32) -> (i32, i32) {
    %c0_i32 = arith.constant 0 : i32
    %c0_i32_0 = arith.constant 0 : i32
    %c0_i32_1 = arith.constant 0 : i32
    return %c0_i32, %c0_i32_0 : i32, i32
  }
  func.func @transform_2(%arg0: i32) -> (i32, i32) {
    %c0_i32 = arith.constant 0 : i32
    %c0_i32_0 = arith.constant 0 : i32
    %c0_i32_1 = arith.constant 0 : i32
    return %c0_i32, %c0_i32_0 : i32, i32
  }
  func.func @transform_3(%arg0: i32) -> (i32, i32) {
    %c0_i32 = arith.constant 0 : i32
    %c0_i32_0 = arith.constant 0 : i32
    return %arg0, %c0_i32 : i32, i32
  }
}

module attributes {stable_mosaic.version = 11 : i64} {
  func.func @_max3_kernel(%arg0: i32, %arg1: memref<136x128xbf16, #tpu.memory_space<vmem>>, %arg2: memref<136x128xbf16, #tpu.memory_space<vmem>>, %arg3: memref<136x128xbf16, #tpu.memory_space<vmem>>, %arg4: memref<136x128xbf16, #tpu.memory_space<vmem>>) attributes {dimension_semantics = [#tpu.dimension_semantics<parallel>], iteration_bounds = array<i64: 1>, scalar_prefetch = 0 : i64, scratch_operands = 0 : i64, tpu.core_type = #tpu.core_type<tc>, window_params = [{transform_indices = @transform_0, window_bounds = array<i64: 136, 128>}, {transform_indices = @transform_1, window_bounds = array<i64: 136, 128>}, {transform_indices = @transform_2, window_bounds = array<i64: 136, 128>}, {transform_indices = @transform_3, window_bounds = array<i64: 136, 128>}]} {
    %c0 = arith.constant 0 : index
    %c0_0 = arith.constant 0 : index
    %0 = vector.load %arg1[%c0, %c0_0] : memref<136x128xbf16, #tpu.memory_space<vmem>>, vector<136x128xbf16>
    %c0_1 = arith.constant 0 : index
    %c0_2 = arith.constant 0 : index
    %1 = vector.load %arg2[%c0_1, %c0_2] : memref<136x128xbf16, #tpu.memory_space<vmem>>, vector<136x128xbf16>
    %2 = arith.maximumf %0, %1 : vector<136x128xbf16>
    %c0_3 = arith.constant 0 : index
    %c0_4 = arith.constant 0 : index
    %3 = vector.load %arg3[%c0_3, %c0_4] : memref<136x128xbf16, #tpu.memory_space<vmem>>, vector<136x128xbf16>
    %4 = arith.maximumf %2, %3 : vector<136x128xbf16>
    %c0_5 = arith.constant 0 : index
    %c0_6 = arith.constant 0 : index
    %5 = vector.load %arg4[%c0_5, %c0_6] : memref<136x128xbf16, #tpu.memory_space<vmem>>, vector<136x128xbf16>
    tpu.vector_store %arg4[%c0_5, %c0_6], %4 {strides = array<i32>} : memref<136x128xbf16, #tpu.memory_space<vmem>>, vector<136x128xbf16>,
    return
  }
  func.func @transform_0(%arg0: i32) -> (i32, i32) {
    %c0_i32 = arith.constant 0 : i32
    %c0_i32_0 = arith.constant 0 : i32
    return %arg0, %c0_i32 : i32, i32
  }
  func.func @transform_1(%arg0: i32) -> (i32, i32) {
    %c0_i32 = arith.constant 0 : i32
    %c0_i32_0 = arith.constant 0 : i32
    return %arg0, %c0_i32 : i32, i32
  }
  func.func @transform_2(%arg0: i32) -> (i32, i32) {
    %c0_i32 = arith.constant 0 : i32
    %c0_i32_0 = arith.constant 0 : i32
    return %arg0, %c0_i32 : i32, i32
  }
  func.func @transform_3(%arg0: i32) -> (i32, i32) {
    %c0_i32 = arith.constant 0 : i32
    %c0_i32_0 = arith.constant 0 : i32
    return %arg0, %c0_i32 : i32, i32
  }
}

module attributes {stable_mosaic.version = 11 : i64} {
  func.func @_max3_kernel(%arg0: i32, %arg1: memref<64x128xbf16, #tpu.memory_space<vmem>>, %arg2: memref<64x128xbf16, #tpu.memory_space<vmem>>, %arg3: memref<64x128xbf16, #tpu.memory_space<vmem>>, %arg4: memref<64x128xbf16, #tpu.memory_space<vmem>>) attributes {dimension_semantics = [#tpu.dimension_semantics<parallel>], iteration_bounds = array<i64: 1>, scalar_prefetch = 0 : i64, scratch_operands = 0 : i64, tpu.core_type = #tpu.core_type<tc>, window_params = [{transform_indices = @transform_0, window_bounds = array<i64: 64, 128>}, {transform_indices = @transform_1, window_bounds = array<i64: 64, 128>}, {transform_indices = @transform_2, window_bounds = array<i64: 64, 128>}, {transform_indices = @transform_3, window_bounds = array<i64: 64, 128>}]} {
    %c0 = arith.constant 0 : index
    %c0_0 = arith.constant 0 : index
    %0 = vector.load %arg1[%c0, %c0_0] : memref<64x128xbf16, #tpu.memory_space<vmem>>, vector<64x128xbf16>
    %c0_1 = arith.constant 0 : index
    %c0_2 = arith.constant 0 : index
    %1 = vector.load %arg2[%c0_1, %c0_2] : memref<64x128xbf16, #tpu.memory_space<vmem>>, vector<64x128xbf16>
    %2 = arith.maximumf %0, %1 : vector<64x128xbf16>
    %c0_3 = arith.constant 0 : index
    %c0_4 = arith.constant 0 : index
    %3 = vector.load %arg3[%c0_3, %c0_4] : memref<64x128xbf16, #tpu.memory_space<vmem>>, vector<64x128xbf16>
    %4 = arith.maximumf %2, %3 : vector<64x128xbf16>
    %c0_5 = arith.constant 0 : index
    %c0_6 = arith.constant 0 : index
    %5 = vector.load %arg4[%c0_5, %c0_6] : memref<64x128xbf16, #tpu.memory_space<vmem>>, vector<64x128xbf16>
    tpu.vector_store %arg4[%c0_5, %c0_6], %4 {strides = array<i32>} : memref<64x128xbf16, #tpu.memory_space<vmem>>, vector<64x128xbf16>,
    return
  }
  func.func @transform_0(%arg0: i32) -> (i32, i32) {
    %c0_i32 = arith.constant 0 : i32
    %c0_i32_0 = arith.constant 0 : i32
    return %arg0, %c0_i32 : i32, i32
  }
  func.func @transform_1(%arg0: i32) -> (i32, i32) {
    %c0_i32 = arith.constant 0 : i32
    %c0_i32_0 = arith.constant 0 : i32
    return %arg0, %c0_i32 : i32, i32
  }
  func.func @transform_2(%arg0: i32) -> (i32, i32) {
    %c0_i32 = arith.constant 0 : i32
    %c0_i32_0 = arith.constant 0 : i32
    return %arg0, %c0_i32 : i32, i32
  }
  func.func @transform_3(%arg0: i32) -> (i32, i32) {
    %c0_i32 = arith.constant 0 : i32
    %c0_i32_0 = arith.constant 0 : i32
    return %arg0, %c0_i32 : i32, i32
  }
}

module attributes {stable_mosaic.version = 11 : i64} {
  func.func @_matmul_epilogue_kernel(%arg0: i32, %arg1: memref<512x144xbf16, #tpu.memory_space<vmem>>, %arg2: memref<144x16xbf16, #tpu.memory_space<vmem>>, %arg3: memref<1x16xf32, #tpu.memory_space<vmem>>, %arg4: memref<512x16xbf16, #tpu.memory_space<vmem>>) attributes {dimension_semantics = [#tpu.dimension_semantics<parallel>], iteration_bounds = array<i64: 1>, scalar_prefetch = 0 : i64, scratch_operands = 0 : i64, tpu.core_type = #tpu.core_type<tc>, window_params = [{transform_indices = @transform_0, window_bounds = array<i64: 512, 144>}, {pipeline_mode = #tpu.pipeline_mode<synchronous>, transform_indices = @transform_1, window_bounds = array<i64: 144, 16>}, {pipeline_mode = #tpu.pipeline_mode<synchronous>, transform_indices = @transform_2, window_bounds = array<i64: 1, 16>}, {transform_indices = @transform_3, window_bounds = array<i64: 512, 16>}]} {
    %c0 = arith.constant 0 : index
    %c0_0 = arith.constant 0 : index
    %0 = vector.load %arg1[%c0, %c0_0] : memref<512x144xbf16, #tpu.memory_space<vmem>>, vector<512x144xbf16>
    %c0_1 = arith.constant 0 : index
    %c0_2 = arith.constant 0 : index
    %1 = vector.load %arg2[%c0_1, %c0_2] : memref<144x16xbf16, #tpu.memory_space<vmem>>, vector<144x16xbf16>
    %cst = arith.constant dense<0.000000e+00> : vector<512x16xf32>
    %2 = tpu.matmul %0, %1, %cst {dimension_numbers = #tpu.dot_dimension_numbers<[1], [0], [0], [1], [0, 0, 1, 1], [], []>} : vector<512x144xbf16>, vector<144x16xbf16>, vector<512x16xf32> -> vector<512x16xf32>
    %c0_3 = arith.constant 0 : index
    %c0_4 = arith.constant 0 : index
    %3 = vector.load %arg3[%c0_3, %c0_4] : memref<1x16xf32, #tpu.memory_space<vmem>>, vector<1x16xf32>
    %4 = vector.broadcast %3 : vector<1x16xf32> to vector<512x16xf32>
    %5 = arith.addf %2, %4 : vector<512x16xf32>
    %cst_5 = arith.constant 0.000000e+00 : f32
    %6 = vector.broadcast %cst_5 : f32 to vector<512x16xf32>
    %7 = arith.maximumf %5, %6 : vector<512x16xf32>
    %8 = arith.truncf %7 : vector<512x16xf32> to vector<512x16xbf16>
    %c0_6 = arith.constant 0 : index
    %c0_7 = arith.constant 0 : index
    %9 = vector.load %arg4[%c0_6, %c0_7] : memref<512x16xbf16, #tpu.memory_space<vmem>>, vector<512x16xbf16>
    tpu.vector_store %arg4[%c0_6, %c0_7], %8 {strides = array<i32>} : memref<512x16xbf16, #tpu.memory_space<vmem>>, vector<512x16xbf16>,
    return
  }
  func.func @transform_0(%arg0: i32) -> (i32, i32) {
    %c0_i32 = arith.constant 0 : i32
    %c0_i32_0 = arith.constant 0 : i32
    return %arg0, %c0_i32 : i32, i32
  }
  func.func @transform_1(%arg0: i32) -> (i32, i32) {
    %c0_i32 = arith.constant 0 : i32
    %c0_i32_0 = arith.constant 0 : i32
    %c0_i32_1 = arith.constant 0 : i32
    return %c0_i32, %c0_i32_0 : i32, i32
  }
  func.func @transform_2(%arg0: i32) -> (i32, i32) {
    %c0_i32 = arith.constant 0 : i32
    %c0_i32_0 = arith.constant 0 : i32
    %c0_i32_1 = arith.constant 0 : i32
    return %c0_i32, %c0_i32_0 : i32, i32
  }
  func.func @transform_3(%arg0: i32) -> (i32, i32) {
    %c0_i32 = arith.constant 0 : i32
    %c0_i32_0 = arith.constant 0 : i32
    return %arg0, %c0_i32 : i32, i32
  }
}

module attributes {stable_mosaic.version = 11 : i64} {
  func.func @_matmul_epilogue_kernel(%arg0: i32, %arg1: memref<512x144xbf16, #tpu.memory_space<vmem>>, %arg2: memref<144x16xbf16, #tpu.memory_space<vmem>>, %arg3: memref<1x16xf32, #tpu.memory_space<vmem>>, %arg4: memref<512x16xbf16, #tpu.memory_space<vmem>>, %arg5: memref<512x16xbf16, #tpu.memory_space<vmem>>) attributes {dimension_semantics = [#tpu.dimension_semantics<parallel>], iteration_bounds = array<i64: 1>, scalar_prefetch = 0 : i64, scratch_operands = 0 : i64, tpu.core_type = #tpu.core_type<tc>, window_params = [{transform_indices = @transform_0, window_bounds = array<i64: 512, 144>}, {pipeline_mode = #tpu.pipeline_mode<synchronous>, transform_indices = @transform_1, window_bounds = array<i64: 144, 16>}, {pipeline_mode = #tpu.pipeline_mode<synchronous>, transform_indices = @transform_2, window_bounds = array<i64: 1, 16>}, {transform_indices = @transform_3, window_bounds = array<i64: 512, 16>}, {transform_indices = @transform_4, window_bounds = array<i64: 512, 16>}]} {
    %c0 = arith.constant 0 : index
    %c0_0 = arith.constant 0 : index
    %0 = vector.load %arg1[%c0, %c0_0] : memref<512x144xbf16, #tpu.memory_space<vmem>>, vector<512x144xbf16>
    %c0_1 = arith.constant 0 : index
    %c0_2 = arith.constant 0 : index
    %1 = vector.load %arg2[%c0_1, %c0_2] : memref<144x16xbf16, #tpu.memory_space<vmem>>, vector<144x16xbf16>
    %cst = arith.constant dense<0.000000e+00> : vector<512x16xf32>
    %2 = tpu.matmul %0, %1, %cst {dimension_numbers = #tpu.dot_dimension_numbers<[1], [0], [0], [1], [0, 0, 1, 1], [], []>} : vector<512x144xbf16>, vector<144x16xbf16>, vector<512x16xf32> -> vector<512x16xf32>
    %c0_3 = arith.constant 0 : index
    %c0_4 = arith.constant 0 : index
    %3 = vector.load %arg3[%c0_3, %c0_4] : memref<1x16xf32, #tpu.memory_space<vmem>>, vector<1x16xf32>
    %4 = vector.broadcast %3 : vector<1x16xf32> to vector<512x16xf32>
    %5 = arith.addf %2, %4 : vector<512x16xf32>
    %c0_5 = arith.constant 0 : index
    %c0_6 = arith.constant 0 : index
    %6 = vector.load %arg4[%c0_5, %c0_6] : memref<512x16xbf16, #tpu.memory_space<vmem>>, vector<512x16xbf16>
    %7 = arith.extf %6 : vector<512x16xbf16> to vector<512x16xf32>
    %8 = arith.addf %5, %7 : vector<512x16xf32>
    %cst_7 = arith.constant 0.000000e+00 : f32
    %9 = vector.broadcast %cst_7 : f32 to vector<512x16xf32>
    %10 = arith.maximumf %8, %9 : vector<512x16xf32>
    %11 = arith.truncf %10 : vector<512x16xf32> to vector<512x16xbf16>
    %c0_8 = arith.constant 0 : index
    %c0_9 = arith.constant 0 : index
    %12 = vector.load %arg5[%c0_8, %c0_9] : memref<512x16xbf16, #tpu.memory_space<vmem>>, vector<512x16xbf16>
    tpu.vector_store %arg5[%c0_8, %c0_9], %11 {strides = array<i32>} : memref<512x16xbf16, #tpu.memory_space<vmem>>, vector<512x16xbf16>,
    return
  }
  func.func @transform_0(%arg0: i32) -> (i32, i32) {
    %c0_i32 = arith.constant 0 : i32
    %c0_i32_0 = arith.constant 0 : i32
    return %arg0, %c0_i32 : i32, i32
  }
  func.func @transform_1(%arg0: i32) -> (i32, i32) {
    %c0_i32 = arith.constant 0 : i32
    %c0_i32_0 = arith.constant 0 : i32
    %c0_i32_1 = arith.constant 0 : i32
    return %c0_i32, %c0_i32_0 : i32, i32
  }
  func.func @transform_2(%arg0: i32) -> (i32, i32) {
    %c0_i32 = arith.constant 0 : i32
    %c0_i32_0 = arith.constant 0 : i32
    %c0_i32_1 = arith.constant 0 : i32
    return %c0_i32, %c0_i32_0 : i32, i32
  }
  func.func @transform_3(%arg0: i32) -> (i32, i32) {
    %c0_i32 = arith.constant 0 : i32
    %c0_i32_0 = arith.constant 0 : i32
    return %arg0, %c0_i32 : i32, i32
  }
  func.func @transform_4(%arg0: i32) -> (i32, i32) {
    %c0_i32 = arith.constant 0 : i32
    %c0_i32_0 = arith.constant 0 : i32
    return %arg0, %c0_i32 : i32, i32
  }
}

module attributes {stable_mosaic.version = 11 : i64} {
  func.func @_matmul_epilogue_kernel(%arg0: i32, %arg1: memref<128x144xbf16, #tpu.memory_space<vmem>>, %arg2: memref<144x32xbf16, #tpu.memory_space<vmem>>, %arg3: memref<1x32xf32, #tpu.memory_space<vmem>>, %arg4: memref<128x32xbf16, #tpu.memory_space<vmem>>) attributes {dimension_semantics = [#tpu.dimension_semantics<parallel>], iteration_bounds = array<i64: 1>, scalar_prefetch = 0 : i64, scratch_operands = 0 : i64, tpu.core_type = #tpu.core_type<tc>, window_params = [{transform_indices = @transform_0, window_bounds = array<i64: 128, 144>}, {pipeline_mode = #tpu.pipeline_mode<synchronous>, transform_indices = @transform_1, window_bounds = array<i64: 144, 32>}, {pipeline_mode = #tpu.pipeline_mode<synchronous>, transform_indices = @transform_2, window_bounds = array<i64: 1, 32>}, {transform_indices = @transform_3, window_bounds = array<i64: 128, 32>}]} {
    %c0 = arith.constant 0 : index
    %c0_0 = arith.constant 0 : index
    %0 = vector.load %arg1[%c0, %c0_0] : memref<128x144xbf16, #tpu.memory_space<vmem>>, vector<128x144xbf16>
    %c0_1 = arith.constant 0 : index
    %c0_2 = arith.constant 0 : index
    %1 = vector.load %arg2[%c0_1, %c0_2] : memref<144x32xbf16, #tpu.memory_space<vmem>>, vector<144x32xbf16>
    %cst = arith.constant dense<0.000000e+00> : vector<128x32xf32>
    %2 = tpu.matmul %0, %1, %cst {dimension_numbers = #tpu.dot_dimension_numbers<[1], [0], [0], [1], [0, 0, 1, 1], [], []>} : vector<128x144xbf16>, vector<144x32xbf16>, vector<128x32xf32> -> vector<128x32xf32>
    %c0_3 = arith.constant 0 : index
    %c0_4 = arith.constant 0 : index
    %3 = vector.load %arg3[%c0_3, %c0_4] : memref<1x32xf32, #tpu.memory_space<vmem>>, vector<1x32xf32>
    %4 = vector.broadcast %3 : vector<1x32xf32> to vector<128x32xf32>
    %5 = arith.addf %2, %4 : vector<128x32xf32>
    %cst_5 = arith.constant 0.000000e+00 : f32
    %6 = vector.broadcast %cst_5 : f32 to vector<128x32xf32>
    %7 = arith.maximumf %5, %6 : vector<128x32xf32>
    %8 = arith.truncf %7 : vector<128x32xf32> to vector<128x32xbf16>
    %c0_6 = arith.constant 0 : index
    %c0_7 = arith.constant 0 : index
    %9 = vector.load %arg4[%c0_6, %c0_7] : memref<128x32xbf16, #tpu.memory_space<vmem>>, vector<128x32xbf16>
    tpu.vector_store %arg4[%c0_6, %c0_7], %8 {strides = array<i32>} : memref<128x32xbf16, #tpu.memory_space<vmem>>, vector<128x32xbf16>,
    return
  }
  func.func @transform_0(%arg0: i32) -> (i32, i32) {
    %c0_i32 = arith.constant 0 : i32
    %c0_i32_0 = arith.constant 0 : i32
    return %arg0, %c0_i32 : i32, i32
  }
  func.func @transform_1(%arg0: i32) -> (i32, i32) {
    %c0_i32 = arith.constant 0 : i32
    %c0_i32_0 = arith.constant 0 : i32
    %c0_i32_1 = arith.constant 0 : i32
    return %c0_i32, %c0_i32_0 : i32, i32
  }
  func.func @transform_2(%arg0: i32) -> (i32, i32) {
    %c0_i32 = arith.constant 0 : i32
    %c0_i32_0 = arith.constant 0 : i32
    %c0_i32_1 = arith.constant 0 : i32
    return %c0_i32, %c0_i32_0 : i32, i32
  }
  func.func @transform_3(%arg0: i32) -> (i32, i32) {
    %c0_i32 = arith.constant 0 : i32
    %c0_i32_0 = arith.constant 0 : i32
    return %arg0, %c0_i32 : i32, i32
  }
}

module attributes {stable_mosaic.version = 11 : i64} {
  func.func @_matmul_epilogue_kernel(%arg0: i32, %arg1: memref<128x304xbf16, #tpu.memory_space<vmem>>, %arg2: memref<304x32xbf16, #tpu.memory_space<vmem>>, %arg3: memref<1x32xf32, #tpu.memory_space<vmem>>, %arg4: memref<128x32xbf16, #tpu.memory_space<vmem>>) attributes {dimension_semantics = [#tpu.dimension_semantics<parallel>], iteration_bounds = array<i64: 1>, scalar_prefetch = 0 : i64, scratch_operands = 0 : i64, tpu.core_type = #tpu.core_type<tc>, window_params = [{transform_indices = @transform_0, window_bounds = array<i64: 128, 304>}, {pipeline_mode = #tpu.pipeline_mode<synchronous>, transform_indices = @transform_1, window_bounds = array<i64: 304, 32>}, {pipeline_mode = #tpu.pipeline_mode<synchronous>, transform_indices = @transform_2, window_bounds = array<i64: 1, 32>}, {transform_indices = @transform_3, window_bounds = array<i64: 128, 32>}]} {
    %c0 = arith.constant 0 : index
    %c0_0 = arith.constant 0 : index
    %0 = vector.load %arg1[%c0, %c0_0] : memref<128x304xbf16, #tpu.memory_space<vmem>>, vector<128x304xbf16>
    %c0_1 = arith.constant 0 : index
    %c0_2 = arith.constant 0 : index
    %1 = vector.load %arg2[%c0_1, %c0_2] : memref<304x32xbf16, #tpu.memory_space<vmem>>, vector<304x32xbf16>
    %cst = arith.constant dense<0.000000e+00> : vector<128x32xf32>
    %2 = tpu.matmul %0, %1, %cst {dimension_numbers = #tpu.dot_dimension_numbers<[1], [0], [0], [1], [0, 0, 1, 1], [], []>} : vector<128x304xbf16>, vector<304x32xbf16>, vector<128x32xf32> -> vector<128x32xf32>
    %c0_3 = arith.constant 0 : index
    %c0_4 = arith.constant 0 : index
    %3 = vector.load %arg3[%c0_3, %c0_4] : memref<1x32xf32, #tpu.memory_space<vmem>>, vector<1x32xf32>
    %4 = vector.broadcast %3 : vector<1x32xf32> to vector<128x32xf32>
    %5 = arith.addf %2, %4 : vector<128x32xf32>
    %cst_5 = arith.constant 0.000000e+00 : f32
    %6 = vector.broadcast %cst_5 : f32 to vector<128x32xf32>
    %7 = arith.maximumf %5, %6 : vector<128x32xf32>
    %8 = arith.truncf %7 : vector<128x32xf32> to vector<128x32xbf16>
    %c0_6 = arith.constant 0 : index
    %c0_7 = arith.constant 0 : index
    %9 = vector.load %arg4[%c0_6, %c0_7] : memref<128x32xbf16, #tpu.memory_space<vmem>>, vector<128x32xbf16>
    tpu.vector_store %arg4[%c0_6, %c0_7], %8 {strides = array<i32>} : memref<128x32xbf16, #tpu.memory_space<vmem>>, vector<128x32xbf16>,
    return
  }
  func.func @transform_0(%arg0: i32) -> (i32, i32) {
    %c0_i32 = arith.constant 0 : i32
    %c0_i32_0 = arith.constant 0 : i32
    return %arg0, %c0_i32 : i32, i32
  }
  func.func @transform_1(%arg0: i32) -> (i32, i32) {
    %c0_i32 = arith.constant 0 : i32
    %c0_i32_0 = arith.constant 0 : i32
    %c0_i32_1 = arith.constant 0 : i32
    return %c0_i32, %c0_i32_0 : i32, i32
  }
  func.func @transform_2(%arg0: i32) -> (i32, i32) {
    %c0_i32 = arith.constant 0 : i32
    %c0_i32_0 = arith.constant 0 : i32
    %c0_i32_1 = arith.constant 0 : i32
    return %c0_i32, %c0_i32_0 : i32, i32
  }
  func.func @transform_3(%arg0: i32) -> (i32, i32) {
    %c0_i32 = arith.constant 0 : i32
    %c0_i32_0 = arith.constant 0 : i32
    return %arg0, %c0_i32 : i32, i32
  }
}

module attributes {stable_mosaic.version = 11 : i64} {
  func.func @_matmul_epilogue_kernel(%arg0: i32, %arg1: memref<128x288xbf16, #tpu.memory_space<vmem>>, %arg2: memref<288x32xbf16, #tpu.memory_space<vmem>>, %arg3: memref<1x32xf32, #tpu.memory_space<vmem>>, %arg4: memref<128x32xbf16, #tpu.memory_space<vmem>>) attributes {dimension_semantics = [#tpu.dimension_semantics<parallel>], iteration_bounds = array<i64: 1>, scalar_prefetch = 0 : i64, scratch_operands = 0 : i64, tpu.core_type = #tpu.core_type<tc>, window_params = [{transform_indices = @transform_0, window_bounds = array<i64: 128, 288>}, {pipeline_mode = #tpu.pipeline_mode<synchronous>, transform_indices = @transform_1, window_bounds = array<i64: 288, 32>}, {pipeline_mode = #tpu.pipeline_mode<synchronous>, transform_indices = @transform_2, window_bounds = array<i64: 1, 32>}, {transform_indices = @transform_3, window_bounds = array<i64: 128, 32>}]} {
    %c0 = arith.constant 0 : index
    %c0_0 = arith.constant 0 : index
    %0 = vector.load %arg1[%c0, %c0_0] : memref<128x288xbf16, #tpu.memory_space<vmem>>, vector<128x288xbf16>
    %c0_1 = arith.constant 0 : index
    %c0_2 = arith.constant 0 : index
    %1 = vector.load %arg2[%c0_1, %c0_2] : memref<288x32xbf16, #tpu.memory_space<vmem>>, vector<288x32xbf16>
    %cst = arith.constant dense<0.000000e+00> : vector<128x32xf32>
    %2 = tpu.matmul %0, %1, %cst {dimension_numbers = #tpu.dot_dimension_numbers<[1], [0], [0], [1], [0, 0, 1, 1], [], []>} : vector<128x288xbf16>, vector<288x32xbf16>, vector<128x32xf32> -> vector<128x32xf32>
    %c0_3 = arith.constant 0 : index
    %c0_4 = arith.constant 0 : index
    %3 = vector.load %arg3[%c0_3, %c0_4] : memref<1x32xf32, #tpu.memory_space<vmem>>, vector<1x32xf32>
    %4 = vector.broadcast %3 : vector<1x32xf32> to vector<128x32xf32>
    %5 = arith.addf %2, %4 : vector<128x32xf32>
    %cst_5 = arith.constant 0.000000e+00 : f32
    %6 = vector.broadcast %cst_5 : f32 to vector<128x32xf32>
    %7 = arith.maximumf %5, %6 : vector<128x32xf32>
    %8 = arith.truncf %7 : vector<128x32xf32> to vector<128x32xbf16>
    %c0_6 = arith.constant 0 : index
    %c0_7 = arith.constant 0 : index
    %9 = vector.load %arg4[%c0_6, %c0_7] : memref<128x32xbf16, #tpu.memory_space<vmem>>, vector<128x32xbf16>
    tpu.vector_store %arg4[%c0_6, %c0_7], %8 {strides = array<i32>} : memref<128x32xbf16, #tpu.memory_space<vmem>>, vector<128x32xbf16>,
    return
  }
  func.func @transform_0(%arg0: i32) -> (i32, i32) {
    %c0_i32 = arith.constant 0 : i32
    %c0_i32_0 = arith.constant 0 : i32
    return %arg0, %c0_i32 : i32, i32
  }
  func.func @transform_1(%arg0: i32) -> (i32, i32) {
    %c0_i32 = arith.constant 0 : i32
    %c0_i32_0 = arith.constant 0 : i32
    %c0_i32_1 = arith.constant 0 : i32
    return %c0_i32, %c0_i32_0 : i32, i32
  }
  func.func @transform_2(%arg0: i32) -> (i32, i32) {
    %c0_i32 = arith.constant 0 : i32
    %c0_i32_0 = arith.constant 0 : i32
    %c0_i32_1 = arith.constant 0 : i32
    return %c0_i32, %c0_i32_0 : i32, i32
  }
  func.func @transform_3(%arg0: i32) -> (i32, i32) {
    %c0_i32 = arith.constant 0 : i32
    %c0_i32_0 = arith.constant 0 : i32
    return %arg0, %c0_i32 : i32, i32
  }
}

module attributes {stable_mosaic.version = 11 : i64} {
  func.func @_matmul_epilogue_kernel(%arg0: i32, %arg1: memref<128x288xbf16, #tpu.memory_space<vmem>>, %arg2: memref<288x32xbf16, #tpu.memory_space<vmem>>, %arg3: memref<1x32xf32, #tpu.memory_space<vmem>>, %arg4: memref<128x32xbf16, #tpu.memory_space<vmem>>, %arg5: memref<128x32xbf16, #tpu.memory_space<vmem>>) attributes {dimension_semantics = [#tpu.dimension_semantics<parallel>], iteration_bounds = array<i64: 1>, scalar_prefetch = 0 : i64, scratch_operands = 0 : i64, tpu.core_type = #tpu.core_type<tc>, window_params = [{transform_indices = @transform_0, window_bounds = array<i64: 128, 288>}, {pipeline_mode = #tpu.pipeline_mode<synchronous>, transform_indices = @transform_1, window_bounds = array<i64: 288, 32>}, {pipeline_mode = #tpu.pipeline_mode<synchronous>, transform_indices = @transform_2, window_bounds = array<i64: 1, 32>}, {transform_indices = @transform_3, window_bounds = array<i64: 128, 32>}, {transform_indices = @transform_4, window_bounds = array<i64: 128, 32>}]} {
    %c0 = arith.constant 0 : index
    %c0_0 = arith.constant 0 : index
    %0 = vector.load %arg1[%c0, %c0_0] : memref<128x288xbf16, #tpu.memory_space<vmem>>, vector<128x288xbf16>
    %c0_1 = arith.constant 0 : index
    %c0_2 = arith.constant 0 : index
    %1 = vector.load %arg2[%c0_1, %c0_2] : memref<288x32xbf16, #tpu.memory_space<vmem>>, vector<288x32xbf16>
    %cst = arith.constant dense<0.000000e+00> : vector<128x32xf32>
    %2 = tpu.matmul %0, %1, %cst {dimension_numbers = #tpu.dot_dimension_numbers<[1], [0], [0], [1], [0, 0, 1, 1], [], []>} : vector<128x288xbf16>, vector<288x32xbf16>, vector<128x32xf32> -> vector<128x32xf32>
    %c0_3 = arith.constant 0 : index
    %c0_4 = arith.constant 0 : index
    %3 = vector.load %arg3[%c0_3, %c0_4] : memref<1x32xf32, #tpu.memory_space<vmem>>, vector<1x32xf32>
    %4 = vector.broadcast %3 : vector<1x32xf32> to vector<128x32xf32>
    %5 = arith.addf %2, %4 : vector<128x32xf32>
    %c0_5 = arith.constant 0 : index
    %c0_6 = arith.constant 0 : index
    %6 = vector.load %arg4[%c0_5, %c0_6] : memref<128x32xbf16, #tpu.memory_space<vmem>>, vector<128x32xbf16>
    %7 = arith.extf %6 : vector<128x32xbf16> to vector<128x32xf32>
    %8 = arith.addf %5, %7 : vector<128x32xf32>
    %cst_7 = arith.constant 0.000000e+00 : f32
    %9 = vector.broadcast %cst_7 : f32 to vector<128x32xf32>
    %10 = arith.maximumf %8, %9 : vector<128x32xf32>
    %11 = arith.truncf %10 : vector<128x32xf32> to vector<128x32xbf16>
    %c0_8 = arith.constant 0 : index
    %c0_9 = arith.constant 0 : index
    %12 = vector.load %arg5[%c0_8, %c0_9] : memref<128x32xbf16, #tpu.memory_space<vmem>>, vector<128x32xbf16>
    tpu.vector_store %arg5[%c0_8, %c0_9], %11 {strides = array<i32>} : memref<128x32xbf16, #tpu.memory_space<vmem>>, vector<128x32xbf16>,
    return
  }
  func.func @transform_0(%arg0: i32) -> (i32, i32) {
    %c0_i32 = arith.constant 0 : i32
    %c0_i32_0 = arith.constant 0 : i32
    return %arg0, %c0_i32 : i32, i32
  }
  func.func @transform_1(%arg0: i32) -> (i32, i32) {
    %c0_i32 = arith.constant 0 : i32
    %c0_i32_0 = arith.constant 0 : i32
    %c0_i32_1 = arith.constant 0 : i32
    return %c0_i32, %c0_i32_0 : i32, i32
  }
  func.func @transform_2(%arg0: i32) -> (i32, i32) {
    %c0_i32 = arith.constant 0 : i32
    %c0_i32_0 = arith.constant 0 : i32
    %c0_i32_1 = arith.constant 0 : i32
    return %c0_i32, %c0_i32_0 : i32, i32
  }
  func.func @transform_3(%arg0: i32) -> (i32, i32) {
    %c0_i32 = arith.constant 0 : i32
    %c0_i32_0 = arith.constant 0 : i32
    return %arg0, %c0_i32 : i32, i32
  }
  func.func @transform_4(%arg0: i32) -> (i32, i32) {
    %c0_i32 = arith.constant 0 : i32
    %c0_i32_0 = arith.constant 0 : i32
    return %arg0, %c0_i32 : i32, i32
  }
}

module attributes {stable_mosaic.version = 11 : i64} {
  func.func @_matmul_epilogue_kernel(%arg0: i32, %arg1: memref<32x288xbf16, #tpu.memory_space<vmem>>, %arg2: memref<288x64xbf16, #tpu.memory_space<vmem>>, %arg3: memref<1x64xf32, #tpu.memory_space<vmem>>, %arg4: memref<32x64xbf16, #tpu.memory_space<vmem>>) attributes {dimension_semantics = [#tpu.dimension_semantics<parallel>], iteration_bounds = array<i64: 1>, scalar_prefetch = 0 : i64, scratch_operands = 0 : i64, tpu.core_type = #tpu.core_type<tc>, window_params = [{transform_indices = @transform_0, window_bounds = array<i64: 32, 288>}, {pipeline_mode = #tpu.pipeline_mode<synchronous>, transform_indices = @transform_1, window_bounds = array<i64: 288, 64>}, {pipeline_mode = #tpu.pipeline_mode<synchronous>, transform_indices = @transform_2, window_bounds = array<i64: 1, 64>}, {transform_indices = @transform_3, window_bounds = array<i64: 32, 64>}]} {
    %c0 = arith.constant 0 : index
    %c0_0 = arith.constant 0 : index
    %0 = vector.load %arg1[%c0, %c0_0] : memref<32x288xbf16, #tpu.memory_space<vmem>>, vector<32x288xbf16>
    %c0_1 = arith.constant 0 : index
    %c0_2 = arith.constant 0 : index
    %1 = vector.load %arg2[%c0_1, %c0_2] : memref<288x64xbf16, #tpu.memory_space<vmem>>, vector<288x64xbf16>
    %cst = arith.constant dense<0.000000e+00> : vector<32x64xf32>
    %2 = tpu.matmul %0, %1, %cst {dimension_numbers = #tpu.dot_dimension_numbers<[1], [0], [0], [1], [0, 0, 1, 1], [], []>} : vector<32x288xbf16>, vector<288x64xbf16>, vector<32x64xf32> -> vector<32x64xf32>
    %c0_3 = arith.constant 0 : index
    %c0_4 = arith.constant 0 : index
    %3 = vector.load %arg3[%c0_3, %c0_4] : memref<1x64xf32, #tpu.memory_space<vmem>>, vector<1x64xf32>
    %4 = vector.broadcast %3 : vector<1x64xf32> to vector<32x64xf32>
    %5 = arith.addf %2, %4 : vector<32x64xf32>
    %cst_5 = arith.constant 0.000000e+00 : f32
    %6 = vector.broadcast %cst_5 : f32 to vector<32x64xf32>
    %7 = arith.maximumf %5, %6 : vector<32x64xf32>
    %8 = arith.truncf %7 : vector<32x64xf32> to vector<32x64xbf16>
    %c0_6 = arith.constant 0 : index
    %c0_7 = arith.constant 0 : index
    %9 = vector.load %arg4[%c0_6, %c0_7] : memref<32x64xbf16, #tpu.memory_space<vmem>>, vector<32x64xbf16>
    tpu.vector_store %arg4[%c0_6, %c0_7], %8 {strides = array<i32>} : memref<32x64xbf16, #tpu.memory_space<vmem>>, vector<32x64xbf16>,
    return
  }
  func.func @transform_0(%arg0: i32) -> (i32, i32) {
    %c0_i32 = arith.constant 0 : i32
    %c0_i32_0 = arith.constant 0 : i32
    return %arg0, %c0_i32 : i32, i32
  }
  func.func @transform_1(%arg0: i32) -> (i32, i32) {
    %c0_i32 = arith.constant 0 : i32
    %c0_i32_0 = arith.constant 0 : i32
    %c0_i32_1 = arith.constant 0 : i32
    return %c0_i32, %c0_i32_0 : i32, i32
  }
  func.func @transform_2(%arg0: i32) -> (i32, i32) {
    %c0_i32 = arith.constant 0 : i32
    %c0_i32_0 = arith.constant 0 : i32
    %c0_i32_1 = arith.constant 0 : i32
    return %c0_i32, %c0_i32_0 : i32, i32
  }
  func.func @transform_3(%arg0: i32) -> (i32, i32) {
    %c0_i32 = arith.constant 0 : i32
    %c0_i32_0 = arith.constant 0 : i32
    return %arg0, %c0_i32 : i32, i32
  }
}

module attributes {stable_mosaic.version = 11 : i64} {
  func.func @_matmul_epilogue_kernel(%arg0: i32, %arg1: memref<32x608xbf16, #tpu.memory_space<vmem>>, %arg2: memref<608x64xbf16, #tpu.memory_space<vmem>>, %arg3: memref<1x64xf32, #tpu.memory_space<vmem>>, %arg4: memref<32x64xbf16, #tpu.memory_space<vmem>>) attributes {dimension_semantics = [#tpu.dimension_semantics<parallel>], iteration_bounds = array<i64: 1>, scalar_prefetch = 0 : i64, scratch_operands = 0 : i64, tpu.core_type = #tpu.core_type<tc>, window_params = [{transform_indices = @transform_0, window_bounds = array<i64: 32, 608>}, {pipeline_mode = #tpu.pipeline_mode<synchronous>, transform_indices = @transform_1, window_bounds = array<i64: 608, 64>}, {pipeline_mode = #tpu.pipeline_mode<synchronous>, transform_indices = @transform_2, window_bounds = array<i64: 1, 64>}, {transform_indices = @transform_3, window_bounds = array<i64: 32, 64>}]} {
    %c0 = arith.constant 0 : index
    %c0_0 = arith.constant 0 : index
    %0 = vector.load %arg1[%c0, %c0_0] : memref<32x608xbf16, #tpu.memory_space<vmem>>, vector<32x608xbf16>
    %c0_1 = arith.constant 0 : index
    %c0_2 = arith.constant 0 : index
    %1 = vector.load %arg2[%c0_1, %c0_2] : memref<608x64xbf16, #tpu.memory_space<vmem>>, vector<608x64xbf16>
    %cst = arith.constant dense<0.000000e+00> : vector<32x64xf32>
    %2 = tpu.matmul %0, %1, %cst {dimension_numbers = #tpu.dot_dimension_numbers<[1], [0], [0], [1], [0, 0, 1, 1], [], []>} : vector<32x608xbf16>, vector<608x64xbf16>, vector<32x64xf32> -> vector<32x64xf32>
    %c0_3 = arith.constant 0 : index
    %c0_4 = arith.constant 0 : index
    %3 = vector.load %arg3[%c0_3, %c0_4] : memref<1x64xf32, #tpu.memory_space<vmem>>, vector<1x64xf32>
    %4 = vector.broadcast %3 : vector<1x64xf32> to vector<32x64xf32>
    %5 = arith.addf %2, %4 : vector<32x64xf32>
    %cst_5 = arith.constant 0.000000e+00 : f32
    %6 = vector.broadcast %cst_5 : f32 to vector<32x64xf32>
    %7 = arith.maximumf %5, %6 : vector<32x64xf32>
    %8 = arith.truncf %7 : vector<32x64xf32> to vector<32x64xbf16>
    %c0_6 = arith.constant 0 : index
    %c0_7 = arith.constant 0 : index
    %9 = vector.load %arg4[%c0_6, %c0_7] : memref<32x64xbf16, #tpu.memory_space<vmem>>, vector<32x64xbf16>
    tpu.vector_store %arg4[%c0_6, %c0_7], %8 {strides = array<i32>} : memref<32x64xbf16, #tpu.memory_space<vmem>>, vector<32x64xbf16>,
    return
  }
  func.func @transform_0(%arg0: i32) -> (i32, i32) {
    %c0_i32 = arith.constant 0 : i32
    %c0_i32_0 = arith.constant 0 : i32
    return %arg0, %c0_i32 : i32, i32
  }
  func.func @transform_1(%arg0: i32) -> (i32, i32) {
    %c0_i32 = arith.constant 0 : i32
    %c0_i32_0 = arith.constant 0 : i32
    %c0_i32_1 = arith.constant 0 : i32
    return %c0_i32, %c0_i32_0 : i32, i32
  }
  func.func @transform_2(%arg0: i32) -> (i32, i32) {
    %c0_i32 = arith.constant 0 : i32
    %c0_i32_0 = arith.constant 0 : i32
    %c0_i32_1 = arith.constant 0 : i32
    return %c0_i32, %c0_i32_0 : i32, i32
  }
  func.func @transform_3(%arg0: i32) -> (i32, i32) {
    %c0_i32 = arith.constant 0 : i32
    %c0_i32_0 = arith.constant 0 : i32
    return %arg0, %c0_i32 : i32, i32
  }
}

module attributes {stable_mosaic.version = 11 : i64} {
  func.func @_matmul_epilogue_kernel(%arg0: i32, %arg1: memref<32x576xbf16, #tpu.memory_space<vmem>>, %arg2: memref<576x64xbf16, #tpu.memory_space<vmem>>, %arg3: memref<1x64xf32, #tpu.memory_space<vmem>>, %arg4: memref<32x64xbf16, #tpu.memory_space<vmem>>, %arg5: memref<32x64xbf16, #tpu.memory_space<vmem>>) attributes {dimension_semantics = [#tpu.dimension_semantics<parallel>], iteration_bounds = array<i64: 1>, scalar_prefetch = 0 : i64, scratch_operands = 0 : i64, tpu.core_type = #tpu.core_type<tc>, window_params = [{transform_indices = @transform_0, window_bounds = array<i64: 32, 576>}, {pipeline_mode = #tpu.pipeline_mode<synchronous>, transform_indices = @transform_1, window_bounds = array<i64: 576, 64>}, {pipeline_mode = #tpu.pipeline_mode<synchronous>, transform_indices = @transform_2, window_bounds = array<i64: 1, 64>}, {transform_indices = @transform_3, window_bounds = array<i64: 32, 64>}, {transform_indices = @transform_4, window_bounds = array<i64: 32, 64>}]} {
    %c0 = arith.constant 0 : index
    %c0_0 = arith.constant 0 : index
    %0 = vector.load %arg1[%c0, %c0_0] : memref<32x576xbf16, #tpu.memory_space<vmem>>, vector<32x576xbf16>
    %c0_1 = arith.constant 0 : index
    %c0_2 = arith.constant 0 : index
    %1 = vector.load %arg2[%c0_1, %c0_2] : memref<576x64xbf16, #tpu.memory_space<vmem>>, vector<576x64xbf16>
    %cst = arith.constant dense<0.000000e+00> : vector<32x64xf32>
    %2 = tpu.matmul %0, %1, %cst {dimension_numbers = #tpu.dot_dimension_numbers<[1], [0], [0], [1], [0, 0, 1, 1], [], []>} : vector<32x576xbf16>, vector<576x64xbf16>, vector<32x64xf32> -> vector<32x64xf32>
    %c0_3 = arith.constant 0 : index
    %c0_4 = arith.constant 0 : index
    %3 = vector.load %arg3[%c0_3, %c0_4] : memref<1x64xf32, #tpu.memory_space<vmem>>, vector<1x64xf32>
    %4 = vector.broadcast %3 : vector<1x64xf32> to vector<32x64xf32>
    %5 = arith.addf %2, %4 : vector<32x64xf32>
    %c0_5 = arith.constant 0 : index
    %c0_6 = arith.constant 0 : index
    %6 = vector.load %arg4[%c0_5, %c0_6] : memref<32x64xbf16, #tpu.memory_space<vmem>>, vector<32x64xbf16>
    %7 = arith.extf %6 : vector<32x64xbf16> to vector<32x64xf32>
    %8 = arith.addf %5, %7 : vector<32x64xf32>
    %cst_7 = arith.constant 0.000000e+00 : f32
    %9 = vector.broadcast %cst_7 : f32 to vector<32x64xf32>
    %10 = arith.maximumf %8, %9 : vector<32x64xf32>
    %11 = arith.truncf %10 : vector<32x64xf32> to vector<32x64xbf16>
    %c0_8 = arith.constant 0 : index
    %c0_9 = arith.constant 0 : index
    %12 = vector.load %arg5[%c0_8, %c0_9] : memref<32x64xbf16, #tpu.memory_space<vmem>>, vector<32x64xbf16>
    tpu.vector_store %arg5[%c0_8, %c0_9], %11 {strides = array<i32>} : memref<32x64xbf16, #tpu.memory_space<vmem>>, vector<32x64xbf16>,
    return
  }
  func.func @transform_0(%arg0: i32) -> (i32, i32) {
    %c0_i32 = arith.constant 0 : i32
    %c0_i32_0 = arith.constant 0 : i32
    return %arg0, %c0_i32 : i32, i32
  }
  func.func @transform_1(%arg0: i32) -> (i32, i32) {
    %c0_i32 = arith.constant 0 : i32
    %c0_i32_0 = arith.constant 0 : i32
    %c0_i32_1 = arith.constant 0 : i32
    return %c0_i32, %c0_i32_0 : i32, i32
  }
  func.func @transform_2(%arg0: i32) -> (i32, i32) {
    %c0_i32 = arith.constant 0 : i32
    %c0_i32_0 = arith.constant 0 : i32
    %c0_i32_1 = arith.constant 0 : i32
    return %c0_i32, %c0_i32_0 : i32, i32
  }
  func.func @transform_3(%arg0: i32) -> (i32, i32) {
    %c0_i32 = arith.constant 0 : i32
    %c0_i32_0 = arith.constant 0 : i32
    return %arg0, %c0_i32 : i32, i32
  }
  func.func @transform_4(%arg0: i32) -> (i32, i32) {
    %c0_i32 = arith.constant 0 : i32
    %c0_i32_0 = arith.constant 0 : i32
    return %arg0, %c0_i32 : i32, i32
  }
}

module attributes {stable_mosaic.version = 11 : i64} {
  func.func @_matmul_epilogue_kernel(%arg0: i32, %arg1: memref<32x576xbf16, #tpu.memory_space<vmem>>, %arg2: memref<576x64xbf16, #tpu.memory_space<vmem>>, %arg3: memref<1x64xf32, #tpu.memory_space<vmem>>, %arg4: memref<32x64xbf16, #tpu.memory_space<vmem>>) attributes {dimension_semantics = [#tpu.dimension_semantics<parallel>], iteration_bounds = array<i64: 1>, scalar_prefetch = 0 : i64, scratch_operands = 0 : i64, tpu.core_type = #tpu.core_type<tc>, window_params = [{transform_indices = @transform_0, window_bounds = array<i64: 32, 576>}, {pipeline_mode = #tpu.pipeline_mode<synchronous>, transform_indices = @transform_1, window_bounds = array<i64: 576, 64>}, {pipeline_mode = #tpu.pipeline_mode<synchronous>, transform_indices = @transform_2, window_bounds = array<i64: 1, 64>}, {transform_indices = @transform_3, window_bounds = array<i64: 32, 64>}]} {
    %c0 = arith.constant 0 : index
    %c0_0 = arith.constant 0 : index
    %0 = vector.load %arg1[%c0, %c0_0] : memref<32x576xbf16, #tpu.memory_space<vmem>>, vector<32x576xbf16>
    %c0_1 = arith.constant 0 : index
    %c0_2 = arith.constant 0 : index
    %1 = vector.load %arg2[%c0_1, %c0_2] : memref<576x64xbf16, #tpu.memory_space<vmem>>, vector<576x64xbf16>
    %cst = arith.constant dense<0.000000e+00> : vector<32x64xf32>
    %2 = tpu.matmul %0, %1, %cst {dimension_numbers = #tpu.dot_dimension_numbers<[1], [0], [0], [1], [0, 0, 1, 1], [], []>} : vector<32x576xbf16>, vector<576x64xbf16>, vector<32x64xf32> -> vector<32x64xf32>
    %c0_3 = arith.constant 0 : index
    %c0_4 = arith.constant 0 : index
    %3 = vector.load %arg3[%c0_3, %c0_4] : memref<1x64xf32, #tpu.memory_space<vmem>>, vector<1x64xf32>
    %4 = vector.broadcast %3 : vector<1x64xf32> to vector<32x64xf32>
    %5 = arith.addf %2, %4 : vector<32x64xf32>
    %cst_5 = arith.constant 0.000000e+00 : f32
    %6 = vector.broadcast %cst_5 : f32 to vector<32x64xf32>
    %7 = arith.maximumf %5, %6 : vector<32x64xf32>
    %8 = arith.truncf %7 : vector<32x64xf32> to vector<32x64xbf16>
    %c0_6 = arith.constant 0 : index
    %c0_7 = arith.constant 0 : index
    %9 = vector.load %arg4[%c0_6, %c0_7] : memref<32x64xbf16, #tpu.memory_space<vmem>>, vector<32x64xbf16>
    tpu.vector_store %arg4[%c0_6, %c0_7], %8 {strides = array<i32>} : memref<32x64xbf16, #tpu.memory_space<vmem>>, vector<32x64xbf16>,
    return
  }
  func.func @transform_0(%arg0: i32) -> (i32, i32) {
    %c0_i32 = arith.constant 0 : i32
    %c0_i32_0 = arith.constant 0 : i32
    return %arg0, %c0_i32 : i32, i32
  }
  func.func @transform_1(%arg0: i32) -> (i32, i32) {
    %c0_i32 = arith.constant 0 : i32
    %c0_i32_0 = arith.constant 0 : i32
    %c0_i32_1 = arith.constant 0 : i32
    return %c0_i32, %c0_i32_0 : i32, i32
  }
  func.func @transform_2(%arg0: i32) -> (i32, i32) {
    %c0_i32 = arith.constant 0 : i32
    %c0_i32_0 = arith.constant 0 : i32
    %c0_i32_1 = arith.constant 0 : i32
    return %c0_i32, %c0_i32_0 : i32, i32
  }
  func.func @transform_3(%arg0: i32) -> (i32, i32) {
    %c0_i32 = arith.constant 0 : i32
    %c0_i32_0 = arith.constant 0 : i32
    return %arg0, %c0_i32 : i32, i32
  }
}

module attributes {stable_mosaic.version = 11 : i64} {
  func.func @_matmul_epilogue_kernel(%arg0: i32, %arg1: memref<8x576xbf16, #tpu.memory_space<vmem>>, %arg2: memref<576x128xbf16, #tpu.memory_space<vmem>>, %arg3: memref<1x128xf32, #tpu.memory_space<vmem>>, %arg4: memref<8x128xbf16, #tpu.memory_space<vmem>>) attributes {dimension_semantics = [#tpu.dimension_semantics<parallel>], iteration_bounds = array<i64: 1>, scalar_prefetch = 0 : i64, scratch_operands = 0 : i64, tpu.core_type = #tpu.core_type<tc>, window_params = [{transform_indices = @transform_0, window_bounds = array<i64: 8, 576>}, {pipeline_mode = #tpu.pipeline_mode<synchronous>, transform_indices = @transform_1, window_bounds = array<i64: 576, 128>}, {pipeline_mode = #tpu.pipeline_mode<synchronous>, transform_indices = @transform_2, window_bounds = array<i64: 1, 128>}, {transform_indices = @transform_3, window_bounds = array<i64: 8, 128>}]} {
    %c0 = arith.constant 0 : index
    %c0_0 = arith.constant 0 : index
    %0 = vector.load %arg1[%c0, %c0_0] : memref<8x576xbf16, #tpu.memory_space<vmem>>, vector<8x576xbf16>
    %c0_1 = arith.constant 0 : index
    %c0_2 = arith.constant 0 : index
    %1 = vector.load %arg2[%c0_1, %c0_2] : memref<576x128xbf16, #tpu.memory_space<vmem>>, vector<576x128xbf16>
    %cst = arith.constant dense<0.000000e+00> : vector<8x128xf32>
    %2 = tpu.matmul %0, %1, %cst {dimension_numbers = #tpu.dot_dimension_numbers<[1], [0], [0], [1], [0, 0, 1, 1], [], []>} : vector<8x576xbf16>, vector<576x128xbf16>, vector<8x128xf32> -> vector<8x128xf32>
    %c0_3 = arith.constant 0 : index
    %c0_4 = arith.constant 0 : index
    %3 = vector.load %arg3[%c0_3, %c0_4] : memref<1x128xf32, #tpu.memory_space<vmem>>, vector<1x128xf32>
    %4 = vector.broadcast %3 : vector<1x128xf32> to vector<8x128xf32>
    %5 = arith.addf %2, %4 : vector<8x128xf32>
    %cst_5 = arith.constant 0.000000e+00 : f32
    %6 = vector.broadcast %cst_5 : f32 to vector<8x128xf32>
    %7 = arith.maximumf %5, %6 : vector<8x128xf32>
    %8 = arith.truncf %7 : vector<8x128xf32> to vector<8x128xbf16>
    %c0_6 = arith.constant 0 : index
    %c0_7 = arith.constant 0 : index
    %9 = vector.load %arg4[%c0_6, %c0_7] : memref<8x128xbf16, #tpu.memory_space<vmem>>, vector<8x128xbf16>
    tpu.vector_store %arg4[%c0_6, %c0_7], %8 {strides = array<i32>} : memref<8x128xbf16, #tpu.memory_space<vmem>>, vector<8x128xbf16>,
    return
  }
  func.func @transform_0(%arg0: i32) -> (i32, i32) {
    %c0_i32 = arith.constant 0 : i32
    %c0_i32_0 = arith.constant 0 : i32
    return %arg0, %c0_i32 : i32, i32
  }
  func.func @transform_1(%arg0: i32) -> (i32, i32) {
    %c0_i32 = arith.constant 0 : i32
    %c0_i32_0 = arith.constant 0 : i32
    %c0_i32_1 = arith.constant 0 : i32
    return %c0_i32, %c0_i32_0 : i32, i32
  }
  func.func @transform_2(%arg0: i32) -> (i32, i32) {
    %c0_i32 = arith.constant 0 : i32
    %c0_i32_0 = arith.constant 0 : i32
    %c0_i32_1 = arith.constant 0 : i32
    return %c0_i32, %c0_i32_0 : i32, i32
  }
  func.func @transform_3(%arg0: i32) -> (i32, i32) {
    %c0_i32 = arith.constant 0 : i32
    %c0_i32_0 = arith.constant 0 : i32
    return %arg0, %c0_i32 : i32, i32
  }
}

module attributes {stable_mosaic.version = 11 : i64} {
  func.func @_matmul_epilogue_kernel(%arg0: i32, %arg1: memref<8x1216xbf16, #tpu.memory_space<vmem>>, %arg2: memref<1216x128xbf16, #tpu.memory_space<vmem>>, %arg3: memref<1x128xf32, #tpu.memory_space<vmem>>, %arg4: memref<8x128xbf16, #tpu.memory_space<vmem>>) attributes {dimension_semantics = [#tpu.dimension_semantics<parallel>], iteration_bounds = array<i64: 1>, scalar_prefetch = 0 : i64, scratch_operands = 0 : i64, tpu.core_type = #tpu.core_type<tc>, window_params = [{transform_indices = @transform_0, window_bounds = array<i64: 8, 1216>}, {pipeline_mode = #tpu.pipeline_mode<synchronous>, transform_indices = @transform_1, window_bounds = array<i64: 1216, 128>}, {pipeline_mode = #tpu.pipeline_mode<synchronous>, transform_indices = @transform_2, window_bounds = array<i64: 1, 128>}, {transform_indices = @transform_3, window_bounds = array<i64: 8, 128>}]} {
    %c0 = arith.constant 0 : index
    %c0_0 = arith.constant 0 : index
    %0 = vector.load %arg1[%c0, %c0_0] : memref<8x1216xbf16, #tpu.memory_space<vmem>>, vector<8x1216xbf16>
    %c0_1 = arith.constant 0 : index
    %c0_2 = arith.constant 0 : index
    %1 = vector.load %arg2[%c0_1, %c0_2] : memref<1216x128xbf16, #tpu.memory_space<vmem>>, vector<1216x128xbf16>
    %cst = arith.constant dense<0.000000e+00> : vector<8x128xf32>
    %2 = tpu.matmul %0, %1, %cst {dimension_numbers = #tpu.dot_dimension_numbers<[1], [0], [0], [1], [0, 0, 1, 1], [], []>} : vector<8x1216xbf16>, vector<1216x128xbf16>, vector<8x128xf32> -> vector<8x128xf32>
    %c0_3 = arith.constant 0 : index
    %c0_4 = arith.constant 0 : index
    %3 = vector.load %arg3[%c0_3, %c0_4] : memref<1x128xf32, #tpu.memory_space<vmem>>, vector<1x128xf32>
    %4 = vector.broadcast %3 : vector<1x128xf32> to vector<8x128xf32>
    %5 = arith.addf %2, %4 : vector<8x128xf32>
    %cst_5 = arith.constant 0.000000e+00 : f32
    %6 = vector.broadcast %cst_5 : f32 to vector<8x128xf32>
    %7 = arith.maximumf %5, %6 : vector<8x128xf32>
    %8 = arith.truncf %7 : vector<8x128xf32> to vector<8x128xbf16>
    %c0_6 = arith.constant 0 : index
    %c0_7 = arith.constant 0 : index
    %9 = vector.load %arg4[%c0_6, %c0_7] : memref<8x128xbf16, #tpu.memory_space<vmem>>, vector<8x128xbf16>
    tpu.vector_store %arg4[%c0_6, %c0_7], %8 {strides = array<i32>} : memref<8x128xbf16, #tpu.memory_space<vmem>>, vector<8x128xbf16>,
    return
  }
  func.func @transform_0(%arg0: i32) -> (i32, i32) {
    %c0_i32 = arith.constant 0 : i32
    %c0_i32_0 = arith.constant 0 : i32
    return %arg0, %c0_i32 : i32, i32
  }
  func.func @transform_1(%arg0: i32) -> (i32, i32) {
    %c0_i32 = arith.constant 0 : i32
    %c0_i32_0 = arith.constant 0 : i32
    %c0_i32_1 = arith.constant 0 : i32
    return %c0_i32, %c0_i32_0 : i32, i32
  }
  func.func @transform_2(%arg0: i32) -> (i32, i32) {
    %c0_i32 = arith.constant 0 : i32
    %c0_i32_0 = arith.constant 0 : i32
    %c0_i32_1 = arith.constant 0 : i32
    return %c0_i32, %c0_i32_0 : i32, i32
  }
  func.func @transform_3(%arg0: i32) -> (i32, i32) {
    %c0_i32 = arith.constant 0 : i32
    %c0_i32_0 = arith.constant 0 : i32
    return %arg0, %c0_i32 : i32, i32
  }
}

module attributes {stable_mosaic.version = 11 : i64} {
  func.func @_matmul_epilogue_kernel(%arg0: i32, %arg1: memref<8x1152xbf16, #tpu.memory_space<vmem>>, %arg2: memref<1152x128xbf16, #tpu.memory_space<vmem>>, %arg3: memref<1x128xf32, #tpu.memory_space<vmem>>, %arg4: memref<8x128xbf16, #tpu.memory_space<vmem>>, %arg5: memref<8x128xbf16, #tpu.memory_space<vmem>>) attributes {dimension_semantics = [#tpu.dimension_semantics<parallel>], iteration_bounds = array<i64: 1>, scalar_prefetch = 0 : i64, scratch_operands = 0 : i64, tpu.core_type = #tpu.core_type<tc>, window_params = [{transform_indices = @transform_0, window_bounds = array<i64: 8, 1152>}, {pipeline_mode = #tpu.pipeline_mode<synchronous>, transform_indices = @transform_1, window_bounds = array<i64: 1152, 128>}, {pipeline_mode = #tpu.pipeline_mode<synchronous>, transform_indices = @transform_2, window_bounds = array<i64: 1, 128>}, {transform_indices = @transform_3, window_bounds = array<i64: 8, 128>}, {transform_indices = @transform_4, window_bounds = array<i64: 8, 128>}]} {
    %c0 = arith.constant 0 : index
    %c0_0 = arith.constant 0 : index
    %0 = vector.load %arg1[%c0, %c0_0] : memref<8x1152xbf16, #tpu.memory_space<vmem>>, vector<8x1152xbf16>
    %c0_1 = arith.constant 0 : index
    %c0_2 = arith.constant 0 : index
    %1 = vector.load %arg2[%c0_1, %c0_2] : memref<1152x128xbf16, #tpu.memory_space<vmem>>, vector<1152x128xbf16>
    %cst = arith.constant dense<0.000000e+00> : vector<8x128xf32>
    %2 = tpu.matmul %0, %1, %cst {dimension_numbers = #tpu.dot_dimension_numbers<[1], [0], [0], [1], [0, 0, 1, 1], [], []>} : vector<8x1152xbf16>, vector<1152x128xbf16>, vector<8x128xf32> -> vector<8x128xf32>
    %c0_3 = arith.constant 0 : index
    %c0_4 = arith.constant 0 : index
    %3 = vector.load %arg3[%c0_3, %c0_4] : memref<1x128xf32, #tpu.memory_space<vmem>>, vector<1x128xf32>
    %4 = vector.broadcast %3 : vector<1x128xf32> to vector<8x128xf32>
    %5 = arith.addf %2, %4 : vector<8x128xf32>
    %c0_5 = arith.constant 0 : index
    %c0_6 = arith.constant 0 : index
    %6 = vector.load %arg4[%c0_5, %c0_6] : memref<8x128xbf16, #tpu.memory_space<vmem>>, vector<8x128xbf16>
    %7 = arith.extf %6 : vector<8x128xbf16> to vector<8x128xf32>
    %8 = arith.addf %5, %7 : vector<8x128xf32>
    %cst_7 = arith.constant 0.000000e+00 : f32
    %9 = vector.broadcast %cst_7 : f32 to vector<8x128xf32>
    %10 = arith.maximumf %8, %9 : vector<8x128xf32>
    %11 = arith.truncf %10 : vector<8x128xf32> to vector<8x128xbf16>
    %c0_8 = arith.constant 0 : index
    %c0_9 = arith.constant 0 : index
    %12 = vector.load %arg5[%c0_8, %c0_9] : memref<8x128xbf16, #tpu.memory_space<vmem>>, vector<8x128xbf16>
    tpu.vector_store %arg5[%c0_8, %c0_9], %11 {strides = array<i32>} : memref<8x128xbf16, #tpu.memory_space<vmem>>, vector<8x128xbf16>,
    return
  }
  func.func @transform_0(%arg0: i32) -> (i32, i32) {
    %c0_i32 = arith.constant 0 : i32
    %c0_i32_0 = arith.constant 0 : i32
    return %arg0, %c0_i32 : i32, i32
  }
  func.func @transform_1(%arg0: i32) -> (i32, i32) {
    %c0_i32 = arith.constant 0 : i32
    %c0_i32_0 = arith.constant 0 : i32
    %c0_i32_1 = arith.constant 0 : i32
    return %c0_i32, %c0_i32_0 : i32, i32
  }
  func.func @transform_2(%arg0: i32) -> (i32, i32) {
    %c0_i32 = arith.constant 0 : i32
    %c0_i32_0 = arith.constant 0 : i32
    %c0_i32_1 = arith.constant 0 : i32
    return %c0_i32, %c0_i32_0 : i32, i32
  }
  func.func @transform_3(%arg0: i32) -> (i32, i32) {
    %c0_i32 = arith.constant 0 : i32
    %c0_i32_0 = arith.constant 0 : i32
    return %arg0, %c0_i32 : i32, i32
  }
  func.func @transform_4(%arg0: i32) -> (i32, i32) {
    %c0_i32 = arith.constant 0 : i32
    %c0_i32_0 = arith.constant 0 : i32
    return %arg0, %c0_i32 : i32, i32
  }
}

module attributes {stable_mosaic.version = 11 : i64} {
  func.func @_matmul_epilogue_kernel(%arg0: i32, %arg1: memref<8x1152xbf16, #tpu.memory_space<vmem>>, %arg2: memref<1152x128xbf16, #tpu.memory_space<vmem>>, %arg3: memref<1x128xf32, #tpu.memory_space<vmem>>, %arg4: memref<8x128xbf16, #tpu.memory_space<vmem>>) attributes {dimension_semantics = [#tpu.dimension_semantics<parallel>], iteration_bounds = array<i64: 1>, scalar_prefetch = 0 : i64, scratch_operands = 0 : i64, tpu.core_type = #tpu.core_type<tc>, window_params = [{transform_indices = @transform_0, window_bounds = array<i64: 8, 1152>}, {pipeline_mode = #tpu.pipeline_mode<synchronous>, transform_indices = @transform_1, window_bounds = array<i64: 1152, 128>}, {pipeline_mode = #tpu.pipeline_mode<synchronous>, transform_indices = @transform_2, window_bounds = array<i64: 1, 128>}, {transform_indices = @transform_3, window_bounds = array<i64: 8, 128>}]} {
    %c0 = arith.constant 0 : index
    %c0_0 = arith.constant 0 : index
    %0 = vector.load %arg1[%c0, %c0_0] : memref<8x1152xbf16, #tpu.memory_space<vmem>>, vector<8x1152xbf16>
    %c0_1 = arith.constant 0 : index
    %c0_2 = arith.constant 0 : index
    %1 = vector.load %arg2[%c0_1, %c0_2] : memref<1152x128xbf16, #tpu.memory_space<vmem>>, vector<1152x128xbf16>
    %cst = arith.constant dense<0.000000e+00> : vector<8x128xf32>
    %2 = tpu.matmul %0, %1, %cst {dimension_numbers = #tpu.dot_dimension_numbers<[1], [0], [0], [1], [0, 0, 1, 1], [], []>} : vector<8x1152xbf16>, vector<1152x128xbf16>, vector<8x128xf32> -> vector<8x128xf32>
    %c0_3 = arith.constant 0 : index
    %c0_4 = arith.constant 0 : index
    %3 = vector.load %arg3[%c0_3, %c0_4] : memref<1x128xf32, #tpu.memory_space<vmem>>, vector<1x128xf32>
    %4 = vector.broadcast %3 : vector<1x128xf32> to vector<8x128xf32>
    %5 = arith.addf %2, %4 : vector<8x128xf32>
    %cst_5 = arith.constant 0.000000e+00 : f32
    %6 = vector.broadcast %cst_5 : f32 to vector<8x128xf32>
    %7 = arith.maximumf %5, %6 : vector<8x128xf32>
    %8 = arith.truncf %7 : vector<8x128xf32> to vector<8x128xbf16>
    %c0_6 = arith.constant 0 : index
    %c0_7 = arith.constant 0 : index
    %9 = vector.load %arg4[%c0_6, %c0_7] : memref<8x128xbf16, #tpu.memory_space<vmem>>, vector<8x128xbf16>
    tpu.vector_store %arg4[%c0_6, %c0_7], %8 {strides = array<i32>} : memref<8x128xbf16, #tpu.memory_space<vmem>>, vector<8x128xbf16>,
    return
  }
  func.func @transform_0(%arg0: i32) -> (i32, i32) {
    %c0_i32 = arith.constant 0 : i32
    %c0_i32_0 = arith.constant 0 : i32
    return %arg0, %c0_i32 : i32, i32
  }
  func.func @transform_1(%arg0: i32) -> (i32, i32) {
    %c0_i32 = arith.constant 0 : i32
    %c0_i32_0 = arith.constant 0 : i32
    %c0_i32_1 = arith.constant 0 : i32
    return %c0_i32, %c0_i32_0 : i32, i32
  }
  func.func @transform_2(%arg0: i32) -> (i32, i32) {
    %c0_i32 = arith.constant 0 : i32
    %c0_i32_0 = arith.constant 0 : i32
    %c0_i32_1 = arith.constant 0 : i32
    return %c0_i32, %c0_i32_0 : i32, i32
  }
  func.func @transform_3(%arg0: i32) -> (i32, i32) {
    %c0_i32 = arith.constant 0 : i32
    %c0_i32_0 = arith.constant 0 : i32
    return %arg0, %c0_i32 : i32, i32
  }
}

module attributes {stable_mosaic.version = 11 : i64} {
  func.func @_avgpool_fc_kernel(%arg0: i32, %arg1: memref<2x4x128xbf16, #tpu.memory_space<vmem>>, %arg2: memref<128x5xf32, #tpu.memory_space<vmem>>, %arg3: memref<1x5xf32, #tpu.memory_space<vmem>>, %arg4: memref<2x5xf32, #tpu.memory_space<vmem>>) attributes {dimension_semantics = [#tpu.dimension_semantics<arbitrary>], iteration_bounds = array<i64: 1>, scalar_prefetch = 0 : i64, scratch_operands = 0 : i64, tpu.core_type = #tpu.core_type<tc>, window_params = [{pipeline_mode = #tpu.pipeline_mode<synchronous>, transform_indices = @transform_0, window_bounds = array<i64: 2, 4, 128>}, {pipeline_mode = #tpu.pipeline_mode<synchronous>, transform_indices = @transform_1, window_bounds = array<i64: 128, 5>}, {pipeline_mode = #tpu.pipeline_mode<synchronous>, transform_indices = @transform_2, window_bounds = array<i64: 1, 5>}, {pipeline_mode = #tpu.pipeline_mode<synchronous>, transform_indices = @transform_3, window_bounds = array<i64: 2, 5>}]} {
    %c0 = arith.constant 0 : index
    %c0_0 = arith.constant 0 : index
    %c0_1 = arith.constant 0 : index
    %0 = vector.load %arg1[%c0, %c0_0, %c0_1] : memref<2x4x128xbf16, #tpu.memory_space<vmem>>, vector<2x4x128xbf16>
    %1 = arith.extf %0 : vector<2x4x128xbf16> to vector<2x4x128xf32>
    %cst = arith.constant dense<0.000000e+00> : vector<2x128xf32>
    %2 = vector.multi_reduction <add>, %1, %cst [1] : vector<2x4x128xf32> to vector<2x128xf32>
    %cst_2 = arith.constant 4.000000e+00 : f32
    %3 = vector.broadcast %cst_2 : f32 to vector<2x128xf32>
    %4 = arith.divf %2, %3 : vector<2x128xf32>
    %c0_3 = arith.constant 0 : index
    %c0_4 = arith.constant 0 : index
    %5 = vector.load %arg2[%c0_3, %c0_4] : memref<128x5xf32, #tpu.memory_space<vmem>>, vector<128x5xf32>
    %cst_5 = arith.constant dense<0.000000e+00> : vector<2x5xf32>
    %6 = tpu.matmul %4, %5, %cst_5 {dimension_numbers = #tpu.dot_dimension_numbers<[1], [0], [0], [1], [0, 0, 1, 1], [], []>} : vector<2x128xf32>, vector<128x5xf32>, vector<2x5xf32> -> vector<2x5xf32>
    %c0_6 = arith.constant 0 : index
    %c0_7 = arith.constant 0 : index
    %7 = vector.load %arg3[%c0_6, %c0_7] : memref<1x5xf32, #tpu.memory_space<vmem>>, vector<1x5xf32>
    %8 = vector.broadcast %7 : vector<1x5xf32> to vector<2x5xf32>
    %9 = arith.addf %6, %8 : vector<2x5xf32>
    %c0_8 = arith.constant 0 : index
    %c0_9 = arith.constant 0 : index
    %10 = vector.load %arg4[%c0_8, %c0_9] : memref<2x5xf32, #tpu.memory_space<vmem>>, vector<2x5xf32>
    tpu.vector_store %arg4[%c0_8, %c0_9], %9 {strides = array<i32>} : memref<2x5xf32, #tpu.memory_space<vmem>>, vector<2x5xf32>,
    return
  }
  func.func @transform_0(%arg0: i32) -> (i32, i32, i32) {
    %c0_i32 = arith.constant 0 : i32
    %c0_i32_0 = arith.constant 0 : i32
    %c0_i32_1 = arith.constant 0 : i32
    %c0_i32_2 = arith.constant 0 : i32
    return %c0_i32, %c0_i32_0, %c0_i32_1 : i32, i32, i32
  }
  func.func @transform_1(%arg0: i32) -> (i32, i32) {
    %c0_i32 = arith.constant 0 : i32
    %c0_i32_0 = arith.constant 0 : i32
    %c0_i32_1 = arith.constant 0 : i32
    return %c0_i32, %c0_i32_0 : i32, i32
  }
  func.func @transform_2(%arg0: i32) -> (i32, i32) {
    %c0_i32 = arith.constant 0 : i32
    %c0_i32_0 = arith.constant 0 : i32
    %c0_i32_1 = arith.constant 0 : i32
    return %c0_i32, %c0_i32_0 : i32, i32
  }
  func.func @transform_3(%arg0: i32) -> (i32, i32) {
    %c0_i32 = arith.constant 0 : i32
    %c0_i32_0 = arith.constant 0 : i32
    %c0_i32_1 = arith.constant 0 : i32
    return %c0_i32, %c0_i32_0 : i32, i32
  }
}

</mosaic_0001>

<llo_original>
// kernel: resnet_forward.20
$region0: #{resnet_forward.20}
  #allocation0 [shape = 'u32[]', space=smem, size = 0x4, offset = 0x4, fixed_abs, tag = 'smem constant byte address 0x4 - core index']
  #allocation1 [shape = 'u32[144,128]{1,0:T(1,128)}', space=vmem, size = 0x12000, scoped, tag = 'internal scratch']
  %s0 = inlined_call_operand.vmem [shape: bf16[2048,152], index: 0, kind: input, shape index: {}]
  %s1 = inlined_call_operand.vmem [shape: bf16[152,16], index: 1, kind: input, shape index: {}]
  %s2 = inlined_call_operand.vmem [shape: f32[1,16], index: 2, kind: input, shape index: {}]
  %s3 = inlined_call_operand.vmem [shape: bf16[2048,16], index: 3, kind: output, shape index: {}]
  %s4 = sld [smem:[#allocation0]]
  $region45: #{resnet_forward.20} parent=0
    _
  %s6 = ssub.s32 1, %s4
  %s7 = scalar_select 0, %s6, %s4
  loop: start=0, step=1, limit=6
  $region2: #{resnet_forward.20} parent=0 // loop_pre_header
    _
  $region3: #{resnet_forward.20} parent=0 // loop_header
    %s9 = sphi 0, %s13
    %p10 = scmp.ge.s32.totalorder %s9, 6
    %s19 = sphi 0, %s21
    %s22 = sphi 0, %s19
    %s23 = sphi 0, %s22
    %s39 = sphi 0, %s23
    %s43 = sphi 0, %s43
    %s45 = sphi 0, %s43
    %s46 = sphi 0, %s45
    %s60 = sphi 0, %s46
    %s64 = sphi 0, %s64
    %s66 = sphi 0, %s64
    %s67 = sphi 0, %s66
    %s81 = sphi 0, %s67
    %s87 = sphi 0, %s89
    %s90 = sphi 0, %s87
    %s91 = sphi 0, %s90
    %s107 = sphi 0, %s91
  $region4: #{resnet_forward.20} parent=0 // loop_header_branch
    %12 = sbr.rel (%p10) target = $region8
  $region5: #{resnet_forward.20} parent=0 // loop_body
    %s14 = ssub.s32 %s9, 1
    %s15 = ssub.s32 %s9, 2
    %s16 = sadd.s32 %s9, 1
    %s17 = ssub.s32 %s9, %s16
    %p18 = scmp.eq.s32.totalorder %s17, 0
    %s20 = sadd.s32 %s19, 1
    %s21 = scalar_select %p18, %s19, %s20
    %p24 = pneg %p18
    %p25 = scmp.eq.s32.totalorder %s9, 3
    %p26 = por %p24, %p25
    %p27 = scmp.ne.s32.totalorder %s19, %s22
    %p28 = scmp.eq.s32.totalorder %s9, 0
    %p29 = por %p27, %p28
    %p30 = scmp.ne.s32.totalorder %s19, %s22
    %p31 = scmp.eq.s32.totalorder %s14, 3
    %p32 = por %p30, %p31
    %p33 = scmp.ne.s32.totalorder %s22, %s23
    %p34 = scmp.eq.s32.totalorder %s14, 0
    %p35 = por %p33, %p34
    %p36 = scmp.ne.s32.totalorder %s22, %s23
    %p37 = scmp.eq.s32.totalorder %s15, 3
    %p38 = por %p36, %p37
    %p40 = scmp.ne.s32.totalorder %s23, %s39
    %p41 = scmp.eq.s32.totalorder %s15, 0
    %p42 = por %p40, %p41
    %s44 = sadd.s32 %s43, 1
    %p47 = scmp.eq.s32.totalorder %s9, 3
    %p48 = scmp.ne.s32.totalorder %s43, %s45
    %p49 = scmp.eq.s32.totalorder %s9, 0
    %p50 = por %p48, %p49
    %p51 = scmp.ne.s32.totalorder %s43, %s45
    %p52 = scmp.eq.s32.totalorder %s14, 3
    %p53 = por %p51, %p52
    %p54 = scmp.ne.s32.totalorder %s45, %s46
    %p55 = scmp.eq.s32.totalorder %s14, 0
    %p56 = por %p54, %p55
    %p57 = scmp.ne.s32.totalorder %s45, %s46
    %p58 = scmp.eq.s32.totalorder %s15, 3
    %p59 = por %p57, %p58
    %p61 = scmp.ne.s32.totalorder %s46, %s60
    %p62 = scmp.eq.s32.totalorder %s15, 0
    %p63 = por %p61, %p62
    %s65 = sadd.s32 %s64, 1
    %p68 = scmp.eq.s32.totalorder %s9, 3
    %p69 = scmp.ne.s32.totalorder %s64, %s66
    %p70 = scmp.eq.s32.totalorder %s9, 0
    %p71 = por %p69, %p70
    %p72 = scmp.ne.s32.totalorder %s64, %s66
    %p73 = scmp.eq.s32.totalorder %s14, 3
    %p74 = por %p72, %p73
    %p75 = scmp.ne.s32.totalorder %s66, %s67
    %p76 = scmp.eq.s32.totalorder %s14, 0
    %p77 = por %p75, %p76
    %p78 = scmp.ne.s32.totalorder %s66, %s67
    %p79 = scmp.eq.s32.totalorder %s15, 3
    %p80 = por %p78, %p79
    %p82 = scmp.ne.s32.totalorder %s67, %s81
    %p83 = scmp.eq.s32.totalorder %s15, 0
    %p84 = por %p82, %p83
    %s85 = ssub.s32 %s9, %s16
    %p86 = scmp.eq.s32.totalorder %s85, 0
    %s88 = sadd.s32 %s87, 1
    %s89 = scalar_select %p86, %s87, %s88
    %p92 = pneg %p86
    %p93 = scmp.eq.s32.totalorder %s9, 3
    %p94 = por %p92, %p93
    %p95 = scmp.ne.s32.totalorder %s87, %s90
    %p96 = scmp.eq.s32.totalorder %s9, 0
    %p97 = por %p95, %p96
    %p98 = scmp.ne.s32.totalorder %s87, %s90
    %p99 = scmp.eq.s32.totalorder %s14, 3
    %p100 = por %p98, %p99
    %p101 = scmp.ne.s32.totalorder %s90, %s91
    %p102 = scmp.eq.s32.totalorder %s14, 0
    %p103 = por %p101, %p102
    %p104 = scmp.ne.s32.totalorder %s90, %s91
    %p105 = scmp.eq.s32.totalorder %s15, 3
    %p106 = por %p104, %p105
    %p108 = scmp.ne.s32.totalorder %s91, %s107
    %p109 = scmp.eq.s32.totalorder %s15, 0
    %p110 = por %p108, %p109
    %p111 = scmp.le.s32.totalorder 1, %s9
    %p112 = scmp.lt.s32.totalorder %s9, 5
    %p113 = pnand %p111, %p112
    %p114 = pneg %p113
    // Predicated region
    $region9: #{resnet_forward.20} parent=5 // pred_check
      _
    $region10: #{resnet_forward.20} parent=5 // pred_check_branch
      %116 = sbr.rel (%p113) target = $region12
    $region11: #{resnet_forward.20} parent=5 // pred_region
      %s117 = ssub.s32 %s9, 1
      // Predicated region
      $region13: #{resnet_forward.20} parent=11 // pred_check
        %p118 = pneg %p56
      $region14: #{resnet_forward.20} parent=11 // pred_check_branch
        %120 = sbr.rel (%p118) target = $region16
      $region15: #{resnet_forward.20} parent=11 // pred_region
        _
      $region16: #{resnet_forward.20} parent=11 // pred_fallthru
        _
      // Predicated region
      $region17: #{resnet_forward.20} parent=11 // pred_check
        %p121 = pneg %p77
      $region18: #{resnet_forward.20} parent=11 // pred_check_branch
        %123 = sbr.rel (%p121) target = $region20
      $region19: #{resnet_forward.20} parent=11 // pred_region
        _
      $region20: #{resnet_forward.20} parent=11 // pred_fallthru
        _
    $region12: #{resnet_forward.20} parent=5 // pred_fallthru
      _
    %p124 = scmp.lt.s32.totalorder %s9, 4
    // Predicated region
    $region21: #{resnet_forward.20} parent=5 // pred_check
      %p125 = pneg %p124
    $region22: #{resnet_forward.20} parent=5 // pred_check_branch
      %127 = sbr.rel (%p125) target = $region24
    $region23: #{resnet_forward.20} parent=5 // pred_region
      // Predicated region
      $region25: #{resnet_forward.20} parent=23 // pred_check
        %p128 = pneg %p29
      $region26: #{resnet_forward.20} parent=23 // pred_check_branch
        %130 = sbr.rel (%p128) target = $region28
      $region27: #{resnet_forward.20} parent=23 // pred_region
        %s131 = smul.u32 64, %s9
        %p132 = scmp.lt.s32.totalorder %s131, 255
        %s133 = scalar_select %p132, %s131, 255
        %s134 = smul.addr %s133, 2
        %s135 = smul.addr %s134, 4
        %s136 = scalar_lea.vmem %s0, %s135
        %s137 = smul.u32 64, %s9
      $region28: #{resnet_forward.20} parent=23 // pred_fallthru
        _
    $region24: #{resnet_forward.20} parent=5 // pred_fallthru
      _
    %p138 = scmp.le.s32.totalorder 1, %s9
    %p139 = scmp.lt.s32.totalorder %s9, 5
    %p140 = pnand %p138, %p139
    %p141 = pneg %p140
    // Predicated region
    $region29: #{resnet_forward.20} parent=5 // pred_check
      _
    $region30: #{resnet_forward.20} parent=5 // pred_check_branch
      %143 = sbr.rel (%p140) target = $region32
    $region31: #{resnet_forward.20} parent=5 // pred_region
      %s144 = ssub.s32 %s9, 1
      %s145 = smul.u32 64, %s14
      %p146 = scmp.lt.s32.totalorder %s145, 255
      %s147 = scalar_select %p146, %s145, 255
      %s148 = smul.addr %s147, 2
      %s149 = smul.addr %s148, 4
      %s150 = scalar_lea.vmem %s0, %s149
      %p151 = pneg %p35
      %p152 = pneg %p32
      %p153 = pneg %p56
      %p154 = pneg %p53
      %p155 = pneg %p77
      %p156 = pneg %p74
      %p157 = pneg %p103
      %p158 = pneg %p100
      %s159 = smul.u32 64, %s14
      %p160 = scmp.lt.s32.totalorder %s159, 255
      %s161 = scalar_select %p160, %s159, 255
      %s162 = smul.addr %s161, 4
      %s163 = scalar_lea.vmem %s3, %s162
      %s164 = smul.u32 64, %s14
      %p165 = scmp.lt.s32.totalorder %s164, 255
      %s166 = scalar_select %p165, %s164, 255
      %s167 = smul.addr %s166, 2
      %s168 = smul.addr %s167, 4
      %s169 = scalar_lea.vmem %s0, %s168
      %s170 = smul.u32 64, %s14
      %s171 = smul.u32 64, %s14
      %p172 = scmp.lt.s32.totalorder %s171, 255
      %s173 = scalar_select %p172, %s171, 255
      %s174 = smul.addr %s173, 4
      %s175 = scalar_lea.vmem %s3, %s174
      %s176 = smul.u32 64, %s14
      %v178 = vld [vmem:[%s169] sm:$0xff]
      %v179 = vld [vmem:[%s169 + $0x8] sm:$0xff]
      %v180 = vld [vmem:[%s169 + $0x10] sm:$0xff]
      %v181 = vld [vmem:[%s169 + $0x18] sm:$0xff]
      %v182 = vld [vmem:[%s169 + $0x20] sm:$0xff]
      %v183 = vld [vmem:[%s169 + $0x28] sm:$0xff]
      %v184 = vld [vmem:[%s169 + $0x30] sm:$0xff]
      %v185 = vld [vmem:[%s169 + $0x38] sm:$0xff]
      %v186 = vld [vmem:[%s169 + $0x40] sm:$0xff]
      %v187 = vld [vmem:[%s169 + $0x48] sm:$0xff]
      %v188 = vld [vmem:[%s169 + $0x50] sm:$0xff]
      %v189 = vld [vmem:[%s169 + $0x58] sm:$0xff]
      %v190 = vld [vmem:[%s169 + $0x60] sm:$0xff]
      %v191 = vld [vmem:[%s169 + $0x68] sm:$0xff]
      %v192 = vld [vmem:[%s169 + $0x70] sm:$0xff]
      %v193 = vld [vmem:[%s169 + $0x78] sm:$0xff]
      %v194 = vld [vmem:[%s169 + $0x80] sm:$0xff]
      %v195 = vld [vmem:[%s169 + $0x88] sm:$0xff]
      %v196 = vld [vmem:[%s169 + $0x90] sm:$0xff]
      %v197 = vld [vmem:[%s169 + $0x98] sm:$0xff]
      %v198 = vld [vmem:[%s169 + $0xa0] sm:$0xff]
      %v199 = vld [vmem:[%s169 + $0xa8] sm:$0xff]
      %v200 = vld [vmem:[%s169 + $0xb0] sm:$0xff]
      %v201 = vld [vmem:[%s169 + $0xb8] sm:$0xff]
      %v202 = vld [vmem:[%s169 + $0xc0] sm:$0xff]
      %v203 = vld [vmem:[%s169 + $0xc8] sm:$0xff]
      %v204 = vld [vmem:[%s169 + $0xd0] sm:$0xff]
      %v205 = vld [vmem:[%s169 + $0xd8] sm:$0xff]
      %v206 = vld [vmem:[%s169 + $0xe0] sm:$0xff]
      %v207 = vld [vmem:[%s169 + $0xe8] sm:$0xff]
      %v208 = vld [vmem:[%s169 + $0xf0] sm:$0xff]
      %v209 = vld [vmem:[%s169 + $0xf8] sm:$0xff]
      %v210 = vld [vmem:[%s169 + $0x100] sm:$0xff]
      %v211 = vld [vmem:[%s169 + $0x108] sm:$0xff]
      %v212 = vld [vmem:[%s169 + $0x110] sm:$0xff]
      %v213 = vld [vmem:[%s169 + $0x118] sm:$0xff]
      %v214 = vld [vmem:[%s169 + $0x120] sm:$0xff]
      %v215 = vld [vmem:[%s169 + $0x128] sm:$0xff]
      %v216 = vld [vmem:[%s169 + $0x130] sm:$0xff]
      %v217 = vld [vmem:[%s169 + $0x138] sm:$0xff]
      %v218 = vld [vmem:[%s169 + $0x140] sm:$0xff]
      %v219 = vld [vmem:[%s169 + $0x148] sm:$0xff]
      %v220 = vld [vmem:[%s169 + $0x150] sm:$0xff]
      %v221 = vld [vmem:[%s169 + $0x158] sm:$0xff]
      %v222 = vld [vmem:[%s169 + $0x160] sm:$0xff]
      %v223 = vld [vmem:[%s169 + $0x168] sm:$0xff]
      %v224 = vld [vmem:[%s169 + $0x170] sm:$0xff]
      %v225 = vld [vmem:[%s169 + $0x178] sm:$0xff]
      %v226 = vld [vmem:[%s169 + $0x180] sm:$0xff]
      %v227 = vld [vmem:[%s169 + $0x188] sm:$0xff]
      %v228 = vld [vmem:[%s169 + $0x190] sm:$0xff]
      %v229 = vld [vmem:[%s169 + $0x198] sm:$0xff]
      %v230 = vld [vmem:[%s169 + $0x1a0] sm:$0xff]
      %v231 = vld [vmem:[%s169 + $0x1a8] sm:$0xff]
      %v232 = vld [vmem:[%s169 + $0x1b0] sm:$0xff]
      %v233 = vld [vmem:[%s169 + $0x1b8] sm:$0xff]
      %v234 = vld [vmem:[%s169 + $0x1c0] sm:$0xff]
      %v235 = vld [vmem:[%s169 + $0x1c8] sm:$0xff]
      %v236 = vld [vmem:[%s169 + $0x1d0] sm:$0xff]
      %v237 = vld [vmem:[%s169 + $0x1d8] sm:$0xff]
      %v238 = vld [vmem:[%s169 + $0x1e0] sm:$0xff]
      %v239 = vld [vmem:[%s169 + $0x1e8] sm:$0xff]
      %v240 = vld [vmem:[%s169 + $0x1f0] sm:$0xff]
      %v241 = vld [vmem:[%s169 + $0x1f8] sm:$0xff]
      %v242 = vld [vmem:[%s1] sm:$0xf]
      %v243 = vld [vmem:[%s1 + $0x4] sm:$0xf]
      %v244 = vld [vmem:[%s1 + $0x8] sm:$0xf]
      %v245 = vld [vmem:[%s1 + $0xc] sm:$0xf]
      %v246 = vld [vmem:[%s1 + $0x10] sm:$0xf]
      %v247 = vld [vmem:[%s1 + $0x14] sm:$0xf]
      %v248 = vld [vmem:[%s1 + $0x18] sm:$0xf]
      %v249 = vld [vmem:[%s1 + $0x1c] sm:$0xf]
      %v250 = vld [vmem:[%s1 + $0x20] sm:$0xf]
      %v251 = vld [vmem:[%s1 + $0x24] sm:$0xf]
      %v252 = vld [vmem:[%s1 + $0x28] sm:$0xf]
      %v253 = vld [vmem:[%s1 + $0x2c] sm:$0xf]
      %v254 = vld [vmem:[%s1 + $0x30] sm:$0xf]
      %v255 = vld [vmem:[%s1 + $0x34] sm:$0xf]
      %v256 = vld [vmem:[%s1 + $0x38] sm:$0xf]
      %v257 = vld [vmem:[%s1 + $0x3c] sm:$0xf]
      %v258 = vld [vmem:[%s1 + $0x40] sm:$0xf]
      %v259 = vld [vmem:[%s1 + $0x44] sm:$0xf]
      %v260 = vld [vmem:[%s1 + $0x48] sm:$0xf]
      %v261 = vld [vmem:[%s2] sm:$0x1]
      %v263 = vlaneseq
      %v264 = vshrl.u32 %v263, 7
      %v265 = vsub.s32 0, %v264
      %v266 = vrot.slane %v261, %v265
      %v332 = vunpack.c.l.b16 %v178
      %v333 = vunpack.c.h.b16 %v178
      %v334 = vunpack.c.l.b16 %v179
      %v335 = vunpack.c.h.b16 %v179
      %v336 = vunpack.c.l.b16 %v180
      %v337 = vunpack.c.h.b16 %v180
      %v338 = vunpack.c.l.b16 %v181
      %v339 = vunpack.c.h.b16 %v181
      %v340 = vunpack.c.l.b16 %v182
      %v341 = vunpack.c.h.b16 %v182
      %v342 = vunpack.c.l.b16 %v183
      %v343 = vunpack.c.h.b16 %v183
      %v344 = vunpack.c.l.b16 %v184
      %v345 = vunpack.c.h.b16 %v184
      %v346 = vunpack.c.l.b16 %v185
      %v347 = vunpack.c.h.b16 %v185
      %v348 = vunpack.c.l.b16 %v186
      %v349 = vunpack.c.h.b16 %v186
      %v350 = vunpack.c.l.b16 %v187
      %v351 = vunpack.c.h.b16 %v187
      %v352 = vunpack.c.l.b16 %v188
      %v353 = vunpack.c.h.b16 %v188
      %v354 = vunpack.c.l.b16 %v189
      %v355 = vunpack.c.h.b16 %v189
      %v356 = vunpack.c.l.b16 %v190
      %v357 = vunpack.c.h.b16 %v190
      %v358 = vunpack.c.l.b16 %v191
      %v359 = vunpack.c.h.b16 %v191
      %v360 = vunpack.c.l.b16 %v192
      %v361 = vunpack.c.h.b16 %v192
      %v362 = vunpack.c.l.b16 %v193
      %v363 = vunpack.c.h.b16 %v193
      %v364 = vunpack.c.l.b16 %v194
      %v365 = vunpack.c.h.b16 %v194
      %v366 = vunpack.c.l.b16 %v195
      %v367 = vunpack.c.h.b16 %v195
      %v368 = vunpack.c.l.b16 %v196
      %v369 = vunpack.c.h.b16 %v196
      %v370 = vunpack.c.l.b16 %v197
      %v371 = vunpack.c.h.b16 %v197
      %v372 = vunpack.c.l.b16 %v198
      %v373 = vunpack.c.h.b16 %v198
      %v374 = vunpack.c.l.b16 %v199
      %v375 = vunpack.c.h.b16 %v199
      %v376 = vunpack.c.l.b16 %v200
      %v377 = vunpack.c.h.b16 %v200
      %v378 = vunpack.c.l.b16 %v201
      %v379 = vunpack.c.h.b16 %v201
      %v380 = vunpack.c.l.b16 %v202
      %v381 = vunpack.c.h.b16 %v202
      %v382 = vunpack.c.l.b16 %v203
      %v383 = vunpack.c.h.b16 %v203
      %v384 = vunpack.c.l.b16 %v204
      %v385 = vunpack.c.h.b16 %v204
      %v386 = vunpack.c.l.b16 %v205
      %v387 = vunpack.c.h.b16 %v205
      %v388 = vunpack.c.l.b16 %v206
      %v389 = vunpack.c.h.b16 %v206
      %v390 = vunpack.c.l.b16 %v207
      %v391 = vunpack.c.h.b16 %v207
      %v392 = vunpack.c.l.b16 %v208
      %v393 = vunpack.c.h.b16 %v208
      %v394 = vunpack.c.l.b16 %v209
      %v395 = vunpack.c.h.b16 %v209
      %v396 = vunpack.c.l.b16 %v210
      %v397 = vunpack.c.h.b16 %v210
      %v398 = vunpack.c.l.b16 %v211
      %v399 = vunpack.c.h.b16 %v211
      %v400 = vunpack.c.l.b16 %v212
      %v401 = vunpack.c.h.b16 %v212
      %v402 = vunpack.c.l.b16 %v213
      %v403 = vunpack.c.h.b16 %v213
      %v404 = vunpack.c.l.b16 %v214
      %v405 = vunpack.c.h.b16 %v214
      %v406 = vunpack.c.l.b16 %v215
      %v407 = vunpack.c.h.b16 %v215
      %v408 = vunpack.c.l.b16 %v216
      %v409 = vunpack.c.h.b16 %v216
      %v410 = vunpack.c.l.b16 %v217
      %v411 = vunpack.c.h.b16 %v217
      %v412 = vunpack.c.l.b16 %v218
      %v413 = vunpack.c.h.b16 %v218
      %v414 = vunpack.c.l.b16 %v219
      %v415 = vunpack.c.h.b16 %v219
      %v416 = vunpack.c.l.b16 %v220
      %v417 = vunpack.c.h.b16 %v220
      %v418 = vunpack.c.l.b16 %v221
      %v419 = vunpack.c.h.b16 %v221
      %v420 = vunpack.c.l.b16 %v222
      %v421 = vunpack.c.h.b16 %v222
      %v422 = vunpack.c.l.b16 %v223
      %v423 = vunpack.c.h.b16 %v223
      %v424 = vunpack.c.l.b16 %v224
      %v425 = vunpack.c.h.b16 %v224
      %v426 = vunpack.c.l.b16 %v225
      %v427 = vunpack.c.h.b16 %v225
      %v428 = vunpack.c.l.b16 %v226
      %v429 = vunpack.c.h.b16 %v226
      %v430 = vunpack.c.l.b16 %v227
      %v431 = vunpack.c.h.b16 %v227
      %v432 = vunpack.c.l.b16 %v228
      %v433 = vunpack.c.h.b16 %v228
      %v434 = vunpack.c.l.b16 %v229
      %v435 = vunpack.c.h.b16 %v229
      %v436 = vunpack.c.l.b16 %v230
      %v437 = vunpack.c.h.b16 %v230
      %v438 = vunpack.c.l.b16 %v231
      %v439 = vunpack.c.h.b16 %v231
      %v440 = vunpack.c.l.b16 %v232
      %v441 = vunpack.c.h.b16 %v232
      %v442 = vunpack.c.l.b16 %v233
      %v443 = vunpack.c.h.b16 %v233
      %v444 = vunpack.c.l.b16 %v234
      %v445 = vunpack.c.h.b16 %v234
      %v446 = vunpack.c.l.b16 %v235
      %v447 = vunpack.c.h.b16 %v235
      %v448 = vunpack.c.l.b16 %v236
      %v449 = vunpack.c.h.b16 %v236
      %v450 = vunpack.c.l.b16 %v237
      %v451 = vunpack.c.h.b16 %v237
      %v452 = vunpack.c.l.b16 %v238
      %v453 = vunpack.c.h.b16 %v238
      %v454 = vunpack.c.l.b16 %v239
      %v455 = vunpack.c.h.b16 %v239
      %v456 = vunpack.c.l.b16 %v240
      %v457 = vunpack.c.h.b16 %v240
      %v458 = vunpack.c.l.b16 %v241
      %v459 = vunpack.c.h.b16 %v241
      %v460 = vpack.c.b16 %v334, %v332
      %v461 = vpack.c.b16 %v335, %v333
      %v462 = vpack.c.b16 %v338, %v336
      %v463 = vpack.c.b16 %v339, %v337
      %v464 = vpack.c.b16 %v342, %v340
      %v465 = vpack.c.b16 %v343, %v341
      %v466 = vpack.c.b16 %v346, %v344
      %v467 = vpack.c.b16 %v347, %v345
      %v468 = vpack.c.b16 %v350, %v348
      %v469 = vpack.c.b16 %v351, %v349
      %v470 = vpack.c.b16 %v354, %v352
      %v471 = vpack.c.b16 %v355, %v353
      %v472 = vpack.c.b16 %v358, %v356
      %v473 = vpack.c.b16 %v359, %v357
      %v474 = vpack.c.b16 %v362, %v360
      %v475 = vpack.c.b16 %v363, %v361
      %v476 = vpack.c.b16 %v366, %v364
      %v477 = vpack.c.b16 %v367, %v365
      %v478 = vpack.c.b16 %v370, %v368
      %v479 = vpack.c.b16 %v371, %v369
      %v480 = vpack.c.b16 %v374, %v372
      %v481 = vpack.c.b16 %v375, %v373
      %v482 = vpack.c.b16 %v378, %v376
      %v483 = vpack.c.b16 %v379, %v377
      %v484 = vpack.c.b16 %v382, %v380
      %v485 = vpack.c.b16 %v383, %v381
      %v486 = vpack.c.b16 %v386, %v384
      %v487 = vpack.c.b16 %v387, %v385
      %v488 = vpack.c.b16 %v390, %v388
      %v489 = vpack.c.b16 %v391, %v389
      %v490 = vpack.c.b16 %v394, %v392
      %v491 = vpack.c.b16 %v395, %v393
      %v492 = vpack.c.b16 %v398, %v396
      %v493 = vpack.c.b16 %v399, %v397
      %v494 = vpack.c.b16 %v402, %v400
      %v495 = vpack.c.b16 %v403, %v401
      %v496 = vpack.c.b16 %v406, %v404
      %v497 = vpack.c.b16 %v407, %v405
      %v498 = vpack.c.b16 %v410, %v408
      %v499 = vpack.c.b16 %v411, %v409
      %v500 = vpack.c.b16 %v414, %v412
      %v501 = vpack.c.b16 %v415, %v413
      %v502 = vpack.c.b16 %v418, %v416
      %v503 = vpack.c.b16 %v419, %v417
      %v504 = vpack.c.b16 %v422, %v420
      %v505 = vpack.c.b16 %v423, %v421
      %v506 = vpack.c.b16 %v426, %v424
      %v507 = vpack.c.b16 %v427, %v425
      %v508 = vpack.c.b16 %v430, %v428
      %v509 = vpack.c.b16 %v431, %v429
      %v510 = vpack.c.b16 %v434, %v432
      %v511 = vpack.c.b16 %v435, %v433
      %v512 = vpack.c.b16 %v438, %v436
      %v513 = vpack.c.b16 %v439, %v437
      %v514 = vpack.c.b16 %v442, %v440
      %v515 = vpack.c.b16 %v443, %v441
      %v516 = vpack.c.b16 %v446, %v444
      %v517 = vpack.c.b16 %v447, %v445
      %v518 = vpack.c.b16 %v450, %v448
      %v519 = vpack.c.b16 %v451, %v449
      %v520 = vpack.c.b16 %v454, %v452
      %v521 = vpack.c.b16 %v455, %v453
      %v522 = vpack.c.b16 %v458, %v456
      %v523 = vpack.c.b16 %v459, %v457
      %v575 = vunpack.c.l.b16 %v242
      %v576 = vunpack.c.l.b16 %v243
      %v577 = vunpack.c.l.b16 %v244
      %v578 = vunpack.c.l.b16 %v245
      %v579 = vunpack.c.l.b16 %v246
      %v580 = vunpack.c.l.b16 %v247
      %v581 = vunpack.c.l.b16 %v248
      %v582 = vunpack.c.l.b16 %v249
      %v583 = vunpack.c.l.b16 %v250
      %v584 = vunpack.c.l.b16 %v251
      %v585 = vunpack.c.l.b16 %v252
      %v586 = vunpack.c.l.b16 %v253
      %v587 = vunpack.c.l.b16 %v254
      %v588 = vunpack.c.l.b16 %v255
      %v589 = vunpack.c.l.b16 %v256
      %v590 = vunpack.c.l.b16 %v257
      %v591 = vunpack.c.l.b16 %v258
      %v592 = vunpack.c.l.b16 %v259
      %v593 = vunpack.c.l.b16 %v260
      %v594 = vpack.c.b16 %v576, %v575
      %v595 = vpack.c.b16 %v578, %v577
      %v596 = vpack.c.b16 %v580, %v579
      %v597 = vpack.c.b16 %v582, %v581
      %v598 = vpack.c.b16 %v584, %v583
      %v599 = vpack.c.b16 %v586, %v585
      %v600 = vpack.c.b16 %v588, %v587
      %v601 = vpack.c.b16 %v590, %v589
      %v602 = vpack.c.b16 %v592, %v591
      %v603 = vpack.c.b16 %v593, %v593
      %vm613 = vcmask 195584
      %v615 = vsel %vm613, %v461, 0
      %v618 = vsel %vm613, %v463, 0
      %v621 = vsel %vm613, %v465, 0
      %v624 = vsel %vm613, %v467, 0
      %v627 = vsel %vm613, %v469, 0
      %v630 = vsel %vm613, %v471, 0
      %v633 = vsel %vm613, %v473, 0
      %v636 = vsel %vm613, %v475, 0
      %v639 = vsel %vm613, %v477, 0
      %v642 = vsel %vm613, %v479, 0
      %v645 = vsel %vm613, %v481, 0
      %v648 = vsel %vm613, %v483, 0
      %v651 = vsel %vm613, %v485, 0
      %v654 = vsel %vm613, %v487, 0
      %v657 = vsel %vm613, %v489, 0
      %v660 = vsel %vm613, %v491, 0
      %v663 = vsel %vm613, %v493, 0
      %v666 = vsel %vm613, %v495, 0
      %v669 = vsel %vm613, %v497, 0
      %v672 = vsel %vm613, %v499, 0
      %v675 = vsel %vm613, %v501, 0
      %v678 = vsel %vm613, %v503, 0
      %v681 = vsel %vm613, %v505, 0
      %v684 = vsel %vm613, %v507, 0
      %v687 = vsel %vm613, %v509, 0
      %v690 = vsel %vm613, %v511, 0
      %v693 = vsel %vm613, %v513, 0
      %v696 = vsel %vm613, %v515, 0
      %v699 = vsel %vm613, %v517, 0
      %v702 = vsel %vm613, %v519, 0
      %v705 = vsel %vm613, %v521, 0
      %v708 = vsel %vm613, %v523, 0
      %vm710 = vcmask 1043456
      %v712 = vsel %vm710, %v603, 0
      %714 = vmatprep.subr.bf16.mxu0 0
      %715 = vmatpush1.bf16.msra.mxu0 %v594
      %716 = vmatprep.subr.bf16.mxu0 0
      %717 = vmatpush1.bf16.msra.mxu0 %v595
      %718 = vmatprep.subr.bf16.mxu0 0
      %719 = vmatpush1.bf16.msra.mxu0 %v596
      %720 = vmatprep.subr.bf16.mxu0 0
      %721 = vmatpush1.bf16.msra.mxu0 %v597
      %722 = vmatprep.subr.bf16.mxu0 0
      %723 = vmatpush1.bf16.msra.mxu0 %v598
      %724 = vmatprep.subr.bf16.mxu0 0
      %725 = vmatpush1.bf16.msra.mxu0 %v599
      %726 = vmatprep.subr.bf16.mxu0 0
      %727 = vmatpush1.bf16.msra.mxu0 %v600
      %728 = vmatprep.subr.bf16.mxu0 0
      %729 = vmatpush1.bf16.msra.mxu0 %v601
      %730 = vmatprep.subr.bf16.mxu0 0
      %731 = vmatpush1.bf16.msra.mxu0 %v602
      %732 = vmatprep.subr.bf16.mxu0 0
      %733 = vmatpush1.bf16.msra.mxu0 %v712
      %734 = vmatprep.subr.bf16.mxu0 0
      %735 = vmatpush1.bf16.msra.mxu0 0
      %736 = vmatprep.subr.bf16.mxu0 0
      %737 = vmatpush1.bf16.msra.mxu0 0
      %738 = vmatprep.subr.bf16.mxu0 0
      %739 = vmatpush1.bf16.msra.mxu0 0
      %740 = vmatprep.subr.bf16.mxu0 0
      %741 = vmatpush1.bf16.msra.mxu0 0
      %742 = vmatprep.subr.bf16.mxu0 0
      %743 = vmatpush1.bf16.msra.mxu0 0
      %744 = vmatprep.subr.bf16.mxu0 0
      %745 = vmatpush1.bf16.msra.mxu0 0
      %746 = vmatprep.mubr.bf16.mxu0 %v615
      %747 = vmatmul.mubr.bf16.gmra.mrb[0].mxu0 %v460
      %v748 = vpop.f32.mrb[0].mxu0
      %v749 = vadd.f32 %v266, %v748
      %v750 = vpop.f32.mrb[0].mxu0
      %v751 = vpop.f32.mrb[0].mxu0
      %v752 = vadd.f32 %v266, %v751
      %v753 = vpop.f32.mrb[0].mxu0
      %754 = vmatprep.mubr.bf16.mxu0 %v618
      %755 = vmatmul.mubr.bf16.gmra.mrb[0].mxu0 %v462
      %v756 = vpop.f32.mrb[0].mxu0
      %v757 = vadd.f32 %v266, %v756
      %v758 = vpop.f32.mrb[0].mxu0
      %v759 = vpop.f32.mrb[0].mxu0
      %v760 = vadd.f32 %v266, %v759
      %v761 = vpop.f32.mrb[0].mxu0
      %762 = vmatprep.mubr.bf16.mxu0 %v621
      %763 = vmatmul.mubr.bf16.gmra.mrb[0].mxu0 %v464
      %v764 = vpop.f32.mrb[0].mxu0
      %v765 = vadd.f32 %v266, %v764
      %v766 = vpop.f32.mrb[0].mxu0
      %v767 = vpop.f32.mrb[0].mxu0
      %v768 = vadd.f32 %v266, %v767
      %v769 = vpop.f32.mrb[0].mxu0
      %770 = vmatprep.mubr.bf16.mxu0 %v624
      %771 = vmatmul.mubr.bf16.gmra.mrb[0].mxu0 %v466
      %v772 = vpop.f32.mrb[0].mxu0
      %v773 = vadd.f32 %v266, %v772
      %v774 = vpop.f32.mrb[0].mxu0
      %v775 = vpop.f32.mrb[0].mxu0
      %v776 = vadd.f32 %v266, %v775
      %v777 = vpop.f32.mrb[0].mxu0
      %778 = vmatprep.mubr.bf16.mxu0 %v627
      %779 = vmatmul.mubr.bf16.gmra.mrb[0].mxu0 %v468
      %v780 = vpop.f32.mrb[0].mxu0
      %v781 = vadd.f32 %v266, %v780
      %v782 = vpop.f32.mrb[0].mxu0
      %v783 = vpop.f32.mrb[0].mxu0
      %v784 = vadd.f32 %v266, %v783
      %v785 = vpop.f32.mrb[0].mxu0
      %786 = vmatprep.mubr.bf16.mxu0 %v630
      %787 = vmatmul.mubr.bf16.gmra.mrb[0].mxu0 %v470
      %v788 = vpop.f32.mrb[0].mxu0
      %v789 = vadd.f32 %v266, %v788
      %v790 = vpop.f32.mrb[0].mxu0
      %v791 = vpop.f32.mrb[0].mxu0
      %v792 = vadd.f32 %v266, %v791
      %v793 = vpop.f32.mrb[0].mxu0
      %794 = vmatprep.mubr.bf16.mxu0 %v633
      %795 = vmatmul.mubr.bf16.gmra.mrb[0].mxu0 %v472
      %v796 = vpop.f32.mrb[0].mxu0
      %v797 = vadd.f32 %v266, %v796
      %v798 = vpop.f32.mrb[0].mxu0
      %v799 = vpop.f32.mrb[0].mxu0
      %v800 = vadd.f32 %v266, %v799
      %v801 = vpop.f32.mrb[0].mxu0
      %802 = vmatprep.mubr.bf16.mxu0 %v636
      %803 = vmatmul.mubr.bf16.gmra.mrb[0].mxu0 %v474
      %v804 = vpop.f32.mrb[0].mxu0
      %v805 = vadd.f32 %v266, %v804
      %v806 = vpop.f32.mrb[0].mxu0
      %v807 = vpop.f32.mrb[0].mxu0
      %v808 = vadd.f32 %v266, %v807
      %v809 = vpop.f32.mrb[0].mxu0
      %810 = vmatprep.mubr.bf16.mxu0 %v639
      %811 = vmatmul.mubr.bf16.gmra.mrb[0].mxu0 %v476
      %v812 = vpop.f32.mrb[0].mxu0
      %v813 = vadd.f32 %v266, %v812
      %v814 = vpop.f32.mrb[0].mxu0
      %v815 = vpop.f32.mrb[0].mxu0
      %v816 = vadd.f32 %v266, %v815
      %v817 = vpop.f32.mrb[0].mxu0
      %818 = vmatprep.mubr.bf16.mxu0 %v642
      %819 = vmatmul.mubr.bf16.gmra.mrb[0].mxu0 %v478
      %v820 = vpop.f32.mrb[0].mxu0
      %v821 = vadd.f32 %v266, %v820
      %v822 = vpop.f32.mrb[0].mxu0
      %v823 = vpop.f32.mrb[0].mxu0
      %v824 = vadd.f32 %v266, %v823
      %v825 = vpop.f32.mrb[0].mxu0
      %826 = vmatprep.mubr.bf16.mxu0 %v645
      %827 = vmatmul.mubr.bf16.gmra.mrb[0].mxu0 %v480
      %v828 = vpop.f32.mrb[0].mxu0
      %v829 = vadd.f32 %v266, %v828
      %v830 = vpop.f32.mrb[0].mxu0
      %v831 = vpop.f32.mrb[0].mxu0
      %v832 = vadd.f32 %v266, %v831
      %v833 = vpop.f32.mrb[0].mxu0
      %834 = vmatprep.mubr.bf16.mxu0 %v648
      %835 = vmatmul.mubr.bf16.gmra.mrb[0].mxu0 %v482
      %v836 = vpop.f32.mrb[0].mxu0
      %v837 = vadd.f32 %v266, %v836
      %v838 = vpop.f32.mrb[0].mxu0
      %v839 = vpop.f32.mrb[0].mxu0
      %v840 = vadd.f32 %v266, %v839
      %v841 = vpop.f32.mrb[0].mxu0
      %842 = vmatprep.mubr.bf16.mxu0 %v651
      %843 = vmatmul.mubr.bf16.gmra.mrb[0].mxu0 %v484
      %v844 = vpop.f32.mrb[0].mxu0
      %v845 = vadd.f32 %v266, %v844
      %v846 = vpop.f32.mrb[0].mxu0
      %v847 = vpop.f32.mrb[0].mxu0
      %v848 = vadd.f32 %v266, %v847
      %v849 = vpop.f32.mrb[0].mxu0
      %850 = vmatprep.mubr.bf16.mxu0 %v654
      %851 = vmatmul.mubr.bf16.gmra.mrb[0].mxu0 %v486
      %v852 = vpop.f32.mrb[0].mxu0
      %v853 = vadd.f32 %v266, %v852
      %v854 = vpop.f32.mrb[0].mxu0
      %v855 = vpop.f32.mrb[0].mxu0
      %v856 = vadd.f32 %v266, %v855
      %v857 = vpop.f32.mrb[0].mxu0
      %858 = vmatprep.mubr.bf16.mxu0 %v657
      %859 = vmatmul.mubr.bf16.gmra.mrb[0].mxu0 %v488
      %v860 = vpop.f32.mrb[0].mxu0
      %v861 = vadd.f32 %v266, %v860
      %v862 = vpop.f32.mrb[0].mxu0
      %v863 = vpop.f32.mrb[0].mxu0
      %v864 = vadd.f32 %v266, %v863
      %v865 = vpop.f32.mrb[0].mxu0
      %866 = vmatprep.mubr.bf16.mxu0 %v660
      %867 = vmatmul.mubr.bf16.gmra.mrb[0].mxu0 %v490
      %v868 = vpop.f32.mrb[0].mxu0
      %v869 = vadd.f32 %v266, %v868
      %v870 = vpop.f32.mrb[0].mxu0
      %v871 = vpop.f32.mrb[0].mxu0
      %v872 = vadd.f32 %v266, %v871
      %v873 = vpop.f32.mrb[0].mxu0
      %874 = vmatprep.mubr.bf16.mxu0 %v663
      %875 = vmatmul.mubr.bf16.gmra.mrb[0].mxu0 %v492
      %v876 = vpop.f32.mrb[0].mxu0
      %v877 = vadd.f32 %v266, %v876
      %v878 = vpop.f32.mrb[0].mxu0
      %v879 = vpop.f32.mrb[0].mxu0
      %v880 = vadd.f32 %v266, %v879
      %v881 = vpop.f32.mrb[0].mxu0
      %882 = vmatprep.mubr.bf16.mxu0 %v666
      %883 = vmatmul.mubr.bf16.gmra.mrb[0].mxu0 %v494
      %v884 = vpop.f32.mrb[0].mxu0
      %v885 = vadd.f32 %v266, %v884
      %v886 = vpop.f32.mrb[0].mxu0
      %v887 = vpop.f32.mrb[0].mxu0
      %v888 = vadd.f32 %v266, %v887
      %v889 = vpop.f32.mrb[0].mxu0
      %890 = vmatprep.mubr.bf16.mxu0 %v669
      %891 = vmatmul.mubr.bf16.gmra.mrb[0].mxu0 %v496
      %v892 = vpop.f32.mrb[0].mxu0
      %v893 = vadd.f32 %v266, %v892
      %v894 = vpop.f32.mrb[0].mxu0
      %v895 = vpop.f32.mrb[0].mxu0
      %v896 = vadd.f32 %v266, %v895
      %v897 = vpop.f32.mrb[0].mxu0
      %898 = vmatprep.mubr.bf16.mxu0 %v672
      %899 = vmatmul.mubr.bf16.gmra.mrb[0].mxu0 %v498
      %v900 = vpop.f32.mrb[0].mxu0
      %v901 = vadd.f32 %v266, %v900
      %v902 = vpop.f32.mrb[0].mxu0
      %v903 = vpop.f32.mrb[0].mxu0
      %v904 = vadd.f32 %v266, %v903
      %v905 = vpop.f32.mrb[0].mxu0
      %906 = vmatprep.mubr.bf16.mxu0 %v675
      %907 = vmatmul.mubr.bf16.gmra.mrb[0].mxu0 %v500
      %v908 = vpop.f32.mrb[0].mxu0
      %v909 = vadd.f32 %v266, %v908
      %v910 = vpop.f32.mrb[0].mxu0
      %v911 = vpop.f32.mrb[0].mxu0
      %v912 = vadd.f32 %v266, %v911
      %v913 = vpop.f32.mrb[0].mxu0
      %914 = vmatprep.mubr.bf16.mxu0 %v678
      %915 = vmatmul.mubr.bf16.gmra.mrb[0].mxu0 %v502
      %v916 = vpop.f32.mrb[0].mxu0
      %v917 = vadd.f32 %v266, %v916
      %v918 = vpop.f32.mrb[0].mxu0
      %v919 = vpop.f32.mrb[0].mxu0
      %v920 = vadd.f32 %v266, %v919
      %v921 = vpop.f32.mrb[0].mxu0
      %922 = vmatprep.mubr.bf16.mxu0 %v681
      %923 = vmatmul.mubr.bf16.gmra.mrb[0].mxu0 %v504
      %v924 = vpop.f32.mrb[0].mxu0
      %v925 = vadd.f32 %v266, %v924
      %v926 = vpop.f32.mrb[0].mxu0
      %v927 = vpop.f32.mrb[0].mxu0
      %v928 = vadd.f32 %v266, %v927
      %v929 = vpop.f32.mrb[0].mxu0
      %930 = vmatprep.mubr.bf16.mxu0 %v684
      %931 = vmatmul.mubr.bf16.gmra.mrb[0].mxu0 %v506
      %v932 = vpop.f32.mrb[0].mxu0
      %v933 = vadd.f32 %v266, %v932
      %v934 = vpop.f32.mrb[0].mxu0
      %v935 = vpop.f32.mrb[0].mxu0
      %v936 = vadd.f32 %v266, %v935
      %v937 = vpop.f32.mrb[0].mxu0
      %938 = vmatprep.mubr.bf16.mxu0 %v687
      %939 = vmatmul.mubr.bf16.gmra.mrb[0].mxu0 %v508
      %v940 = vpop.f32.mrb[0].mxu0
      %v941 = vadd.f32 %v266, %v940
      %v942 = vpop.f32.mrb[0].mxu0
      %v943 = vpop.f32.mrb[0].mxu0
      %v944 = vadd.f32 %v266, %v943
      %v945 = vpop.f32.mrb[0].mxu0
      %946 = vmatprep.mubr.bf16.mxu0 %v690
      %947 = vmatmul.mubr.bf16.gmra.mrb[0].mxu0 %v510
      %v948 = vpop.f32.mrb[0].mxu0
      %v949 = vadd.f32 %v266, %v948
      %v950 = vpop.f32.mrb[0].mxu0
      %v951 = vpop.f32.mrb[0].mxu0
      %v952 = vadd.f32 %v266, %v951
      %v953 = vpop.f32.mrb[0].mxu0
      %954 = vmatprep.mubr.bf16.mxu0 %v693
      %955 = vmatmul.mubr.bf16.gmra.mrb[0].mxu0 %v512
      %v956 = vpop.f32.mrb[0].mxu0
      %v957 = vadd.f32 %v266, %v956
      %v958 = vpop.f32.mrb[0].mxu0
      %v959 = vpop.f32.mrb[0].mxu0
      %v960 = vadd.f32 %v266, %v959
      %v961 = vpop.f32.mrb[0].mxu0
      %962 = vmatprep.mubr.bf16.mxu0 %v696
      %963 = vmatmul.mubr.bf16.gmra.mrb[0].mxu0 %v514
      %v964 = vpop.f32.mrb[0].mxu0
      %v965 = vadd.f32 %v266, %v964
      %v966 = vpop.f32.mrb[0].mxu0
      %v967 = vpop.f32.mrb[0].mxu0
      %v968 = vadd.f32 %v266, %v967
      %v969 = vpop.f32.mrb[0].mxu0
      %970 = vmatprep.mubr.bf16.mxu0 %v699
      %971 = vmatmul.mubr.bf16.gmra.mrb[0].mxu0 %v516
      %v972 = vpop.f32.mrb[0].mxu0
      %v973 = vadd.f32 %v266, %v972
      %v974 = vpop.f32.mrb[0].mxu0
      %v975 = vpop.f32.mrb[0].mxu0
      %v976 = vadd.f32 %v266, %v975
      %v977 = vpop.f32.mrb[0].mxu0
      %978 = vmatprep.mubr.bf16.mxu0 %v702
      %979 = vmatmul.mubr.bf16.gmra.mrb[0].mxu0 %v518
      %v980 = vpop.f32.mrb[0].mxu0
      %v981 = vadd.f32 %v266, %v980
      %v982 = vpop.f32.mrb[0].mxu0
      %v983 = vpop.f32.mrb[0].mxu0
      %v984 = vadd.f32 %v266, %v983
      %v985 = vpop.f32.mrb[0].mxu0
      %986 = vmatprep.mubr.bf16.mxu0 %v705
      %987 = vmatmul.mubr.bf16.gmra.mrb[0].mxu0 %v520
      %v988 = vpop.f32.mrb[0].mxu0
      %v989 = vadd.f32 %v266, %v988
      %v990 = vpop.f32.mrb[0].mxu0
      %v991 = vpop.f32.mrb[0].mxu0
      %v992 = vadd.f32 %v266, %v991
      %v993 = vpop.f32.mrb[0].mxu0
      %994 = vmatprep.mubr.bf16.mxu0 %v708
      %995 = vmatmul.mubr.bf16.gmra.mrb[0].mxu0 %v522
      %v996 = vpop.f32.mrb[0].mxu0
      %v997 = vadd.f32 %v266, %v996
      %v998 = vpop.f32.mrb[0].mxu0
      %v999 = vpop.f32.mrb[0].mxu0
      %v1000 = vadd.f32 %v266, %v999
      %v1001 = vpop.f32.mrb[0].mxu0
      %1002 = vdwg.mxu0
      %v1003 = vmax.f32 %v749, 0.0
      %v1004 = vmax.f32 %v752, 0.0
      %v1005 = vmax.f32 %v757, 0.0
      %v1006 = vmax.f32 %v760, 0.0
      %v1007 = vmax.f32 %v765, 0.0
      %v1008 = vmax.f32 %v768, 0.0
      %v1009 = vmax.f32 %v773, 0.0
      %v1010 = vmax.f32 %v776, 0.0
      %v1011 = vmax.f32 %v781, 0.0
      %v1012 = vmax.f32 %v784, 0.0
      %v1013 = vmax.f32 %v789, 0.0
      %v1014 = vmax.f32 %v792, 0.0
      %v1015 = vmax.f32 %v797, 0.0
      %v1016 = vmax.f32 %v800, 0.0
      %v1017 = vmax.f32 %v805, 0.0
      %v1018 = vmax.f32 %v808, 0.0
      %v1019 = vmax.f32 %v813, 0.0
      %v1020 = vmax.f32 %v816, 0.0
      %v1021 = vmax.f32 %v821, 0.0
      %v1022 = vmax.f32 %v824, 0.0
      %v1023 = vmax.f32 %v829, 0.0
      %v1024 = vmax.f32 %v832, 0.0
      %v1025 = vmax.f32 %v837, 0.0
      %v1026 = vmax.f32 %v840, 0.0
      %v1027 = vmax.f32 %v845, 0.0
      %v1028 = vmax.f32 %v848, 0.0
      %v1029 = vmax.f32 %v853, 0.0
      %v1030 = vmax.f32 %v856, 0.0
      %v1031 = vmax.f32 %v861, 0.0
      %v1032 = vmax.f32 %v864, 0.0
      %v1033 = vmax.f32 %v869, 0.0
      %v1034 = vmax.f32 %v872, 0.0
      %v1035 = vmax.f32 %v877, 0.0
      %v1036 = vmax.f32 %v880, 0.0
      %v1037 = vmax.f32 %v885, 0.0
      %v1038 = vmax.f32 %v888, 0.0
      %v1039 = vmax.f32 %v893, 0.0
      %v1040 = vmax.f32 %v896, 0.0
      %v1041 = vmax.f32 %v901, 0.0
      %v1042 = vmax.f32 %v904, 0.0
      %v1043 = vmax.f32 %v909, 0.0
      %v1044 = vmax.f32 %v912, 0.0
      %v1045 = vmax.f32 %v917, 0.0
      %v1046 = vmax.f32 %v920, 0.0
      %v1047 = vmax.f32 %v925, 0.0
      %v1048 = vmax.f32 %v928, 0.0
      %v1049 = vmax.f32 %v933, 0.0
      %v1050 = vmax.f32 %v936, 0.0
      %v1051 = vmax.f32 %v941, 0.0
      %v1052 = vmax.f32 %v944, 0.0
      %v1053 = vmax.f32 %v949, 0.0
      %v1054 = vmax.f32 %v952, 0.0
      %v1055 = vmax.f32 %v957, 0.0
      %v1056 = vmax.f32 %v960, 0.0
      %v1057 = vmax.f32 %v965, 0.0
      %v1058 = vmax.f32 %v968, 0.0
      %v1059 = vmax.f32 %v973, 0.0
      %v1060 = vmax.f32 %v976, 0.0
      %v1061 = vmax.f32 %v981, 0.0
      %v1062 = vmax.f32 %v984, 0.0
      %v1063 = vmax.f32 %v989, 0.0
      %v1064 = vmax.f32 %v992, 0.0
      %v1065 = vmax.f32 %v997, 0.0
      %v1066 = vmax.f32 %v1000, 0.0
      %v1067 = vpack.c.bf16 %v1004, %v1003
      %v1068 = vpack.c.bf16 %v1006, %v1005
      %v1069 = vpack.c.bf16 %v1008, %v1007
      %v1070 = vpack.c.bf16 %v1010, %v1009
      %v1071 = vpack.c.bf16 %v1012, %v1011
      %v1072 = vpack.c.bf16 %v1014, %v1013
      %v1073 = vpack.c.bf16 %v1016, %v1015
      %v1074 = vpack.c.bf16 %v1018, %v1017
      %v1075 = vpack.c.bf16 %v1020, %v1019
      %v1076 = vpack.c.bf16 %v1022, %v1021
      %v1077 = vpack.c.bf16 %v1024, %v1023
      %v1078 = vpack.c.bf16 %v1026, %v1025
      %v1079 = vpack.c.bf16 %v1028, %v1027
      %v1080 = vpack.c.bf16 %v1030, %v1029
      %v1081 = vpack.c.bf16 %v1032, %v1031
      %v1082 = vpack.c.bf16 %v1034, %v1033
      %v1083 = vpack.c.bf16 %v1036, %v1035
      %v1084 = vpack.c.bf16 %v1038, %v1037
      %v1085 = vpack.c.bf16 %v1040, %v1039
      %v1086 = vpack.c.bf16 %v1042, %v1041
      %v1087 = vpack.c.bf16 %v1044, %v1043
      %v1088 = vpack.c.bf16 %v1046, %v1045
      %v1089 = vpack.c.bf16 %v1048, %v1047
      %v1090 = vpack.c.bf16 %v1050, %v1049
      %v1091 = vpack.c.bf16 %v1052, %v1051
      %v1092 = vpack.c.bf16 %v1054, %v1053
      %v1093 = vpack.c.bf16 %v1056, %v1055
      %v1094 = vpack.c.bf16 %v1058, %v1057
      %v1095 = vpack.c.bf16 %v1060, %v1059
      %v1096 = vpack.c.bf16 %v1062, %v1061
      %v1097 = vpack.c.bf16 %v1064, %v1063
      %v1098 = vpack.c.bf16 %v1066, %v1065
      %v1131 = vunpack.c.l.b16 %v1067
      %v1132 = vunpack.c.h.b16 %v1067
      %v1133 = vunpack.c.l.b16 %v1068
      %v1134 = vunpack.c.h.b16 %v1068
      %v1135 = vunpack.c.l.b16 %v1069
      %v1136 = vunpack.c.h.b16 %v1069
      %v1137 = vunpack.c.l.b16 %v1070
      %v1138 = vunpack.c.h.b16 %v1070
      %v1139 = vunpack.c.l.b16 %v1071
      %v1140 = vunpack.c.h.b16 %v1071
      %v1141 = vunpack.c.l.b16 %v1072
      %v1142 = vunpack.c.h.b16 %v1072
      %v1143 = vunpack.c.l.b16 %v1073
      %v1144 = vunpack.c.h.b16 %v1073
      %v1145 = vunpack.c.l.b16 %v1074
      %v1146 = vunpack.c.h.b16 %v1074
      %v1147 = vunpack.c.l.b16 %v1075
      %v1148 = vunpack.c.h.b16 %v1075
      %v1149 = vunpack.c.l.b16 %v1076
      %v1150 = vunpack.c.h.b16 %v1076
      %v1151 = vunpack.c.l.b16 %v1077
      %v1152 = vunpack.c.h.b16 %v1077
      %v1153 = vunpack.c.l.b16 %v1078
      %v1154 = vunpack.c.h.b16 %v1078
      %v1155 = vunpack.c.l.b16 %v1079
      %v1156 = vunpack.c.h.b16 %v1079
      %v1157 = vunpack.c.l.b16 %v1080
      %v1158 = vunpack.c.h.b16 %v1080
      %v1159 = vunpack.c.l.b16 %v1081
      %v1160 = vunpack.c.h.b16 %v1081
      %v1161 = vunpack.c.l.b16 %v1082
      %v1162 = vunpack.c.h.b16 %v1082
      %v1163 = vunpack.c.l.b16 %v1083
      %v1164 = vunpack.c.h.b16 %v1083
      %v1165 = vunpack.c.l.b16 %v1084
      %v1166 = vunpack.c.h.b16 %v1084
      %v1167 = vunpack.c.l.b16 %v1085
      %v1168 = vunpack.c.h.b16 %v1085
      %v1169 = vunpack.c.l.b16 %v1086
      %v1170 = vunpack.c.h.b16 %v1086
      %v1171 = vunpack.c.l.b16 %v1087
      %v1172 = vunpack.c.h.b16 %v1087
      %v1173 = vunpack.c.l.b16 %v1088
      %v1174 = vunpack.c.h.b16 %v1088
      %v1175 = vunpack.c.l.b16 %v1089
      %v1176 = vunpack.c.h.b16 %v1089
      %v1177 = vunpack.c.l.b16 %v1090
      %v1178 = vunpack.c.h.b16 %v1090
      %v1179 = vunpack.c.l.b16 %v1091
      %v1180 = vunpack.c.h.b16 %v1091
      %v1181 = vunpack.c.l.b16 %v1092
      %v1182 = vunpack.c.h.b16 %v1092
      %v1183 = vunpack.c.l.b16 %v1093
      %v1184 = vunpack.c.h.b16 %v1093
      %v1185 = vunpack.c.l.b16 %v1094
      %v1186 = vunpack.c.h.b16 %v1094
      %v1187 = vunpack.c.l.b16 %v1095
      %v1188 = vunpack.c.h.b16 %v1095
      %v1189 = vunpack.c.l.b16 %v1096
      %v1190 = vunpack.c.h.b16 %v1096
      %v1191 = vunpack.c.l.b16 %v1097
      %v1192 = vunpack.c.h.b16 %v1097
      %v1193 = vunpack.c.l.b16 %v1098
      %v1194 = vunpack.c.h.b16 %v1098
      %v1195 = vpack.c.b16 %v1131, %v1131
      %v1196 = vpack.c.b16 %v1132, %v1132
      %v1197 = vpack.c.b16 %v1133, %v1133
      %v1198 = vpack.c.b16 %v1134, %v1134
      %v1199 = vpack.c.b16 %v1135, %v1135
      %v1200 = vpack.c.b16 %v1136, %v1136
      %v1201 = vpack.c.b16 %v1137, %v1137
      %v1202 = vpack.c.b16 %v1138, %v1138
      %v1203 = vpack.c.b16 %v1139, %v1139
      %v1204 = vpack.c.b16 %v1140, %v1140
      %v1205 = vpack.c.b16 %v1141, %v1141
      %v1206 = vpack.c.b16 %v1142, %v1142
      %v1207 = vpack.c.b16 %v1143, %v1143
      %v1208 = vpack.c.b16 %v1144, %v1144
      %v1209 = vpack.c.b16 %v1145, %v1145
      %v1210 = vpack.c.b16 %v1146, %v1146
      %v1211 = vpack.c.b16 %v1147, %v1147
      %v1212 = vpack.c.b16 %v1148, %v1148
      %v1213 = vpack.c.b16 %v1149, %v1149
      %v1214 = vpack.c.b16 %v1150, %v1150
      %v1215 = vpack.c.b16 %v1151, %v1151
      %v1216 = vpack.c.b16 %v1152, %v1152
      %v1217 = vpack.c.b16 %v1153, %v1153
      %v1218 = vpack.c.b16 %v1154, %v1154
      %v1219 = vpack.c.b16 %v1155, %v1155
      %v1220 = vpack.c.b16 %v1156, %v1156
      %v1221 = vpack.c.b16 %v1157, %v1157
      %v1222 = vpack.c.b16 %v1158, %v1158
      %v1223 = vpack.c.b16 %v1159, %v1159
      %v1224 = vpack.c.b16 %v1160, %v1160
      %v1225 = vpack.c.b16 %v1161, %v1161
      %v1226 = vpack.c.b16 %v1162, %v1162
      %v1227 = vpack.c.b16 %v1163, %v1163
      %v1228 = vpack.c.b16 %v1164, %v1164
      %v1229 = vpack.c.b16 %v1165, %v1165
      %v1230 = vpack.c.b16 %v1166, %v1166
      %v1231 = vpack.c.b16 %v1167, %v1167
      %v1232 = vpack.c.b16 %v1168, %v1168
      %v1233 = vpack.c.b16 %v1169, %v1169
      %v1234 = vpack.c.b16 %v1170, %v1170
      %v1235 = vpack.c.b16 %v1171, %v1171
      %v1236 = vpack.c.b16 %v1172, %v1172
      %v1237 = vpack.c.b16 %v1173, %v1173
      %v1238 = vpack.c.b16 %v1174, %v1174
      %v1239 = vpack.c.b16 %v1175, %v1175
      %v1240 = vpack.c.b16 %v1176, %v1176
      %v1241 = vpack.c.b16 %v1177, %v1177
      %v1242 = vpack.c.b16 %v1178, %v1178
      %v1243 = vpack.c.b16 %v1179, %v1179
      %v1244 = vpack.c.b16 %v1180, %v1180
      %v1245 = vpack.c.b16 %v1181, %v1181
      %v1246 = vpack.c.b16 %v1182, %v1182
      %v1247 = vpack.c.b16 %v1183, %v1183
      %v1248 = vpack.c.b16 %v1184, %v1184
      %v1249 = vpack.c.b16 %v1185, %v1185
      %v1250 = vpack.c.b16 %v1186, %v1186
      %v1251 = vpack.c.b16 %v1187, %v1187
      %v1252 = vpack.c.b16 %v1188, %v1188
      %v1253 = vpack.c.b16 %v1189, %v1189
      %v1254 = vpack.c.b16 %v1190, %v1190
      %v1255 = vpack.c.b16 %v1191, %v1191
      %v1256 = vpack.c.b16 %v1192, %v1192
      %v1257 = vpack.c.b16 %v1193, %v1193
      %v1258 = vpack.c.b16 %v1194, %v1194
      %vm1323 = vcmask 125952
      %1324 = vst.msk [vmem:[%s175] sm:$0xf] %vm1323, %v1195
      %1325 = vst.msk [vmem:[%s175 + $0x4] sm:$0xf] %vm1323, %v1196
      %1326 = vst.msk [vmem:[%s175 + $0x8] sm:$0xf] %vm1323, %v1197
      %1327 = vst.msk [vmem:[%s175 + $0xc] sm:$0xf] %vm1323, %v1198
      %1328 = vst.msk [vmem:[%s175 + $0x10] sm:$0xf] %vm1323, %v1199
      %1329 = vst.msk [vmem:[%s175 + $0x14] sm:$0xf] %vm1323, %v1200
      %1330 = vst.msk [vmem:[%s175 + $0x18] sm:$0xf] %vm1323, %v1201
      %1331 = vst.msk [vmem:[%s175 + $0x1c] sm:$0xf] %vm1323, %v1202
      %1332 = vst.msk [vmem:[%s175 + $0x20] sm:$0xf] %vm1323, %v1203
      %1333 = vst.msk [vmem:[%s175 + $0x24] sm:$0xf] %vm1323, %v1204
      %1334 = vst.msk [vmem:[%s175 + $0x28] sm:$0xf] %vm1323, %v1205
      %1335 = vst.msk [vmem:[%s175 + $0x2c] sm:$0xf] %vm1323, %v1206
      %1336 = vst.msk [vmem:[%s175 + $0x30] sm:$0xf] %vm1323, %v1207
      %1337 = vst.msk [vmem:[%s175 + $0x34] sm:$0xf] %vm1323, %v1208
      %1338 = vst.msk [vmem:[%s175 + $0x38] sm:$0xf] %vm1323, %v1209
      %1339 = vst.msk [vmem:[%s175 + $0x3c] sm:$0xf] %vm1323, %v1210
      %1340 = vst.msk [vmem:[%s175 + $0x40] sm:$0xf] %vm1323, %v1211
      %1341 = vst.msk [vmem:[%s175 + $0x44] sm:$0xf] %vm1323, %v1212
      %1342 = vst.msk [vmem:[%s175 + $0x48] sm:$0xf] %vm1323, %v1213
      %1343 = vst.msk [vmem:[%s175 + $0x4c] sm:$0xf] %vm1323, %v1214
      %1344 = vst.msk [vmem:[%s175 + $0x50] sm:$0xf] %vm1323, %v1215
      %1345 = vst.msk [vmem:[%s175 + $0x54] sm:$0xf] %vm1323, %v1216
      %1346 = vst.msk [vmem:[%s175 + $0x58] sm:$0xf] %vm1323, %v1217
      %1347 = vst.msk [vmem:[%s175 + $0x5c] sm:$0xf] %vm1323, %v1218
      %1348 = vst.msk [vmem:[%s175 + $0x60] sm:$0xf] %vm1323, %v1219
      %1349 = vst.msk [vmem:[%s175 + $0x64] sm:$0xf] %vm1323, %v1220
      %1350 = vst.msk [vmem:[%s175 + $0x68] sm:$0xf] %vm1323, %v1221
      %1351 = vst.msk [vmem:[%s175 + $0x6c] sm:$0xf] %vm1323, %v1222
      %1352 = vst.msk [vmem:[%s175 + $0x70] sm:$0xf] %vm1323, %v1223
      %1353 = vst.msk [vmem:[%s175 + $0x74] sm:$0xf] %vm1323, %v1224
      %1354 = vst.msk [vmem:[%s175 + $0x78] sm:$0xf] %vm1323, %v1225
      %1355 = vst.msk [vmem:[%s175 + $0x7c] sm:$0xf] %vm1323, %v1226
      %1356 = vst.msk [vmem:[%s175 + $0x80] sm:$0xf] %vm1323, %v1227
      %1357 = vst.msk [vmem:[%s175 + $0x84] sm:$0xf] %vm1323, %v1228
      %1358 = vst.msk [vmem:[%s175 + $0x88] sm:$0xf] %vm1323, %v1229
      %1359 = vst.msk [vmem:[%s175 + $0x8c] sm:$0xf] %vm1323, %v1230
      %1360 = vst.msk [vmem:[%s175 + $0x90] sm:$0xf] %vm1323, %v1231
      %1361 = vst.msk [vmem:[%s175 + $0x94] sm:$0xf] %vm1323, %v1232
      %1362 = vst.msk [vmem:[%s175 + $0x98] sm:$0xf] %vm1323, %v1233
      %1363 = vst.msk [vmem:[%s175 + $0x9c] sm:$0xf] %vm1323, %v1234
      %1364 = vst.msk [vmem:[%s175 + $0xa0] sm:$0xf] %vm1323, %v1235
      %1365 = vst.msk [vmem:[%s175 + $0xa4] sm:$0xf] %vm1323, %v1236
      %1366 = vst.msk [vmem:[%s175 + $0xa8] sm:$0xf] %vm1323, %v1237
      %1367 = vst.msk [vmem:[%s175 + $0xac] sm:$0xf] %vm1323, %v1238
      %1368 = vst.msk [vmem:[%s175 + $0xb0] sm:$0xf] %vm1323, %v1239
      %1369 = vst.msk [vmem:[%s175 + $0xb4] sm:$0xf] %vm1323, %v1240
      %1370 = vst.msk [vmem:[%s175 + $0xb8] sm:$0xf] %vm1323, %v1241
      %1371 = vst.msk [vmem:[%s175 + $0xbc] sm:$0xf] %vm1323, %v1242
      %1372 = vst.msk [vmem:[%s175 + $0xc0] sm:$0xf] %vm1323, %v1243
      %1373 = vst.msk [vmem:[%s175 + $0xc4] sm:$0xf] %vm1323, %v1244
      %1374 = vst.msk [vmem:[%s175 + $0xc8] sm:$0xf] %vm1323, %v1245
      %1375 = vst.msk [vmem:[%s175 + $0xcc] sm:$0xf] %vm1323, %v1246
      %1376 = vst.msk [vmem:[%s175 + $0xd0] sm:$0xf] %vm1323, %v1247
      %1377 = vst.msk [vmem:[%s175 + $0xd4] sm:$0xf] %vm1323, %v1248
      %1378 = vst.msk [vmem:[%s175 + $0xd8] sm:$0xf] %vm1323, %v1249
      %1379 = vst.msk [vmem:[%s175 + $0xdc] sm:$0xf] %vm1323, %v1250
      %1380 = vst.msk [vmem:[%s175 + $0xe0] sm:$0xf] %vm1323, %v1251
      %1381 = vst.msk [vmem:[%s175 + $0xe4] sm:$0xf] %vm1323, %v1252
      %1382 = vst.msk [vmem:[%s175 + $0xe8] sm:$0xf] %vm1323, %v1253
      %1383 = vst.msk [vmem:[%s175 + $0xec] sm:$0xf] %vm1323, %v1254
      %1384 = vst.msk [vmem:[%s175 + $0xf0] sm:$0xf] %vm1323, %v1255
      %1385 = vst.msk [vmem:[%s175 + $0xf4] sm:$0xf] %vm1323, %v1256
      %1386 = vst.msk [vmem:[%s175 + $0xf8] sm:$0xf] %vm1323, %v1257
      %1387 = vst.msk [vmem:[%s175 + $0xfc] sm:$0xf] %vm1323, %v1258
      %s1388 = smul.u32 64, %s14
      %p1389 = scmp.lt.s32.totalorder %s1388, 255
      %s1390 = scalar_select %p1389, %s1388, 255
      %s1391 = smul.addr %s1390, 4
      %s1392 = scalar_lea.vmem %s3, %s1391
      // Predicated region
      $region33: #{resnet_forward.20} parent=31 // pred_check
        %p1393 = pneg %p100
      $region34: #{resnet_forward.20} parent=31 // pred_check_branch
        %1395 = sbr.rel (%p1393) target = $region36
      $region35: #{resnet_forward.20} parent=31 // pred_region
        %s1396 = smul.u32 64, %s14
      $region36: #{resnet_forward.20} parent=31 // pred_fallthru
        _
    $region32: #{resnet_forward.20} parent=5 // pred_fallthru
      _
    %p1397 = scmp.le.s32.totalorder 2, %s9
    // Predicated region
    $region37: #{resnet_forward.20} parent=5 // pred_check
      %p1398 = pneg %p1397
    $region38: #{resnet_forward.20} parent=5 // pred_check_branch
      %1400 = sbr.rel (%p1398) target = $region40
    $region39: #{resnet_forward.20} parent=5 // pred_region
      %s1401 = ssub.s32 %s9, 2
      // Predicated region
      $region41: #{resnet_forward.20} parent=39 // pred_check
        %p1402 = pneg %p106
      $region42: #{resnet_forward.20} parent=39 // pred_check_branch
        %1404 = sbr.rel (%p1402) target = $region44
      $region43: #{resnet_forward.20} parent=39 // pred_region
        %s1405 = smul.u32 64, %s15
        %p1406 = scmp.lt.s32.totalorder %s1405, 255
        %s1407 = scalar_select %p1406, %s1405, 255
        %s1408 = smul.addr %s1407, 4
        %s1409 = scalar_lea.vmem %s3, %s1408
      $region44: #{resnet_forward.20} parent=39 // pred_fallthru
        _
    $region40: #{resnet_forward.20} parent=5 // pred_fallthru
      _
  $region6: #{resnet_forward.20} parent=0 // loop_footer
    %s13 = sadd.s32 1, %s9
  $region7: #{resnet_forward.20} parent=0 // loop_footer_branch
    %8 = sbr.rel target = $region3
  $region8: #{resnet_forward.20} parent=0 // loop_exit
    _

// kernel: resnet_forward.21
$region0: #{resnet_forward.21}
  #allocation0 [shape = 'u32[]', space=smem, size = 0x4, offset = 0x4, fixed_abs, tag = 'smem constant byte address 0x4 - core index']
  #allocation1 [shape = 'u32[144,128]{1,0:T(1,128)}', space=vmem, size = 0x12000, scoped, tag = 'internal scratch']
  %s0 = inlined_call_operand.vmem [shape: bf16[136,128], index: 0, kind: input, shape index: {}]
  %s1 = inlined_call_operand.vmem [shape: bf16[136,128], index: 1, kind: input, shape index: {}]
  %s2 = inlined_call_operand.vmem [shape: bf16[136,128], index: 2, kind: input, shape index: {}]
  %s3 = inlined_call_operand.vmem [shape: bf16[136,128], index: 3, kind: output, shape index: {}]
  %s4 = sld [smem:[#allocation0]]
  $region22: #{resnet_forward.21} parent=0
    _
  %s6 = ssub.s32 1, %s4
  %s7 = scalar_select 0, %s6, %s4
  // Predicated region
  $region2: #{resnet_forward.21} parent=0 // pred_check
    _
  $region3: #{resnet_forward.21} parent=0 // pred_check_branch
    %9 = sbr.rel (0) target = $region5
  $region4: #{resnet_forward.21} parent=0 // pred_region
    _
  $region5: #{resnet_forward.21} parent=0 // pred_fallthru
    _
  // Predicated region
  $region6: #{resnet_forward.21} parent=0 // pred_check
    _
  $region7: #{resnet_forward.21} parent=0 // pred_check_branch
    %11 = sbr.rel (0) target = $region9
  $region8: #{resnet_forward.21} parent=0 // pred_region
    _
  $region9: #{resnet_forward.21} parent=0 // pred_fallthru
    _
  // Predicated region
  $region10: #{resnet_forward.21} parent=0 // pred_check
    _
  $region11: #{resnet_forward.21} parent=0 // pred_check_branch
    %13 = sbr.rel (0) target = $region13
  $region12: #{resnet_forward.21} parent=0 // pred_region
    _
  $region13: #{resnet_forward.21} parent=0 // pred_fallthru
    _
  %v14 = vld [vmem:[%s0] sm:$0xf]
  %v15 = vld [vmem:[%s0 + $0x4] sm:$0xf]
  %v16 = vld [vmem:[%s0 + $0x8] sm:$0xf]
  %v17 = vld [vmem:[%s0 + $0xc] sm:$0xf]
  %v18 = vld [vmem:[%s0 + $0x10] sm:$0xf]
  %v19 = vld [vmem:[%s0 + $0x14] sm:$0xf]
  %v20 = vld [vmem:[%s0 + $0x18] sm:$0xf]
  %v21 = vld [vmem:[%s0 + $0x1c] sm:$0xf]
  %v22 = vld [vmem:[%s0 + $0x20] sm:$0xf]
  %v23 = vld [vmem:[%s0 + $0x24] sm:$0xf]
  %v24 = vld [vmem:[%s0 + $0x28] sm:$0xf]
  %v25 = vld [vmem:[%s0 + $0x2c] sm:$0xf]
  %v26 = vld [vmem:[%s0 + $0x30] sm:$0xf]
  %v27 = vld [vmem:[%s0 + $0x34] sm:$0xf]
  %v28 = vld [vmem:[%s0 + $0x38] sm:$0xf]
  %v29 = vld [vmem:[%s0 + $0x3c] sm:$0xf]
  %v30 = vld [vmem:[%s0 + $0x40] sm:$0xf]
  %v31 = vld [vmem:[%s1] sm:$0xf]
  %v32 = vld [vmem:[%s1 + $0x4] sm:$0xf]
  %v33 = vld [vmem:[%s1 + $0x8] sm:$0xf]
  %v34 = vld [vmem:[%s1 + $0xc] sm:$0xf]
  %v35 = vld [vmem:[%s1 + $0x10] sm:$0xf]
  %v36 = vld [vmem:[%s1 + $0x14] sm:$0xf]
  %v37 = vld [vmem:[%s1 + $0x18] sm:$0xf]
  %v38 = vld [vmem:[%s1 + $0x1c] sm:$0xf]
  %v39 = vld [vmem:[%s1 + $0x20] sm:$0xf]
  %v40 = vld [vmem:[%s1 + $0x24] sm:$0xf]
  %v41 = vld [vmem:[%s1 + $0x28] sm:$0xf]
  %v42 = vld [vmem:[%s1 + $0x2c] sm:$0xf]
  %v43 = vld [vmem:[%s1 + $0x30] sm:$0xf]
  %v44 = vld [vmem:[%s1 + $0x34] sm:$0xf]
  %v45 = vld [vmem:[%s1 + $0x38] sm:$0xf]
  %v46 = vld [vmem:[%s1 + $0x3c] sm:$0xf]
  %v47 = vld [vmem:[%s1 + $0x40] sm:$0xf]
  %v48 = vmax.bf16 %v14, %v31
  %v49 = vmax.bf16 %v15, %v32
  %v50 = vmax.bf16 %v16, %v33
  %v51 = vmax.bf16 %v17, %v34
  %v52 = vmax.bf16 %v18, %v35
  %v53 = vmax.bf16 %v19, %v36
  %v54 = vmax.bf16 %v20, %v37
  %v55 = vmax.bf16 %v21, %v38
  %v56 = vmax.bf16 %v22, %v39
  %v57 = vmax.bf16 %v23, %v40
  %v58 = vmax.bf16 %v24, %v41
  %v59 = vmax.bf16 %v25, %v42
  %v60 = vmax.bf16 %v26, %v43
  %v61 = vmax.bf16 %v27, %v44
  %v62 = vmax.bf16 %v28, %v45
  %v63 = vmax.bf16 %v29, %v46
  %v64 = vmax.bf16 %v30, %v47
  %v65 = vld [vmem:[%s2] sm:$0xf]
  %v66 = vld [vmem:[%s2 + $0x4] sm:$0xf]
  %v67 = vld [vmem:[%s2 + $0x8] sm:$0xf]
  %v68 = vld [vmem:[%s2 + $0xc] sm:$0xf]
  %v69 = vld [vmem:[%s2 + $0x10] sm:$0xf]
  %v70 = vld [vmem:[%s2 + $0x14] sm:$0xf]
  %v71 = vld [vmem:[%s2 + $0x18] sm:$0xf]
  %v72 = vld [vmem:[%s2 + $0x1c] sm:$0xf]
  %v73 = vld [vmem:[%s2 + $0x20] sm:$0xf]
  %v74 = vld [vmem:[%s2 + $0x24] sm:$0xf]
  %v75 = vld [vmem:[%s2 + $0x28] sm:$0xf]
  %v76 = vld [vmem:[%s2 + $0x2c] sm:$0xf]
  %v77 = vld [vmem:[%s2 + $0x30] sm:$0xf]
  %v78 = vld [vmem:[%s2 + $0x34] sm:$0xf]
  %v79 = vld [vmem:[%s2 + $0x38] sm:$0xf]
  %v80 = vld [vmem:[%s2 + $0x3c] sm:$0xf]
  %v81 = vld [vmem:[%s2 + $0x40] sm:$0xf]
  %v82 = vmax.bf16 %v48, %v65
  %v83 = vmax.bf16 %v49, %v66
  %v84 = vmax.bf16 %v50, %v67
  %v85 = vmax.bf16 %v51, %v68
  %v86 = vmax.bf16 %v52, %v69
  %v87 = vmax.bf16 %v53, %v70
  %v88 = vmax.bf16 %v54, %v71
  %v89 = vmax.bf16 %v55, %v72
  %v90 = vmax.bf16 %v56, %v73
  %v91 = vmax.bf16 %v57, %v74
  %v92 = vmax.bf16 %v58, %v75
  %v93 = vmax.bf16 %v59, %v76
  %v94 = vmax.bf16 %v60, %v77
  %v95 = vmax.bf16 %v61, %v78
  %v96 = vmax.bf16 %v62, %v79
  %v97 = vmax.bf16 %v63, %v80
  %v98 = vmax.bf16 %v64, %v81
  %99 = vst [vmem:[%s3] sm:$0xf] %v82
  %100 = vst [vmem:[%s3 + $0x4] sm:$0xf] %v83
  %101 = vst [vmem:[%s3 + $0x8] sm:$0xf] %v84
  %102 = vst [vmem:[%s3 + $0xc] sm:$0xf] %v85
  %103 = vst [vmem:[%s3 + $0x10] sm:$0xf] %v86
  %104 = vst [vmem:[%s3 + $0x14] sm:$0xf] %v87
  %105 = vst [vmem:[%s3 + $0x18] sm:$0xf] %v88
  %106 = vst [vmem:[%s3 + $0x1c] sm:$0xf] %v89
  %107 = vst [vmem:[%s3 + $0x20] sm:$0xf] %v90
  %108 = vst [vmem:[%s3 + $0x24] sm:$0xf] %v91
  %109 = vst [vmem:[%s3 + $0x28] sm:$0xf] %v92
  %110 = vst [vmem:[%s3 + $0x2c] sm:$0xf] %v93
  %111 = vst [vmem:[%s3 + $0x30] sm:$0xf] %v94
  %112 = vst [vmem:[%s3 + $0x34] sm:$0xf] %v95
  %113 = vst [vmem:[%s3 + $0x38] sm:$0xf] %v96
  %114 = vst [vmem:[%s3 + $0x3c] sm:$0xf] %v97
  %115 = vst [vmem:[%s3 + $0x40] sm:$0xf] %v98
  // Predicated region
  $region14: #{resnet_forward.21} parent=0 // pred_check
    _
  $region15: #{resnet_forward.21} parent=0 // pred_check_branch
    %117 = sbr.rel (0) target = $region17
  $region16: #{resnet_forward.21} parent=0 // pred_region
    _
  $region17: #{resnet_forward.21} parent=0 // pred_fallthru
    _
  // Predicated region
  $region18: #{resnet_forward.21} parent=0 // pred_check
    _
  $region19: #{resnet_forward.21} parent=0 // pred_check_branch
    %119 = sbr.rel (0) target = $region21
  $region20: #{resnet_forward.21} parent=0 // pred_region
    _
  $region21: #{resnet_forward.21} parent=0 // pred_fallthru
    _

// kernel: resnet_forward.22
$region0: #{resnet_forward.22}
  #allocation0 [shape = 'u32[]', space=smem, size = 0x4, offset = 0x4, fixed_abs, tag = 'smem constant byte address 0x4 - core index']
  #allocation1 [shape = 'u32[144,128]{1,0:T(1,128)}', space=vmem, size = 0x12000, scoped, tag = 'internal scratch']
  %s0 = inlined_call_operand.vmem [shape: bf16[64,128], index: 0, kind: input, shape index: {}]
  %s1 = inlined_call_operand.vmem [shape: bf16[64,128], index: 1, kind: input, shape index: {}]
  %s2 = inlined_call_operand.vmem [shape: bf16[64,128], index: 2, kind: input, shape index: {}]
  %s3 = inlined_call_operand.vmem [shape: bf16[64,128], index: 3, kind: output, shape index: {}]
  %s4 = sld [smem:[#allocation0]]
  $region22: #{resnet_forward.22} parent=0
    _
  %s6 = ssub.s32 1, %s4
  %s7 = scalar_select 0, %s6, %s4
  // Predicated region
  $region2: #{resnet_forward.22} parent=0 // pred_check
    _
  $region3: #{resnet_forward.22} parent=0 // pred_check_branch
    %9 = sbr.rel (0) target = $region5
  $region4: #{resnet_forward.22} parent=0 // pred_region
    _
  $region5: #{resnet_forward.22} parent=0 // pred_fallthru
    _
  // Predicated region
  $region6: #{resnet_forward.22} parent=0 // pred_check
    _
  $region7: #{resnet_forward.22} parent=0 // pred_check_branch
    %11 = sbr.rel (0) target = $region9
  $region8: #{resnet_forward.22} parent=0 // pred_region
    _
  $region9: #{resnet_forward.22} parent=0 // pred_fallthru
    _
  // Predicated region
  $region10: #{resnet_forward.22} parent=0 // pred_check
    _
  $region11: #{resnet_forward.22} parent=0 // pred_check_branch
    %13 = sbr.rel (0) target = $region13
  $region12: #{resnet_forward.22} parent=0 // pred_region
    _
  $region13: #{resnet_forward.22} parent=0 // pred_fallthru
    _
  %v14 = vld [vmem:[%s0] sm:$0xf]
  %v15 = vld [vmem:[%s0 + $0x4] sm:$0xf]
  %v16 = vld [vmem:[%s0 + $0x8] sm:$0xf]
  %v17 = vld [vmem:[%s0 + $0xc] sm:$0xf]
  %v18 = vld [vmem:[%s0 + $0x10] sm:$0xf]
  %v19 = vld [vmem:[%s0 + $0x14] sm:$0xf]
  %v20 = vld [vmem:[%s0 + $0x18] sm:$0xf]
  %v21 = vld [vmem:[%s0 + $0x1c] sm:$0xf]
  %v22 = vld [vmem:[%s1] sm:$0xf]
  %v23 = vld [vmem:[%s1 + $0x4] sm:$0xf]
  %v24 = vld [vmem:[%s1 + $0x8] sm:$0xf]
  %v25 = vld [vmem:[%s1 + $0xc] sm:$0xf]
  %v26 = vld [vmem:[%s1 + $0x10] sm:$0xf]
  %v27 = vld [vmem:[%s1 + $0x14] sm:$0xf]
  %v28 = vld [vmem:[%s1 + $0x18] sm:$0xf]
  %v29 = vld [vmem:[%s1 + $0x1c] sm:$0xf]
  %v30 = vmax.bf16 %v14, %v22
  %v31 = vmax.bf16 %v15, %v23
  %v32 = vmax.bf16 %v16, %v24
  %v33 = vmax.bf16 %v17, %v25
  %v34 = vmax.bf16 %v18, %v26
  %v35 = vmax.bf16 %v19, %v27
  %v36 = vmax.bf16 %v20, %v28
  %v37 = vmax.bf16 %v21, %v29
  %v38 = vld [vmem:[%s2] sm:$0xf]
  %v39 = vld [vmem:[%s2 + $0x4] sm:$0xf]
  %v40 = vld [vmem:[%s2 + $0x8] sm:$0xf]
  %v41 = vld [vmem:[%s2 + $0xc] sm:$0xf]
  %v42 = vld [vmem:[%s2 + $0x10] sm:$0xf]
  %v43 = vld [vmem:[%s2 + $0x14] sm:$0xf]
  %v44 = vld [vmem:[%s2 + $0x18] sm:$0xf]
  %v45 = vld [vmem:[%s2 + $0x1c] sm:$0xf]
  %v46 = vmax.bf16 %v30, %v38
  %v47 = vmax.bf16 %v31, %v39
  %v48 = vmax.bf16 %v32, %v40
  %v49 = vmax.bf16 %v33, %v41
  %v50 = vmax.bf16 %v34, %v42
  %v51 = vmax.bf16 %v35, %v43
  %v52 = vmax.bf16 %v36, %v44
  %v53 = vmax.bf16 %v37, %v45
  %54 = vst [vmem:[%s3] sm:$0xf] %v46
  %55 = vst [vmem:[%s3 + $0x4] sm:$0xf] %v47
  %56 = vst [vmem:[%s3 + $0x8] sm:$0xf] %v48
  %57 = vst [vmem:[%s3 + $0xc] sm:$0xf] %v49
  %58 = vst [vmem:[%s3 + $0x10] sm:$0xf] %v50
  %59 = vst [vmem:[%s3 + $0x14] sm:$0xf] %v51
  %60 = vst [vmem:[%s3 + $0x18] sm:$0xf] %v52
  %61 = vst [vmem:[%s3 + $0x1c] sm:$0xf] %v53
  // Predicated region
  $region14: #{resnet_forward.22} parent=0 // pred_check
    _
  $region15: #{resnet_forward.22} parent=0 // pred_check_branch
    %63 = sbr.rel (0) target = $region17
  $region16: #{resnet_forward.22} parent=0 // pred_region
    _
  $region17: #{resnet_forward.22} parent=0 // pred_fallthru
    _
  // Predicated region
  $region18: #{resnet_forward.22} parent=0 // pred_check
    _
  $region19: #{resnet_forward.22} parent=0 // pred_check_branch
    %65 = sbr.rel (0) target = $region21
  $region20: #{resnet_forward.22} parent=0 // pred_region
    _
  $region21: #{resnet_forward.22} parent=0 // pred_fallthru
    _

// kernel: resnet_forward.23
$region0: #{resnet_forward.23}
  #allocation0 [shape = 'u32[]', space=smem, size = 0x4, offset = 0x4, fixed_abs, tag = 'smem constant byte address 0x4 - core index']
  #allocation1 [shape = 'u32[144,128]{1,0:T(1,128)}', space=vmem, size = 0x12000, scoped, tag = 'internal scratch']
  %s0 = inlined_call_operand.vmem [shape: bf16[512,144], index: 0, kind: input, shape index: {}]
  %s1 = inlined_call_operand.vmem [shape: bf16[144,16], index: 1, kind: input, shape index: {}]
  %s2 = inlined_call_operand.vmem [shape: f32[1,16], index: 2, kind: input, shape index: {}]
  %s3 = inlined_call_operand.vmem [shape: bf16[512,16], index: 3, kind: output, shape index: {}]
  %s4 = sld [smem:[#allocation0]]
  $region22: #{resnet_forward.23} parent=0
    _
  %s6 = ssub.s32 1, %s4
  %s7 = scalar_select 0, %s6, %s4
  // Predicated region
  $region2: #{resnet_forward.23} parent=0 // pred_check
    _
  $region3: #{resnet_forward.23} parent=0 // pred_check_branch
    %9 = sbr.rel (0) target = $region5
  $region4: #{resnet_forward.23} parent=0 // pred_region
    _
  $region5: #{resnet_forward.23} parent=0 // pred_fallthru
    _
  // Predicated region
  $region6: #{resnet_forward.23} parent=0 // pred_check
    _
  $region7: #{resnet_forward.23} parent=0 // pred_check_branch
    %11 = sbr.rel (0) target = $region9
  $region8: #{resnet_forward.23} parent=0 // pred_region
    _
  $region9: #{resnet_forward.23} parent=0 // pred_fallthru
    _
  // Predicated region
  $region10: #{resnet_forward.23} parent=0 // pred_check
    _
  $region11: #{resnet_forward.23} parent=0 // pred_check_branch
    %13 = sbr.rel (0) target = $region13
  $region12: #{resnet_forward.23} parent=0 // pred_region
    _
  $region13: #{resnet_forward.23} parent=0 // pred_fallthru
    _
  %v15 = vld [vmem:[%s0] sm:$0xff]
  %v16 = vld [vmem:[%s0 + $0x8] sm:$0xff]
  %v17 = vld [vmem:[%s0 + $0x10] sm:$0xff]
  %v18 = vld [vmem:[%s0 + $0x18] sm:$0xff]
  %v19 = vld [vmem:[%s0 + $0x20] sm:$0xff]
  %v20 = vld [vmem:[%s0 + $0x28] sm:$0xff]
  %v21 = vld [vmem:[%s0 + $0x30] sm:$0xff]
  %v22 = vld [vmem:[%s0 + $0x38] sm:$0xff]
  %v23 = vld [vmem:[%s0 + $0x40] sm:$0xff]
  %v24 = vld [vmem:[%s0 + $0x48] sm:$0xff]
  %v25 = vld [vmem:[%s0 + $0x50] sm:$0xff]
  %v26 = vld [vmem:[%s0 + $0x58] sm:$0xff]
  %v27 = vld [vmem:[%s0 + $0x60] sm:$0xff]
  %v28 = vld [vmem:[%s0 + $0x68] sm:$0xff]
  %v29 = vld [vmem:[%s0 + $0x70] sm:$0xff]
  %v30 = vld [vmem:[%s0 + $0x78] sm:$0xff]
  %v31 = vld [vmem:[%s0 + $0x80] sm:$0xff]
  %v32 = vld [vmem:[%s0 + $0x88] sm:$0xff]
  %v33 = vld [vmem:[%s0 + $0x90] sm:$0xff]
  %v34 = vld [vmem:[%s0 + $0x98] sm:$0xff]
  %v35 = vld [vmem:[%s0 + $0xa0] sm:$0xff]
  %v36 = vld [vmem:[%s0 + $0xa8] sm:$0xff]
  %v37 = vld [vmem:[%s0 + $0xb0] sm:$0xff]
  %v38 = vld [vmem:[%s0 + $0xb8] sm:$0xff]
  %v39 = vld [vmem:[%s0 + $0xc0] sm:$0xff]
  %v40 = vld [vmem:[%s0 + $0xc8] sm:$0xff]
  %v41 = vld [vmem:[%s0 + $0xd0] sm:$0xff]
  %v42 = vld [vmem:[%s0 + $0xd8] sm:$0xff]
  %v43 = vld [vmem:[%s0 + $0xe0] sm:$0xff]
  %v44 = vld [vmem:[%s0 + $0xe8] sm:$0xff]
  %v45 = vld [vmem:[%s0 + $0xf0] sm:$0xff]
  %v46 = vld [vmem:[%s0 + $0xf8] sm:$0xff]
  %v47 = vld [vmem:[%s0 + $0x100] sm:$0xff]
  %v48 = vld [vmem:[%s0 + $0x108] sm:$0xff]
  %v49 = vld [vmem:[%s0 + $0x110] sm:$0xff]
  %v50 = vld [vmem:[%s0 + $0x118] sm:$0xff]
  %v51 = vld [vmem:[%s0 + $0x120] sm:$0xff]
  %v52 = vld [vmem:[%s0 + $0x128] sm:$0xff]
  %v53 = vld [vmem:[%s0 + $0x130] sm:$0xff]
  %v54 = vld [vmem:[%s0 + $0x138] sm:$0xff]
  %v55 = vld [vmem:[%s0 + $0x140] sm:$0xff]
  %v56 = vld [vmem:[%s0 + $0x148] sm:$0xff]
  %v57 = vld [vmem:[%s0 + $0x150] sm:$0xff]
  %v58 = vld [vmem:[%s0 + $0x158] sm:$0xff]
  %v59 = vld [vmem:[%s0 + $0x160] sm:$0xff]
  %v60 = vld [vmem:[%s0 + $0x168] sm:$0xff]
  %v61 = vld [vmem:[%s0 + $0x170] sm:$0xff]
  %v62 = vld [vmem:[%s0 + $0x178] sm:$0xff]
  %v63 = vld [vmem:[%s0 + $0x180] sm:$0xff]
  %v64 = vld [vmem:[%s0 + $0x188] sm:$0xff]
  %v65 = vld [vmem:[%s0 + $0x190] sm:$0xff]
  %v66 = vld [vmem:[%s0 + $0x198] sm:$0xff]
  %v67 = vld [vmem:[%s0 + $0x1a0] sm:$0xff]
  %v68 = vld [vmem:[%s0 + $0x1a8] sm:$0xff]
  %v69 = vld [vmem:[%s0 + $0x1b0] sm:$0xff]
  %v70 = vld [vmem:[%s0 + $0x1b8] sm:$0xff]
  %v71 = vld [vmem:[%s0 + $0x1c0] sm:$0xff]
  %v72 = vld [vmem:[%s0 + $0x1c8] sm:$0xff]
  %v73 = vld [vmem:[%s0 + $0x1d0] sm:$0xff]
  %v74 = vld [vmem:[%s0 + $0x1d8] sm:$0xff]
  %v75 = vld [vmem:[%s0 + $0x1e0] sm:$0xff]
  %v76 = vld [vmem:[%s0 + $0x1e8] sm:$0xff]
  %v77 = vld [vmem:[%s0 + $0x1f0] sm:$0xff]
  %v78 = vld [vmem:[%s0 + $0x1f8] sm:$0xff]
  %v79 = vld [vmem:[%s1] sm:$0xf]
  %v80 = vld [vmem:[%s1 + $0x4] sm:$0xf]
  %v81 = vld [vmem:[%s1 + $0x8] sm:$0xf]
  %v82 = vld [vmem:[%s1 + $0xc] sm:$0xf]
  %v83 = vld [vmem:[%s1 + $0x10] sm:$0xf]
  %v84 = vld [vmem:[%s1 + $0x14] sm:$0xf]
  %v85 = vld [vmem:[%s1 + $0x18] sm:$0xf]
  %v86 = vld [vmem:[%s1 + $0x1c] sm:$0xf]
  %v87 = vld [vmem:[%s1 + $0x20] sm:$0xf]
  %v88 = vld [vmem:[%s1 + $0x24] sm:$0xf]
  %v89 = vld [vmem:[%s1 + $0x28] sm:$0xf]
  %v90 = vld [vmem:[%s1 + $0x2c] sm:$0xf]
  %v91 = vld [vmem:[%s1 + $0x30] sm:$0xf]
  %v92 = vld [vmem:[%s1 + $0x34] sm:$0xf]
  %v93 = vld [vmem:[%s1 + $0x38] sm:$0xf]
  %v94 = vld [vmem:[%s1 + $0x3c] sm:$0xf]
  %v95 = vld [vmem:[%s1 + $0x40] sm:$0xf]
  %v96 = vld [vmem:[%s1 + $0x44] sm:$0xf]
  %v97 = vld [vmem:[%s2] sm:$0x1]
  %v99 = vlaneseq
  %v100 = vshrl.u32 %v99, 7
  %v101 = vsub.s32 0, %v100
  %v102 = vrot.slane %v97, %v101
  %v168 = vunpack.c.l.b16 %v15
  %v169 = vunpack.c.h.b16 %v15
  %v170 = vunpack.c.l.b16 %v16
  %v171 = vunpack.c.h.b16 %v16
  %v172 = vunpack.c.l.b16 %v17
  %v173 = vunpack.c.h.b16 %v17
  %v174 = vunpack.c.l.b16 %v18
  %v175 = vunpack.c.h.b16 %v18
  %v176 = vunpack.c.l.b16 %v19
  %v177 = vunpack.c.h.b16 %v19
  %v178 = vunpack.c.l.b16 %v20
  %v179 = vunpack.c.h.b16 %v20
  %v180 = vunpack.c.l.b16 %v21
  %v181 = vunpack.c.h.b16 %v21
  %v182 = vunpack.c.l.b16 %v22
  %v183 = vunpack.c.h.b16 %v22
  %v184 = vunpack.c.l.b16 %v23
  %v185 = vunpack.c.h.b16 %v23
  %v186 = vunpack.c.l.b16 %v24
  %v187 = vunpack.c.h.b16 %v24
  %v188 = vunpack.c.l.b16 %v25
  %v189 = vunpack.c.h.b16 %v25
  %v190 = vunpack.c.l.b16 %v26
  %v191 = vunpack.c.h.b16 %v26
  %v192 = vunpack.c.l.b16 %v27
  %v193 = vunpack.c.h.b16 %v27
  %v194 = vunpack.c.l.b16 %v28
  %v195 = vunpack.c.h.b16 %v28
  %v196 = vunpack.c.l.b16 %v29
  %v197 = vunpack.c.h.b16 %v29
  %v198 = vunpack.c.l.b16 %v30
  %v199 = vunpack.c.h.b16 %v30
  %v200 = vunpack.c.l.b16 %v31
  %v201 = vunpack.c.h.b16 %v31
  %v202 = vunpack.c.l.b16 %v32
  %v203 = vunpack.c.h.b16 %v32
  %v204 = vunpack.c.l.b16 %v33
  %v205 = vunpack.c.h.b16 %v33
  %v206 = vunpack.c.l.b16 %v34
  %v207 = vunpack.c.h.b16 %v34
  %v208 = vunpack.c.l.b16 %v35
  %v209 = vunpack.c.h.b16 %v35
  %v210 = vunpack.c.l.b16 %v36
  %v211 = vunpack.c.h.b16 %v36
  %v212 = vunpack.c.l.b16 %v37
  %v213 = vunpack.c.h.b16 %v37
  %v214 = vunpack.c.l.b16 %v38
  %v215 = vunpack.c.h.b16 %v38
  %v216 = vunpack.c.l.b16 %v39
  %v217 = vunpack.c.h.b16 %v39
  %v218 = vunpack.c.l.b16 %v40
  %v219 = vunpack.c.h.b16 %v40
  %v220 = vunpack.c.l.b16 %v41
  %v221 = vunpack.c.h.b16 %v41
  %v222 = vunpack.c.l.b16 %v42
  %v223 = vunpack.c.h.b16 %v42
  %v224 = vunpack.c.l.b16 %v43
  %v225 = vunpack.c.h.b16 %v43
  %v226 = vunpack.c.l.b16 %v44
  %v227 = vunpack.c.h.b16 %v44
  %v228 = vunpack.c.l.b16 %v45
  %v229 = vunpack.c.h.b16 %v45
  %v230 = vunpack.c.l.b16 %v46
  %v231 = vunpack.c.h.b16 %v46
  %v232 = vunpack.c.l.b16 %v47
  %v233 = vunpack.c.h.b16 %v47
  %v234 = vunpack.c.l.b16 %v48
  %v235 = vunpack.c.h.b16 %v48
  %v236 = vunpack.c.l.b16 %v49
  %v237 = vunpack.c.h.b16 %v49
  %v238 = vunpack.c.l.b16 %v50
  %v239 = vunpack.c.h.b16 %v50
  %v240 = vunpack.c.l.b16 %v51
  %v241 = vunpack.c.h.b16 %v51
  %v242 = vunpack.c.l.b16 %v52
  %v243 = vunpack.c.h.b16 %v52
  %v244 = vunpack.c.l.b16 %v53
  %v245 = vunpack.c.h.b16 %v53
  %v246 = vunpack.c.l.b16 %v54
  %v247 = vunpack.c.h.b16 %v54
  %v248 = vunpack.c.l.b16 %v55
  %v249 = vunpack.c.h.b16 %v55
  %v250 = vunpack.c.l.b16 %v56
  %v251 = vunpack.c.h.b16 %v56
  %v252 = vunpack.c.l.b16 %v57
  %v253 = vunpack.c.h.b16 %v57
  %v254 = vunpack.c.l.b16 %v58
  %v255 = vunpack.c.h.b16 %v58
  %v256 = vunpack.c.l.b16 %v59
  %v257 = vunpack.c.h.b16 %v59
  %v258 = vunpack.c.l.b16 %v60
  %v259 = vunpack.c.h.b16 %v60
  %v260 = vunpack.c.l.b16 %v61
  %v261 = vunpack.c.h.b16 %v61
  %v262 = vunpack.c.l.b16 %v62
  %v263 = vunpack.c.h.b16 %v62
  %v264 = vunpack.c.l.b16 %v63
  %v265 = vunpack.c.h.b16 %v63
  %v266 = vunpack.c.l.b16 %v64
  %v267 = vunpack.c.h.b16 %v64
  %v268 = vunpack.c.l.b16 %v65
  %v269 = vunpack.c.h.b16 %v65
  %v270 = vunpack.c.l.b16 %v66
  %v271 = vunpack.c.h.b16 %v66
  %v272 = vunpack.c.l.b16 %v67
  %v273 = vunpack.c.h.b16 %v67
  %v274 = vunpack.c.l.b16 %v68
  %v275 = vunpack.c.h.b16 %v68
  %v276 = vunpack.c.l.b16 %v69
  %v277 = vunpack.c.h.b16 %v69
  %v278 = vunpack.c.l.b16 %v70
  %v279 = vunpack.c.h.b16 %v70
  %v280 = vunpack.c.l.b16 %v71
  %v281 = vunpack.c.h.b16 %v71
  %v282 = vunpack.c.l.b16 %v72
  %v283 = vunpack.c.h.b16 %v72
  %v284 = vunpack.c.l.b16 %v73
  %v285 = vunpack.c.h.b16 %v73
  %v286 = vunpack.c.l.b16 %v74
  %v287 = vunpack.c.h.b16 %v74
  %v288 = vunpack.c.l.b16 %v75
  %v289 = vunpack.c.h.b16 %v75
  %v290 = vunpack.c.l.b16 %v76
  %v291 = vunpack.c.h.b16 %v76
  %v292 = vunpack.c.l.b16 %v77
  %v293 = vunpack.c.h.b16 %v77
  %v294 = vunpack.c.l.b16 %v78
  %v295 = vunpack.c.h.b16 %v78
  %v296 = vpack.c.b16 %v170, %v168
  %v297 = vpack.c.b16 %v171, %v169
  %v298 = vpack.c.b16 %v174, %v172
  %v299 = vpack.c.b16 %v175, %v173
  %v300 = vpack.c.b16 %v178, %v176
  %v301 = vpack.c.b16 %v179, %v177
  %v302 = vpack.c.b16 %v182, %v180
  %v303 = vpack.c.b16 %v183, %v181
  %v304 = vpack.c.b16 %v186, %v184
  %v305 = vpack.c.b16 %v187, %v185
  %v306 = vpack.c.b16 %v190, %v188
  %v307 = vpack.c.b16 %v191, %v189
  %v308 = vpack.c.b16 %v194, %v192
  %v309 = vpack.c.b16 %v195, %v193
  %v310 = vpack.c.b16 %v198, %v196
  %v311 = vpack.c.b16 %v199, %v197
  %v312 = vpack.c.b16 %v202, %v200
  %v313 = vpack.c.b16 %v203, %v201
  %v314 = vpack.c.b16 %v206, %v204
  %v315 = vpack.c.b16 %v207, %v205
  %v316 = vpack.c.b16 %v210, %v208
  %v317 = vpack.c.b16 %v211, %v209
  %v318 = vpack.c.b16 %v214, %v212
  %v319 = vpack.c.b16 %v215, %v213
  %v320 = vpack.c.b16 %v218, %v216
  %v321 = vpack.c.b16 %v219, %v217
  %v322 = vpack.c.b16 %v222, %v220
  %v323 = vpack.c.b16 %v223, %v221
  %v324 = vpack.c.b16 %v226, %v224
  %v325 = vpack.c.b16 %v227, %v225
  %v326 = vpack.c.b16 %v230, %v228
  %v327 = vpack.c.b16 %v231, %v229
  %v328 = vpack.c.b16 %v234, %v232
  %v329 = vpack.c.b16 %v235, %v233
  %v330 = vpack.c.b16 %v238, %v236
  %v331 = vpack.c.b16 %v239, %v237
  %v332 = vpack.c.b16 %v242, %v240
  %v333 = vpack.c.b16 %v243, %v241
  %v334 = vpack.c.b16 %v246, %v244
  %v335 = vpack.c.b16 %v247, %v245
  %v336 = vpack.c.b16 %v250, %v248
  %v337 = vpack.c.b16 %v251, %v249
  %v338 = vpack.c.b16 %v254, %v252
  %v339 = vpack.c.b16 %v255, %v253
  %v340 = vpack.c.b16 %v258, %v256
  %v341 = vpack.c.b16 %v259, %v257
  %v342 = vpack.c.b16 %v262, %v260
  %v343 = vpack.c.b16 %v263, %v261
  %v344 = vpack.c.b16 %v266, %v264
  %v345 = vpack.c.b16 %v267, %v265
  %v346 = vpack.c.b16 %v270, %v268
  %v347 = vpack.c.b16 %v271, %v269
  %v348 = vpack.c.b16 %v274, %v272
  %v349 = vpack.c.b16 %v275, %v273
  %v350 = vpack.c.b16 %v278, %v276
  %v351 = vpack.c.b16 %v279, %v277
  %v352 = vpack.c.b16 %v282, %v280
  %v353 = vpack.c.b16 %v283, %v281
  %v354 = vpack.c.b16 %v286, %v284
  %v355 = vpack.c.b16 %v287, %v285
  %v356 = vpack.c.b16 %v290, %v288
  %v357 = vpack.c.b16 %v291, %v289
  %v358 = vpack.c.b16 %v294, %v292
  %v359 = vpack.c.b16 %v295, %v293
  %v410 = vunpack.c.l.b16 %v79
  %v411 = vunpack.c.l.b16 %v80
  %v412 = vunpack.c.l.b16 %v81
  %v413 = vunpack.c.l.b16 %v82
  %v414 = vunpack.c.l.b16 %v83
  %v415 = vunpack.c.l.b16 %v84
  %v416 = vunpack.c.l.b16 %v85
  %v417 = vunpack.c.l.b16 %v86
  %v418 = vunpack.c.l.b16 %v87
  %v419 = vunpack.c.l.b16 %v88
  %v420 = vunpack.c.l.b16 %v89
  %v421 = vunpack.c.l.b16 %v90
  %v422 = vunpack.c.l.b16 %v91
  %v423 = vunpack.c.l.b16 %v92
  %v424 = vunpack.c.l.b16 %v93
  %v425 = vunpack.c.l.b16 %v94
  %v426 = vunpack.c.l.b16 %v95
  %v427 = vunpack.c.l.b16 %v96
  %v428 = vpack.c.b16 %v411, %v410
  %v429 = vpack.c.b16 %v413, %v412
  %v430 = vpack.c.b16 %v415, %v414
  %v431 = vpack.c.b16 %v417, %v416
  %v432 = vpack.c.b16 %v419, %v418
  %v433 = vpack.c.b16 %v421, %v420
  %v434 = vpack.c.b16 %v423, %v422
  %v435 = vpack.c.b16 %v425, %v424
  %v436 = vpack.c.b16 %v427, %v426
  %vm446 = vcmask 130048
  %v448 = vsel %vm446, %v297, 0
  %v451 = vsel %vm446, %v299, 0
  %v454 = vsel %vm446, %v301, 0
  %v457 = vsel %vm446, %v303, 0
  %v460 = vsel %vm446, %v305, 0
  %v463 = vsel %vm446, %v307, 0
  %v466 = vsel %vm446, %v309, 0
  %v469 = vsel %vm446, %v311, 0
  %v472 = vsel %vm446, %v313, 0
  %v475 = vsel %vm446, %v315, 0
  %v478 = vsel %vm446, %v317, 0
  %v481 = vsel %vm446, %v319, 0
  %v484 = vsel %vm446, %v321, 0
  %v487 = vsel %vm446, %v323, 0
  %v490 = vsel %vm446, %v325, 0
  %v493 = vsel %vm446, %v327, 0
  %v496 = vsel %vm446, %v329, 0
  %v499 = vsel %vm446, %v331, 0
  %v502 = vsel %vm446, %v333, 0
  %v505 = vsel %vm446, %v335, 0
  %v508 = vsel %vm446, %v337, 0
  %v511 = vsel %vm446, %v339, 0
  %v514 = vsel %vm446, %v341, 0
  %v517 = vsel %vm446, %v343, 0
  %v520 = vsel %vm446, %v345, 0
  %v523 = vsel %vm446, %v347, 0
  %v526 = vsel %vm446, %v349, 0
  %v529 = vsel %vm446, %v351, 0
  %v532 = vsel %vm446, %v353, 0
  %v535 = vsel %vm446, %v355, 0
  %v538 = vsel %vm446, %v357, 0
  %v541 = vsel %vm446, %v359, 0
  %543 = vmatprep.subr.bf16.mxu0 0
  %544 = vmatpush1.bf16.msra.mxu0 %v428
  %545 = vmatprep.subr.bf16.mxu0 0
  %546 = vmatpush1.bf16.msra.mxu0 %v429
  %547 = vmatprep.subr.bf16.mxu0 0
  %548 = vmatpush1.bf16.msra.mxu0 %v430
  %549 = vmatprep.subr.bf16.mxu0 0
  %550 = vmatpush1.bf16.msra.mxu0 %v431
  %551 = vmatprep.subr.bf16.mxu0 0
  %552 = vmatpush1.bf16.msra.mxu0 %v432
  %553 = vmatprep.subr.bf16.mxu0 0
  %554 = vmatpush1.bf16.msra.mxu0 %v433
  %555 = vmatprep.subr.bf16.mxu0 0
  %556 = vmatpush1.bf16.msra.mxu0 %v434
  %557 = vmatprep.subr.bf16.mxu0 0
  %558 = vmatpush1.bf16.msra.mxu0 %v435
  %559 = vmatprep.subr.bf16.mxu0 0
  %560 = vmatpush1.bf16.msra.mxu0 %v436
  %561 = vmatprep.subr.bf16.mxu0 0
  %562 = vmatpush1.bf16.msra.mxu0 0
  %563 = vmatprep.subr.bf16.mxu0 0
  %564 = vmatpush1.bf16.msra.mxu0 0
  %565 = vmatprep.subr.bf16.mxu0 0
  %566 = vmatpush1.bf16.msra.mxu0 0
  %567 = vmatprep.subr.bf16.mxu0 0
  %568 = vmatpush1.bf16.msra.mxu0 0
  %569 = vmatprep.subr.bf16.mxu0 0
  %570 = vmatpush1.bf16.msra.mxu0 0
  %571 = vmatprep.subr.bf16.mxu0 0
  %572 = vmatpush1.bf16.msra.mxu0 0
  %573 = vmatprep.subr.bf16.mxu0 0
  %574 = vmatpush1.bf16.msra.mxu0 0
  %575 = vmatprep.mubr.bf16.mxu0 %v448
  %576 = vmatmul.mubr.bf16.gmra.mrb[0].mxu0 %v296
  %v577 = vpop.f32.mrb[0].mxu0
  %v578 = vadd.f32 %v102, %v577
  %v579 = vpop.f32.mrb[0].mxu0
  %v580 = vpop.f32.mrb[0].mxu0
  %v581 = vadd.f32 %v102, %v580
  %v582 = vpop.f32.mrb[0].mxu0
  %583 = vmatprep.mubr.bf16.mxu0 %v451
  %584 = vmatmul.mubr.bf16.gmra.mrb[0].mxu0 %v298
  %v585 = vpop.f32.mrb[0].mxu0
  %v586 = vadd.f32 %v102, %v585
  %v587 = vpop.f32.mrb[0].mxu0
  %v588 = vpop.f32.mrb[0].mxu0
  %v589 = vadd.f32 %v102, %v588
  %v590 = vpop.f32.mrb[0].mxu0
  %591 = vmatprep.mubr.bf16.mxu0 %v454
  %592 = vmatmul.mubr.bf16.gmra.mrb[0].mxu0 %v300
  %v593 = vpop.f32.mrb[0].mxu0
  %v594 = vadd.f32 %v102, %v593
  %v595 = vpop.f32.mrb[0].mxu0
  %v596 = vpop.f32.mrb[0].mxu0
  %v597 = vadd.f32 %v102, %v596
  %v598 = vpop.f32.mrb[0].mxu0
  %599 = vmatprep.mubr.bf16.mxu0 %v457
  %600 = vmatmul.mubr.bf16.gmra.mrb[0].mxu0 %v302
  %v601 = vpop.f32.mrb[0].mxu0
  %v602 = vadd.f32 %v102, %v601
  %v603 = vpop.f32.mrb[0].mxu0
  %v604 = vpop.f32.mrb[0].mxu0
  %v605 = vadd.f32 %v102, %v604
  %v606 = vpop.f32.mrb[0].mxu0
  %607 = vmatprep.mubr.bf16.mxu0 %v460
  %608 = vmatmul.mubr.bf16.gmra.mrb[0].mxu0 %v304
  %v609 = vpop.f32.mrb[0].mxu0
  %v610 = vadd.f32 %v102, %v609
  %v611 = vpop.f32.mrb[0].mxu0
  %v612 = vpop.f32.mrb[0].mxu0
  %v613 = vadd.f32 %v102, %v612
  %v614 = vpop.f32.mrb[0].mxu0
  %615 = vmatprep.mubr.bf16.mxu0 %v463
  %616 = vmatmul.mubr.bf16.gmra.mrb[0].mxu0 %v306
  %v617 = vpop.f32.mrb[0].mxu0
  %v618 = vadd.f32 %v102, %v617
  %v619 = vpop.f32.mrb[0].mxu0
  %v620 = vpop.f32.mrb[0].mxu0
  %v621 = vadd.f32 %v102, %v620
  %v622 = vpop.f32.mrb[0].mxu0
  %623 = vmatprep.mubr.bf16.mxu0 %v466
  %624 = vmatmul.mubr.bf16.gmra.mrb[0].mxu0 %v308
  %v625 = vpop.f32.mrb[0].mxu0
  %v626 = vadd.f32 %v102, %v625
  %v627 = vpop.f32.mrb[0].mxu0
  %v628 = vpop.f32.mrb[0].mxu0
  %v629 = vadd.f32 %v102, %v628
  %v630 = vpop.f32.mrb[0].mxu0
  %631 = vmatprep.mubr.bf16.mxu0 %v469
  %632 = vmatmul.mubr.bf16.gmra.mrb[0].mxu0 %v310
  %v633 = vpop.f32.mrb[0].mxu0
  %v634 = vadd.f32 %v102, %v633
  %v635 = vpop.f32.mrb[0].mxu0
  %v636 = vpop.f32.mrb[0].mxu0
  %v637 = vadd.f32 %v102, %v636
  %v638 = vpop.f32.mrb[0].mxu0
  %639 = vmatprep.mubr.bf16.mxu0 %v472
  %640 = vmatmul.mubr.bf16.gmra.mrb[0].mxu0 %v312
  %v641 = vpop.f32.mrb[0].mxu0
  %v642 = vadd.f32 %v102, %v641
  %v643 = vpop.f32.mrb[0].mxu0
  %v644 = vpop.f32.mrb[0].mxu0
  %v645 = vadd.f32 %v102, %v644
  %v646 = vpop.f32.mrb[0].mxu0
  %647 = vmatprep.mubr.bf16.mxu0 %v475
  %648 = vmatmul.mubr.bf16.gmra.mrb[0].mxu0 %v314
  %v649 = vpop.f32.mrb[0].mxu0
  %v650 = vadd.f32 %v102, %v649
  %v651 = vpop.f32.mrb[0].mxu0
  %v652 = vpop.f32.mrb[0].mxu0
  %v653 = vadd.f32 %v102, %v652
  %v654 = vpop.f32.mrb[0].mxu0
  %655 = vmatprep.mubr.bf16.mxu0 %v478
  %656 = vmatmul.mubr.bf16.gmra.mrb[0].mxu0 %v316
  %v657 = vpop.f32.mrb[0].mxu0
  %v658 = vadd.f32 %v102, %v657
  %v659 = vpop.f32.mrb[0].mxu0
  %v660 = vpop.f32.mrb[0].mxu0
  %v661 = vadd.f32 %v102, %v660
  %v662 = vpop.f32.mrb[0].mxu0
  %663 = vmatprep.mubr.bf16.mxu0 %v481
  %664 = vmatmul.mubr.bf16.gmra.mrb[0].mxu0 %v318
  %v665 = vpop.f32.mrb[0].mxu0
  %v666 = vadd.f32 %v102, %v665
  %v667 = vpop.f32.mrb[0].mxu0
  %v668 = vpop.f32.mrb[0].mxu0
  %v669 = vadd.f32 %v102, %v668
  %v670 = vpop.f32.mrb[0].mxu0
  %671 = vmatprep.mubr.bf16.mxu0 %v484
  %672 = vmatmul.mubr.bf16.gmra.mrb[0].mxu0 %v320
  %v673 = vpop.f32.mrb[0].mxu0
  %v674 = vadd.f32 %v102, %v673
  %v675 = vpop.f32.mrb[0].mxu0
  %v676 = vpop.f32.mrb[0].mxu0
  %v677 = vadd.f32 %v102, %v676
  %v678 = vpop.f32.mrb[0].mxu0
  %679 = vmatprep.mubr.bf16.mxu0 %v487
  %680 = vmatmul.mubr.bf16.gmra.mrb[0].mxu0 %v322
  %v681 = vpop.f32.mrb[0].mxu0
  %v682 = vadd.f32 %v102, %v681
  %v683 = vpop.f32.mrb[0].mxu0
  %v684 = vpop.f32.mrb[0].mxu0
  %v685 = vadd.f32 %v102, %v684
  %v686 = vpop.f32.mrb[0].mxu0
  %687 = vmatprep.mubr.bf16.mxu0 %v490
  %688 = vmatmul.mubr.bf16.gmra.mrb[0].mxu0 %v324
  %v689 = vpop.f32.mrb[0].mxu0
  %v690 = vadd.f32 %v102, %v689
  %v691 = vpop.f32.mrb[0].mxu0
  %v692 = vpop.f32.mrb[0].mxu0
  %v693 = vadd.f32 %v102, %v692
  %v694 = vpop.f32.mrb[0].mxu0
  %695 = vmatprep.mubr.bf16.mxu0 %v493
  %696 = vmatmul.mubr.bf16.gmra.mrb[0].mxu0 %v326
  %v697 = vpop.f32.mrb[0].mxu0
  %v698 = vadd.f32 %v102, %v697
  %v699 = vpop.f32.mrb[0].mxu0
  %v700 = vpop.f32.mrb[0].mxu0
  %v701 = vadd.f32 %v102, %v700
  %v702 = vpop.f32.mrb[0].mxu0
  %703 = vmatprep.mubr.bf16.mxu0 %v496
  %704 = vmatmul.mubr.bf16.gmra.mrb[0].mxu0 %v328
  %v705 = vpop.f32.mrb[0].mxu0
  %v706 = vadd.f32 %v102, %v705
  %v707 = vpop.f32.mrb[0].mxu0
  %v708 = vpop.f32.mrb[0].mxu0
  %v709 = vadd.f32 %v102, %v708
  %v710 = vpop.f32.mrb[0].mxu0
  %711 = vmatprep.mubr.bf16.mxu0 %v499
  %712 = vmatmul.mubr.bf16.gmra.mrb[0].mxu0 %v330
  %v713 = vpop.f32.mrb[0].mxu0
  %v714 = vadd.f32 %v102, %v713
  %v715 = vpop.f32.mrb[0].mxu0
  %v716 = vpop.f32.mrb[0].mxu0
  %v717 = vadd.f32 %v102, %v716
  %v718 = vpop.f32.mrb[0].mxu0
  %719 = vmatprep.mubr.bf16.mxu0 %v502
  %720 = vmatmul.mubr.bf16.gmra.mrb[0].mxu0 %v332
  %v721 = vpop.f32.mrb[0].mxu0
  %v722 = vadd.f32 %v102, %v721
  %v723 = vpop.f32.mrb[0].mxu0
  %v724 = vpop.f32.mrb[0].mxu0
  %v725 = vadd.f32 %v102, %v724
  %v726 = vpop.f32.mrb[0].mxu0
  %727 = vmatprep.mubr.bf16.mxu0 %v505
  %728 = vmatmul.mubr.bf16.gmra.mrb[0].mxu0 %v334
  %v729 = vpop.f32.mrb[0].mxu0
  %v730 = vadd.f32 %v102, %v729
  %v731 = vpop.f32.mrb[0].mxu0
  %v732 = vpop.f32.mrb[0].mxu0
  %v733 = vadd.f32 %v102, %v732
  %v734 = vpop.f32.mrb[0].mxu0
  %735 = vmatprep.mubr.bf16.mxu0 %v508
  %736 = vmatmul.mubr.bf16.gmra.mrb[0].mxu0 %v336
  %v737 = vpop.f32.mrb[0].mxu0
  %v738 = vadd.f32 %v102, %v737
  %v739 = vpop.f32.mrb[0].mxu0
  %v740 = vpop.f32.mrb[0].mxu0
  %v741 = vadd.f32 %v102, %v740
  %v742 = vpop.f32.mrb[0].mxu0
  %743 = vmatprep.mubr.bf16.mxu0 %v511
  %744 = vmatmul.mubr.bf16.gmra.mrb[0].mxu0 %v338
  %v745 = vpop.f32.mrb[0].mxu0
  %v746 = vadd.f32 %v102, %v745
  %v747 = vpop.f32.mrb[0].mxu0
  %v748 = vpop.f32.mrb[0].mxu0
  %v749 = vadd.f32 %v102, %v748
  %v750 = vpop.f32.mrb[0].mxu0
  %751 = vmatprep.mubr.bf16.mxu0 %v514
  %752 = vmatmul.mubr.bf16.gmra.mrb[0].mxu0 %v340
  %v753 = vpop.f32.mrb[0].mxu0
  %v754 = vadd.f32 %v102, %v753
  %v755 = vpop.f32.mrb[0].mxu0
  %v756 = vpop.f32.mrb[0].mxu0
  %v757 = vadd.f32 %v102, %v756
  %v758 = vpop.f32.mrb[0].mxu0
  %759 = vmatprep.mubr.bf16.mxu0 %v517
  %760 = vmatmul.mubr.bf16.gmra.mrb[0].mxu0 %v342
  %v761 = vpop.f32.mrb[0].mxu0
  %v762 = vadd.f32 %v102, %v761
  %v763 = vpop.f32.mrb[0].mxu0
  %v764 = vpop.f32.mrb[0].mxu0
  %v765 = vadd.f32 %v102, %v764
  %v766 = vpop.f32.mrb[0].mxu0
  %767 = vmatprep.mubr.bf16.mxu0 %v520
  %768 = vmatmul.mubr.bf16.gmra.mrb[0].mxu0 %v344
  %v769 = vpop.f32.mrb[0].mxu0
  %v770 = vadd.f32 %v102, %v769
  %v771 = vpop.f32.mrb[0].mxu0
  %v772 = vpop.f32.mrb[0].mxu0
  %v773 = vadd.f32 %v102, %v772
  %v774 = vpop.f32.mrb[0].mxu0
  %775 = vmatprep.mubr.bf16.mxu0 %v523
  %776 = vmatmul.mubr.bf16.gmra.mrb[0].mxu0 %v346
  %v777 = vpop.f32.mrb[0].mxu0
  %v778 = vadd.f32 %v102, %v777
  %v779 = vpop.f32.mrb[0].mxu0
  %v780 = vpop.f32.mrb[0].mxu0
  %v781 = vadd.f32 %v102, %v780
  %v782 = vpop.f32.mrb[0].mxu0
  %783 = vmatprep.mubr.bf16.mxu0 %v526
  %784 = vmatmul.mubr.bf16.gmra.mrb[0].mxu0 %v348
  %v785 = vpop.f32.mrb[0].mxu0
  %v786 = vadd.f32 %v102, %v785
  %v787 = vpop.f32.mrb[0].mxu0
  %v788 = vpop.f32.mrb[0].mxu0
  %v789 = vadd.f32 %v102, %v788
  %v790 = vpop.f32.mrb[0].mxu0
  %791 = vmatprep.mubr.bf16.mxu0 %v529
  %792 = vmatmul.mubr.bf16.gmra.mrb[0].mxu0 %v350
  %v793 = vpop.f32.mrb[0].mxu0
  %v794 = vadd.f32 %v102, %v793
  %v795 = vpop.f32.mrb[0].mxu0
  %v796 = vpop.f32.mrb[0].mxu0
  %v797 = vadd.f32 %v102, %v796
  %v798 = vpop.f32.mrb[0].mxu0
  %799 = vmatprep.mubr.bf16.mxu0 %v532
  %800 = vmatmul.mubr.bf16.gmra.mrb[0].mxu0 %v352
  %v801 = vpop.f32.mrb[0].mxu0
  %v802 = vadd.f32 %v102, %v801
  %v803 = vpop.f32.mrb[0].mxu0
  %v804 = vpop.f32.mrb[0].mxu0
  %v805 = vadd.f32 %v102, %v804
  %v806 = vpop.f32.mrb[0].mxu0
  %807 = vmatprep.mubr.bf16.mxu0 %v535
  %808 = vmatmul.mubr.bf16.gmra.mrb[0].mxu0 %v354
  %v809 = vpop.f32.mrb[0].mxu0
  %v810 = vadd.f32 %v102, %v809
  %v811 = vpop.f32.mrb[0].mxu0
  %v812 = vpop.f32.mrb[0].mxu0
  %v813 = vadd.f32 %v102, %v812
  %v814 = vpop.f32.mrb[0].mxu0
  %815 = vmatprep.mubr.bf16.mxu0 %v538
  %816 = vmatmul.mubr.bf16.gmra.mrb[0].mxu0 %v356
  %v817 = vpop.f32.mrb[0].mxu0
  %v818 = vadd.f32 %v102, %v817
  %v819 = vpop.f32.mrb[0].mxu0
  %v820 = vpop.f32.mrb[0].mxu0
  %v821 = vadd.f32 %v102, %v820
  %v822 = vpop.f32.mrb[0].mxu0
  %823 = vmatprep.mubr.bf16.mxu0 %v541
  %824 = vmatmul.mubr.bf16.gmra.mrb[0].mxu0 %v358
  %v825 = vpop.f32.mrb[0].mxu0
  %v826 = vadd.f32 %v102, %v825
  %v827 = vpop.f32.mrb[0].mxu0
  %v828 = vpop.f32.mrb[0].mxu0
  %v829 = vadd.f32 %v102, %v828
  %v830 = vpop.f32.mrb[0].mxu0
  %831 = vdwg.mxu0
  %v832 = vmax.f32 %v578, 0.0
  %v833 = vmax.f32 %v581, 0.0
  %v834 = vmax.f32 %v586, 0.0
  %v835 = vmax.f32 %v589, 0.0
  %v836 = vmax.f32 %v594, 0.0
  %v837 = vmax.f32 %v597, 0.0
  %v838 = vmax.f32 %v602, 0.0
  %v839 = vmax.f32 %v605, 0.0
  %v840 = vmax.f32 %v610, 0.0
  %v841 = vmax.f32 %v613, 0.0
  %v842 = vmax.f32 %v618, 0.0
  %v843 = vmax.f32 %v621, 0.0
  %v844 = vmax.f32 %v626, 0.0
  %v845 = vmax.f32 %v629, 0.0
  %v846 = vmax.f32 %v634, 0.0
  %v847 = vmax.f32 %v637, 0.0
  %v848 = vmax.f32 %v642, 0.0
  %v849 = vmax.f32 %v645, 0.0
  %v850 = vmax.f32 %v650, 0.0
  %v851 = vmax.f32 %v653, 0.0
  %v852 = vmax.f32 %v658, 0.0
  %v853 = vmax.f32 %v661, 0.0
  %v854 = vmax.f32 %v666, 0.0
  %v855 = vmax.f32 %v669, 0.0
  %v856 = vmax.f32 %v674, 0.0
  %v857 = vmax.f32 %v677, 0.0
  %v858 = vmax.f32 %v682, 0.0
  %v859 = vmax.f32 %v685, 0.0
  %v860 = vmax.f32 %v690, 0.0
  %v861 = vmax.f32 %v693, 0.0
  %v862 = vmax.f32 %v698, 0.0
  %v863 = vmax.f32 %v701, 0.0
  %v864 = vmax.f32 %v706, 0.0
  %v865 = vmax.f32 %v709, 0.0
  %v866 = vmax.f32 %v714, 0.0
  %v867 = vmax.f32 %v717, 0.0
  %v868 = vmax.f32 %v722, 0.0
  %v869 = vmax.f32 %v725, 0.0
  %v870 = vmax.f32 %v730, 0.0
  %v871 = vmax.f32 %v733, 0.0
  %v872 = vmax.f32 %v738, 0.0
  %v873 = vmax.f32 %v741, 0.0
  %v874 = vmax.f32 %v746, 0.0
  %v875 = vmax.f32 %v749, 0.0
  %v876 = vmax.f32 %v754, 0.0
  %v877 = vmax.f32 %v757, 0.0
  %v878 = vmax.f32 %v762, 0.0
  %v879 = vmax.f32 %v765, 0.0
  %v880 = vmax.f32 %v770, 0.0
  %v881 = vmax.f32 %v773, 0.0
  %v882 = vmax.f32 %v778, 0.0
  %v883 = vmax.f32 %v781, 0.0
  %v884 = vmax.f32 %v786, 0.0
  %v885 = vmax.f32 %v789, 0.0
  %v886 = vmax.f32 %v794, 0.0
  %v887 = vmax.f32 %v797, 0.0
  %v888 = vmax.f32 %v802, 0.0
  %v889 = vmax.f32 %v805, 0.0
  %v890 = vmax.f32 %v810, 0.0
  %v891 = vmax.f32 %v813, 0.0
  %v892 = vmax.f32 %v818, 0.0
  %v893 = vmax.f32 %v821, 0.0
  %v894 = vmax.f32 %v826, 0.0
  %v895 = vmax.f32 %v829, 0.0
  %v896 = vpack.c.bf16 %v833, %v832
  %v897 = vpack.c.bf16 %v835, %v834
  %v898 = vpack.c.bf16 %v837, %v836
  %v899 = vpack.c.bf16 %v839, %v838
  %v900 = vpack.c.bf16 %v841, %v840
  %v901 = vpack.c.bf16 %v843, %v842
  %v902 = vpack.c.bf16 %v845, %v844
  %v903 = vpack.c.bf16 %v847, %v846
  %v904 = vpack.c.bf16 %v849, %v848
  %v905 = vpack.c.bf16 %v851, %v850
  %v906 = vpack.c.bf16 %v853, %v852
  %v907 = vpack.c.bf16 %v855, %v854
  %v908 = vpack.c.bf16 %v857, %v856
  %v909 = vpack.c.bf16 %v859, %v858
  %v910 = vpack.c.bf16 %v861, %v860
  %v911 = vpack.c.bf16 %v863, %v862
  %v912 = vpack.c.bf16 %v865, %v864
  %v913 = vpack.c.bf16 %v867, %v866
  %v914 = vpack.c.bf16 %v869, %v868
  %v915 = vpack.c.bf16 %v871, %v870
  %v916 = vpack.c.bf16 %v873, %v872
  %v917 = vpack.c.bf16 %v875, %v874
  %v918 = vpack.c.bf16 %v877, %v876
  %v919 = vpack.c.bf16 %v879, %v878
  %v920 = vpack.c.bf16 %v881, %v880
  %v921 = vpack.c.bf16 %v883, %v882
  %v922 = vpack.c.bf16 %v885, %v884
  %v923 = vpack.c.bf16 %v887, %v886
  %v924 = vpack.c.bf16 %v889, %v888
  %v925 = vpack.c.bf16 %v891, %v890
  %v926 = vpack.c.bf16 %v893, %v892
  %v927 = vpack.c.bf16 %v895, %v894
  %v960 = vunpack.c.l.b16 %v896
  %v961 = vunpack.c.h.b16 %v896
  %v962 = vunpack.c.l.b16 %v897
  %v963 = vunpack.c.h.b16 %v897
  %v964 = vunpack.c.l.b16 %v898
  %v965 = vunpack.c.h.b16 %v898
  %v966 = vunpack.c.l.b16 %v899
  %v967 = vunpack.c.h.b16 %v899
  %v968 = vunpack.c.l.b16 %v900
  %v969 = vunpack.c.h.b16 %v900
  %v970 = vunpack.c.l.b16 %v901
  %v971 = vunpack.c.h.b16 %v901
  %v972 = vunpack.c.l.b16 %v902
  %v973 = vunpack.c.h.b16 %v902
  %v974 = vunpack.c.l.b16 %v903
  %v975 = vunpack.c.h.b16 %v903
  %v976 = vunpack.c.l.b16 %v904
  %v977 = vunpack.c.h.b16 %v904
  %v978 = vunpack.c.l.b16 %v905
  %v979 = vunpack.c.h.b16 %v905
  %v980 = vunpack.c.l.b16 %v906
  %v981 = vunpack.c.h.b16 %v906
  %v982 = vunpack.c.l.b16 %v907
  %v983 = vunpack.c.h.b16 %v907
  %v984 = vunpack.c.l.b16 %v908
  %v985 = vunpack.c.h.b16 %v908
  %v986 = vunpack.c.l.b16 %v909
  %v987 = vunpack.c.h.b16 %v909
  %v988 = vunpack.c.l.b16 %v910
  %v989 = vunpack.c.h.b16 %v910
  %v990 = vunpack.c.l.b16 %v911
  %v991 = vunpack.c.h.b16 %v911
  %v992 = vunpack.c.l.b16 %v912
  %v993 = vunpack.c.h.b16 %v912
  %v994 = vunpack.c.l.b16 %v913
  %v995 = vunpack.c.h.b16 %v913
  %v996 = vunpack.c.l.b16 %v914
  %v997 = vunpack.c.h.b16 %v914
  %v998 = vunpack.c.l.b16 %v915
  %v999 = vunpack.c.h.b16 %v915
  %v1000 = vunpack.c.l.b16 %v916
  %v1001 = vunpack.c.h.b16 %v916
  %v1002 = vunpack.c.l.b16 %v917
  %v1003 = vunpack.c.h.b16 %v917
  %v1004 = vunpack.c.l.b16 %v918
  %v1005 = vunpack.c.h.b16 %v918
  %v1006 = vunpack.c.l.b16 %v919
  %v1007 = vunpack.c.h.b16 %v919
  %v1008 = vunpack.c.l.b16 %v920
  %v1009 = vunpack.c.h.b16 %v920
  %v1010 = vunpack.c.l.b16 %v921
  %v1011 = vunpack.c.h.b16 %v921
  %v1012 = vunpack.c.l.b16 %v922
  %v1013 = vunpack.c.h.b16 %v922
  %v1014 = vunpack.c.l.b16 %v923
  %v1015 = vunpack.c.h.b16 %v923
  %v1016 = vunpack.c.l.b16 %v924
  %v1017 = vunpack.c.h.b16 %v924
  %v1018 = vunpack.c.l.b16 %v925
  %v1019 = vunpack.c.h.b16 %v925
  %v1020 = vunpack.c.l.b16 %v926
  %v1021 = vunpack.c.h.b16 %v926
  %v1022 = vunpack.c.l.b16 %v927
  %v1023 = vunpack.c.h.b16 %v927
  %v1024 = vpack.c.b16 %v960, %v960
  %v1025 = vpack.c.b16 %v961, %v961
  %v1026 = vpack.c.b16 %v962, %v962
  %v1027 = vpack.c.b16 %v963, %v963
  %v1028 = vpack.c.b16 %v964, %v964
  %v1029 = vpack.c.b16 %v965, %v965
  %v1030 = vpack.c.b16 %v966, %v966
  %v1031 = vpack.c.b16 %v967, %v967
  %v1032 = vpack.c.b16 %v968, %v968
  %v1033 = vpack.c.b16 %v969, %v969
  %v1034 = vpack.c.b16 %v970, %v970
  %v1035 = vpack.c.b16 %v971, %v971
  %v1036 = vpack.c.b16 %v972, %v972
  %v1037 = vpack.c.b16 %v973, %v973
  %v1038 = vpack.c.b16 %v974, %v974
  %v1039 = vpack.c.b16 %v975, %v975
  %v1040 = vpack.c.b16 %v976, %v976
  %v1041 = vpack.c.b16 %v977, %v977
  %v1042 = vpack.c.b16 %v978, %v978
  %v1043 = vpack.c.b16 %v979, %v979
  %v1044 = vpack.c.b16 %v980, %v980
  %v1045 = vpack.c.b16 %v981, %v981
  %v1046 = vpack.c.b16 %v982, %v982
  %v1047 = vpack.c.b16 %v983, %v983
  %v1048 = vpack.c.b16 %v984, %v984
  %v1049 = vpack.c.b16 %v985, %v985
  %v1050 = vpack.c.b16 %v986, %v986
  %v1051 = vpack.c.b16 %v987, %v987
  %v1052 = vpack.c.b16 %v988, %v988
  %v1053 = vpack.c.b16 %v989, %v989
  %v1054 = vpack.c.b16 %v990, %v990
  %v1055 = vpack.c.b16 %v991, %v991
  %v1056 = vpack.c.b16 %v992, %v992
  %v1057 = vpack.c.b16 %v993, %v993
  %v1058 = vpack.c.b16 %v994, %v994
  %v1059 = vpack.c.b16 %v995, %v995
  %v1060 = vpack.c.b16 %v996, %v996
  %v1061 = vpack.c.b16 %v997, %v997
  %v1062 = vpack.c.b16 %v998, %v998
  %v1063 = vpack.c.b16 %v999, %v999
  %v1064 = vpack.c.b16 %v1000, %v1000
  %v1065 = vpack.c.b16 %v1001, %v1001
  %v1066 = vpack.c.b16 %v1002, %v1002
  %v1067 = vpack.c.b16 %v1003, %v1003
  %v1068 = vpack.c.b16 %v1004, %v1004
  %v1069 = vpack.c.b16 %v1005, %v1005
  %v1070 = vpack.c.b16 %v1006, %v1006
  %v1071 = vpack.c.b16 %v1007, %v1007
  %v1072 = vpack.c.b16 %v1008, %v1008
  %v1073 = vpack.c.b16 %v1009, %v1009
  %v1074 = vpack.c.b16 %v1010, %v1010
  %v1075 = vpack.c.b16 %v1011, %v1011
  %v1076 = vpack.c.b16 %v1012, %v1012
  %v1077 = vpack.c.b16 %v1013, %v1013
  %v1078 = vpack.c.b16 %v1014, %v1014
  %v1079 = vpack.c.b16 %v1015, %v1015
  %v1080 = vpack.c.b16 %v1016, %v1016
  %v1081 = vpack.c.b16 %v1017, %v1017
  %v1082 = vpack.c.b16 %v1018, %v1018
  %v1083 = vpack.c.b16 %v1019, %v1019
  %v1084 = vpack.c.b16 %v1020, %v1020
  %v1085 = vpack.c.b16 %v1021, %v1021
  %v1086 = vpack.c.b16 %v1022, %v1022
  %v1087 = vpack.c.b16 %v1023, %v1023
  %vm1152 = vcmask 125952
  %1153 = vst.msk [vmem:[%s3] sm:$0xf] %vm1152, %v1024
  %1154 = vst.msk [vmem:[%s3 + $0x4] sm:$0xf] %vm1152, %v1025
  %1155 = vst.msk [vmem:[%s3 + $0x8] sm:$0xf] %vm1152, %v1026
  %1156 = vst.msk [vmem:[%s3 + $0xc] sm:$0xf] %vm1152, %v1027
  %1157 = vst.msk [vmem:[%s3 + $0x10] sm:$0xf] %vm1152, %v1028
  %1158 = vst.msk [vmem:[%s3 + $0x14] sm:$0xf] %vm1152, %v1029
  %1159 = vst.msk [vmem:[%s3 + $0x18] sm:$0xf] %vm1152, %v1030
  %1160 = vst.msk [vmem:[%s3 + $0x1c] sm:$0xf] %vm1152, %v1031
  %1161 = vst.msk [vmem:[%s3 + $0x20] sm:$0xf] %vm1152, %v1032
  %1162 = vst.msk [vmem:[%s3 + $0x24] sm:$0xf] %vm1152, %v1033
  %1163 = vst.msk [vmem:[%s3 + $0x28] sm:$0xf] %vm1152, %v1034
  %1164 = vst.msk [vmem:[%s3 + $0x2c] sm:$0xf] %vm1152, %v1035
  %1165 = vst.msk [vmem:[%s3 + $0x30] sm:$0xf] %vm1152, %v1036
  %1166 = vst.msk [vmem:[%s3 + $0x34] sm:$0xf] %vm1152, %v1037
  %1167 = vst.msk [vmem:[%s3 + $0x38] sm:$0xf] %vm1152, %v1038
  %1168 = vst.msk [vmem:[%s3 + $0x3c] sm:$0xf] %vm1152, %v1039
  %1169 = vst.msk [vmem:[%s3 + $0x40] sm:$0xf] %vm1152, %v1040
  %1170 = vst.msk [vmem:[%s3 + $0x44] sm:$0xf] %vm1152, %v1041
  %1171 = vst.msk [vmem:[%s3 + $0x48] sm:$0xf] %vm1152, %v1042
  %1172 = vst.msk [vmem:[%s3 + $0x4c] sm:$0xf] %vm1152, %v1043
  %1173 = vst.msk [vmem:[%s3 + $0x50] sm:$0xf] %vm1152, %v1044
  %1174 = vst.msk [vmem:[%s3 + $0x54] sm:$0xf] %vm1152, %v1045
  %1175 = vst.msk [vmem:[%s3 + $0x58] sm:$0xf] %vm1152, %v1046
  %1176 = vst.msk [vmem:[%s3 + $0x5c] sm:$0xf] %vm1152, %v1047
  %1177 = vst.msk [vmem:[%s3 + $0x60] sm:$0xf] %vm1152, %v1048
  %1178 = vst.msk [vmem:[%s3 + $0x64] sm:$0xf] %vm1152, %v1049
  %1179 = vst.msk [vmem:[%s3 + $0x68] sm:$0xf] %vm1152, %v1050
  %1180 = vst.msk [vmem:[%s3 + $0x6c] sm:$0xf] %vm1152, %v1051
  %1181 = vst.msk [vmem:[%s3 + $0x70] sm:$0xf] %vm1152, %v1052
  %1182 = vst.msk [vmem:[%s3 + $0x74] sm:$0xf] %vm1152, %v1053
  %1183 = vst.msk [vmem:[%s3 + $0x78] sm:$0xf] %vm1152, %v1054
  %1184 = vst.msk [vmem:[%s3 + $0x7c] sm:$0xf] %vm1152, %v1055
  %1185 = vst.msk [vmem:[%s3 + $0x80] sm:$0xf] %vm1152, %v1056
  %1186 = vst.msk [vmem:[%s3 + $0x84] sm:$0xf] %vm1152, %v1057
  %1187 = vst.msk [vmem:[%s3 + $0x88] sm:$0xf] %vm1152, %v1058
  %1188 = vst.msk [vmem:[%s3 + $0x8c] sm:$0xf] %vm1152, %v1059
  %1189 = vst.msk [vmem:[%s3 + $0x90] sm:$0xf] %vm1152, %v1060
  %1190 = vst.msk [vmem:[%s3 + $0x94] sm:$0xf] %vm1152, %v1061
  %1191 = vst.msk [vmem:[%s3 + $0x98] sm:$0xf] %vm1152, %v1062
  %1192 = vst.msk [vmem:[%s3 + $0x9c] sm:$0xf] %vm1152, %v1063
  %1193 = vst.msk [vmem:[%s3 + $0xa0] sm:$0xf] %vm1152, %v1064
  %1194 = vst.msk [vmem:[%s3 + $0xa4] sm:$0xf] %vm1152, %v1065
  %1195 = vst.msk [vmem:[%s3 + $0xa8] sm:$0xf] %vm1152, %v1066
  %1196 = vst.msk [vmem:[%s3 + $0xac] sm:$0xf] %vm1152, %v1067
  %1197 = vst.msk [vmem:[%s3 + $0xb0] sm:$0xf] %vm1152, %v1068
  %1198 = vst.msk [vmem:[%s3 + $0xb4] sm:$0xf] %vm1152, %v1069
  %1199 = vst.msk [vmem:[%s3 + $0xb8] sm:$0xf] %vm1152, %v1070
  %1200 = vst.msk [vmem:[%s3 + $0xbc] sm:$0xf] %vm1152, %v1071
  %1201 = vst.msk [vmem:[%s3 + $0xc0] sm:$0xf] %vm1152, %v1072
  %1202 = vst.msk [vmem:[%s3 + $0xc4] sm:$0xf] %vm1152, %v1073
  %1203 = vst.msk [vmem:[%s3 + $0xc8] sm:$0xf] %vm1152, %v1074
  %1204 = vst.msk [vmem:[%s3 + $0xcc] sm:$0xf] %vm1152, %v1075
  %1205 = vst.msk [vmem:[%s3 + $0xd0] sm:$0xf] %vm1152, %v1076
  %1206 = vst.msk [vmem:[%s3 + $0xd4] sm:$0xf] %vm1152, %v1077
  %1207 = vst.msk [vmem:[%s3 + $0xd8] sm:$0xf] %vm1152, %v1078
  %1208 = vst.msk [vmem:[%s3 + $0xdc] sm:$0xf] %vm1152, %v1079
  %1209 = vst.msk [vmem:[%s3 + $0xe0] sm:$0xf] %vm1152, %v1080
  %1210 = vst.msk [vmem:[%s3 + $0xe4] sm:$0xf] %vm1152, %v1081
  %1211 = vst.msk [vmem:[%s3 + $0xe8] sm:$0xf] %vm1152, %v1082
  %1212 = vst.msk [vmem:[%s3 + $0xec] sm:$0xf] %vm1152, %v1083
  %1213 = vst.msk [vmem:[%s3 + $0xf0] sm:$0xf] %vm1152, %v1084
  %1214 = vst.msk [vmem:[%s3 + $0xf4] sm:$0xf] %vm1152, %v1085
  %1215 = vst.msk [vmem:[%s3 + $0xf8] sm:$0xf] %vm1152, %v1086
  %1216 = vst.msk [vmem:[%s3 + $0xfc] sm:$0xf] %vm1152, %v1087
  // Predicated region
  $region14: #{resnet_forward.23} parent=0 // pred_check
    _
  $region15: #{resnet_forward.23} parent=0 // pred_check_branch
    %1218 = sbr.rel (0) target = $region17
  $region16: #{resnet_forward.23} parent=0 // pred_region
    _
  $region17: #{resnet_forward.23} parent=0 // pred_fallthru
    _
  // Predicated region
  $region18: #{resnet_forward.23} parent=0 // pred_check
    _
  $region19: #{resnet_forward.23} parent=0 // pred_check_branch
    %1220 = sbr.rel (0) target = $region21
  $region20: #{resnet_forward.23} parent=0 // pred_region
    _
  $region21: #{resnet_forward.23} parent=0 // pred_fallthru
    _

// kernel: resnet_forward.24
$region0: #{resnet_forward.24}
  #allocation0 [shape = 'u32[]', space=smem, size = 0x4, offset = 0x4, fixed_abs, tag = 'smem constant byte address 0x4 - core index']
  #allocation1 [shape = 'u32[144,128]{1,0:T(1,128)}', space=vmem, size = 0x12000, scoped, tag = 'internal scratch']
  %s0 = inlined_call_operand.vmem [shape: bf16[512,144], index: 0, kind: input, shape index: {}]
  %s1 = inlined_call_operand.vmem [shape: bf16[144,16], index: 1, kind: input, shape index: {}]
  %s2 = inlined_call_operand.vmem [shape: f32[1,16], index: 2, kind: input, shape index: {}]
  %s3 = inlined_call_operand.vmem [shape: bf16[512,16], index: 3, kind: input, shape index: {}]
  %s4 = inlined_call_operand.vmem [shape: bf16[512,16], index: 4, kind: output, shape index: {}]
  %s5 = sld [smem:[#allocation0]]
  $region26: #{resnet_forward.24} parent=0
    _
  %s7 = ssub.s32 1, %s5
  %s8 = scalar_select 0, %s7, %s5
  // Predicated region
  $region2: #{resnet_forward.24} parent=0 // pred_check
    _
  $region3: #{resnet_forward.24} parent=0 // pred_check_branch
    %10 = sbr.rel (0) target = $region5
  $region4: #{resnet_forward.24} parent=0 // pred_region
    _
  $region5: #{resnet_forward.24} parent=0 // pred_fallthru
    _
  // Predicated region
  $region6: #{resnet_forward.24} parent=0 // pred_check
    _
  $region7: #{resnet_forward.24} parent=0 // pred_check_branch
    %12 = sbr.rel (0) target = $region9
  $region8: #{resnet_forward.24} parent=0 // pred_region
    _
  $region9: #{resnet_forward.24} parent=0 // pred_fallthru
    _
  // Predicated region
  $region10: #{resnet_forward.24} parent=0 // pred_check
    _
  $region11: #{resnet_forward.24} parent=0 // pred_check_branch
    %14 = sbr.rel (0) target = $region13
  $region12: #{resnet_forward.24} parent=0 // pred_region
    _
  $region13: #{resnet_forward.24} parent=0 // pred_fallthru
    _
  // Predicated region
  $region14: #{resnet_forward.24} parent=0 // pred_check
    _
  $region15: #{resnet_forward.24} parent=0 // pred_check_branch
    %16 = sbr.rel (0) target = $region17
  $region16: #{resnet_forward.24} parent=0 // pred_region
    _
  $region17: #{resnet_forward.24} parent=0 // pred_fallthru
    _
  %v18 = vld [vmem:[%s0] sm:$0xff]
  %v19 = vld [vmem:[%s0 + $0x8] sm:$0xff]
  %v20 = vld [vmem:[%s0 + $0x10] sm:$0xff]
  %v21 = vld [vmem:[%s0 + $0x18] sm:$0xff]
  %v22 = vld [vmem:[%s0 + $0x20] sm:$0xff]
  %v23 = vld [vmem:[%s0 + $0x28] sm:$0xff]
  %v24 = vld [vmem:[%s0 + $0x30] sm:$0xff]
  %v25 = vld [vmem:[%s0 + $0x38] sm:$0xff]
  %v26 = vld [vmem:[%s0 + $0x40] sm:$0xff]
  %v27 = vld [vmem:[%s0 + $0x48] sm:$0xff]
  %v28 = vld [vmem:[%s0 + $0x50] sm:$0xff]
  %v29 = vld [vmem:[%s0 + $0x58] sm:$0xff]
  %v30 = vld [vmem:[%s0 + $0x60] sm:$0xff]
  %v31 = vld [vmem:[%s0 + $0x68] sm:$0xff]
  %v32 = vld [vmem:[%s0 + $0x70] sm:$0xff]
  %v33 = vld [vmem:[%s0 + $0x78] sm:$0xff]
  %v34 = vld [vmem:[%s0 + $0x80] sm:$0xff]
  %v35 = vld [vmem:[%s0 + $0x88] sm:$0xff]
  %v36 = vld [vmem:[%s0 + $0x90] sm:$0xff]
  %v37 = vld [vmem:[%s0 + $0x98] sm:$0xff]
  %v38 = vld [vmem:[%s0 + $0xa0] sm:$0xff]
  %v39 = vld [vmem:[%s0 + $0xa8] sm:$0xff]
  %v40 = vld [vmem:[%s0 + $0xb0] sm:$0xff]
  %v41 = vld [vmem:[%s0 + $0xb8] sm:$0xff]
  %v42 = vld [vmem:[%s0 + $0xc0] sm:$0xff]
  %v43 = vld [vmem:[%s0 + $0xc8] sm:$0xff]
  %v44 = vld [vmem:[%s0 + $0xd0] sm:$0xff]
  %v45 = vld [vmem:[%s0 + $0xd8] sm:$0xff]
  %v46 = vld [vmem:[%s0 + $0xe0] sm:$0xff]
  %v47 = vld [vmem:[%s0 + $0xe8] sm:$0xff]
  %v48 = vld [vmem:[%s0 + $0xf0] sm:$0xff]
  %v49 = vld [vmem:[%s0 + $0xf8] sm:$0xff]
  %v50 = vld [vmem:[%s0 + $0x100] sm:$0xff]
  %v51 = vld [vmem:[%s0 + $0x108] sm:$0xff]
  %v52 = vld [vmem:[%s0 + $0x110] sm:$0xff]
  %v53 = vld [vmem:[%s0 + $0x118] sm:$0xff]
  %v54 = vld [vmem:[%s0 + $0x120] sm:$0xff]
  %v55 = vld [vmem:[%s0 + $0x128] sm:$0xff]
  %v56 = vld [vmem:[%s0 + $0x130] sm:$0xff]
  %v57 = vld [vmem:[%s0 + $0x138] sm:$0xff]
  %v58 = vld [vmem:[%s0 + $0x140] sm:$0xff]
  %v59 = vld [vmem:[%s0 + $0x148] sm:$0xff]
  %v60 = vld [vmem:[%s0 + $0x150] sm:$0xff]
  %v61 = vld [vmem:[%s0 + $0x158] sm:$0xff]
  %v62 = vld [vmem:[%s0 + $0x160] sm:$0xff]
  %v63 = vld [vmem:[%s0 + $0x168] sm:$0xff]
  %v64 = vld [vmem:[%s0 + $0x170] sm:$0xff]
  %v65 = vld [vmem:[%s0 + $0x178] sm:$0xff]
  %v66 = vld [vmem:[%s0 + $0x180] sm:$0xff]
  %v67 = vld [vmem:[%s0 + $0x188] sm:$0xff]
  %v68 = vld [vmem:[%s0 + $0x190] sm:$0xff]
  %v69 = vld [vmem:[%s0 + $0x198] sm:$0xff]
  %v70 = vld [vmem:[%s0 + $0x1a0] sm:$0xff]
  %v71 = vld [vmem:[%s0 + $0x1a8] sm:$0xff]
  %v72 = vld [vmem:[%s0 + $0x1b0] sm:$0xff]
  %v73 = vld [vmem:[%s0 + $0x1b8] sm:$0xff]
  %v74 = vld [vmem:[%s0 + $0x1c0] sm:$0xff]
  %v75 = vld [vmem:[%s0 + $0x1c8] sm:$0xff]
  %v76 = vld [vmem:[%s0 + $0x1d0] sm:$0xff]
  %v77 = vld [vmem:[%s0 + $0x1d8] sm:$0xff]
  %v78 = vld [vmem:[%s0 + $0x1e0] sm:$0xff]
  %v79 = vld [vmem:[%s0 + $0x1e8] sm:$0xff]
  %v80 = vld [vmem:[%s0 + $0x1f0] sm:$0xff]
  %v81 = vld [vmem:[%s0 + $0x1f8] sm:$0xff]
  %v82 = vld [vmem:[%s1] sm:$0xf]
  %v83 = vld [vmem:[%s1 + $0x4] sm:$0xf]
  %v84 = vld [vmem:[%s1 + $0x8] sm:$0xf]
  %v85 = vld [vmem:[%s1 + $0xc] sm:$0xf]
  %v86 = vld [vmem:[%s1 + $0x10] sm:$0xf]
  %v87 = vld [vmem:[%s1 + $0x14] sm:$0xf]
  %v88 = vld [vmem:[%s1 + $0x18] sm:$0xf]
  %v89 = vld [vmem:[%s1 + $0x1c] sm:$0xf]
  %v90 = vld [vmem:[%s1 + $0x20] sm:$0xf]
  %v91 = vld [vmem:[%s1 + $0x24] sm:$0xf]
  %v92 = vld [vmem:[%s1 + $0x28] sm:$0xf]
  %v93 = vld [vmem:[%s1 + $0x2c] sm:$0xf]
  %v94 = vld [vmem:[%s1 + $0x30] sm:$0xf]
  %v95 = vld [vmem:[%s1 + $0x34] sm:$0xf]
  %v96 = vld [vmem:[%s1 + $0x38] sm:$0xf]
  %v97 = vld [vmem:[%s1 + $0x3c] sm:$0xf]
  %v98 = vld [vmem:[%s1 + $0x40] sm:$0xf]
  %v99 = vld [vmem:[%s1 + $0x44] sm:$0xf]
  %v100 = vld [vmem:[%s2] sm:$0x1]
  %v102 = vlaneseq
  %v103 = vshrl.u32 %v102, 7
  %v104 = vsub.s32 0, %v103
  %v105 = vrot.slane %v100, %v104
  %v171 = vunpack.c.l.b16 %v18
  %v172 = vunpack.c.h.b16 %v18
  %v173 = vunpack.c.l.b16 %v19
  %v174 = vunpack.c.h.b16 %v19
  %v175 = vunpack.c.l.b16 %v20
  %v176 = vunpack.c.h.b16 %v20
  %v177 = vunpack.c.l.b16 %v21
  %v178 = vunpack.c.h.b16 %v21
  %v179 = vunpack.c.l.b16 %v22
  %v180 = vunpack.c.h.b16 %v22
  %v181 = vunpack.c.l.b16 %v23
  %v182 = vunpack.c.h.b16 %v23
  %v183 = vunpack.c.l.b16 %v24
  %v184 = vunpack.c.h.b16 %v24
  %v185 = vunpack.c.l.b16 %v25
  %v186 = vunpack.c.h.b16 %v25
  %v187 = vunpack.c.l.b16 %v26
  %v188 = vunpack.c.h.b16 %v26
  %v189 = vunpack.c.l.b16 %v27
  %v190 = vunpack.c.h.b16 %v27
  %v191 = vunpack.c.l.b16 %v28
  %v192 = vunpack.c.h.b16 %v28
  %v193 = vunpack.c.l.b16 %v29
  %v194 = vunpack.c.h.b16 %v29
  %v195 = vunpack.c.l.b16 %v30
  %v196 = vunpack.c.h.b16 %v30
  %v197 = vunpack.c.l.b16 %v31
  %v198 = vunpack.c.h.b16 %v31
  %v199 = vunpack.c.l.b16 %v32
  %v200 = vunpack.c.h.b16 %v32
  %v201 = vunpack.c.l.b16 %v33
  %v202 = vunpack.c.h.b16 %v33
  %v203 = vunpack.c.l.b16 %v34
  %v204 = vunpack.c.h.b16 %v34
  %v205 = vunpack.c.l.b16 %v35
  %v206 = vunpack.c.h.b16 %v35
  %v207 = vunpack.c.l.b16 %v36
  %v208 = vunpack.c.h.b16 %v36
  %v209 = vunpack.c.l.b16 %v37
  %v210 = vunpack.c.h.b16 %v37
  %v211 = vunpack.c.l.b16 %v38
  %v212 = vunpack.c.h.b16 %v38
  %v213 = vunpack.c.l.b16 %v39
  %v214 = vunpack.c.h.b16 %v39
  %v215 = vunpack.c.l.b16 %v40
  %v216 = vunpack.c.h.b16 %v40
  %v217 = vunpack.c.l.b16 %v41
  %v218 = vunpack.c.h.b16 %v41
  %v219 = vunpack.c.l.b16 %v42
  %v220 = vunpack.c.h.b16 %v42
  %v221 = vunpack.c.l.b16 %v43
  %v222 = vunpack.c.h.b16 %v43
  %v223 = vunpack.c.l.b16 %v44
  %v224 = vunpack.c.h.b16 %v44
  %v225 = vunpack.c.l.b16 %v45
  %v226 = vunpack.c.h.b16 %v45
  %v227 = vunpack.c.l.b16 %v46
  %v228 = vunpack.c.h.b16 %v46
  %v229 = vunpack.c.l.b16 %v47
  %v230 = vunpack.c.h.b16 %v47
  %v231 = vunpack.c.l.b16 %v48
  %v232 = vunpack.c.h.b16 %v48
  %v233 = vunpack.c.l.b16 %v49
  %v234 = vunpack.c.h.b16 %v49
  %v235 = vunpack.c.l.b16 %v50
  %v236 = vunpack.c.h.b16 %v50
  %v237 = vunpack.c.l.b16 %v51
  %v238 = vunpack.c.h.b16 %v51
  %v239 = vunpack.c.l.b16 %v52
  %v240 = vunpack.c.h.b16 %v52
  %v241 = vunpack.c.l.b16 %v53
  %v242 = vunpack.c.h.b16 %v53
  %v243 = vunpack.c.l.b16 %v54
  %v244 = vunpack.c.h.b16 %v54
  %v245 = vunpack.c.l.b16 %v55
  %v246 = vunpack.c.h.b16 %v55
  %v247 = vunpack.c.l.b16 %v56
  %v248 = vunpack.c.h.b16 %v56
  %v249 = vunpack.c.l.b16 %v57
  %v250 = vunpack.c.h.b16 %v57
  %v251 = vunpack.c.l.b16 %v58
  %v252 = vunpack.c.h.b16 %v58
  %v253 = vunpack.c.l.b16 %v59
  %v254 = vunpack.c.h.b16 %v59
  %v255 = vunpack.c.l.b16 %v60
  %v256 = vunpack.c.h.b16 %v60
  %v257 = vunpack.c.l.b16 %v61
  %v258 = vunpack.c.h.b16 %v61
  %v259 = vunpack.c.l.b16 %v62
  %v260 = vunpack.c.h.b16 %v62
  %v261 = vunpack.c.l.b16 %v63
  %v262 = vunpack.c.h.b16 %v63
  %v263 = vunpack.c.l.b16 %v64
  %v264 = vunpack.c.h.b16 %v64
  %v265 = vunpack.c.l.b16 %v65
  %v266 = vunpack.c.h.b16 %v65
  %v267 = vunpack.c.l.b16 %v66
  %v268 = vunpack.c.h.b16 %v66
  %v269 = vunpack.c.l.b16 %v67
  %v270 = vunpack.c.h.b16 %v67
  %v271 = vunpack.c.l.b16 %v68
  %v272 = vunpack.c.h.b16 %v68
  %v273 = vunpack.c.l.b16 %v69
  %v274 = vunpack.c.h.b16 %v69
  %v275 = vunpack.c.l.b16 %v70
  %v276 = vunpack.c.h.b16 %v70
  %v277 = vunpack.c.l.b16 %v71
  %v278 = vunpack.c.h.b16 %v71
  %v279 = vunpack.c.l.b16 %v72
  %v280 = vunpack.c.h.b16 %v72
  %v281 = vunpack.c.l.b16 %v73
  %v282 = vunpack.c.h.b16 %v73
  %v283 = vunpack.c.l.b16 %v74
  %v284 = vunpack.c.h.b16 %v74
  %v285 = vunpack.c.l.b16 %v75
  %v286 = vunpack.c.h.b16 %v75
  %v287 = vunpack.c.l.b16 %v76
  %v288 = vunpack.c.h.b16 %v76
  %v289 = vunpack.c.l.b16 %v77
  %v290 = vunpack.c.h.b16 %v77
  %v291 = vunpack.c.l.b16 %v78
  %v292 = vunpack.c.h.b16 %v78
  %v293 = vunpack.c.l.b16 %v79
  %v294 = vunpack.c.h.b16 %v79
  %v295 = vunpack.c.l.b16 %v80
  %v296 = vunpack.c.h.b16 %v80
  %v297 = vunpack.c.l.b16 %v81
  %v298 = vunpack.c.h.b16 %v81
  %v299 = vpack.c.b16 %v173, %v171
  %v300 = vpack.c.b16 %v174, %v172
  %v301 = vpack.c.b16 %v177, %v175
  %v302 = vpack.c.b16 %v178, %v176
  %v303 = vpack.c.b16 %v181, %v179
  %v304 = vpack.c.b16 %v182, %v180
  %v305 = vpack.c.b16 %v185, %v183
  %v306 = vpack.c.b16 %v186, %v184
  %v307 = vpack.c.b16 %v189, %v187
  %v308 = vpack.c.b16 %v190, %v188
  %v309 = vpack.c.b16 %v193, %v191
  %v310 = vpack.c.b16 %v194, %v192
  %v311 = vpack.c.b16 %v197, %v195
  %v312 = vpack.c.b16 %v198, %v196
  %v313 = vpack.c.b16 %v201, %v199
  %v314 = vpack.c.b16 %v202, %v200
  %v315 = vpack.c.b16 %v205, %v203
  %v316 = vpack.c.b16 %v206, %v204
  %v317 = vpack.c.b16 %v209, %v207
  %v318 = vpack.c.b16 %v210, %v208
  %v319 = vpack.c.b16 %v213, %v211
  %v320 = vpack.c.b16 %v214, %v212
  %v321 = vpack.c.b16 %v217, %v215
  %v322 = vpack.c.b16 %v218, %v216
  %v323 = vpack.c.b16 %v221, %v219
  %v324 = vpack.c.b16 %v222, %v220
  %v325 = vpack.c.b16 %v225, %v223
  %v326 = vpack.c.b16 %v226, %v224
  %v327 = vpack.c.b16 %v229, %v227
  %v328 = vpack.c.b16 %v230, %v228
  %v329 = vpack.c.b16 %v233, %v231
  %v330 = vpack.c.b16 %v234, %v232
  %v331 = vpack.c.b16 %v237, %v235
  %v332 = vpack.c.b16 %v238, %v236
  %v333 = vpack.c.b16 %v241, %v239
  %v334 = vpack.c.b16 %v242, %v240
  %v335 = vpack.c.b16 %v245, %v243
  %v336 = vpack.c.b16 %v246, %v244
  %v337 = vpack.c.b16 %v249, %v247
  %v338 = vpack.c.b16 %v250, %v248
  %v339 = vpack.c.b16 %v253, %v251
  %v340 = vpack.c.b16 %v254, %v252
  %v341 = vpack.c.b16 %v257, %v255
  %v342 = vpack.c.b16 %v258, %v256
  %v343 = vpack.c.b16 %v261, %v259
  %v344 = vpack.c.b16 %v262, %v260
  %v345 = vpack.c.b16 %v265, %v263
  %v346 = vpack.c.b16 %v266, %v264
  %v347 = vpack.c.b16 %v269, %v267
  %v348 = vpack.c.b16 %v270, %v268
  %v349 = vpack.c.b16 %v273, %v271
  %v350 = vpack.c.b16 %v274, %v272
  %v351 = vpack.c.b16 %v277, %v275
  %v352 = vpack.c.b16 %v278, %v276
  %v353 = vpack.c.b16 %v281, %v279
  %v354 = vpack.c.b16 %v282, %v280
  %v355 = vpack.c.b16 %v285, %v283
  %v356 = vpack.c.b16 %v286, %v284
  %v357 = vpack.c.b16 %v289, %v287
  %v358 = vpack.c.b16 %v290, %v288
  %v359 = vpack.c.b16 %v293, %v291
  %v360 = vpack.c.b16 %v294, %v292
  %v361 = vpack.c.b16 %v297, %v295
  %v362 = vpack.c.b16 %v298, %v296
  %v413 = vunpack.c.l.b16 %v82
  %v414 = vunpack.c.l.b16 %v83
  %v415 = vunpack.c.l.b16 %v84
  %v416 = vunpack.c.l.b16 %v85
  %v417 = vunpack.c.l.b16 %v86
  %v418 = vunpack.c.l.b16 %v87
  %v419 = vunpack.c.l.b16 %v88
  %v420 = vunpack.c.l.b16 %v89
  %v421 = vunpack.c.l.b16 %v90
  %v422 = vunpack.c.l.b16 %v91
  %v423 = vunpack.c.l.b16 %v92
  %v424 = vunpack.c.l.b16 %v93
  %v425 = vunpack.c.l.b16 %v94
  %v426 = vunpack.c.l.b16 %v95
  %v427 = vunpack.c.l.b16 %v96
  %v428 = vunpack.c.l.b16 %v97
  %v429 = vunpack.c.l.b16 %v98
  %v430 = vunpack.c.l.b16 %v99
  %v431 = vpack.c.b16 %v414, %v413
  %v432 = vpack.c.b16 %v416, %v415
  %v433 = vpack.c.b16 %v418, %v417
  %v434 = vpack.c.b16 %v420, %v419
  %v435 = vpack.c.b16 %v422, %v421
  %v436 = vpack.c.b16 %v424, %v423
  %v437 = vpack.c.b16 %v426, %v425
  %v438 = vpack.c.b16 %v428, %v427
  %v439 = vpack.c.b16 %v430, %v429
  %vm449 = vcmask 130048
  %v451 = vsel %vm449, %v300, 0
  %v454 = vsel %vm449, %v302, 0
  %v457 = vsel %vm449, %v304, 0
  %v460 = vsel %vm449, %v306, 0
  %v463 = vsel %vm449, %v308, 0
  %v466 = vsel %vm449, %v310, 0
  %v469 = vsel %vm449, %v312, 0
  %v472 = vsel %vm449, %v314, 0
  %v475 = vsel %vm449, %v316, 0
  %v478 = vsel %vm449, %v318, 0
  %v481 = vsel %vm449, %v320, 0
  %v484 = vsel %vm449, %v322, 0
  %v487 = vsel %vm449, %v324, 0
  %v490 = vsel %vm449, %v326, 0
  %v493 = vsel %vm449, %v328, 0
  %v496 = vsel %vm449, %v330, 0
  %v499 = vsel %vm449, %v332, 0
  %v502 = vsel %vm449, %v334, 0
  %v505 = vsel %vm449, %v336, 0
  %v508 = vsel %vm449, %v338, 0
  %v511 = vsel %vm449, %v340, 0
  %v514 = vsel %vm449, %v342, 0
  %v517 = vsel %vm449, %v344, 0
  %v520 = vsel %vm449, %v346, 0
  %v523 = vsel %vm449, %v348, 0
  %v526 = vsel %vm449, %v350, 0
  %v529 = vsel %vm449, %v352, 0
  %v532 = vsel %vm449, %v354, 0
  %v535 = vsel %vm449, %v356, 0
  %v538 = vsel %vm449, %v358, 0
  %v541 = vsel %vm449, %v360, 0
  %v544 = vsel %vm449, %v362, 0
  %546 = vmatprep.subr.bf16.mxu0 0
  %547 = vmatpush1.bf16.msra.mxu0 %v431
  %548 = vmatprep.subr.bf16.mxu0 0
  %549 = vmatpush1.bf16.msra.mxu0 %v432
  %550 = vmatprep.subr.bf16.mxu0 0
  %551 = vmatpush1.bf16.msra.mxu0 %v433
  %552 = vmatprep.subr.bf16.mxu0 0
  %553 = vmatpush1.bf16.msra.mxu0 %v434
  %554 = vmatprep.subr.bf16.mxu0 0
  %555 = vmatpush1.bf16.msra.mxu0 %v435
  %556 = vmatprep.subr.bf16.mxu0 0
  %557 = vmatpush1.bf16.msra.mxu0 %v436
  %558 = vmatprep.subr.bf16.mxu0 0
  %559 = vmatpush1.bf16.msra.mxu0 %v437
  %560 = vmatprep.subr.bf16.mxu0 0
  %561 = vmatpush1.bf16.msra.mxu0 %v438
  %562 = vmatprep.subr.bf16.mxu0 0
  %563 = vmatpush1.bf16.msra.mxu0 %v439
  %564 = vmatprep.subr.bf16.mxu0 0
  %565 = vmatpush1.bf16.msra.mxu0 0
  %566 = vmatprep.subr.bf16.mxu0 0
  %567 = vmatpush1.bf16.msra.mxu0 0
  %568 = vmatprep.subr.bf16.mxu0 0
  %569 = vmatpush1.bf16.msra.mxu0 0
  %570 = vmatprep.subr.bf16.mxu0 0
  %571 = vmatpush1.bf16.msra.mxu0 0
  %572 = vmatprep.subr.bf16.mxu0 0
  %573 = vmatpush1.bf16.msra.mxu0 0
  %574 = vmatprep.subr.bf16.mxu0 0
  %575 = vmatpush1.bf16.msra.mxu0 0
  %576 = vmatprep.subr.bf16.mxu0 0
  %577 = vmatpush1.bf16.msra.mxu0 0
  %578 = vmatprep.mubr.bf16.mxu0 %v451
  %579 = vmatmul.mubr.bf16.gmra.mrb[0].mxu0 %v299
  %v580 = vpop.f32.mrb[0].mxu0
  %v581 = vadd.f32 %v105, %v580
  %v582 = vpop.f32.mrb[0].mxu0
  %v583 = vpop.f32.mrb[0].mxu0
  %v584 = vadd.f32 %v105, %v583
  %v585 = vpop.f32.mrb[0].mxu0
  %586 = vmatprep.mubr.bf16.mxu0 %v454
  %587 = vmatmul.mubr.bf16.gmra.mrb[0].mxu0 %v301
  %v588 = vpop.f32.mrb[0].mxu0
  %v589 = vadd.f32 %v105, %v588
  %v590 = vpop.f32.mrb[0].mxu0
  %v591 = vpop.f32.mrb[0].mxu0
  %v592 = vadd.f32 %v105, %v591
  %v593 = vpop.f32.mrb[0].mxu0
  %594 = vmatprep.mubr.bf16.mxu0 %v457
  %595 = vmatmul.mubr.bf16.gmra.mrb[0].mxu0 %v303
  %v596 = vpop.f32.mrb[0].mxu0
  %v597 = vadd.f32 %v105, %v596
  %v598 = vpop.f32.mrb[0].mxu0
  %v599 = vpop.f32.mrb[0].mxu0
  %v600 = vadd.f32 %v105, %v599
  %v601 = vpop.f32.mrb[0].mxu0
  %602 = vmatprep.mubr.bf16.mxu0 %v460
  %603 = vmatmul.mubr.bf16.gmra.mrb[0].mxu0 %v305
  %v604 = vpop.f32.mrb[0].mxu0
  %v605 = vadd.f32 %v105, %v604
  %v606 = vpop.f32.mrb[0].mxu0
  %v607 = vpop.f32.mrb[0].mxu0
  %v608 = vadd.f32 %v105, %v607
  %v609 = vpop.f32.mrb[0].mxu0
  %610 = vmatprep.mubr.bf16.mxu0 %v463
  %611 = vmatmul.mubr.bf16.gmra.mrb[0].mxu0 %v307
  %v612 = vpop.f32.mrb[0].mxu0
  %v613 = vadd.f32 %v105, %v612
  %v614 = vpop.f32.mrb[0].mxu0
  %v615 = vpop.f32.mrb[0].mxu0
  %v616 = vadd.f32 %v105, %v615
  %v617 = vpop.f32.mrb[0].mxu0
  %618 = vmatprep.mubr.bf16.mxu0 %v466
  %619 = vmatmul.mubr.bf16.gmra.mrb[0].mxu0 %v309
  %v620 = vpop.f32.mrb[0].mxu0
  %v621 = vadd.f32 %v105, %v620
  %v622 = vpop.f32.mrb[0].mxu0
  %v623 = vpop.f32.mrb[0].mxu0
  %v624 = vadd.f32 %v105, %v623
  %v625 = vpop.f32.mrb[0].mxu0
  %626 = vmatprep.mubr.bf16.mxu0 %v469
  %627 = vmatmul.mubr.bf16.gmra.mrb[0].mxu0 %v311
  %v628 = vpop.f32.mrb[0].mxu0
  %v629 = vadd.f32 %v105, %v628
  %v630 = vpop.f32.mrb[0].mxu0
  %v631 = vpop.f32.mrb[0].mxu0
  %v632 = vadd.f32 %v105, %v631
  %v633 = vpop.f32.mrb[0].mxu0
  %634 = vmatprep.mubr.bf16.mxu0 %v472
  %635 = vmatmul.mubr.bf16.gmra.mrb[0].mxu0 %v313
  %v636 = vpop.f32.mrb[0].mxu0
  %v637 = vadd.f32 %v105, %v636
  %v638 = vpop.f32.mrb[0].mxu0
  %v639 = vpop.f32.mrb[0].mxu0
  %v640 = vadd.f32 %v105, %v639
  %v641 = vpop.f32.mrb[0].mxu0
  %642 = vmatprep.mubr.bf16.mxu0 %v475
  %643 = vmatmul.mubr.bf16.gmra.mrb[0].mxu0 %v315
  %v644 = vpop.f32.mrb[0].mxu0
  %v645 = vadd.f32 %v105, %v644
  %v646 = vpop.f32.mrb[0].mxu0
  %v647 = vpop.f32.mrb[0].mxu0
  %v648 = vadd.f32 %v105, %v647
  %v649 = vpop.f32.mrb[0].mxu0
  %650 = vmatprep.mubr.bf16.mxu0 %v478
  %651 = vmatmul.mubr.bf16.gmra.mrb[0].mxu0 %v317
  %v652 = vpop.f32.mrb[0].mxu0
  %v653 = vadd.f32 %v105, %v652
  %v654 = vpop.f32.mrb[0].mxu0
  %v655 = vpop.f32.mrb[0].mxu0
  %v656 = vadd.f32 %v105, %v655
  %v657 = vpop.f32.mrb[0].mxu0
  %658 = vmatprep.mubr.bf16.mxu0 %v481
  %659 = vmatmul.mubr.bf16.gmra.mrb[0].mxu0 %v319
  %v660 = vpop.f32.mrb[0].mxu0
  %v661 = vadd.f32 %v105, %v660
  %v662 = vpop.f32.mrb[0].mxu0
  %v663 = vpop.f32.mrb[0].mxu0
  %v664 = vadd.f32 %v105, %v663
  %v665 = vpop.f32.mrb[0].mxu0
  %666 = vmatprep.mubr.bf16.mxu0 %v484
  %667 = vmatmul.mubr.bf16.gmra.mrb[0].mxu0 %v321
  %v668 = vpop.f32.mrb[0].mxu0
  %v669 = vadd.f32 %v105, %v668
  %v670 = vpop.f32.mrb[0].mxu0
  %v671 = vpop.f32.mrb[0].mxu0
  %v672 = vadd.f32 %v105, %v671
  %v673 = vpop.f32.mrb[0].mxu0
  %674 = vmatprep.mubr.bf16.mxu0 %v487
  %675 = vmatmul.mubr.bf16.gmra.mrb[0].mxu0 %v323
  %v676 = vpop.f32.mrb[0].mxu0
  %v677 = vadd.f32 %v105, %v676
  %v678 = vpop.f32.mrb[0].mxu0
  %v679 = vpop.f32.mrb[0].mxu0
  %v680 = vadd.f32 %v105, %v679
  %v681 = vpop.f32.mrb[0].mxu0
  %682 = vmatprep.mubr.bf16.mxu0 %v490
  %683 = vmatmul.mubr.bf16.gmra.mrb[0].mxu0 %v325
  %v684 = vpop.f32.mrb[0].mxu0
  %v685 = vadd.f32 %v105, %v684
  %v686 = vpop.f32.mrb[0].mxu0
  %v687 = vpop.f32.mrb[0].mxu0
  %v688 = vadd.f32 %v105, %v687
  %v689 = vpop.f32.mrb[0].mxu0
  %690 = vmatprep.mubr.bf16.mxu0 %v493
  %691 = vmatmul.mubr.bf16.gmra.mrb[0].mxu0 %v327
  %v692 = vpop.f32.mrb[0].mxu0
  %v693 = vadd.f32 %v105, %v692
  %v694 = vpop.f32.mrb[0].mxu0
  %v695 = vpop.f32.mrb[0].mxu0
  %v696 = vadd.f32 %v105, %v695
  %v697 = vpop.f32.mrb[0].mxu0
  %698 = vmatprep.mubr.bf16.mxu0 %v496
  %699 = vmatmul.mubr.bf16.gmra.mrb[0].mxu0 %v329
  %v700 = vpop.f32.mrb[0].mxu0
  %v701 = vadd.f32 %v105, %v700
  %v702 = vpop.f32.mrb[0].mxu0
  %v703 = vpop.f32.mrb[0].mxu0
  %v704 = vadd.f32 %v105, %v703
  %v705 = vpop.f32.mrb[0].mxu0
  %706 = vmatprep.mubr.bf16.mxu0 %v499
  %707 = vmatmul.mubr.bf16.gmra.mrb[0].mxu0 %v331
  %v708 = vpop.f32.mrb[0].mxu0
  %v709 = vadd.f32 %v105, %v708
  %v710 = vpop.f32.mrb[0].mxu0
  %v711 = vpop.f32.mrb[0].mxu0
  %v712 = vadd.f32 %v105, %v711
  %v713 = vpop.f32.mrb[0].mxu0
  %714 = vmatprep.mubr.bf16.mxu0 %v502
  %715 = vmatmul.mubr.bf16.gmra.mrb[0].mxu0 %v333
  %v716 = vpop.f32.mrb[0].mxu0
  %v717 = vadd.f32 %v105, %v716
  %v718 = vpop.f32.mrb[0].mxu0
  %v719 = vpop.f32.mrb[0].mxu0
  %v720 = vadd.f32 %v105, %v719
  %v721 = vpop.f32.mrb[0].mxu0
  %722 = vmatprep.mubr.bf16.mxu0 %v505
  %723 = vmatmul.mubr.bf16.gmra.mrb[0].mxu0 %v335
  %v724 = vpop.f32.mrb[0].mxu0
  %v725 = vadd.f32 %v105, %v724
  %v726 = vpop.f32.mrb[0].mxu0
  %v727 = vpop.f32.mrb[0].mxu0
  %v728 = vadd.f32 %v105, %v727
  %v729 = vpop.f32.mrb[0].mxu0
  %730 = vmatprep.mubr.bf16.mxu0 %v508
  %731 = vmatmul.mubr.bf16.gmra.mrb[0].mxu0 %v337
  %v732 = vpop.f32.mrb[0].mxu0
  %v733 = vadd.f32 %v105, %v732
  %v734 = vpop.f32.mrb[0].mxu0
  %v735 = vpop.f32.mrb[0].mxu0
  %v736 = vadd.f32 %v105, %v735
  %v737 = vpop.f32.mrb[0].mxu0
  %738 = vmatprep.mubr.bf16.mxu0 %v511
  %739 = vmatmul.mubr.bf16.gmra.mrb[0].mxu0 %v339
  %v740 = vpop.f32.mrb[0].mxu0
  %v741 = vadd.f32 %v105, %v740
  %v742 = vpop.f32.mrb[0].mxu0
  %v743 = vpop.f32.mrb[0].mxu0
  %v744 = vadd.f32 %v105, %v743
  %v745 = vpop.f32.mrb[0].mxu0
  %746 = vmatprep.mubr.bf16.mxu0 %v514
  %747 = vmatmul.mubr.bf16.gmra.mrb[0].mxu0 %v341
  %v748 = vpop.f32.mrb[0].mxu0
  %v749 = vadd.f32 %v105, %v748
  %v750 = vpop.f32.mrb[0].mxu0
  %v751 = vpop.f32.mrb[0].mxu0
  %v752 = vadd.f32 %v105, %v751
  %v753 = vpop.f32.mrb[0].mxu0
  %754 = vmatprep.mubr.bf16.mxu0 %v517
  %755 = vmatmul.mubr.bf16.gmra.mrb[0].mxu0 %v343
  %v756 = vpop.f32.mrb[0].mxu0
  %v757 = vadd.f32 %v105, %v756
  %v758 = vpop.f32.mrb[0].mxu0
  %v759 = vpop.f32.mrb[0].mxu0
  %v760 = vadd.f32 %v105, %v759
  %v761 = vpop.f32.mrb[0].mxu0
  %762 = vmatprep.mubr.bf16.mxu0 %v520
  %763 = vmatmul.mubr.bf16.gmra.mrb[0].mxu0 %v345
  %v764 = vpop.f32.mrb[0].mxu0
  %v765 = vadd.f32 %v105, %v764
  %v766 = vpop.f32.mrb[0].mxu0
  %v767 = vpop.f32.mrb[0].mxu0
  %v768 = vadd.f32 %v105, %v767
  %v769 = vpop.f32.mrb[0].mxu0
  %770 = vmatprep.mubr.bf16.mxu0 %v523
  %771 = vmatmul.mubr.bf16.gmra.mrb[0].mxu0 %v347
  %v772 = vpop.f32.mrb[0].mxu0
  %v773 = vadd.f32 %v105, %v772
  %v774 = vpop.f32.mrb[0].mxu0
  %v775 = vpop.f32.mrb[0].mxu0
  %v776 = vadd.f32 %v105, %v775
  %v777 = vpop.f32.mrb[0].mxu0
  %778 = vmatprep.mubr.bf16.mxu0 %v526
  %779 = vmatmul.mubr.bf16.gmra.mrb[0].mxu0 %v349
  %v780 = vpop.f32.mrb[0].mxu0
  %v781 = vadd.f32 %v105, %v780
  %v782 = vpop.f32.mrb[0].mxu0
  %v783 = vpop.f32.mrb[0].mxu0
  %v784 = vadd.f32 %v105, %v783
  %v785 = vpop.f32.mrb[0].mxu0
  %786 = vmatprep.mubr.bf16.mxu0 %v529
  %787 = vmatmul.mubr.bf16.gmra.mrb[0].mxu0 %v351
  %v788 = vpop.f32.mrb[0].mxu0
  %v789 = vadd.f32 %v105, %v788
  %v790 = vpop.f32.mrb[0].mxu0
  %v791 = vpop.f32.mrb[0].mxu0
  %v792 = vadd.f32 %v105, %v791
  %v793 = vpop.f32.mrb[0].mxu0
  %794 = vmatprep.mubr.bf16.mxu0 %v532
  %795 = vmatmul.mubr.bf16.gmra.mrb[0].mxu0 %v353
  %v796 = vpop.f32.mrb[0].mxu0
  %v797 = vadd.f32 %v105, %v796
  %v798 = vpop.f32.mrb[0].mxu0
  %v799 = vpop.f32.mrb[0].mxu0
  %v800 = vadd.f32 %v105, %v799
  %v801 = vpop.f32.mrb[0].mxu0
  %802 = vmatprep.mubr.bf16.mxu0 %v535
  %803 = vmatmul.mubr.bf16.gmra.mrb[0].mxu0 %v355
  %v804 = vpop.f32.mrb[0].mxu0
  %v805 = vadd.f32 %v105, %v804
  %v806 = vpop.f32.mrb[0].mxu0
  %v807 = vpop.f32.mrb[0].mxu0
  %v808 = vadd.f32 %v105, %v807
  %v809 = vpop.f32.mrb[0].mxu0
  %810 = vmatprep.mubr.bf16.mxu0 %v538
  %811 = vmatmul.mubr.bf16.gmra.mrb[0].mxu0 %v357
  %v812 = vpop.f32.mrb[0].mxu0
  %v813 = vadd.f32 %v105, %v812
  %v814 = vpop.f32.mrb[0].mxu0
  %v815 = vpop.f32.mrb[0].mxu0
  %v816 = vadd.f32 %v105, %v815
  %v817 = vpop.f32.mrb[0].mxu0
  %818 = vmatprep.mubr.bf16.mxu0 %v541
  %819 = vmatmul.mubr.bf16.gmra.mrb[0].mxu0 %v359
  %v820 = vpop.f32.mrb[0].mxu0
  %v821 = vadd.f32 %v105, %v820
  %v822 = vpop.f32.mrb[0].mxu0
  %v823 = vpop.f32.mrb[0].mxu0
  %v824 = vadd.f32 %v105, %v823
  %v825 = vpop.f32.mrb[0].mxu0
  %826 = vmatprep.mubr.bf16.mxu0 %v544
  %827 = vmatmul.mubr.bf16.gmra.mrb[0].mxu0 %v361
  %v828 = vpop.f32.mrb[0].mxu0
  %v829 = vadd.f32 %v105, %v828
  %v830 = vpop.f32.mrb[0].mxu0
  %v831 = vpop.f32.mrb[0].mxu0
  %v832 = vadd.f32 %v105, %v831
  %v833 = vpop.f32.mrb[0].mxu0
  %834 = vdwg.mxu0
  %v835 = vld [vmem:[%s3] sm:$0xf]
  %v836 = vld [vmem:[%s3 + $0x4] sm:$0xf]
  %v837 = vld [vmem:[%s3 + $0x8] sm:$0xf]
  %v838 = vld [vmem:[%s3 + $0xc] sm:$0xf]
  %v839 = vld [vmem:[%s3 + $0x10] sm:$0xf]
  %v840 = vld [vmem:[%s3 + $0x14] sm:$0xf]
  %v841 = vld [vmem:[%s3 + $0x18] sm:$0xf]
  %v842 = vld [vmem:[%s3 + $0x1c] sm:$0xf]
  %v843 = vld [vmem:[%s3 + $0x20] sm:$0xf]
  %v844 = vld [vmem:[%s3 + $0x24] sm:$0xf]
  %v845 = vld [vmem:[%s3 + $0x28] sm:$0xf]
  %v846 = vld [vmem:[%s3 + $0x2c] sm:$0xf]
  %v847 = vld [vmem:[%s3 + $0x30] sm:$0xf]
  %v848 = vld [vmem:[%s3 + $0x34] sm:$0xf]
  %v849 = vld [vmem:[%s3 + $0x38] sm:$0xf]
  %v850 = vld [vmem:[%s3 + $0x3c] sm:$0xf]
  %v851 = vld [vmem:[%s3 + $0x40] sm:$0xf]
  %v852 = vld [vmem:[%s3 + $0x44] sm:$0xf]
  %v853 = vld [vmem:[%s3 + $0x48] sm:$0xf]
  %v854 = vld [vmem:[%s3 + $0x4c] sm:$0xf]
  %v855 = vld [vmem:[%s3 + $0x50] sm:$0xf]
  %v856 = vld [vmem:[%s3 + $0x54] sm:$0xf]
  %v857 = vld [vmem:[%s3 + $0x58] sm:$0xf]
  %v858 = vld [vmem:[%s3 + $0x5c] sm:$0xf]
  %v859 = vld [vmem:[%s3 + $0x60] sm:$0xf]
  %v860 = vld [vmem:[%s3 + $0x64] sm:$0xf]
  %v861 = vld [vmem:[%s3 + $0x68] sm:$0xf]
  %v862 = vld [vmem:[%s3 + $0x6c] sm:$0xf]
  %v863 = vld [vmem:[%s3 + $0x70] sm:$0xf]
  %v864 = vld [vmem:[%s3 + $0x74] sm:$0xf]
  %v865 = vld [vmem:[%s3 + $0x78] sm:$0xf]
  %v866 = vld [vmem:[%s3 + $0x7c] sm:$0xf]
  %v867 = vld [vmem:[%s3 + $0x80] sm:$0xf]
  %v868 = vld [vmem:[%s3 + $0x84] sm:$0xf]
  %v869 = vld [vmem:[%s3 + $0x88] sm:$0xf]
  %v870 = vld [vmem:[%s3 + $0x8c] sm:$0xf]
  %v871 = vld [vmem:[%s3 + $0x90] sm:$0xf]
  %v872 = vld [vmem:[%s3 + $0x94] sm:$0xf]
  %v873 = vld [vmem:[%s3 + $0x98] sm:$0xf]
  %v874 = vld [vmem:[%s3 + $0x9c] sm:$0xf]
  %v875 = vld [vmem:[%s3 + $0xa0] sm:$0xf]
  %v876 = vld [vmem:[%s3 + $0xa4] sm:$0xf]
  %v877 = vld [vmem:[%s3 + $0xa8] sm:$0xf]
  %v878 = vld [vmem:[%s3 + $0xac] sm:$0xf]
  %v879 = vld [vmem:[%s3 + $0xb0] sm:$0xf]
  %v880 = vld [vmem:[%s3 + $0xb4] sm:$0xf]
  %v881 = vld [vmem:[%s3 + $0xb8] sm:$0xf]
  %v882 = vld [vmem:[%s3 + $0xbc] sm:$0xf]
  %v883 = vld [vmem:[%s3 + $0xc0] sm:$0xf]
  %v884 = vld [vmem:[%s3 + $0xc4] sm:$0xf]
  %v885 = vld [vmem:[%s3 + $0xc8] sm:$0xf]
  %v886 = vld [vmem:[%s3 + $0xcc] sm:$0xf]
  %v887 = vld [vmem:[%s3 + $0xd0] sm:$0xf]
  %v888 = vld [vmem:[%s3 + $0xd4] sm:$0xf]
  %v889 = vld [vmem:[%s3 + $0xd8] sm:$0xf]
  %v890 = vld [vmem:[%s3 + $0xdc] sm:$0xf]
  %v891 = vld [vmem:[%s3 + $0xe0] sm:$0xf]
  %v892 = vld [vmem:[%s3 + $0xe4] sm:$0xf]
  %v893 = vld [vmem:[%s3 + $0xe8] sm:$0xf]
  %v894 = vld [vmem:[%s3 + $0xec] sm:$0xf]
  %v895 = vld [vmem:[%s3 + $0xf0] sm:$0xf]
  %v896 = vld [vmem:[%s3 + $0xf4] sm:$0xf]
  %v897 = vld [vmem:[%s3 + $0xf8] sm:$0xf]
  %v898 = vld [vmem:[%s3 + $0xfc] sm:$0xf]
  %v899 = vunpack.c.l.bf16 %v835
  %v900 = vunpack.c.l.bf16 %v836
  %v901 = vunpack.c.l.bf16 %v837
  %v902 = vunpack.c.l.bf16 %v838
  %v903 = vunpack.c.l.bf16 %v839
  %v904 = vunpack.c.l.bf16 %v840
  %v905 = vunpack.c.l.bf16 %v841
  %v906 = vunpack.c.l.bf16 %v842
  %v907 = vunpack.c.l.bf16 %v843
  %v908 = vunpack.c.l.bf16 %v844
  %v909 = vunpack.c.l.bf16 %v845
  %v910 = vunpack.c.l.bf16 %v846
  %v911 = vunpack.c.l.bf16 %v847
  %v912 = vunpack.c.l.bf16 %v848
  %v913 = vunpack.c.l.bf16 %v849
  %v914 = vunpack.c.l.bf16 %v850
  %v915 = vunpack.c.l.bf16 %v851
  %v916 = vunpack.c.l.bf16 %v852
  %v917 = vunpack.c.l.bf16 %v853
  %v918 = vunpack.c.l.bf16 %v854
  %v919 = vunpack.c.l.bf16 %v855
  %v920 = vunpack.c.l.bf16 %v856
  %v921 = vunpack.c.l.bf16 %v857
  %v922 = vunpack.c.l.bf16 %v858
  %v923 = vunpack.c.l.bf16 %v859
  %v924 = vunpack.c.l.bf16 %v860
  %v925 = vunpack.c.l.bf16 %v861
  %v926 = vunpack.c.l.bf16 %v862
  %v927 = vunpack.c.l.bf16 %v863
  %v928 = vunpack.c.l.bf16 %v864
  %v929 = vunpack.c.l.bf16 %v865
  %v930 = vunpack.c.l.bf16 %v866
  %v931 = vunpack.c.l.bf16 %v867
  %v932 = vunpack.c.l.bf16 %v868
  %v933 = vunpack.c.l.bf16 %v869
  %v934 = vunpack.c.l.bf16 %v870
  %v935 = vunpack.c.l.bf16 %v871
  %v936 = vunpack.c.l.bf16 %v872
  %v937 = vunpack.c.l.bf16 %v873
  %v938 = vunpack.c.l.bf16 %v874
  %v939 = vunpack.c.l.bf16 %v875
  %v940 = vunpack.c.l.bf16 %v876
  %v941 = vunpack.c.l.bf16 %v877
  %v942 = vunpack.c.l.bf16 %v878
  %v943 = vunpack.c.l.bf16 %v879
  %v944 = vunpack.c.l.bf16 %v880
  %v945 = vunpack.c.l.bf16 %v881
  %v946 = vunpack.c.l.bf16 %v882
  %v947 = vunpack.c.l.bf16 %v883
  %v948 = vunpack.c.l.bf16 %v884
  %v949 = vunpack.c.l.bf16 %v885
  %v950 = vunpack.c.l.bf16 %v886
  %v951 = vunpack.c.l.bf16 %v887
  %v952 = vunpack.c.l.bf16 %v888
  %v953 = vunpack.c.l.bf16 %v889
  %v954 = vunpack.c.l.bf16 %v890
  %v955 = vunpack.c.l.bf16 %v891
  %v956 = vunpack.c.l.bf16 %v892
  %v957 = vunpack.c.l.bf16 %v893
  %v958 = vunpack.c.l.bf16 %v894
  %v959 = vunpack.c.l.bf16 %v895
  %v960 = vunpack.c.l.bf16 %v896
  %v961 = vunpack.c.l.bf16 %v897
  %v962 = vunpack.c.l.bf16 %v898
  %v963 = vadd.f32 %v581, %v899
  %v964 = vadd.f32 %v584, %v900
  %v965 = vadd.f32 %v589, %v901
  %v966 = vadd.f32 %v592, %v902
  %v967 = vadd.f32 %v597, %v903
  %v968 = vadd.f32 %v600, %v904
  %v969 = vadd.f32 %v605, %v905
  %v970 = vadd.f32 %v608, %v906
  %v971 = vadd.f32 %v613, %v907
  %v972 = vadd.f32 %v616, %v908
  %v973 = vadd.f32 %v621, %v909
  %v974 = vadd.f32 %v624, %v910
  %v975 = vadd.f32 %v629, %v911
  %v976 = vadd.f32 %v632, %v912
  %v977 = vadd.f32 %v637, %v913
  %v978 = vadd.f32 %v640, %v914
  %v979 = vadd.f32 %v645, %v915
  %v980 = vadd.f32 %v648, %v916
  %v981 = vadd.f32 %v653, %v917
  %v982 = vadd.f32 %v656, %v918
  %v983 = vadd.f32 %v661, %v919
  %v984 = vadd.f32 %v664, %v920
  %v985 = vadd.f32 %v669, %v921
  %v986 = vadd.f32 %v672, %v922
  %v987 = vadd.f32 %v677, %v923
  %v988 = vadd.f32 %v680, %v924
  %v989 = vadd.f32 %v685, %v925
  %v990 = vadd.f32 %v688, %v926
  %v991 = vadd.f32 %v693, %v927
  %v992 = vadd.f32 %v696, %v928
  %v993 = vadd.f32 %v701, %v929
  %v994 = vadd.f32 %v704, %v930
  %v995 = vadd.f32 %v709, %v931
  %v996 = vadd.f32 %v712, %v932
  %v997 = vadd.f32 %v717, %v933
  %v998 = vadd.f32 %v720, %v934
  %v999 = vadd.f32 %v725, %v935
  %v1000 = vadd.f32 %v728, %v936
  %v1001 = vadd.f32 %v733, %v937
  %v1002 = vadd.f32 %v736, %v938
  %v1003 = vadd.f32 %v741, %v939
  %v1004 = vadd.f32 %v744, %v940
  %v1005 = vadd.f32 %v749, %v941
  %v1006 = vadd.f32 %v752, %v942
  %v1007 = vadd.f32 %v757, %v943
  %v1008 = vadd.f32 %v760, %v944
  %v1009 = vadd.f32 %v765, %v945
  %v1010 = vadd.f32 %v768, %v946
  %v1011 = vadd.f32 %v773, %v947
  %v1012 = vadd.f32 %v776, %v948
  %v1013 = vadd.f32 %v781, %v949
  %v1014 = vadd.f32 %v784, %v950
  %v1015 = vadd.f32 %v789, %v951
  %v1016 = vadd.f32 %v792, %v952
  %v1017 = vadd.f32 %v797, %v953
  %v1018 = vadd.f32 %v800, %v954
  %v1019 = vadd.f32 %v805, %v955
  %v1020 = vadd.f32 %v808, %v956
  %v1021 = vadd.f32 %v813, %v957
  %v1022 = vadd.f32 %v816, %v958
  %v1023 = vadd.f32 %v821, %v959
  %v1024 = vadd.f32 %v824, %v960
  %v1025 = vadd.f32 %v829, %v961
  %v1026 = vadd.f32 %v832, %v962
  %v1027 = vmax.f32 %v963, 0.0
  %v1028 = vmax.f32 %v964, 0.0
  %v1029 = vmax.f32 %v965, 0.0
  %v1030 = vmax.f32 %v966, 0.0
  %v1031 = vmax.f32 %v967, 0.0
  %v1032 = vmax.f32 %v968, 0.0
  %v1033 = vmax.f32 %v969, 0.0
  %v1034 = vmax.f32 %v970, 0.0
  %v1035 = vmax.f32 %v971, 0.0
  %v1036 = vmax.f32 %v972, 0.0
  %v1037 = vmax.f32 %v973, 0.0
  %v1038 = vmax.f32 %v974, 0.0
  %v1039 = vmax.f32 %v975, 0.0
  %v1040 = vmax.f32 %v976, 0.0
  %v1041 = vmax.f32 %v977, 0.0
  %v1042 = vmax.f32 %v978, 0.0
  %v1043 = vmax.f32 %v979, 0.0
  %v1044 = vmax.f32 %v980, 0.0
  %v1045 = vmax.f32 %v981, 0.0
  %v1046 = vmax.f32 %v982, 0.0
  %v1047 = vmax.f32 %v983, 0.0
  %v1048 = vmax.f32 %v984, 0.0
  %v1049 = vmax.f32 %v985, 0.0
  %v1050 = vmax.f32 %v986, 0.0
  %v1051 = vmax.f32 %v987, 0.0
  %v1052 = vmax.f32 %v988, 0.0
  %v1053 = vmax.f32 %v989, 0.0
  %v1054 = vmax.f32 %v990, 0.0
  %v1055 = vmax.f32 %v991, 0.0
  %v1056 = vmax.f32 %v992, 0.0
  %v1057 = vmax.f32 %v993, 0.0
  %v1058 = vmax.f32 %v994, 0.0
  %v1059 = vmax.f32 %v995, 0.0
  %v1060 = vmax.f32 %v996, 0.0
  %v1061 = vmax.f32 %v997, 0.0
  %v1062 = vmax.f32 %v998, 0.0
  %v1063 = vmax.f32 %v999, 0.0
  %v1064 = vmax.f32 %v1000, 0.0
  %v1065 = vmax.f32 %v1001, 0.0
  %v1066 = vmax.f32 %v1002, 0.0
  %v1067 = vmax.f32 %v1003, 0.0
  %v1068 = vmax.f32 %v1004, 0.0
  %v1069 = vmax.f32 %v1005, 0.0
  %v1070 = vmax.f32 %v1006, 0.0
  %v1071 = vmax.f32 %v1007, 0.0
  %v1072 = vmax.f32 %v1008, 0.0
  %v1073 = vmax.f32 %v1009, 0.0
  %v1074 = vmax.f32 %v1010, 0.0
  %v1075 = vmax.f32 %v1011, 0.0
  %v1076 = vmax.f32 %v1012, 0.0
  %v1077 = vmax.f32 %v1013, 0.0
  %v1078 = vmax.f32 %v1014, 0.0
  %v1079 = vmax.f32 %v1015, 0.0
  %v1080 = vmax.f32 %v1016, 0.0
  %v1081 = vmax.f32 %v1017, 0.0
  %v1082 = vmax.f32 %v1018, 0.0
  %v1083 = vmax.f32 %v1019, 0.0
  %v1084 = vmax.f32 %v1020, 0.0
  %v1085 = vmax.f32 %v1021, 0.0
  %v1086 = vmax.f32 %v1022, 0.0
  %v1087 = vmax.f32 %v1023, 0.0
  %v1088 = vmax.f32 %v1024, 0.0
  %v1089 = vmax.f32 %v1025, 0.0
  %v1090 = vmax.f32 %v1026, 0.0
  %v1091 = vpack.c.bf16 %v1028, %v1027
  %v1092 = vpack.c.bf16 %v1030, %v1029
  %v1093 = vpack.c.bf16 %v1032, %v1031
  %v1094 = vpack.c.bf16 %v1034, %v1033
  %v1095 = vpack.c.bf16 %v1036, %v1035
  %v1096 = vpack.c.bf16 %v1038, %v1037
  %v1097 = vpack.c.bf16 %v1040, %v1039
  %v1098 = vpack.c.bf16 %v1042, %v1041
  %v1099 = vpack.c.bf16 %v1044, %v1043
  %v1100 = vpack.c.bf16 %v1046, %v1045
  %v1101 = vpack.c.bf16 %v1048, %v1047
  %v1102 = vpack.c.bf16 %v1050, %v1049
  %v1103 = vpack.c.bf16 %v1052, %v1051
  %v1104 = vpack.c.bf16 %v1054, %v1053
  %v1105 = vpack.c.bf16 %v1056, %v1055
  %v1106 = vpack.c.bf16 %v1058, %v1057
  %v1107 = vpack.c.bf16 %v1060, %v1059
  %v1108 = vpack.c.bf16 %v1062, %v1061
  %v1109 = vpack.c.bf16 %v1064, %v1063
  %v1110 = vpack.c.bf16 %v1066, %v1065
  %v1111 = vpack.c.bf16 %v1068, %v1067
  %v1112 = vpack.c.bf16 %v1070, %v1069
  %v1113 = vpack.c.bf16 %v1072, %v1071
  %v1114 = vpack.c.bf16 %v1074, %v1073
  %v1115 = vpack.c.bf16 %v1076, %v1075
  %v1116 = vpack.c.bf16 %v1078, %v1077
  %v1117 = vpack.c.bf16 %v1080, %v1079
  %v1118 = vpack.c.bf16 %v1082, %v1081
  %v1119 = vpack.c.bf16 %v1084, %v1083
  %v1120 = vpack.c.bf16 %v1086, %v1085
  %v1121 = vpack.c.bf16 %v1088, %v1087
  %v1122 = vpack.c.bf16 %v1090, %v1089
  %v1155 = vunpack.c.l.b16 %v1091
  %v1156 = vunpack.c.h.b16 %v1091
  %v1157 = vunpack.c.l.b16 %v1092
  %v1158 = vunpack.c.h.b16 %v1092
  %v1159 = vunpack.c.l.b16 %v1093
  %v1160 = vunpack.c.h.b16 %v1093
  %v1161 = vunpack.c.l.b16 %v1094
  %v1162 = vunpack.c.h.b16 %v1094
  %v1163 = vunpack.c.l.b16 %v1095
  %v1164 = vunpack.c.h.b16 %v1095
  %v1165 = vunpack.c.l.b16 %v1096
  %v1166 = vunpack.c.h.b16 %v1096
  %v1167 = vunpack.c.l.b16 %v1097
  %v1168 = vunpack.c.h.b16 %v1097
  %v1169 = vunpack.c.l.b16 %v1098
  %v1170 = vunpack.c.h.b16 %v1098
  %v1171 = vunpack.c.l.b16 %v1099
  %v1172 = vunpack.c.h.b16 %v1099
  %v1173 = vunpack.c.l.b16 %v1100
  %v1174 = vunpack.c.h.b16 %v1100
  %v1175 = vunpack.c.l.b16 %v1101
  %v1176 = vunpack.c.h.b16 %v1101
  %v1177 = vunpack.c.l.b16 %v1102
  %v1178 = vunpack.c.h.b16 %v1102
  %v1179 = vunpack.c.l.b16 %v1103
  %v1180 = vunpack.c.h.b16 %v1103
  %v1181 = vunpack.c.l.b16 %v1104
  %v1182 = vunpack.c.h.b16 %v1104
  %v1183 = vunpack.c.l.b16 %v1105
  %v1184 = vunpack.c.h.b16 %v1105
  %v1185 = vunpack.c.l.b16 %v1106
  %v1186 = vunpack.c.h.b16 %v1106
  %v1187 = vunpack.c.l.b16 %v1107
  %v1188 = vunpack.c.h.b16 %v1107
  %v1189 = vunpack.c.l.b16 %v1108
  %v1190 = vunpack.c.h.b16 %v1108
  %v1191 = vunpack.c.l.b16 %v1109
  %v1192 = vunpack.c.h.b16 %v1109
  %v1193 = vunpack.c.l.b16 %v1110
  %v1194 = vunpack.c.h.b16 %v1110
  %v1195 = vunpack.c.l.b16 %v1111
  %v1196 = vunpack.c.h.b16 %v1111
  %v1197 = vunpack.c.l.b16 %v1112
  %v1198 = vunpack.c.h.b16 %v1112
  %v1199 = vunpack.c.l.b16 %v1113
  %v1200 = vunpack.c.h.b16 %v1113
  %v1201 = vunpack.c.l.b16 %v1114
  %v1202 = vunpack.c.h.b16 %v1114
  %v1203 = vunpack.c.l.b16 %v1115
  %v1204 = vunpack.c.h.b16 %v1115
  %v1205 = vunpack.c.l.b16 %v1116
  %v1206 = vunpack.c.h.b16 %v1116
  %v1207 = vunpack.c.l.b16 %v1117
  %v1208 = vunpack.c.h.b16 %v1117
  %v1209 = vunpack.c.l.b16 %v1118
  %v1210 = vunpack.c.h.b16 %v1118
  %v1211 = vunpack.c.l.b16 %v1119
  %v1212 = vunpack.c.h.b16 %v1119
  %v1213 = vunpack.c.l.b16 %v1120
  %v1214 = vunpack.c.h.b16 %v1120
  %v1215 = vunpack.c.l.b16 %v1121
  %v1216 = vunpack.c.h.b16 %v1121
  %v1217 = vunpack.c.l.b16 %v1122
  %v1218 = vunpack.c.h.b16 %v1122
  %v1219 = vpack.c.b16 %v1155, %v1155
  %v1220 = vpack.c.b16 %v1156, %v1156
  %v1221 = vpack.c.b16 %v1157, %v1157
  %v1222 = vpack.c.b16 %v1158, %v1158
  %v1223 = vpack.c.b16 %v1159, %v1159
  %v1224 = vpack.c.b16 %v1160, %v1160
  %v1225 = vpack.c.b16 %v1161, %v1161
  %v1226 = vpack.c.b16 %v1162, %v1162
  %v1227 = vpack.c.b16 %v1163, %v1163
  %v1228 = vpack.c.b16 %v1164, %v1164
  %v1229 = vpack.c.b16 %v1165, %v1165
  %v1230 = vpack.c.b16 %v1166, %v1166
  %v1231 = vpack.c.b16 %v1167, %v1167
  %v1232 = vpack.c.b16 %v1168, %v1168
  %v1233 = vpack.c.b16 %v1169, %v1169
  %v1234 = vpack.c.b16 %v1170, %v1170
  %v1235 = vpack.c.b16 %v1171, %v1171
  %v1236 = vpack.c.b16 %v1172, %v1172
  %v1237 = vpack.c.b16 %v1173, %v1173
  %v1238 = vpack.c.b16 %v1174, %v1174
  %v1239 = vpack.c.b16 %v1175, %v1175
  %v1240 = vpack.c.b16 %v1176, %v1176
  %v1241 = vpack.c.b16 %v1177, %v1177
  %v1242 = vpack.c.b16 %v1178, %v1178
  %v1243 = vpack.c.b16 %v1179, %v1179
  %v1244 = vpack.c.b16 %v1180, %v1180
  %v1245 = vpack.c.b16 %v1181, %v1181
  %v1246 = vpack.c.b16 %v1182, %v1182
  %v1247 = vpack.c.b16 %v1183, %v1183
  %v1248 = vpack.c.b16 %v1184, %v1184
  %v1249 = vpack.c.b16 %v1185, %v1185
  %v1250 = vpack.c.b16 %v1186, %v1186
  %v1251 = vpack.c.b16 %v1187, %v1187
  %v1252 = vpack.c.b16 %v1188, %v1188
  %v1253 = vpack.c.b16 %v1189, %v1189
  %v1254 = vpack.c.b16 %v1190, %v1190
  %v1255 = vpack.c.b16 %v1191, %v1191
  %v1256 = vpack.c.b16 %v1192, %v1192
  %v1257 = vpack.c.b16 %v1193, %v1193
  %v1258 = vpack.c.b16 %v1194, %v1194
  %v1259 = vpack.c.b16 %v1195, %v1195
  %v1260 = vpack.c.b16 %v1196, %v1196
  %v1261 = vpack.c.b16 %v1197, %v1197
  %v1262 = vpack.c.b16 %v1198, %v1198
  %v1263 = vpack.c.b16 %v1199, %v1199
  %v1264 = vpack.c.b16 %v1200, %v1200
  %v1265 = vpack.c.b16 %v1201, %v1201
  %v1266 = vpack.c.b16 %v1202, %v1202
  %v1267 = vpack.c.b16 %v1203, %v1203
  %v1268 = vpack.c.b16 %v1204, %v1204
  %v1269 = vpack.c.b16 %v1205, %v1205
  %v1270 = vpack.c.b16 %v1206, %v1206
  %v1271 = vpack.c.b16 %v1207, %v1207
  %v1272 = vpack.c.b16 %v1208, %v1208
  %v1273 = vpack.c.b16 %v1209, %v1209
  %v1274 = vpack.c.b16 %v1210, %v1210
  %v1275 = vpack.c.b16 %v1211, %v1211
  %v1276 = vpack.c.b16 %v1212, %v1212
  %v1277 = vpack.c.b16 %v1213, %v1213
  %v1278 = vpack.c.b16 %v1214, %v1214
  %v1279 = vpack.c.b16 %v1215, %v1215
  %v1280 = vpack.c.b16 %v1216, %v1216
  %v1281 = vpack.c.b16 %v1217, %v1217
  %v1282 = vpack.c.b16 %v1218, %v1218
  %vm1347 = vcmask 125952
  %1348 = vst.msk [vmem:[%s4] sm:$0xf] %vm1347, %v1219
  %1349 = vst.msk [vmem:[%s4 + $0x4] sm:$0xf] %vm1347, %v1220
  %1350 = vst.msk [vmem:[%s4 + $0x8] sm:$0xf] %vm1347, %v1221
  %1351 = vst.msk [vmem:[%s4 + $0xc] sm:$0xf] %vm1347, %v1222
  %1352 = vst.msk [vmem:[%s4 + $0x10] sm:$0xf] %vm1347, %v1223
  %1353 = vst.msk [vmem:[%s4 + $0x14] sm:$0xf] %vm1347, %v1224
  %1354 = vst.msk [vmem:[%s4 + $0x18] sm:$0xf] %vm1347, %v1225
  %1355 = vst.msk [vmem:[%s4 + $0x1c] sm:$0xf] %vm1347, %v1226
  %1356 = vst.msk [vmem:[%s4 + $0x20] sm:$0xf] %vm1347, %v1227
  %1357 = vst.msk [vmem:[%s4 + $0x24] sm:$0xf] %vm1347, %v1228
  %1358 = vst.msk [vmem:[%s4 + $0x28] sm:$0xf] %vm1347, %v1229
  %1359 = vst.msk [vmem:[%s4 + $0x2c] sm:$0xf] %vm1347, %v1230
  %1360 = vst.msk [vmem:[%s4 + $0x30] sm:$0xf] %vm1347, %v1231
  %1361 = vst.msk [vmem:[%s4 + $0x34] sm:$0xf] %vm1347, %v1232
  %1362 = vst.msk [vmem:[%s4 + $0x38] sm:$0xf] %vm1347, %v1233
  %1363 = vst.msk [vmem:[%s4 + $0x3c] sm:$0xf] %vm1347, %v1234
  %1364 = vst.msk [vmem:[%s4 + $0x40] sm:$0xf] %vm1347, %v1235
  %1365 = vst.msk [vmem:[%s4 + $0x44] sm:$0xf] %vm1347, %v1236
  %1366 = vst.msk [vmem:[%s4 + $0x48] sm:$0xf] %vm1347, %v1237
  %1367 = vst.msk [vmem:[%s4 + $0x4c] sm:$0xf] %vm1347, %v1238
  %1368 = vst.msk [vmem:[%s4 + $0x50] sm:$0xf] %vm1347, %v1239
  %1369 = vst.msk [vmem:[%s4 + $0x54] sm:$0xf] %vm1347, %v1240
  %1370 = vst.msk [vmem:[%s4 + $0x58] sm:$0xf] %vm1347, %v1241
  %1371 = vst.msk [vmem:[%s4 + $0x5c] sm:$0xf] %vm1347, %v1242
  %1372 = vst.msk [vmem:[%s4 + $0x60] sm:$0xf] %vm1347, %v1243
  %1373 = vst.msk [vmem:[%s4 + $0x64] sm:$0xf] %vm1347, %v1244
  %1374 = vst.msk [vmem:[%s4 + $0x68] sm:$0xf] %vm1347, %v1245
  %1375 = vst.msk [vmem:[%s4 + $0x6c] sm:$0xf] %vm1347, %v1246
  %1376 = vst.msk [vmem:[%s4 + $0x70] sm:$0xf] %vm1347, %v1247
  %1377 = vst.msk [vmem:[%s4 + $0x74] sm:$0xf] %vm1347, %v1248
  %1378 = vst.msk [vmem:[%s4 + $0x78] sm:$0xf] %vm1347, %v1249
  %1379 = vst.msk [vmem:[%s4 + $0x7c] sm:$0xf] %vm1347, %v1250
  %1380 = vst.msk [vmem:[%s4 + $0x80] sm:$0xf] %vm1347, %v1251
  %1381 = vst.msk [vmem:[%s4 + $0x84] sm:$0xf] %vm1347, %v1252
  %1382 = vst.msk [vmem:[%s4 + $0x88] sm:$0xf] %vm1347, %v1253
  %1383 = vst.msk [vmem:[%s4 + $0x8c] sm:$0xf] %vm1347, %v1254
  %1384 = vst.msk [vmem:[%s4 + $0x90] sm:$0xf] %vm1347, %v1255
  %1385 = vst.msk [vmem:[%s4 + $0x94] sm:$0xf] %vm1347, %v1256
  %1386 = vst.msk [vmem:[%s4 + $0x98] sm:$0xf] %vm1347, %v1257
  %1387 = vst.msk [vmem:[%s4 + $0x9c] sm:$0xf] %vm1347, %v1258
  %1388 = vst.msk [vmem:[%s4 + $0xa0] sm:$0xf] %vm1347, %v1259
  %1389 = vst.msk [vmem:[%s4 + $0xa4] sm:$0xf] %vm1347, %v1260
  %1390 = vst.msk [vmem:[%s4 + $0xa8] sm:$0xf] %vm1347, %v1261
  %1391 = vst.msk [vmem:[%s4 + $0xac] sm:$0xf] %vm1347, %v1262
  %1392 = vst.msk [vmem:[%s4 + $0xb0] sm:$0xf] %vm1347, %v1263
  %1393 = vst.msk [vmem:[%s4 + $0xb4] sm:$0xf] %vm1347, %v1264
  %1394 = vst.msk [vmem:[%s4 + $0xb8] sm:$0xf] %vm1347, %v1265
  %1395 = vst.msk [vmem:[%s4 + $0xbc] sm:$0xf] %vm1347, %v1266
  %1396 = vst.msk [vmem:[%s4 + $0xc0] sm:$0xf] %vm1347, %v1267
  %1397 = vst.msk [vmem:[%s4 + $0xc4] sm:$0xf] %vm1347, %v1268
  %1398 = vst.msk [vmem:[%s4 + $0xc8] sm:$0xf] %vm1347, %v1269
  %1399 = vst.msk [vmem:[%s4 + $0xcc] sm:$0xf] %vm1347, %v1270
  %1400 = vst.msk [vmem:[%s4 + $0xd0] sm:$0xf] %vm1347, %v1271
  %1401 = vst.msk [vmem:[%s4 + $0xd4] sm:$0xf] %vm1347, %v1272
  %1402 = vst.msk [vmem:[%s4 + $0xd8] sm:$0xf] %vm1347, %v1273
  %1403 = vst.msk [vmem:[%s4 + $0xdc] sm:$0xf] %vm1347, %v1274
  %1404 = vst.msk [vmem:[%s4 + $0xe0] sm:$0xf] %vm1347, %v1275
  %1405 = vst.msk [vmem:[%s4 + $0xe4] sm:$0xf] %vm1347, %v1276
  %1406 = vst.msk [vmem:[%s4 + $0xe8] sm:$0xf] %vm1347, %v1277
  %1407 = vst.msk [vmem:[%s4 + $0xec] sm:$0xf] %vm1347, %v1278
  %1408 = vst.msk [vmem:[%s4 + $0xf0] sm:$0xf] %vm1347, %v1279
  %1409 = vst.msk [vmem:[%s4 + $0xf4] sm:$0xf] %vm1347, %v1280
  %1410 = vst.msk [vmem:[%s4 + $0xf8] sm:$0xf] %vm1347, %v1281
  %1411 = vst.msk [vmem:[%s4 + $0xfc] sm:$0xf] %vm1347, %v1282
  // Predicated region
  $region18: #{resnet_forward.24} parent=0 // pred_check
    _
  $region19: #{resnet_forward.24} parent=0 // pred_check_branch
    %1413 = sbr.rel (0) target = $region21
  $region20: #{resnet_forward.24} parent=0 // pred_region
    _
  $region21: #{resnet_forward.24} parent=0 // pred_fallthru
    _
  // Predicated region
  $region22: #{resnet_forward.24} parent=0 // pred_check
    _
  $region23: #{resnet_forward.24} parent=0 // pred_check_branch
    %1415 = sbr.rel (0) target = $region25
  $region24: #{resnet_forward.24} parent=0 // pred_region
    _
  $region25: #{resnet_forward.24} parent=0 // pred_fallthru
    _

// kernel: resnet_forward.27
$region0: #{resnet_forward.27}
  #allocation0 [shape = 'u32[]', space=smem, size = 0x4, offset = 0x4, fixed_abs, tag = 'smem constant byte address 0x4 - core index']
  #allocation1 [shape = 'u32[144,128]{1,0:T(1,128)}', space=vmem, size = 0x12000, scoped, tag = 'internal scratch']
  %s0 = inlined_call_operand.vmem [shape: bf16[128,144], index: 0, kind: input, shape index: {}]
  %s1 = inlined_call_operand.vmem [shape: bf16[144,32], index: 1, kind: input, shape index: {}]
  %s2 = inlined_call_operand.vmem [shape: f32[1,32], index: 2, kind: input, shape index: {}]
  %s3 = inlined_call_operand.vmem [shape: bf16[128,32], index: 3, kind: output, shape index: {}]
  %s4 = sld [smem:[#allocation0]]
  $region22: #{resnet_forward.27} parent=0
    _
  %s6 = ssub.s32 1, %s4
  %s7 = scalar_select 0, %s6, %s4
  // Predicated region
  $region2: #{resnet_forward.27} parent=0 // pred_check
    _
  $region3: #{resnet_forward.27} parent=0 // pred_check_branch
    %9 = sbr.rel (0) target = $region5
  $region4: #{resnet_forward.27} parent=0 // pred_region
    _
  $region5: #{resnet_forward.27} parent=0 // pred_fallthru
    _
  // Predicated region
  $region6: #{resnet_forward.27} parent=0 // pred_check
    _
  $region7: #{resnet_forward.27} parent=0 // pred_check_branch
    %11 = sbr.rel (0) target = $region9
  $region8: #{resnet_forward.27} parent=0 // pred_region
    _
  $region9: #{resnet_forward.27} parent=0 // pred_fallthru
    _
  // Predicated region
  $region10: #{resnet_forward.27} parent=0 // pred_check
    _
  $region11: #{resnet_forward.27} parent=0 // pred_check_branch
    %13 = sbr.rel (0) target = $region13
  $region12: #{resnet_forward.27} parent=0 // pred_region
    _
  $region13: #{resnet_forward.27} parent=0 // pred_fallthru
    _
  %v15 = vld [vmem:[%s0] sm:$0xff]
  %v16 = vld [vmem:[%s0 + $0x8] sm:$0xff]
  %v17 = vld [vmem:[%s0 + $0x10] sm:$0xff]
  %v18 = vld [vmem:[%s0 + $0x18] sm:$0xff]
  %v19 = vld [vmem:[%s0 + $0x20] sm:$0xff]
  %v20 = vld [vmem:[%s0 + $0x28] sm:$0xff]
  %v21 = vld [vmem:[%s0 + $0x30] sm:$0xff]
  %v22 = vld [vmem:[%s0 + $0x38] sm:$0xff]
  %v23 = vld [vmem:[%s0 + $0x40] sm:$0xff]
  %v24 = vld [vmem:[%s0 + $0x48] sm:$0xff]
  %v25 = vld [vmem:[%s0 + $0x50] sm:$0xff]
  %v26 = vld [vmem:[%s0 + $0x58] sm:$0xff]
  %v27 = vld [vmem:[%s0 + $0x60] sm:$0xff]
  %v28 = vld [vmem:[%s0 + $0x68] sm:$0xff]
  %v29 = vld [vmem:[%s0 + $0x70] sm:$0xff]
  %v30 = vld [vmem:[%s0 + $0x78] sm:$0xff]
  %v31 = vld [vmem:[%s1] sm:$0xf]
  %v32 = vld [vmem:[%s1 + $0x4] sm:$0xf]
  %v33 = vld [vmem:[%s1 + $0x8] sm:$0xf]
  %v34 = vld [vmem:[%s1 + $0xc] sm:$0xf]
  %v35 = vld [vmem:[%s1 + $0x10] sm:$0xf]
  %v36 = vld [vmem:[%s1 + $0x14] sm:$0xf]
  %v37 = vld [vmem:[%s1 + $0x18] sm:$0xf]
  %v38 = vld [vmem:[%s1 + $0x1c] sm:$0xf]
  %v39 = vld [vmem:[%s1 + $0x20] sm:$0xf]
  %v40 = vld [vmem:[%s1 + $0x24] sm:$0xf]
  %v41 = vld [vmem:[%s1 + $0x28] sm:$0xf]
  %v42 = vld [vmem:[%s1 + $0x2c] sm:$0xf]
  %v43 = vld [vmem:[%s1 + $0x30] sm:$0xf]
  %v44 = vld [vmem:[%s1 + $0x34] sm:$0xf]
  %v45 = vld [vmem:[%s1 + $0x38] sm:$0xf]
  %v46 = vld [vmem:[%s1 + $0x3c] sm:$0xf]
  %v47 = vld [vmem:[%s1 + $0x40] sm:$0xf]
  %v48 = vld [vmem:[%s1 + $0x44] sm:$0xf]
  %v49 = vld [vmem:[%s2] sm:$0x1]
  %v51 = vlaneseq
  %v52 = vshrl.u32 %v51, 7
  %v53 = vsub.s32 0, %v52
  %v54 = vrot.slane %v49, %v53
  %v72 = vunpack.c.l.b16 %v15
  %v73 = vunpack.c.h.b16 %v15
  %v74 = vunpack.c.l.b16 %v16
  %v75 = vunpack.c.h.b16 %v16
  %v76 = vunpack.c.l.b16 %v17
  %v77 = vunpack.c.h.b16 %v17
  %v78 = vunpack.c.l.b16 %v18
  %v79 = vunpack.c.h.b16 %v18
  %v80 = vunpack.c.l.b16 %v19
  %v81 = vunpack.c.h.b16 %v19
  %v82 = vunpack.c.l.b16 %v20
  %v83 = vunpack.c.h.b16 %v20
  %v84 = vunpack.c.l.b16 %v21
  %v85 = vunpack.c.h.b16 %v21
  %v86 = vunpack.c.l.b16 %v22
  %v87 = vunpack.c.h.b16 %v22
  %v88 = vunpack.c.l.b16 %v23
  %v89 = vunpack.c.h.b16 %v23
  %v90 = vunpack.c.l.b16 %v24
  %v91 = vunpack.c.h.b16 %v24
  %v92 = vunpack.c.l.b16 %v25
  %v93 = vunpack.c.h.b16 %v25
  %v94 = vunpack.c.l.b16 %v26
  %v95 = vunpack.c.h.b16 %v26
  %v96 = vunpack.c.l.b16 %v27
  %v97 = vunpack.c.h.b16 %v27
  %v98 = vunpack.c.l.b16 %v28
  %v99 = vunpack.c.h.b16 %v28
  %v100 = vunpack.c.l.b16 %v29
  %v101 = vunpack.c.h.b16 %v29
  %v102 = vunpack.c.l.b16 %v30
  %v103 = vunpack.c.h.b16 %v30
  %v104 = vpack.c.b16 %v74, %v72
  %v105 = vpack.c.b16 %v75, %v73
  %v106 = vpack.c.b16 %v78, %v76
  %v107 = vpack.c.b16 %v79, %v77
  %v108 = vpack.c.b16 %v82, %v80
  %v109 = vpack.c.b16 %v83, %v81
  %v110 = vpack.c.b16 %v86, %v84
  %v111 = vpack.c.b16 %v87, %v85
  %v112 = vpack.c.b16 %v90, %v88
  %v113 = vpack.c.b16 %v91, %v89
  %v114 = vpack.c.b16 %v94, %v92
  %v115 = vpack.c.b16 %v95, %v93
  %v116 = vpack.c.b16 %v98, %v96
  %v117 = vpack.c.b16 %v99, %v97
  %v118 = vpack.c.b16 %v102, %v100
  %v119 = vpack.c.b16 %v103, %v101
  %v146 = vunpack.c.l.b16 %v31
  %v147 = vunpack.c.l.b16 %v32
  %v148 = vunpack.c.l.b16 %v33
  %v149 = vunpack.c.l.b16 %v34
  %v150 = vunpack.c.l.b16 %v35
  %v151 = vunpack.c.l.b16 %v36
  %v152 = vunpack.c.l.b16 %v37
  %v153 = vunpack.c.l.b16 %v38
  %v154 = vunpack.c.l.b16 %v39
  %v155 = vunpack.c.l.b16 %v40
  %v156 = vunpack.c.l.b16 %v41
  %v157 = vunpack.c.l.b16 %v42
  %v158 = vunpack.c.l.b16 %v43
  %v159 = vunpack.c.l.b16 %v44
  %v160 = vunpack.c.l.b16 %v45
  %v161 = vunpack.c.l.b16 %v46
  %v162 = vunpack.c.l.b16 %v47
  %v163 = vunpack.c.l.b16 %v48
  %v164 = vpack.c.b16 %v147, %v146
  %v165 = vpack.c.b16 %v149, %v148
  %v166 = vpack.c.b16 %v151, %v150
  %v167 = vpack.c.b16 %v153, %v152
  %v168 = vpack.c.b16 %v155, %v154
  %v169 = vpack.c.b16 %v157, %v156
  %v170 = vpack.c.b16 %v159, %v158
  %v171 = vpack.c.b16 %v161, %v160
  %v172 = vpack.c.b16 %v163, %v162
  %vm182 = vcmask 130048
  %v184 = vsel %vm182, %v105, 0
  %v187 = vsel %vm182, %v107, 0
  %v190 = vsel %vm182, %v109, 0
  %v193 = vsel %vm182, %v111, 0
  %v196 = vsel %vm182, %v113, 0
  %v199 = vsel %vm182, %v115, 0
  %v202 = vsel %vm182, %v117, 0
  %v205 = vsel %vm182, %v119, 0
  %207 = vmatprep.subr.bf16.mxu0 0
  %208 = vmatpush1.bf16.msra.mxu0 %v164
  %209 = vmatprep.subr.bf16.mxu0 0
  %210 = vmatpush1.bf16.msra.mxu0 %v165
  %211 = vmatprep.subr.bf16.mxu0 0
  %212 = vmatpush1.bf16.msra.mxu0 %v166
  %213 = vmatprep.subr.bf16.mxu0 0
  %214 = vmatpush1.bf16.msra.mxu0 %v167
  %215 = vmatprep.subr.bf16.mxu0 0
  %216 = vmatpush1.bf16.msra.mxu0 %v168
  %217 = vmatprep.subr.bf16.mxu0 0
  %218 = vmatpush1.bf16.msra.mxu0 %v169
  %219 = vmatprep.subr.bf16.mxu0 0
  %220 = vmatpush1.bf16.msra.mxu0 %v170
  %221 = vmatprep.subr.bf16.mxu0 0
  %222 = vmatpush1.bf16.msra.mxu0 %v171
  %223 = vmatprep.subr.bf16.mxu0 0
  %224 = vmatpush1.bf16.msra.mxu0 %v172
  %225 = vmatprep.subr.bf16.mxu0 0
  %226 = vmatpush1.bf16.msra.mxu0 0
  %227 = vmatprep.subr.bf16.mxu0 0
  %228 = vmatpush1.bf16.msra.mxu0 0
  %229 = vmatprep.subr.bf16.mxu0 0
  %230 = vmatpush1.bf16.msra.mxu0 0
  %231 = vmatprep.subr.bf16.mxu0 0
  %232 = vmatpush1.bf16.msra.mxu0 0
  %233 = vmatprep.subr.bf16.mxu0 0
  %234 = vmatpush1.bf16.msra.mxu0 0
  %235 = vmatprep.subr.bf16.mxu0 0
  %236 = vmatpush1.bf16.msra.mxu0 0
  %237 = vmatprep.subr.bf16.mxu0 0
  %238 = vmatpush1.bf16.msra.mxu0 0
  %239 = vmatprep.mubr.bf16.mxu0 %v184
  %240 = vmatmul.mubr.bf16.gmra.mrb[0].mxu0 %v104
  %v241 = vpop.f32.mrb[0].mxu0
  %v242 = vadd.f32 %v54, %v241
  %v243 = vpop.f32.mrb[0].mxu0
  %v244 = vpop.f32.mrb[0].mxu0
  %v245 = vadd.f32 %v54, %v244
  %v246 = vpop.f32.mrb[0].mxu0
  %247 = vmatprep.mubr.bf16.mxu0 %v187
  %248 = vmatmul.mubr.bf16.gmra.mrb[0].mxu0 %v106
  %v249 = vpop.f32.mrb[0].mxu0
  %v250 = vadd.f32 %v54, %v249
  %v251 = vpop.f32.mrb[0].mxu0
  %v252 = vpop.f32.mrb[0].mxu0
  %v253 = vadd.f32 %v54, %v252
  %v254 = vpop.f32.mrb[0].mxu0
  %255 = vmatprep.mubr.bf16.mxu0 %v190
  %256 = vmatmul.mubr.bf16.gmra.mrb[0].mxu0 %v108
  %v257 = vpop.f32.mrb[0].mxu0
  %v258 = vadd.f32 %v54, %v257
  %v259 = vpop.f32.mrb[0].mxu0
  %v260 = vpop.f32.mrb[0].mxu0
  %v261 = vadd.f32 %v54, %v260
  %v262 = vpop.f32.mrb[0].mxu0
  %263 = vmatprep.mubr.bf16.mxu0 %v193
  %264 = vmatmul.mubr.bf16.gmra.mrb[0].mxu0 %v110
  %v265 = vpop.f32.mrb[0].mxu0
  %v266 = vadd.f32 %v54, %v265
  %v267 = vpop.f32.mrb[0].mxu0
  %v268 = vpop.f32.mrb[0].mxu0
  %v269 = vadd.f32 %v54, %v268
  %v270 = vpop.f32.mrb[0].mxu0
  %271 = vmatprep.mubr.bf16.mxu0 %v196
  %272 = vmatmul.mubr.bf16.gmra.mrb[0].mxu0 %v112
  %v273 = vpop.f32.mrb[0].mxu0
  %v274 = vadd.f32 %v54, %v273
  %v275 = vpop.f32.mrb[0].mxu0
  %v276 = vpop.f32.mrb[0].mxu0
  %v277 = vadd.f32 %v54, %v276
  %v278 = vpop.f32.mrb[0].mxu0
  %279 = vmatprep.mubr.bf16.mxu0 %v199
  %280 = vmatmul.mubr.bf16.gmra.mrb[0].mxu0 %v114
  %v281 = vpop.f32.mrb[0].mxu0
  %v282 = vadd.f32 %v54, %v281
  %v283 = vpop.f32.mrb[0].mxu0
  %v284 = vpop.f32.mrb[0].mxu0
  %v285 = vadd.f32 %v54, %v284
  %v286 = vpop.f32.mrb[0].mxu0
  %287 = vmatprep.mubr.bf16.mxu0 %v202
  %288 = vmatmul.mubr.bf16.gmra.mrb[0].mxu0 %v116
  %v289 = vpop.f32.mrb[0].mxu0
  %v290 = vadd.f32 %v54, %v289
  %v291 = vpop.f32.mrb[0].mxu0
  %v292 = vpop.f32.mrb[0].mxu0
  %v293 = vadd.f32 %v54, %v292
  %v294 = vpop.f32.mrb[0].mxu0
  %295 = vmatprep.mubr.bf16.mxu0 %v205
  %296 = vmatmul.mubr.bf16.gmra.mrb[0].mxu0 %v118
  %v297 = vpop.f32.mrb[0].mxu0
  %v298 = vadd.f32 %v54, %v297
  %v299 = vpop.f32.mrb[0].mxu0
  %v300 = vpop.f32.mrb[0].mxu0
  %v301 = vadd.f32 %v54, %v300
  %v302 = vpop.f32.mrb[0].mxu0
  %303 = vdwg.mxu0
  %v304 = vmax.f32 %v242, 0.0
  %v305 = vmax.f32 %v245, 0.0
  %v306 = vmax.f32 %v250, 0.0
  %v307 = vmax.f32 %v253, 0.0
  %v308 = vmax.f32 %v258, 0.0
  %v309 = vmax.f32 %v261, 0.0
  %v310 = vmax.f32 %v266, 0.0
  %v311 = vmax.f32 %v269, 0.0
  %v312 = vmax.f32 %v274, 0.0
  %v313 = vmax.f32 %v277, 0.0
  %v314 = vmax.f32 %v282, 0.0
  %v315 = vmax.f32 %v285, 0.0
  %v316 = vmax.f32 %v290, 0.0
  %v317 = vmax.f32 %v293, 0.0
  %v318 = vmax.f32 %v298, 0.0
  %v319 = vmax.f32 %v301, 0.0
  %v320 = vpack.c.bf16 %v305, %v304
  %v321 = vpack.c.bf16 %v307, %v306
  %v322 = vpack.c.bf16 %v309, %v308
  %v323 = vpack.c.bf16 %v311, %v310
  %v324 = vpack.c.bf16 %v313, %v312
  %v325 = vpack.c.bf16 %v315, %v314
  %v326 = vpack.c.bf16 %v317, %v316
  %v327 = vpack.c.bf16 %v319, %v318
  %v336 = vunpack.c.l.b16 %v320
  %v337 = vunpack.c.h.b16 %v320
  %v338 = vunpack.c.l.b16 %v321
  %v339 = vunpack.c.h.b16 %v321
  %v340 = vunpack.c.l.b16 %v322
  %v341 = vunpack.c.h.b16 %v322
  %v342 = vunpack.c.l.b16 %v323
  %v343 = vunpack.c.h.b16 %v323
  %v344 = vunpack.c.l.b16 %v324
  %v345 = vunpack.c.h.b16 %v324
  %v346 = vunpack.c.l.b16 %v325
  %v347 = vunpack.c.h.b16 %v325
  %v348 = vunpack.c.l.b16 %v326
  %v349 = vunpack.c.h.b16 %v326
  %v350 = vunpack.c.l.b16 %v327
  %v351 = vunpack.c.h.b16 %v327
  %v352 = vpack.c.b16 %v336, %v336
  %v353 = vpack.c.b16 %v337, %v337
  %v354 = vpack.c.b16 %v338, %v338
  %v355 = vpack.c.b16 %v339, %v339
  %v356 = vpack.c.b16 %v340, %v340
  %v357 = vpack.c.b16 %v341, %v341
  %v358 = vpack.c.b16 %v342, %v342
  %v359 = vpack.c.b16 %v343, %v343
  %v360 = vpack.c.b16 %v344, %v344
  %v361 = vpack.c.b16 %v345, %v345
  %v362 = vpack.c.b16 %v346, %v346
  %v363 = vpack.c.b16 %v347, %v347
  %v364 = vpack.c.b16 %v348, %v348
  %v365 = vpack.c.b16 %v349, %v349
  %v366 = vpack.c.b16 %v350, %v350
  %v367 = vpack.c.b16 %v351, %v351
  %vm384 = vcmask 257024
  %385 = vst.msk [vmem:[%s3] sm:$0xf] %vm384, %v352
  %386 = vst.msk [vmem:[%s3 + $0x4] sm:$0xf] %vm384, %v353
  %387 = vst.msk [vmem:[%s3 + $0x8] sm:$0xf] %vm384, %v354
  %388 = vst.msk [vmem:[%s3 + $0xc] sm:$0xf] %vm384, %v355
  %389 = vst.msk [vmem:[%s3 + $0x10] sm:$0xf] %vm384, %v356
  %390 = vst.msk [vmem:[%s3 + $0x14] sm:$0xf] %vm384, %v357
  %391 = vst.msk [vmem:[%s3 + $0x18] sm:$0xf] %vm384, %v358
  %392 = vst.msk [vmem:[%s3 + $0x1c] sm:$0xf] %vm384, %v359
  %393 = vst.msk [vmem:[%s3 + $0x20] sm:$0xf] %vm384, %v360
  %394 = vst.msk [vmem:[%s3 + $0x24] sm:$0xf] %vm384, %v361
  %395 = vst.msk [vmem:[%s3 + $0x28] sm:$0xf] %vm384, %v362
  %396 = vst.msk [vmem:[%s3 + $0x2c] sm:$0xf] %vm384, %v363
  %397 = vst.msk [vmem:[%s3 + $0x30] sm:$0xf] %vm384, %v364
  %398 = vst.msk [vmem:[%s3 + $0x34] sm:$0xf] %vm384, %v365
  %399 = vst.msk [vmem:[%s3 + $0x38] sm:$0xf] %vm384, %v366
  %400 = vst.msk [vmem:[%s3 + $0x3c] sm:$0xf] %vm384, %v367
  // Predicated region
  $region14: #{resnet_forward.27} parent=0 // pred_check
    _
  $region15: #{resnet_forward.27} parent=0 // pred_check_branch
    %402 = sbr.rel (0) target = $region17
  $region16: #{resnet_forward.27} parent=0 // pred_region
    _
  $region17: #{resnet_forward.27} parent=0 // pred_fallthru
    _
  // Predicated region
  $region18: #{resnet_forward.27} parent=0 // pred_check
    _
  $region19: #{resnet_forward.27} parent=0 // pred_check_branch
    %404 = sbr.rel (0) target = $region21
  $region20: #{resnet_forward.27} parent=0 // pred_region
    _
  $region21: #{resnet_forward.27} parent=0 // pred_fallthru
    _

// kernel: resnet_forward.28
$region0: #{resnet_forward.28}
  #allocation0 [shape = 'u32[]', space=smem, size = 0x4, offset = 0x4, fixed_abs, tag = 'smem constant byte address 0x4 - core index']
  #allocation1 [shape = 'u32[144,128]{1,0:T(1,128)}', space=vmem, size = 0x12000, scoped, tag = 'internal scratch']
  %s0 = inlined_call_operand.vmem [shape: bf16[128,304], index: 0, kind: input, shape index: {}]
  %s1 = inlined_call_operand.vmem [shape: bf16[304,32], index: 1, kind: input, shape index: {}]
  %s2 = inlined_call_operand.vmem [shape: f32[1,32], index: 2, kind: input, shape index: {}]
  %s3 = inlined_call_operand.vmem [shape: bf16[128,32], index: 3, kind: output, shape index: {}]
  %s4 = sld [smem:[#allocation0]]
  $region22: #{resnet_forward.28} parent=0
    _
  %s6 = ssub.s32 1, %s4
  %s7 = scalar_select 0, %s6, %s4
  // Predicated region
  $region2: #{resnet_forward.28} parent=0 // pred_check
    _
  $region3: #{resnet_forward.28} parent=0 // pred_check_branch
    %9 = sbr.rel (0) target = $region5
  $region4: #{resnet_forward.28} parent=0 // pred_region
    _
  $region5: #{resnet_forward.28} parent=0 // pred_fallthru
    _
  // Predicated region
  $region6: #{resnet_forward.28} parent=0 // pred_check
    _
  $region7: #{resnet_forward.28} parent=0 // pred_check_branch
    %11 = sbr.rel (0) target = $region9
  $region8: #{resnet_forward.28} parent=0 // pred_region
    _
  $region9: #{resnet_forward.28} parent=0 // pred_fallthru
    _
  // Predicated region
  $region10: #{resnet_forward.28} parent=0 // pred_check
    _
  $region11: #{resnet_forward.28} parent=0 // pred_check_branch
    %13 = sbr.rel (0) target = $region13
  $region12: #{resnet_forward.28} parent=0 // pred_region
    _
  $region13: #{resnet_forward.28} parent=0 // pred_fallthru
    _
  %v15 = vld [vmem:[%s0] sm:$0xff]
  %v16 = vld [vmem:[%s0 + $0x8] sm:$0xf]
  %v17 = vld [vmem:[%s0 + $0xc] sm:$0xff]
  %v18 = vld [vmem:[%s0 + $0x14] sm:$0xf]
  %v19 = vld [vmem:[%s0 + $0x18] sm:$0xff]
  %v20 = vld [vmem:[%s0 + $0x20] sm:$0xf]
  %v21 = vld [vmem:[%s0 + $0x24] sm:$0xff]
  %v22 = vld [vmem:[%s0 + $0x2c] sm:$0xf]
  %v23 = vld [vmem:[%s0 + $0x30] sm:$0xff]
  %v24 = vld [vmem:[%s0 + $0x38] sm:$0xf]
  %v25 = vld [vmem:[%s0 + $0x3c] sm:$0xff]
  %v26 = vld [vmem:[%s0 + $0x44] sm:$0xf]
  %v27 = vld [vmem:[%s0 + $0x48] sm:$0xff]
  %v28 = vld [vmem:[%s0 + $0x50] sm:$0xf]
  %v29 = vld [vmem:[%s0 + $0x54] sm:$0xff]
  %v30 = vld [vmem:[%s0 + $0x5c] sm:$0xf]
  %v31 = vld [vmem:[%s0 + $0x60] sm:$0xff]
  %v32 = vld [vmem:[%s0 + $0x68] sm:$0xf]
  %v33 = vld [vmem:[%s0 + $0x6c] sm:$0xff]
  %v34 = vld [vmem:[%s0 + $0x74] sm:$0xf]
  %v35 = vld [vmem:[%s0 + $0x78] sm:$0xff]
  %v36 = vld [vmem:[%s0 + $0x80] sm:$0xf]
  %v37 = vld [vmem:[%s0 + $0x84] sm:$0xff]
  %v38 = vld [vmem:[%s0 + $0x8c] sm:$0xf]
  %v39 = vld [vmem:[%s0 + $0x90] sm:$0xff]
  %v40 = vld [vmem:[%s0 + $0x98] sm:$0xf]
  %v41 = vld [vmem:[%s0 + $0x9c] sm:$0xff]
  %v42 = vld [vmem:[%s0 + $0xa4] sm:$0xf]
  %v43 = vld [vmem:[%s0 + $0xa8] sm:$0xff]
  %v44 = vld [vmem:[%s0 + $0xb0] sm:$0xf]
  %v45 = vld [vmem:[%s0 + $0xb4] sm:$0xff]
  %v46 = vld [vmem:[%s0 + $0xbc] sm:$0xf]
  %v47 = vld [vmem:[%s1] sm:$0xf]
  %v48 = vld [vmem:[%s1 + $0x4] sm:$0xf]
  %v49 = vld [vmem:[%s1 + $0x8] sm:$0xf]
  %v50 = vld [vmem:[%s1 + $0xc] sm:$0xf]
  %v51 = vld [vmem:[%s1 + $0x10] sm:$0xf]
  %v52 = vld [vmem:[%s1 + $0x14] sm:$0xf]
  %v53 = vld [vmem:[%s1 + $0x18] sm:$0xf]
  %v54 = vld [vmem:[%s1 + $0x1c] sm:$0xf]
  %v55 = vld [vmem:[%s1 + $0x20] sm:$0xf]
  %v56 = vld [vmem:[%s1 + $0x24] sm:$0xf]
  %v57 = vld [vmem:[%s1 + $0x28] sm:$0xf]
  %v58 = vld [vmem:[%s1 + $0x2c] sm:$0xf]
  %v59 = vld [vmem:[%s1 + $0x30] sm:$0xf]
  %v60 = vld [vmem:[%s1 + $0x34] sm:$0xf]
  %v61 = vld [vmem:[%s1 + $0x38] sm:$0xf]
  %v62 = vld [vmem:[%s1 + $0x3c] sm:$0xf]
  %v63 = vld [vmem:[%s1 + $0x40] sm:$0xf]
  %v64 = vld [vmem:[%s1 + $0x44] sm:$0xf]
  %v65 = vld [vmem:[%s1 + $0x48] sm:$0xf]
  %v66 = vld [vmem:[%s1 + $0x4c] sm:$0xf]
  %v67 = vld [vmem:[%s1 + $0x50] sm:$0xf]
  %v68 = vld [vmem:[%s1 + $0x54] sm:$0xf]
  %v69 = vld [vmem:[%s1 + $0x58] sm:$0xf]
  %v70 = vld [vmem:[%s1 + $0x5c] sm:$0xf]
  %v71 = vld [vmem:[%s1 + $0x60] sm:$0xf]
  %v72 = vld [vmem:[%s1 + $0x64] sm:$0xf]
  %v73 = vld [vmem:[%s1 + $0x68] sm:$0xf]
  %v74 = vld [vmem:[%s1 + $0x6c] sm:$0xf]
  %v75 = vld [vmem:[%s1 + $0x70] sm:$0xf]
  %v76 = vld [vmem:[%s1 + $0x74] sm:$0xf]
  %v77 = vld [vmem:[%s1 + $0x78] sm:$0xf]
  %v78 = vld [vmem:[%s1 + $0x7c] sm:$0xf]
  %v79 = vld [vmem:[%s1 + $0x80] sm:$0xf]
  %v80 = vld [vmem:[%s1 + $0x84] sm:$0xf]
  %v81 = vld [vmem:[%s1 + $0x88] sm:$0xf]
  %v82 = vld [vmem:[%s1 + $0x8c] sm:$0xf]
  %v83 = vld [vmem:[%s1 + $0x90] sm:$0xf]
  %v84 = vld [vmem:[%s1 + $0x94] sm:$0xf]
  %v85 = vld [vmem:[%s2] sm:$0x1]
  %v87 = vlaneseq
  %v88 = vshrl.u32 %v87, 7
  %v89 = vsub.s32 0, %v88
  %v90 = vrot.slane %v85, %v89
  %v124 = vunpack.c.l.b16 %v15
  %v125 = vunpack.c.h.b16 %v15
  %v126 = vunpack.c.l.b16 %v16
  %v127 = vunpack.c.l.b16 %v17
  %v128 = vunpack.c.h.b16 %v17
  %v129 = vunpack.c.l.b16 %v18
  %v130 = vunpack.c.l.b16 %v19
  %v131 = vunpack.c.h.b16 %v19
  %v132 = vunpack.c.l.b16 %v20
  %v133 = vunpack.c.l.b16 %v21
  %v134 = vunpack.c.h.b16 %v21
  %v135 = vunpack.c.l.b16 %v22
  %v136 = vunpack.c.l.b16 %v23
  %v137 = vunpack.c.h.b16 %v23
  %v138 = vunpack.c.l.b16 %v24
  %v139 = vunpack.c.l.b16 %v25
  %v140 = vunpack.c.h.b16 %v25
  %v141 = vunpack.c.l.b16 %v26
  %v142 = vunpack.c.l.b16 %v27
  %v143 = vunpack.c.h.b16 %v27
  %v144 = vunpack.c.l.b16 %v28
  %v145 = vunpack.c.l.b16 %v29
  %v146 = vunpack.c.h.b16 %v29
  %v147 = vunpack.c.l.b16 %v30
  %v148 = vunpack.c.l.b16 %v31
  %v149 = vunpack.c.h.b16 %v31
  %v150 = vunpack.c.l.b16 %v32
  %v151 = vunpack.c.l.b16 %v33
  %v152 = vunpack.c.h.b16 %v33
  %v153 = vunpack.c.l.b16 %v34
  %v154 = vunpack.c.l.b16 %v35
  %v155 = vunpack.c.h.b16 %v35
  %v156 = vunpack.c.l.b16 %v36
  %v157 = vunpack.c.l.b16 %v37
  %v158 = vunpack.c.h.b16 %v37
  %v159 = vunpack.c.l.b16 %v38
  %v160 = vunpack.c.l.b16 %v39
  %v161 = vunpack.c.h.b16 %v39
  %v162 = vunpack.c.l.b16 %v40
  %v163 = vunpack.c.l.b16 %v41
  %v164 = vunpack.c.h.b16 %v41
  %v165 = vunpack.c.l.b16 %v42
  %v166 = vunpack.c.l.b16 %v43
  %v167 = vunpack.c.h.b16 %v43
  %v168 = vunpack.c.l.b16 %v44
  %v169 = vunpack.c.l.b16 %v45
  %v170 = vunpack.c.h.b16 %v45
  %v171 = vunpack.c.l.b16 %v46
  %v172 = vpack.c.b16 %v127, %v124
  %v173 = vpack.c.b16 %v128, %v125
  %v174 = vpack.c.b16 %v129, %v126
  %v175 = vpack.c.b16 %v133, %v130
  %v176 = vpack.c.b16 %v134, %v131
  %v177 = vpack.c.b16 %v135, %v132
  %v178 = vpack.c.b16 %v139, %v136
  %v179 = vpack.c.b16 %v140, %v137
  %v180 = vpack.c.b16 %v141, %v138
  %v181 = vpack.c.b16 %v145, %v142
  %v182 = vpack.c.b16 %v146, %v143
  %v183 = vpack.c.b16 %v147, %v144
  %v184 = vpack.c.b16 %v151, %v148
  %v185 = vpack.c.b16 %v152, %v149
  %v186 = vpack.c.b16 %v153, %v150
  %v187 = vpack.c.b16 %v157, %v154
  %v188 = vpack.c.b16 %v158, %v155
  %v189 = vpack.c.b16 %v159, %v156
  %v190 = vpack.c.b16 %v163, %v160
  %v191 = vpack.c.b16 %v164, %v161
  %v192 = vpack.c.b16 %v165, %v162
  %v193 = vpack.c.b16 %v169, %v166
  %v194 = vpack.c.b16 %v170, %v167
  %v195 = vpack.c.b16 %v171, %v168
  %v250 = vunpack.c.l.b16 %v47
  %v251 = vunpack.c.l.b16 %v48
  %v252 = vunpack.c.l.b16 %v49
  %v253 = vunpack.c.l.b16 %v50
  %v254 = vunpack.c.l.b16 %v51
  %v255 = vunpack.c.l.b16 %v52
  %v256 = vunpack.c.l.b16 %v53
  %v257 = vunpack.c.l.b16 %v54
  %v258 = vunpack.c.l.b16 %v55
  %v259 = vunpack.c.l.b16 %v56
  %v260 = vunpack.c.l.b16 %v57
  %v261 = vunpack.c.l.b16 %v58
  %v262 = vunpack.c.l.b16 %v59
  %v263 = vunpack.c.l.b16 %v60
  %v264 = vunpack.c.l.b16 %v61
  %v265 = vunpack.c.l.b16 %v62
  %v266 = vunpack.c.l.b16 %v63
  %v267 = vunpack.c.l.b16 %v64
  %v268 = vunpack.c.l.b16 %v65
  %v269 = vunpack.c.l.b16 %v66
  %v270 = vunpack.c.l.b16 %v67
  %v271 = vunpack.c.l.b16 %v68
  %v272 = vunpack.c.l.b16 %v69
  %v273 = vunpack.c.l.b16 %v70
  %v274 = vunpack.c.l.b16 %v71
  %v275 = vunpack.c.l.b16 %v72
  %v276 = vunpack.c.l.b16 %v73
  %v277 = vunpack.c.l.b16 %v74
  %v278 = vunpack.c.l.b16 %v75
  %v279 = vunpack.c.l.b16 %v76
  %v280 = vunpack.c.l.b16 %v77
  %v281 = vunpack.c.l.b16 %v78
  %v282 = vunpack.c.l.b16 %v79
  %v283 = vunpack.c.l.b16 %v80
  %v284 = vunpack.c.l.b16 %v81
  %v285 = vunpack.c.l.b16 %v82
  %v286 = vunpack.c.l.b16 %v83
  %v287 = vunpack.c.l.b16 %v84
  %v288 = vpack.c.b16 %v251, %v250
  %v289 = vpack.c.b16 %v253, %v252
  %v290 = vpack.c.b16 %v255, %v254
  %v291 = vpack.c.b16 %v257, %v256
  %v292 = vpack.c.b16 %v259, %v258
  %v293 = vpack.c.b16 %v261, %v260
  %v294 = vpack.c.b16 %v263, %v262
  %v295 = vpack.c.b16 %v265, %v264
  %v296 = vpack.c.b16 %v267, %v266
  %v297 = vpack.c.b16 %v269, %v268
  %v298 = vpack.c.b16 %v271, %v270
  %v299 = vpack.c.b16 %v273, %v272
  %v300 = vpack.c.b16 %v275, %v274
  %v301 = vpack.c.b16 %v277, %v276
  %v302 = vpack.c.b16 %v279, %v278
  %v303 = vpack.c.b16 %v281, %v280
  %v304 = vpack.c.b16 %v283, %v282
  %v305 = vpack.c.b16 %v285, %v284
  %v306 = vpack.c.b16 %v287, %v286
  %vm326 = vcmask 392192
  %v328 = vsel %vm326, %v174, 0
  %v331 = vsel %vm326, %v177, 0
  %v334 = vsel %vm326, %v180, 0
  %v337 = vsel %vm326, %v183, 0
  %v340 = vsel %vm326, %v186, 0
  %v343 = vsel %vm326, %v189, 0
  %v346 = vsel %vm326, %v192, 0
  %v349 = vsel %vm326, %v195, 0
  %351 = vmatprep.subr.bf16.mxu0 0
  %352 = vmatpush1.bf16.msra.mxu0 %v288
  %353 = vmatprep.subr.bf16.mxu0 0
  %354 = vmatpush1.bf16.msra.mxu0 %v289
  %355 = vmatprep.subr.bf16.mxu0 0
  %356 = vmatpush1.bf16.msra.mxu0 %v290
  %357 = vmatprep.subr.bf16.mxu0 0
  %358 = vmatpush1.bf16.msra.mxu0 %v291
  %359 = vmatprep.subr.bf16.mxu0 0
  %360 = vmatpush1.bf16.msra.mxu0 %v292
  %361 = vmatprep.subr.bf16.mxu0 0
  %362 = vmatpush1.bf16.msra.mxu0 %v293
  %363 = vmatprep.subr.bf16.mxu0 0
  %364 = vmatpush1.bf16.msra.mxu0 %v294
  %365 = vmatprep.subr.bf16.mxu0 0
  %366 = vmatpush1.bf16.msra.mxu0 %v295
  %367 = vmatprep.subr.bf16.mxu0 0
  %368 = vmatpush1.bf16.msra.mxu0 %v296
  %369 = vmatprep.subr.bf16.mxu0 0
  %370 = vmatpush1.bf16.msra.mxu0 %v297
  %371 = vmatprep.subr.bf16.mxu0 0
  %372 = vmatpush1.bf16.msra.mxu0 %v298
  %373 = vmatprep.subr.bf16.mxu0 0
  %374 = vmatpush1.bf16.msra.mxu0 %v299
  %375 = vmatprep.subr.bf16.mxu0 0
  %376 = vmatpush1.bf16.msra.mxu0 %v300
  %377 = vmatprep.subr.bf16.mxu0 0
  %378 = vmatpush1.bf16.msra.mxu0 %v301
  %379 = vmatprep.subr.bf16.mxu0 0
  %380 = vmatpush1.bf16.msra.mxu0 %v302
  %381 = vmatprep.subr.bf16.mxu0 0
  %382 = vmatpush1.bf16.msra.mxu0 %v303
  %383 = vmatprep.mubr.bf16.mxu0 %v173
  %384 = vmatmul.mubr.bf16.gmra.mrb[0].mxu0 %v172
  %v385 = vpop.f32.mrb[0].mxu0
  %v386 = vadd.f32 %v90, %v385
  %v387 = vpop.f32.mrb[0].mxu0
  %v388 = vpop.f32.mrb[0].mxu0
  %v389 = vadd.f32 %v90, %v388
  %v390 = vpop.f32.mrb[0].mxu0
  %391 = vmatprep.mubr.bf16.mxu0 %v176
  %392 = vmatmul.mubr.bf16.gmra.mrb[0].mxu0 %v175
  %v393 = vpop.f32.mrb[0].mxu0
  %v394 = vadd.f32 %v90, %v393
  %v395 = vpop.f32.mrb[0].mxu0
  %v396 = vpop.f32.mrb[0].mxu0
  %v397 = vadd.f32 %v90, %v396
  %v398 = vpop.f32.mrb[0].mxu0
  %399 = vmatprep.mubr.bf16.mxu0 %v179
  %400 = vmatmul.mubr.bf16.gmra.mrb[0].mxu0 %v178
  %v401 = vpop.f32.mrb[0].mxu0
  %v402 = vadd.f32 %v90, %v401
  %v403 = vpop.f32.mrb[0].mxu0
  %v404 = vpop.f32.mrb[0].mxu0
  %v405 = vadd.f32 %v90, %v404
  %v406 = vpop.f32.mrb[0].mxu0
  %407 = vmatprep.mubr.bf16.mxu0 %v182
  %408 = vmatmul.mubr.bf16.gmra.mrb[0].mxu0 %v181
  %v409 = vpop.f32.mrb[0].mxu0
  %v410 = vadd.f32 %v90, %v409
  %v411 = vpop.f32.mrb[0].mxu0
  %v412 = vpop.f32.mrb[0].mxu0
  %v413 = vadd.f32 %v90, %v412
  %v414 = vpop.f32.mrb[0].mxu0
  %415 = vmatprep.mubr.bf16.mxu0 %v185
  %416 = vmatmul.mubr.bf16.gmra.mrb[0].mxu0 %v184
  %v417 = vpop.f32.mrb[0].mxu0
  %v418 = vadd.f32 %v90, %v417
  %v419 = vpop.f32.mrb[0].mxu0
  %v420 = vpop.f32.mrb[0].mxu0
  %v421 = vadd.f32 %v90, %v420
  %v422 = vpop.f32.mrb[0].mxu0
  %423 = vmatprep.mubr.bf16.mxu0 %v188
  %424 = vmatmul.mubr.bf16.gmra.mrb[0].mxu0 %v187
  %v425 = vpop.f32.mrb[0].mxu0
  %v426 = vadd.f32 %v90, %v425
  %v427 = vpop.f32.mrb[0].mxu0
  %v428 = vpop.f32.mrb[0].mxu0
  %v429 = vadd.f32 %v90, %v428
  %v430 = vpop.f32.mrb[0].mxu0
  %431 = vmatprep.mubr.bf16.mxu0 %v191
  %432 = vmatmul.mubr.bf16.gmra.mrb[0].mxu0 %v190
  %v433 = vpop.f32.mrb[0].mxu0
  %v434 = vadd.f32 %v90, %v433
  %v435 = vpop.f32.mrb[0].mxu0
  %v436 = vpop.f32.mrb[0].mxu0
  %v437 = vadd.f32 %v90, %v436
  %v438 = vpop.f32.mrb[0].mxu0
  %439 = vmatprep.mubr.bf16.mxu0 %v194
  %440 = vmatmul.mubr.bf16.gmra.mrb[0].mxu0 %v193
  %v441 = vpop.f32.mrb[0].mxu0
  %v442 = vadd.f32 %v90, %v441
  %v443 = vpop.f32.mrb[0].mxu0
  %v444 = vpop.f32.mrb[0].mxu0
  %v445 = vadd.f32 %v90, %v444
  %v446 = vpop.f32.mrb[0].mxu0
  %447 = vdwg.mxu0
  %448 = vmatprep.subr.bf16.mxu0 0
  %449 = vmatpush1.bf16.msra.mxu0 %v304
  %450 = vmatprep.subr.bf16.mxu0 0
  %451 = vmatpush1.bf16.msra.mxu0 %v305
  %452 = vmatprep.subr.bf16.mxu0 0
  %453 = vmatpush1.bf16.msra.mxu0 %v306
  %454 = vmatprep.subr.bf16.mxu0 0
  %455 = vmatpush1.bf16.msra.mxu0 0
  %456 = vmatprep.subr.bf16.mxu0 0
  %457 = vmatpush1.bf16.msra.mxu0 0
  %458 = vmatprep.subr.bf16.mxu0 0
  %459 = vmatpush1.bf16.msra.mxu0 0
  %460 = vmatprep.subr.bf16.mxu0 0
  %461 = vmatpush1.bf16.msra.mxu0 0
  %462 = vmatprep.subr.bf16.mxu0 0
  %463 = vmatpush1.bf16.msra.mxu0 0
  %464 = vmatprep.subr.bf16.mxu0 0
  %465 = vmatpush1.bf16.msra.mxu0 0
  %466 = vmatprep.subr.bf16.mxu0 0
  %467 = vmatpush1.bf16.msra.mxu0 0
  %468 = vmatprep.subr.bf16.mxu0 0
  %469 = vmatpush1.bf16.msra.mxu0 0
  %470 = vmatprep.subr.bf16.mxu0 0
  %471 = vmatpush1.bf16.msra.mxu0 0
  %472 = vmatprep.subr.bf16.mxu0 0
  %473 = vmatpush1.bf16.msra.mxu0 0
  %474 = vmatprep.subr.bf16.mxu0 0
  %475 = vmatpush1.bf16.msra.mxu0 0
  %476 = vmatprep.subr.bf16.mxu0 0
  %477 = vmatpush1.bf16.msra.mxu0 0
  %478 = vmatprep.subr.bf16.mxu0 0
  %479 = vmatpush1.bf16.msra.mxu0 0
  %480 = vmatprep.mubr.bf16.mxu0 0
  %481 = vmatmul.mubr.bf16.gmra.mrb[0].mxu0 %v328
  %v482 = vpop.f32.mrb[0].mxu0
  %v483 = vadd.f32 %v386, %v482
  %v484 = vpop.f32.mrb[0].mxu0
  %v485 = vpop.f32.mrb[0].mxu0
  %v486 = vadd.f32 %v389, %v485
  %v487 = vpop.f32.mrb[0].mxu0
  %488 = vmatprep.mubr.bf16.mxu0 0
  %489 = vmatmul.mubr.bf16.gmra.mrb[0].mxu0 %v331
  %v490 = vpop.f32.mrb[0].mxu0
  %v491 = vadd.f32 %v394, %v490
  %v492 = vpop.f32.mrb[0].mxu0
  %v493 = vpop.f32.mrb[0].mxu0
  %v494 = vadd.f32 %v397, %v493
  %v495 = vpop.f32.mrb[0].mxu0
  %496 = vmatprep.mubr.bf16.mxu0 0
  %497 = vmatmul.mubr.bf16.gmra.mrb[0].mxu0 %v334
  %v498 = vpop.f32.mrb[0].mxu0
  %v499 = vadd.f32 %v402, %v498
  %v500 = vpop.f32.mrb[0].mxu0
  %v501 = vpop.f32.mrb[0].mxu0
  %v502 = vadd.f32 %v405, %v501
  %v503 = vpop.f32.mrb[0].mxu0
  %504 = vmatprep.mubr.bf16.mxu0 0
  %505 = vmatmul.mubr.bf16.gmra.mrb[0].mxu0 %v337
  %v506 = vpop.f32.mrb[0].mxu0
  %v507 = vadd.f32 %v410, %v506
  %v508 = vpop.f32.mrb[0].mxu0
  %v509 = vpop.f32.mrb[0].mxu0
  %v510 = vadd.f32 %v413, %v509
  %v511 = vpop.f32.mrb[0].mxu0
  %512 = vmatprep.mubr.bf16.mxu0 0
  %513 = vmatmul.mubr.bf16.gmra.mrb[0].mxu0 %v340
  %v514 = vpop.f32.mrb[0].mxu0
  %v515 = vadd.f32 %v418, %v514
  %v516 = vpop.f32.mrb[0].mxu0
  %v517 = vpop.f32.mrb[0].mxu0
  %v518 = vadd.f32 %v421, %v517
  %v519 = vpop.f32.mrb[0].mxu0
  %520 = vmatprep.mubr.bf16.mxu0 0
  %521 = vmatmul.mubr.bf16.gmra.mrb[0].mxu0 %v343
  %v522 = vpop.f32.mrb[0].mxu0
  %v523 = vadd.f32 %v426, %v522
  %v524 = vpop.f32.mrb[0].mxu0
  %v525 = vpop.f32.mrb[0].mxu0
  %v526 = vadd.f32 %v429, %v525
  %v527 = vpop.f32.mrb[0].mxu0
  %528 = vmatprep.mubr.bf16.mxu0 0
  %529 = vmatmul.mubr.bf16.gmra.mrb[0].mxu0 %v346
  %v530 = vpop.f32.mrb[0].mxu0
  %v531 = vadd.f32 %v434, %v530
  %v532 = vpop.f32.mrb[0].mxu0
  %v533 = vpop.f32.mrb[0].mxu0
  %v534 = vadd.f32 %v437, %v533
  %v535 = vpop.f32.mrb[0].mxu0
  %536 = vmatprep.mubr.bf16.mxu0 0
  %537 = vmatmul.mubr.bf16.gmra.mrb[0].mxu0 %v349
  %v538 = vpop.f32.mrb[0].mxu0
  %v539 = vadd.f32 %v442, %v538
  %v540 = vpop.f32.mrb[0].mxu0
  %v541 = vpop.f32.mrb[0].mxu0
  %v542 = vadd.f32 %v445, %v541
  %v543 = vpop.f32.mrb[0].mxu0
  %544 = vdwg.mxu0
  %v545 = vmax.f32 %v483, 0.0
  %v546 = vmax.f32 %v486, 0.0
  %v547 = vmax.f32 %v491, 0.0
  %v548 = vmax.f32 %v494, 0.0
  %v549 = vmax.f32 %v499, 0.0
  %v550 = vmax.f32 %v502, 0.0
  %v551 = vmax.f32 %v507, 0.0
  %v552 = vmax.f32 %v510, 0.0
  %v553 = vmax.f32 %v515, 0.0
  %v554 = vmax.f32 %v518, 0.0
  %v555 = vmax.f32 %v523, 0.0
  %v556 = vmax.f32 %v526, 0.0
  %v557 = vmax.f32 %v531, 0.0
  %v558 = vmax.f32 %v534, 0.0
  %v559 = vmax.f32 %v539, 0.0
  %v560 = vmax.f32 %v542, 0.0
  %v561 = vpack.c.bf16 %v546, %v545
  %v562 = vpack.c.bf16 %v548, %v547
  %v563 = vpack.c.bf16 %v550, %v549
  %v564 = vpack.c.bf16 %v552, %v551
  %v565 = vpack.c.bf16 %v554, %v553
  %v566 = vpack.c.bf16 %v556, %v555
  %v567 = vpack.c.bf16 %v558, %v557
  %v568 = vpack.c.bf16 %v560, %v559
  %v577 = vunpack.c.l.b16 %v561
  %v578 = vunpack.c.h.b16 %v561
  %v579 = vunpack.c.l.b16 %v562
  %v580 = vunpack.c.h.b16 %v562
  %v581 = vunpack.c.l.b16 %v563
  %v582 = vunpack.c.h.b16 %v563
  %v583 = vunpack.c.l.b16 %v564
  %v584 = vunpack.c.h.b16 %v564
  %v585 = vunpack.c.l.b16 %v565
  %v586 = vunpack.c.h.b16 %v565
  %v587 = vunpack.c.l.b16 %v566
  %v588 = vunpack.c.h.b16 %v566
  %v589 = vunpack.c.l.b16 %v567
  %v590 = vunpack.c.h.b16 %v567
  %v591 = vunpack.c.l.b16 %v568
  %v592 = vunpack.c.h.b16 %v568
  %v593 = vpack.c.b16 %v577, %v577
  %v594 = vpack.c.b16 %v578, %v578
  %v595 = vpack.c.b16 %v579, %v579
  %v596 = vpack.c.b16 %v580, %v580
  %v597 = vpack.c.b16 %v581, %v581
  %v598 = vpack.c.b16 %v582, %v582
  %v599 = vpack.c.b16 %v583, %v583
  %v600 = vpack.c.b16 %v584, %v584
  %v601 = vpack.c.b16 %v585, %v585
  %v602 = vpack.c.b16 %v586, %v586
  %v603 = vpack.c.b16 %v587, %v587
  %v604 = vpack.c.b16 %v588, %v588
  %v605 = vpack.c.b16 %v589, %v589
  %v606 = vpack.c.b16 %v590, %v590
  %v607 = vpack.c.b16 %v591, %v591
  %v608 = vpack.c.b16 %v592, %v592
  %vm625 = vcmask 257024
  %626 = vst.msk [vmem:[%s3] sm:$0xf] %vm625, %v593
  %627 = vst.msk [vmem:[%s3 + $0x4] sm:$0xf] %vm625, %v594
  %628 = vst.msk [vmem:[%s3 + $0x8] sm:$0xf] %vm625, %v595
  %629 = vst.msk [vmem:[%s3 + $0xc] sm:$0xf] %vm625, %v596
  %630 = vst.msk [vmem:[%s3 + $0x10] sm:$0xf] %vm625, %v597
  %631 = vst.msk [vmem:[%s3 + $0x14] sm:$0xf] %vm625, %v598
  %632 = vst.msk [vmem:[%s3 + $0x18] sm:$0xf] %vm625, %v599
  %633 = vst.msk [vmem:[%s3 + $0x1c] sm:$0xf] %vm625, %v600
  %634 = vst.msk [vmem:[%s3 + $0x20] sm:$0xf] %vm625, %v601
  %635 = vst.msk [vmem:[%s3 + $0x24] sm:$0xf] %vm625, %v602
  %636 = vst.msk [vmem:[%s3 + $0x28] sm:$0xf] %vm625, %v603
  %637 = vst.msk [vmem:[%s3 + $0x2c] sm:$0xf] %vm625, %v604
  %638 = vst.msk [vmem:[%s3 + $0x30] sm:$0xf] %vm625, %v605
  %639 = vst.msk [vmem:[%s3 + $0x34] sm:$0xf] %vm625, %v606
  %640 = vst.msk [vmem:[%s3 + $0x38] sm:$0xf] %vm625, %v607
  %641 = vst.msk [vmem:[%s3 + $0x3c] sm:$0xf] %vm625, %v608
  // Predicated region
  $region14: #{resnet_forward.28} parent=0 // pred_check
    _
  $region15: #{resnet_forward.28} parent=0 // pred_check_branch
    %643 = sbr.rel (0) target = $region17
  $region16: #{resnet_forward.28} parent=0 // pred_region
    _
  $region17: #{resnet_forward.28} parent=0 // pred_fallthru
    _
  // Predicated region
  $region18: #{resnet_forward.28} parent=0 // pred_check
    _
  $region19: #{resnet_forward.28} parent=0 // pred_check_branch
    %645 = sbr.rel (0) target = $region21
  $region20: #{resnet_forward.28} parent=0 // pred_region
    _
  $region21: #{resnet_forward.28} parent=0 // pred_fallthru
    _

// kernel: resnet_forward.29
$region0: #{resnet_forward.29}
  #allocation0 [shape = 'u32[]', space=smem, size = 0x4, offset = 0x4, fixed_abs, tag = 'smem constant byte address 0x4 - core index']
  #allocation1 [shape = 'u32[144,128]{1,0:T(1,128)}', space=vmem, size = 0x12000, scoped, tag = 'internal scratch']
  %s0 = inlined_call_operand.vmem [shape: bf16[128,288], index: 0, kind: input, shape index: {}]
  %s1 = inlined_call_operand.vmem [shape: bf16[288,32], index: 1, kind: input, shape index: {}]
  %s2 = inlined_call_operand.vmem [shape: f32[1,32], index: 2, kind: input, shape index: {}]
  %s3 = inlined_call_operand.vmem [shape: bf16[128,32], index: 3, kind: output, shape index: {}]
  %s4 = sld [smem:[#allocation0]]
  $region22: #{resnet_forward.29} parent=0
    _
  %s6 = ssub.s32 1, %s4
  %s7 = scalar_select 0, %s6, %s4
  // Predicated region
  $region2: #{resnet_forward.29} parent=0 // pred_check
    _
  $region3: #{resnet_forward.29} parent=0 // pred_check_branch
    %9 = sbr.rel (0) target = $region5
  $region4: #{resnet_forward.29} parent=0 // pred_region
    _
  $region5: #{resnet_forward.29} parent=0 // pred_fallthru
    _
  // Predicated region
  $region6: #{resnet_forward.29} parent=0 // pred_check
    _
  $region7: #{resnet_forward.29} parent=0 // pred_check_branch
    %11 = sbr.rel (0) target = $region9
  $region8: #{resnet_forward.29} parent=0 // pred_region
    _
  $region9: #{resnet_forward.29} parent=0 // pred_fallthru
    _
  // Predicated region
  $region10: #{resnet_forward.29} parent=0 // pred_check
    _
  $region11: #{resnet_forward.29} parent=0 // pred_check_branch
    %13 = sbr.rel (0) target = $region13
  $region12: #{resnet_forward.29} parent=0 // pred_region
    _
  $region13: #{resnet_forward.29} parent=0 // pred_fallthru
    _
  %v15 = vld [vmem:[%s0] sm:$0xff]
  %v16 = vld [vmem:[%s0 + $0x8] sm:$0xf]
  %v17 = vld [vmem:[%s0 + $0xc] sm:$0xff]
  %v18 = vld [vmem:[%s0 + $0x14] sm:$0xf]
  %v19 = vld [vmem:[%s0 + $0x18] sm:$0xff]
  %v20 = vld [vmem:[%s0 + $0x20] sm:$0xf]
  %v21 = vld [vmem:[%s0 + $0x24] sm:$0xff]
  %v22 = vld [vmem:[%s0 + $0x2c] sm:$0xf]
  %v23 = vld [vmem:[%s0 + $0x30] sm:$0xff]
  %v24 = vld [vmem:[%s0 + $0x38] sm:$0xf]
  %v25 = vld [vmem:[%s0 + $0x3c] sm:$0xff]
  %v26 = vld [vmem:[%s0 + $0x44] sm:$0xf]
  %v27 = vld [vmem:[%s0 + $0x48] sm:$0xff]
  %v28 = vld [vmem:[%s0 + $0x50] sm:$0xf]
  %v29 = vld [vmem:[%s0 + $0x54] sm:$0xff]
  %v30 = vld [vmem:[%s0 + $0x5c] sm:$0xf]
  %v31 = vld [vmem:[%s0 + $0x60] sm:$0xff]
  %v32 = vld [vmem:[%s0 + $0x68] sm:$0xf]
  %v33 = vld [vmem:[%s0 + $0x6c] sm:$0xff]
  %v34 = vld [vmem:[%s0 + $0x74] sm:$0xf]
  %v35 = vld [vmem:[%s0 + $0x78] sm:$0xff]
  %v36 = vld [vmem:[%s0 + $0x80] sm:$0xf]
  %v37 = vld [vmem:[%s0 + $0x84] sm:$0xff]
  %v38 = vld [vmem:[%s0 + $0x8c] sm:$0xf]
  %v39 = vld [vmem:[%s0 + $0x90] sm:$0xff]
  %v40 = vld [vmem:[%s0 + $0x98] sm:$0xf]
  %v41 = vld [vmem:[%s0 + $0x9c] sm:$0xff]
  %v42 = vld [vmem:[%s0 + $0xa4] sm:$0xf]
  %v43 = vld [vmem:[%s0 + $0xa8] sm:$0xff]
  %v44 = vld [vmem:[%s0 + $0xb0] sm:$0xf]
  %v45 = vld [vmem:[%s0 + $0xb4] sm:$0xff]
  %v46 = vld [vmem:[%s0 + $0xbc] sm:$0xf]
  %v47 = vld [vmem:[%s1] sm:$0xf]
  %v48 = vld [vmem:[%s1 + $0x4] sm:$0xf]
  %v49 = vld [vmem:[%s1 + $0x8] sm:$0xf]
  %v50 = vld [vmem:[%s1 + $0xc] sm:$0xf]
  %v51 = vld [vmem:[%s1 + $0x10] sm:$0xf]
  %v52 = vld [vmem:[%s1 + $0x14] sm:$0xf]
  %v53 = vld [vmem:[%s1 + $0x18] sm:$0xf]
  %v54 = vld [vmem:[%s1 + $0x1c] sm:$0xf]
  %v55 = vld [vmem:[%s1 + $0x20] sm:$0xf]
  %v56 = vld [vmem:[%s1 + $0x24] sm:$0xf]
  %v57 = vld [vmem:[%s1 + $0x28] sm:$0xf]
  %v58 = vld [vmem:[%s1 + $0x2c] sm:$0xf]
  %v59 = vld [vmem:[%s1 + $0x30] sm:$0xf]
  %v60 = vld [vmem:[%s1 + $0x34] sm:$0xf]
  %v61 = vld [vmem:[%s1 + $0x38] sm:$0xf]
  %v62 = vld [vmem:[%s1 + $0x3c] sm:$0xf]
  %v63 = vld [vmem:[%s1 + $0x40] sm:$0xf]
  %v64 = vld [vmem:[%s1 + $0x44] sm:$0xf]
  %v65 = vld [vmem:[%s1 + $0x48] sm:$0xf]
  %v66 = vld [vmem:[%s1 + $0x4c] sm:$0xf]
  %v67 = vld [vmem:[%s1 + $0x50] sm:$0xf]
  %v68 = vld [vmem:[%s1 + $0x54] sm:$0xf]
  %v69 = vld [vmem:[%s1 + $0x58] sm:$0xf]
  %v70 = vld [vmem:[%s1 + $0x5c] sm:$0xf]
  %v71 = vld [vmem:[%s1 + $0x60] sm:$0xf]
  %v72 = vld [vmem:[%s1 + $0x64] sm:$0xf]
  %v73 = vld [vmem:[%s1 + $0x68] sm:$0xf]
  %v74 = vld [vmem:[%s1 + $0x6c] sm:$0xf]
  %v75 = vld [vmem:[%s1 + $0x70] sm:$0xf]
  %v76 = vld [vmem:[%s1 + $0x74] sm:$0xf]
  %v77 = vld [vmem:[%s1 + $0x78] sm:$0xf]
  %v78 = vld [vmem:[%s1 + $0x7c] sm:$0xf]
  %v79 = vld [vmem:[%s1 + $0x80] sm:$0xf]
  %v80 = vld [vmem:[%s1 + $0x84] sm:$0xf]
  %v81 = vld [vmem:[%s1 + $0x88] sm:$0xf]
  %v82 = vld [vmem:[%s1 + $0x8c] sm:$0xf]
  %v83 = vld [vmem:[%s2] sm:$0x1]
  %v85 = vlaneseq
  %v86 = vshrl.u32 %v85, 7
  %v87 = vsub.s32 0, %v86
  %v88 = vrot.slane %v83, %v87
  %v122 = vunpack.c.l.b16 %v15
  %v123 = vunpack.c.h.b16 %v15
  %v124 = vunpack.c.l.b16 %v16
  %v125 = vunpack.c.l.b16 %v17
  %v126 = vunpack.c.h.b16 %v17
  %v127 = vunpack.c.l.b16 %v18
  %v128 = vunpack.c.l.b16 %v19
  %v129 = vunpack.c.h.b16 %v19
  %v130 = vunpack.c.l.b16 %v20
  %v131 = vunpack.c.l.b16 %v21
  %v132 = vunpack.c.h.b16 %v21
  %v133 = vunpack.c.l.b16 %v22
  %v134 = vunpack.c.l.b16 %v23
  %v135 = vunpack.c.h.b16 %v23
  %v136 = vunpack.c.l.b16 %v24
  %v137 = vunpack.c.l.b16 %v25
  %v138 = vunpack.c.h.b16 %v25
  %v139 = vunpack.c.l.b16 %v26
  %v140 = vunpack.c.l.b16 %v27
  %v141 = vunpack.c.h.b16 %v27
  %v142 = vunpack.c.l.b16 %v28
  %v143 = vunpack.c.l.b16 %v29
  %v144 = vunpack.c.h.b16 %v29
  %v145 = vunpack.c.l.b16 %v30
  %v146 = vunpack.c.l.b16 %v31
  %v147 = vunpack.c.h.b16 %v31
  %v148 = vunpack.c.l.b16 %v32
  %v149 = vunpack.c.l.b16 %v33
  %v150 = vunpack.c.h.b16 %v33
  %v151 = vunpack.c.l.b16 %v34
  %v152 = vunpack.c.l.b16 %v35
  %v153 = vunpack.c.h.b16 %v35
  %v154 = vunpack.c.l.b16 %v36
  %v155 = vunpack.c.l.b16 %v37
  %v156 = vunpack.c.h.b16 %v37
  %v157 = vunpack.c.l.b16 %v38
  %v158 = vunpack.c.l.b16 %v39
  %v159 = vunpack.c.h.b16 %v39
  %v160 = vunpack.c.l.b16 %v40
  %v161 = vunpack.c.l.b16 %v41
  %v162 = vunpack.c.h.b16 %v41
  %v163 = vunpack.c.l.b16 %v42
  %v164 = vunpack.c.l.b16 %v43
  %v165 = vunpack.c.h.b16 %v43
  %v166 = vunpack.c.l.b16 %v44
  %v167 = vunpack.c.l.b16 %v45
  %v168 = vunpack.c.h.b16 %v45
  %v169 = vunpack.c.l.b16 %v46
  %v170 = vpack.c.b16 %v125, %v122
  %v171 = vpack.c.b16 %v126, %v123
  %v172 = vpack.c.b16 %v127, %v124
  %v173 = vpack.c.b16 %v131, %v128
  %v174 = vpack.c.b16 %v132, %v129
  %v175 = vpack.c.b16 %v133, %v130
  %v176 = vpack.c.b16 %v137, %v134
  %v177 = vpack.c.b16 %v138, %v135
  %v178 = vpack.c.b16 %v139, %v136
  %v179 = vpack.c.b16 %v143, %v140
  %v180 = vpack.c.b16 %v144, %v141
  %v181 = vpack.c.b16 %v145, %v142
  %v182 = vpack.c.b16 %v149, %v146
  %v183 = vpack.c.b16 %v150, %v147
  %v184 = vpack.c.b16 %v151, %v148
  %v185 = vpack.c.b16 %v155, %v152
  %v186 = vpack.c.b16 %v156, %v153
  %v187 = vpack.c.b16 %v157, %v154
  %v188 = vpack.c.b16 %v161, %v158
  %v189 = vpack.c.b16 %v162, %v159
  %v190 = vpack.c.b16 %v163, %v160
  %v191 = vpack.c.b16 %v167, %v164
  %v192 = vpack.c.b16 %v168, %v165
  %v193 = vpack.c.b16 %v169, %v166
  %v246 = vunpack.c.l.b16 %v47
  %v247 = vunpack.c.l.b16 %v48
  %v248 = vunpack.c.l.b16 %v49
  %v249 = vunpack.c.l.b16 %v50
  %v250 = vunpack.c.l.b16 %v51
  %v251 = vunpack.c.l.b16 %v52
  %v252 = vunpack.c.l.b16 %v53
  %v253 = vunpack.c.l.b16 %v54
  %v254 = vunpack.c.l.b16 %v55
  %v255 = vunpack.c.l.b16 %v56
  %v256 = vunpack.c.l.b16 %v57
  %v257 = vunpack.c.l.b16 %v58
  %v258 = vunpack.c.l.b16 %v59
  %v259 = vunpack.c.l.b16 %v60
  %v260 = vunpack.c.l.b16 %v61
  %v261 = vunpack.c.l.b16 %v62
  %v262 = vunpack.c.l.b16 %v63
  %v263 = vunpack.c.l.b16 %v64
  %v264 = vunpack.c.l.b16 %v65
  %v265 = vunpack.c.l.b16 %v66
  %v266 = vunpack.c.l.b16 %v67
  %v267 = vunpack.c.l.b16 %v68
  %v268 = vunpack.c.l.b16 %v69
  %v269 = vunpack.c.l.b16 %v70
  %v270 = vunpack.c.l.b16 %v71
  %v271 = vunpack.c.l.b16 %v72
  %v272 = vunpack.c.l.b16 %v73
  %v273 = vunpack.c.l.b16 %v74
  %v274 = vunpack.c.l.b16 %v75
  %v275 = vunpack.c.l.b16 %v76
  %v276 = vunpack.c.l.b16 %v77
  %v277 = vunpack.c.l.b16 %v78
  %v278 = vunpack.c.l.b16 %v79
  %v279 = vunpack.c.l.b16 %v80
  %v280 = vunpack.c.l.b16 %v81
  %v281 = vunpack.c.l.b16 %v82
  %v282 = vpack.c.b16 %v247, %v246
  %v283 = vpack.c.b16 %v249, %v248
  %v284 = vpack.c.b16 %v251, %v250
  %v285 = vpack.c.b16 %v253, %v252
  %v286 = vpack.c.b16 %v255, %v254
  %v287 = vpack.c.b16 %v257, %v256
  %v288 = vpack.c.b16 %v259, %v258
  %v289 = vpack.c.b16 %v261, %v260
  %v290 = vpack.c.b16 %v263, %v262
  %v291 = vpack.c.b16 %v265, %v264
  %v292 = vpack.c.b16 %v267, %v266
  %v293 = vpack.c.b16 %v269, %v268
  %v294 = vpack.c.b16 %v271, %v270
  %v295 = vpack.c.b16 %v273, %v272
  %v296 = vpack.c.b16 %v275, %v274
  %v297 = vpack.c.b16 %v277, %v276
  %v298 = vpack.c.b16 %v279, %v278
  %v299 = vpack.c.b16 %v281, %v280
  %vm318 = vcmask 261120
  %v320 = vsel %vm318, %v172, 0
  %v323 = vsel %vm318, %v175, 0
  %v326 = vsel %vm318, %v178, 0
  %v329 = vsel %vm318, %v181, 0
  %v332 = vsel %vm318, %v184, 0
  %v335 = vsel %vm318, %v187, 0
  %v338 = vsel %vm318, %v190, 0
  %v341 = vsel %vm318, %v193, 0
  %343 = vmatprep.subr.bf16.mxu0 0
  %344 = vmatpush1.bf16.msra.mxu0 %v282
  %345 = vmatprep.subr.bf16.mxu0 0
  %346 = vmatpush1.bf16.msra.mxu0 %v283
  %347 = vmatprep.subr.bf16.mxu0 0
  %348 = vmatpush1.bf16.msra.mxu0 %v284
  %349 = vmatprep.subr.bf16.mxu0 0
  %350 = vmatpush1.bf16.msra.mxu0 %v285
  %351 = vmatprep.subr.bf16.mxu0 0
  %352 = vmatpush1.bf16.msra.mxu0 %v286
  %353 = vmatprep.subr.bf16.mxu0 0
  %354 = vmatpush1.bf16.msra.mxu0 %v287
  %355 = vmatprep.subr.bf16.mxu0 0
  %356 = vmatpush1.bf16.msra.mxu0 %v288
  %357 = vmatprep.subr.bf16.mxu0 0
  %358 = vmatpush1.bf16.msra.mxu0 %v289
  %359 = vmatprep.subr.bf16.mxu0 0
  %360 = vmatpush1.bf16.msra.mxu0 %v290
  %361 = vmatprep.subr.bf16.mxu0 0
  %362 = vmatpush1.bf16.msra.mxu0 %v291
  %363 = vmatprep.subr.bf16.mxu0 0
  %364 = vmatpush1.bf16.msra.mxu0 %v292
  %365 = vmatprep.subr.bf16.mxu0 0
  %366 = vmatpush1.bf16.msra.mxu0 %v293
  %367 = vmatprep.subr.bf16.mxu0 0
  %368 = vmatpush1.bf16.msra.mxu0 %v294
  %369 = vmatprep.subr.bf16.mxu0 0
  %370 = vmatpush1.bf16.msra.mxu0 %v295
  %371 = vmatprep.subr.bf16.mxu0 0
  %372 = vmatpush1.bf16.msra.mxu0 %v296
  %373 = vmatprep.subr.bf16.mxu0 0
  %374 = vmatpush1.bf16.msra.mxu0 %v297
  %375 = vmatprep.mubr.bf16.mxu0 %v171
  %376 = vmatmul.mubr.bf16.gmra.mrb[0].mxu0 %v170
  %v377 = vpop.f32.mrb[0].mxu0
  %v378 = vadd.f32 %v88, %v377
  %v379 = vpop.f32.mrb[0].mxu0
  %v380 = vpop.f32.mrb[0].mxu0
  %v381 = vadd.f32 %v88, %v380
  %v382 = vpop.f32.mrb[0].mxu0
  %383 = vmatprep.mubr.bf16.mxu0 %v174
  %384 = vmatmul.mubr.bf16.gmra.mrb[0].mxu0 %v173
  %v385 = vpop.f32.mrb[0].mxu0
  %v386 = vadd.f32 %v88, %v385
  %v387 = vpop.f32.mrb[0].mxu0
  %v388 = vpop.f32.mrb[0].mxu0
  %v389 = vadd.f32 %v88, %v388
  %v390 = vpop.f32.mrb[0].mxu0
  %391 = vmatprep.mubr.bf16.mxu0 %v177
  %392 = vmatmul.mubr.bf16.gmra.mrb[0].mxu0 %v176
  %v393 = vpop.f32.mrb[0].mxu0
  %v394 = vadd.f32 %v88, %v393
  %v395 = vpop.f32.mrb[0].mxu0
  %v396 = vpop.f32.mrb[0].mxu0
  %v397 = vadd.f32 %v88, %v396
  %v398 = vpop.f32.mrb[0].mxu0
  %399 = vmatprep.mubr.bf16.mxu0 %v180
  %400 = vmatmul.mubr.bf16.gmra.mrb[0].mxu0 %v179
  %v401 = vpop.f32.mrb[0].mxu0
  %v402 = vadd.f32 %v88, %v401
  %v403 = vpop.f32.mrb[0].mxu0
  %v404 = vpop.f32.mrb[0].mxu0
  %v405 = vadd.f32 %v88, %v404
  %v406 = vpop.f32.mrb[0].mxu0
  %407 = vmatprep.mubr.bf16.mxu0 %v183
  %408 = vmatmul.mubr.bf16.gmra.mrb[0].mxu0 %v182
  %v409 = vpop.f32.mrb[0].mxu0
  %v410 = vadd.f32 %v88, %v409
  %v411 = vpop.f32.mrb[0].mxu0
  %v412 = vpop.f32.mrb[0].mxu0
  %v413 = vadd.f32 %v88, %v412
  %v414 = vpop.f32.mrb[0].mxu0
  %415 = vmatprep.mubr.bf16.mxu0 %v186
  %416 = vmatmul.mubr.bf16.gmra.mrb[0].mxu0 %v185
  %v417 = vpop.f32.mrb[0].mxu0
  %v418 = vadd.f32 %v88, %v417
  %v419 = vpop.f32.mrb[0].mxu0
  %v420 = vpop.f32.mrb[0].mxu0
  %v421 = vadd.f32 %v88, %v420
  %v422 = vpop.f32.mrb[0].mxu0
  %423 = vmatprep.mubr.bf16.mxu0 %v189
  %424 = vmatmul.mubr.bf16.gmra.mrb[0].mxu0 %v188
  %v425 = vpop.f32.mrb[0].mxu0
  %v426 = vadd.f32 %v88, %v425
  %v427 = vpop.f32.mrb[0].mxu0
  %v428 = vpop.f32.mrb[0].mxu0
  %v429 = vadd.f32 %v88, %v428
  %v430 = vpop.f32.mrb[0].mxu0
  %431 = vmatprep.mubr.bf16.mxu0 %v192
  %432 = vmatmul.mubr.bf16.gmra.mrb[0].mxu0 %v191
  %v433 = vpop.f32.mrb[0].mxu0
  %v434 = vadd.f32 %v88, %v433
  %v435 = vpop.f32.mrb[0].mxu0
  %v436 = vpop.f32.mrb[0].mxu0
  %v437 = vadd.f32 %v88, %v436
  %v438 = vpop.f32.mrb[0].mxu0
  %439 = vdwg.mxu0
  %440 = vmatprep.subr.bf16.mxu0 0
  %441 = vmatpush1.bf16.msra.mxu0 %v298
  %442 = vmatprep.subr.bf16.mxu0 0
  %443 = vmatpush1.bf16.msra.mxu0 %v299
  %444 = vmatprep.subr.bf16.mxu0 0
  %445 = vmatpush1.bf16.msra.mxu0 0
  %446 = vmatprep.subr.bf16.mxu0 0
  %447 = vmatpush1.bf16.msra.mxu0 0
  %448 = vmatprep.subr.bf16.mxu0 0
  %449 = vmatpush1.bf16.msra.mxu0 0
  %450 = vmatprep.subr.bf16.mxu0 0
  %451 = vmatpush1.bf16.msra.mxu0 0
  %452 = vmatprep.subr.bf16.mxu0 0
  %453 = vmatpush1.bf16.msra.mxu0 0
  %454 = vmatprep.subr.bf16.mxu0 0
  %455 = vmatpush1.bf16.msra.mxu0 0
  %456 = vmatprep.subr.bf16.mxu0 0
  %457 = vmatpush1.bf16.msra.mxu0 0
  %458 = vmatprep.subr.bf16.mxu0 0
  %459 = vmatpush1.bf16.msra.mxu0 0
  %460 = vmatprep.subr.bf16.mxu0 0
  %461 = vmatpush1.bf16.msra.mxu0 0
  %462 = vmatprep.subr.bf16.mxu0 0
  %463 = vmatpush1.bf16.msra.mxu0 0
  %464 = vmatprep.subr.bf16.mxu0 0
  %465 = vmatpush1.bf16.msra.mxu0 0
  %466 = vmatprep.subr.bf16.mxu0 0
  %467 = vmatpush1.bf16.msra.mxu0 0
  %468 = vmatprep.subr.bf16.mxu0 0
  %469 = vmatpush1.bf16.msra.mxu0 0
  %470 = vmatprep.subr.bf16.mxu0 0
  %471 = vmatpush1.bf16.msra.mxu0 0
  %472 = vmatprep.mubr.bf16.mxu0 0
  %473 = vmatmul.mubr.bf16.gmra.mrb[0].mxu0 %v320
  %v474 = vpop.f32.mrb[0].mxu0
  %v475 = vadd.f32 %v378, %v474
  %v476 = vpop.f32.mrb[0].mxu0
  %v477 = vpop.f32.mrb[0].mxu0
  %v478 = vadd.f32 %v381, %v477
  %v479 = vpop.f32.mrb[0].mxu0
  %480 = vmatprep.mubr.bf16.mxu0 0
  %481 = vmatmul.mubr.bf16.gmra.mrb[0].mxu0 %v323
  %v482 = vpop.f32.mrb[0].mxu0
  %v483 = vadd.f32 %v386, %v482
  %v484 = vpop.f32.mrb[0].mxu0
  %v485 = vpop.f32.mrb[0].mxu0
  %v486 = vadd.f32 %v389, %v485
  %v487 = vpop.f32.mrb[0].mxu0
  %488 = vmatprep.mubr.bf16.mxu0 0
  %489 = vmatmul.mubr.bf16.gmra.mrb[0].mxu0 %v326
  %v490 = vpop.f32.mrb[0].mxu0
  %v491 = vadd.f32 %v394, %v490
  %v492 = vpop.f32.mrb[0].mxu0
  %v493 = vpop.f32.mrb[0].mxu0
  %v494 = vadd.f32 %v397, %v493
  %v495 = vpop.f32.mrb[0].mxu0
  %496 = vmatprep.mubr.bf16.mxu0 0
  %497 = vmatmul.mubr.bf16.gmra.mrb[0].mxu0 %v329
  %v498 = vpop.f32.mrb[0].mxu0
  %v499 = vadd.f32 %v402, %v498
  %v500 = vpop.f32.mrb[0].mxu0
  %v501 = vpop.f32.mrb[0].mxu0
  %v502 = vadd.f32 %v405, %v501
  %v503 = vpop.f32.mrb[0].mxu0
  %504 = vmatprep.mubr.bf16.mxu0 0
  %505 = vmatmul.mubr.bf16.gmra.mrb[0].mxu0 %v332
  %v506 = vpop.f32.mrb[0].mxu0
  %v507 = vadd.f32 %v410, %v506
  %v508 = vpop.f32.mrb[0].mxu0
  %v509 = vpop.f32.mrb[0].mxu0
  %v510 = vadd.f32 %v413, %v509
  %v511 = vpop.f32.mrb[0].mxu0
  %512 = vmatprep.mubr.bf16.mxu0 0
  %513 = vmatmul.mubr.bf16.gmra.mrb[0].mxu0 %v335
  %v514 = vpop.f32.mrb[0].mxu0
  %v515 = vadd.f32 %v418, %v514
  %v516 = vpop.f32.mrb[0].mxu0
  %v517 = vpop.f32.mrb[0].mxu0
  %v518 = vadd.f32 %v421, %v517
  %v519 = vpop.f32.mrb[0].mxu0
  %520 = vmatprep.mubr.bf16.mxu0 0
  %521 = vmatmul.mubr.bf16.gmra.mrb[0].mxu0 %v338
  %v522 = vpop.f32.mrb[0].mxu0
  %v523 = vadd.f32 %v426, %v522
  %v524 = vpop.f32.mrb[0].mxu0
  %v525 = vpop.f32.mrb[0].mxu0
  %v526 = vadd.f32 %v429, %v525
  %v527 = vpop.f32.mrb[0].mxu0
  %528 = vmatprep.mubr.bf16.mxu0 0
  %529 = vmatmul.mubr.bf16.gmra.mrb[0].mxu0 %v341
  %v530 = vpop.f32.mrb[0].mxu0
  %v531 = vadd.f32 %v434, %v530
  %v532 = vpop.f32.mrb[0].mxu0
  %v533 = vpop.f32.mrb[0].mxu0
  %v534 = vadd.f32 %v437, %v533
  %v535 = vpop.f32.mrb[0].mxu0
  %536 = vdwg.mxu0
  %v537 = vmax.f32 %v475, 0.0
  %v538 = vmax.f32 %v478, 0.0
  %v539 = vmax.f32 %v483, 0.0
  %v540 = vmax.f32 %v486, 0.0
  %v541 = vmax.f32 %v491, 0.0
  %v542 = vmax.f32 %v494, 0.0
  %v543 = vmax.f32 %v499, 0.0
  %v544 = vmax.f32 %v502, 0.0
  %v545 = vmax.f32 %v507, 0.0
  %v546 = vmax.f32 %v510, 0.0
  %v547 = vmax.f32 %v515, 0.0
  %v548 = vmax.f32 %v518, 0.0
  %v549 = vmax.f32 %v523, 0.0
  %v550 = vmax.f32 %v526, 0.0
  %v551 = vmax.f32 %v531, 0.0
  %v552 = vmax.f32 %v534, 0.0
  %v553 = vpack.c.bf16 %v538, %v537
  %v554 = vpack.c.bf16 %v540, %v539
  %v555 = vpack.c.bf16 %v542, %v541
  %v556 = vpack.c.bf16 %v544, %v543
  %v557 = vpack.c.bf16 %v546, %v545
  %v558 = vpack.c.bf16 %v548, %v547
  %v559 = vpack.c.bf16 %v550, %v549
  %v560 = vpack.c.bf16 %v552, %v551
  %v569 = vunpack.c.l.b16 %v553
  %v570 = vunpack.c.h.b16 %v553
  %v571 = vunpack.c.l.b16 %v554
  %v572 = vunpack.c.h.b16 %v554
  %v573 = vunpack.c.l.b16 %v555
  %v574 = vunpack.c.h.b16 %v555
  %v575 = vunpack.c.l.b16 %v556
  %v576 = vunpack.c.h.b16 %v556
  %v577 = vunpack.c.l.b16 %v557
  %v578 = vunpack.c.h.b16 %v557
  %v579 = vunpack.c.l.b16 %v558
  %v580 = vunpack.c.h.b16 %v558
  %v581 = vunpack.c.l.b16 %v559
  %v582 = vunpack.c.h.b16 %v559
  %v583 = vunpack.c.l.b16 %v560
  %v584 = vunpack.c.h.b16 %v560
  %v585 = vpack.c.b16 %v569, %v569
  %v586 = vpack.c.b16 %v570, %v570
  %v587 = vpack.c.b16 %v571, %v571
  %v588 = vpack.c.b16 %v572, %v572
  %v589 = vpack.c.b16 %v573, %v573
  %v590 = vpack.c.b16 %v574, %v574
  %v591 = vpack.c.b16 %v575, %v575
  %v592 = vpack.c.b16 %v576, %v576
  %v593 = vpack.c.b16 %v577, %v577
  %v594 = vpack.c.b16 %v578, %v578
  %v595 = vpack.c.b16 %v579, %v579
  %v596 = vpack.c.b16 %v580, %v580
  %v597 = vpack.c.b16 %v581, %v581
  %v598 = vpack.c.b16 %v582, %v582
  %v599 = vpack.c.b16 %v583, %v583
  %v600 = vpack.c.b16 %v584, %v584
  %vm617 = vcmask 257024
  %618 = vst.msk [vmem:[%s3] sm:$0xf] %vm617, %v585
  %619 = vst.msk [vmem:[%s3 + $0x4] sm:$0xf] %vm617, %v586
  %620 = vst.msk [vmem:[%s3 + $0x8] sm:$0xf] %vm617, %v587
  %621 = vst.msk [vmem:[%s3 + $0xc] sm:$0xf] %vm617, %v588
  %622 = vst.msk [vmem:[%s3 + $0x10] sm:$0xf] %vm617, %v589
  %623 = vst.msk [vmem:[%s3 + $0x14] sm:$0xf] %vm617, %v590
  %624 = vst.msk [vmem:[%s3 + $0x18] sm:$0xf] %vm617, %v591
  %625 = vst.msk [vmem:[%s3 + $0x1c] sm:$0xf] %vm617, %v592
  %626 = vst.msk [vmem:[%s3 + $0x20] sm:$0xf] %vm617, %v593
  %627 = vst.msk [vmem:[%s3 + $0x24] sm:$0xf] %vm617, %v594
  %628 = vst.msk [vmem:[%s3 + $0x28] sm:$0xf] %vm617, %v595
  %629 = vst.msk [vmem:[%s3 + $0x2c] sm:$0xf] %vm617, %v596
  %630 = vst.msk [vmem:[%s3 + $0x30] sm:$0xf] %vm617, %v597
  %631 = vst.msk [vmem:[%s3 + $0x34] sm:$0xf] %vm617, %v598
  %632 = vst.msk [vmem:[%s3 + $0x38] sm:$0xf] %vm617, %v599
  %633 = vst.msk [vmem:[%s3 + $0x3c] sm:$0xf] %vm617, %v600
  // Predicated region
  $region14: #{resnet_forward.29} parent=0 // pred_check
    _
  $region15: #{resnet_forward.29} parent=0 // pred_check_branch
    %635 = sbr.rel (0) target = $region17
  $region16: #{resnet_forward.29} parent=0 // pred_region
    _
  $region17: #{resnet_forward.29} parent=0 // pred_fallthru
    _
  // Predicated region
  $region18: #{resnet_forward.29} parent=0 // pred_check
    _
  $region19: #{resnet_forward.29} parent=0 // pred_check_branch
    %637 = sbr.rel (0) target = $region21
  $region20: #{resnet_forward.29} parent=0 // pred_region
    _
  $region21: #{resnet_forward.29} parent=0 // pred_fallthru
    _

// kernel: resnet_forward.30
$region0: #{resnet_forward.30}
  #allocation0 [shape = 'u32[]', space=smem, size = 0x4, offset = 0x4, fixed_abs, tag = 'smem constant byte address 0x4 - core index']
  #allocation1 [shape = 'u32[144,128]{1,0:T(1,128)}', space=vmem, size = 0x12000, scoped, tag = 'internal scratch']
  %s0 = inlined_call_operand.vmem [shape: bf16[128,288], index: 0, kind: input, shape index: {}]
  %s1 = inlined_call_operand.vmem [shape: bf16[288,32], index: 1, kind: input, shape index: {}]
  %s2 = inlined_call_operand.vmem [shape: f32[1,32], index: 2, kind: input, shape index: {}]
  %s3 = inlined_call_operand.vmem [shape: bf16[128,32], index: 3, kind: input, shape index: {}]
  %s4 = inlined_call_operand.vmem [shape: bf16[128,32], index: 4, kind: output, shape index: {}]
  %s5 = sld [smem:[#allocation0]]
  $region26: #{resnet_forward.30} parent=0
    _
  %s7 = ssub.s32 1, %s5
  %s8 = scalar_select 0, %s7, %s5
  // Predicated region
  $region2: #{resnet_forward.30} parent=0 // pred_check
    _
  $region3: #{resnet_forward.30} parent=0 // pred_check_branch
    %10 = sbr.rel (0) target = $region5
  $region4: #{resnet_forward.30} parent=0 // pred_region
    _
  $region5: #{resnet_forward.30} parent=0 // pred_fallthru
    _
  // Predicated region
  $region6: #{resnet_forward.30} parent=0 // pred_check
    _
  $region7: #{resnet_forward.30} parent=0 // pred_check_branch
    %12 = sbr.rel (0) target = $region9
  $region8: #{resnet_forward.30} parent=0 // pred_region
    _
  $region9: #{resnet_forward.30} parent=0 // pred_fallthru
    _
  // Predicated region
  $region10: #{resnet_forward.30} parent=0 // pred_check
    _
  $region11: #{resnet_forward.30} parent=0 // pred_check_branch
    %14 = sbr.rel (0) target = $region13
  $region12: #{resnet_forward.30} parent=0 // pred_region
    _
  $region13: #{resnet_forward.30} parent=0 // pred_fallthru
    _
  // Predicated region
  $region14: #{resnet_forward.30} parent=0 // pred_check
    _
  $region15: #{resnet_forward.30} parent=0 // pred_check_branch
    %16 = sbr.rel (0) target = $region17
  $region16: #{resnet_forward.30} parent=0 // pred_region
    _
  $region17: #{resnet_forward.30} parent=0 // pred_fallthru
    _
  %v18 = vld [vmem:[%s0] sm:$0xff]
  %v19 = vld [vmem:[%s0 + $0x8] sm:$0xf]
  %v20 = vld [vmem:[%s0 + $0xc] sm:$0xff]
  %v21 = vld [vmem:[%s0 + $0x14] sm:$0xf]
  %v22 = vld [vmem:[%s0 + $0x18] sm:$0xff]
  %v23 = vld [vmem:[%s0 + $0x20] sm:$0xf]
  %v24 = vld [vmem:[%s0 + $0x24] sm:$0xff]
  %v25 = vld [vmem:[%s0 + $0x2c] sm:$0xf]
  %v26 = vld [vmem:[%s0 + $0x30] sm:$0xff]
  %v27 = vld [vmem:[%s0 + $0x38] sm:$0xf]
  %v28 = vld [vmem:[%s0 + $0x3c] sm:$0xff]
  %v29 = vld [vmem:[%s0 + $0x44] sm:$0xf]
  %v30 = vld [vmem:[%s0 + $0x48] sm:$0xff]
  %v31 = vld [vmem:[%s0 + $0x50] sm:$0xf]
  %v32 = vld [vmem:[%s0 + $0x54] sm:$0xff]
  %v33 = vld [vmem:[%s0 + $0x5c] sm:$0xf]
  %v34 = vld [vmem:[%s0 + $0x60] sm:$0xff]
  %v35 = vld [vmem:[%s0 + $0x68] sm:$0xf]
  %v36 = vld [vmem:[%s0 + $0x6c] sm:$0xff]
  %v37 = vld [vmem:[%s0 + $0x74] sm:$0xf]
  %v38 = vld [vmem:[%s0 + $0x78] sm:$0xff]
  %v39 = vld [vmem:[%s0 + $0x80] sm:$0xf]
  %v40 = vld [vmem:[%s0 + $0x84] sm:$0xff]
  %v41 = vld [vmem:[%s0 + $0x8c] sm:$0xf]
  %v42 = vld [vmem:[%s0 + $0x90] sm:$0xff]
  %v43 = vld [vmem:[%s0 + $0x98] sm:$0xf]
  %v44 = vld [vmem:[%s0 + $0x9c] sm:$0xff]
  %v45 = vld [vmem:[%s0 + $0xa4] sm:$0xf]
  %v46 = vld [vmem:[%s0 + $0xa8] sm:$0xff]
  %v47 = vld [vmem:[%s0 + $0xb0] sm:$0xf]
  %v48 = vld [vmem:[%s0 + $0xb4] sm:$0xff]
  %v49 = vld [vmem:[%s0 + $0xbc] sm:$0xf]
  %v50 = vld [vmem:[%s1] sm:$0xf]
  %v51 = vld [vmem:[%s1 + $0x4] sm:$0xf]
  %v52 = vld [vmem:[%s1 + $0x8] sm:$0xf]
  %v53 = vld [vmem:[%s1 + $0xc] sm:$0xf]
  %v54 = vld [vmem:[%s1 + $0x10] sm:$0xf]
  %v55 = vld [vmem:[%s1 + $0x14] sm:$0xf]
  %v56 = vld [vmem:[%s1 + $0x18] sm:$0xf]
  %v57 = vld [vmem:[%s1 + $0x1c] sm:$0xf]
  %v58 = vld [vmem:[%s1 + $0x20] sm:$0xf]
  %v59 = vld [vmem:[%s1 + $0x24] sm:$0xf]
  %v60 = vld [vmem:[%s1 + $0x28] sm:$0xf]
  %v61 = vld [vmem:[%s1 + $0x2c] sm:$0xf]
  %v62 = vld [vmem:[%s1 + $0x30] sm:$0xf]
  %v63 = vld [vmem:[%s1 + $0x34] sm:$0xf]
  %v64 = vld [vmem:[%s1 + $0x38] sm:$0xf]
  %v65 = vld [vmem:[%s1 + $0x3c] sm:$0xf]
  %v66 = vld [vmem:[%s1 + $0x40] sm:$0xf]
  %v67 = vld [vmem:[%s1 + $0x44] sm:$0xf]
  %v68 = vld [vmem:[%s1 + $0x48] sm:$0xf]
  %v69 = vld [vmem:[%s1 + $0x4c] sm:$0xf]
  %v70 = vld [vmem:[%s1 + $0x50] sm:$0xf]
  %v71 = vld [vmem:[%s1 + $0x54] sm:$0xf]
  %v72 = vld [vmem:[%s1 + $0x58] sm:$0xf]
  %v73 = vld [vmem:[%s1 + $0x5c] sm:$0xf]
  %v74 = vld [vmem:[%s1 + $0x60] sm:$0xf]
  %v75 = vld [vmem:[%s1 + $0x64] sm:$0xf]
  %v76 = vld [vmem:[%s1 + $0x68] sm:$0xf]
  %v77 = vld [vmem:[%s1 + $0x6c] sm:$0xf]
  %v78 = vld [vmem:[%s1 + $0x70] sm:$0xf]
  %v79 = vld [vmem:[%s1 + $0x74] sm:$0xf]
  %v80 = vld [vmem:[%s1 + $0x78] sm:$0xf]
  %v81 = vld [vmem:[%s1 + $0x7c] sm:$0xf]
  %v82 = vld [vmem:[%s1 + $0x80] sm:$0xf]
  %v83 = vld [vmem:[%s1 + $0x84] sm:$0xf]
  %v84 = vld [vmem:[%s1 + $0x88] sm:$0xf]
  %v85 = vld [vmem:[%s1 + $0x8c] sm:$0xf]
  %v86 = vld [vmem:[%s2] sm:$0x1]
  %v88 = vlaneseq
  %v89 = vshrl.u32 %v88, 7
  %v90 = vsub.s32 0, %v89
  %v91 = vrot.slane %v86, %v90
  %v125 = vunpack.c.l.b16 %v18
  %v126 = vunpack.c.h.b16 %v18
  %v127 = vunpack.c.l.b16 %v19
  %v128 = vunpack.c.l.b16 %v20
  %v129 = vunpack.c.h.b16 %v20
  %v130 = vunpack.c.l.b16 %v21
  %v131 = vunpack.c.l.b16 %v22
  %v132 = vunpack.c.h.b16 %v22
  %v133 = vunpack.c.l.b16 %v23
  %v134 = vunpack.c.l.b16 %v24
  %v135 = vunpack.c.h.b16 %v24
  %v136 = vunpack.c.l.b16 %v25
  %v137 = vunpack.c.l.b16 %v26
  %v138 = vunpack.c.h.b16 %v26
  %v139 = vunpack.c.l.b16 %v27
  %v140 = vunpack.c.l.b16 %v28
  %v141 = vunpack.c.h.b16 %v28
  %v142 = vunpack.c.l.b16 %v29
  %v143 = vunpack.c.l.b16 %v30
  %v144 = vunpack.c.h.b16 %v30
  %v145 = vunpack.c.l.b16 %v31
  %v146 = vunpack.c.l.b16 %v32
  %v147 = vunpack.c.h.b16 %v32
  %v148 = vunpack.c.l.b16 %v33
  %v149 = vunpack.c.l.b16 %v34
  %v150 = vunpack.c.h.b16 %v34
  %v151 = vunpack.c.l.b16 %v35
  %v152 = vunpack.c.l.b16 %v36
  %v153 = vunpack.c.h.b16 %v36
  %v154 = vunpack.c.l.b16 %v37
  %v155 = vunpack.c.l.b16 %v38
  %v156 = vunpack.c.h.b16 %v38
  %v157 = vunpack.c.l.b16 %v39
  %v158 = vunpack.c.l.b16 %v40
  %v159 = vunpack.c.h.b16 %v40
  %v160 = vunpack.c.l.b16 %v41
  %v161 = vunpack.c.l.b16 %v42
  %v162 = vunpack.c.h.b16 %v42
  %v163 = vunpack.c.l.b16 %v43
  %v164 = vunpack.c.l.b16 %v44
  %v165 = vunpack.c.h.b16 %v44
  %v166 = vunpack.c.l.b16 %v45
  %v167 = vunpack.c.l.b16 %v46
  %v168 = vunpack.c.h.b16 %v46
  %v169 = vunpack.c.l.b16 %v47
  %v170 = vunpack.c.l.b16 %v48
  %v171 = vunpack.c.h.b16 %v48
  %v172 = vunpack.c.l.b16 %v49
  %v173 = vpack.c.b16 %v128, %v125
  %v174 = vpack.c.b16 %v129, %v126
  %v175 = vpack.c.b16 %v130, %v127
  %v176 = vpack.c.b16 %v134, %v131
  %v177 = vpack.c.b16 %v135, %v132
  %v178 = vpack.c.b16 %v136, %v133
  %v179 = vpack.c.b16 %v140, %v137
  %v180 = vpack.c.b16 %v141, %v138
  %v181 = vpack.c.b16 %v142, %v139
  %v182 = vpack.c.b16 %v146, %v143
  %v183 = vpack.c.b16 %v147, %v144
  %v184 = vpack.c.b16 %v148, %v145
  %v185 = vpack.c.b16 %v152, %v149
  %v186 = vpack.c.b16 %v153, %v150
  %v187 = vpack.c.b16 %v154, %v151
  %v188 = vpack.c.b16 %v158, %v155
  %v189 = vpack.c.b16 %v159, %v156
  %v190 = vpack.c.b16 %v160, %v157
  %v191 = vpack.c.b16 %v164, %v161
  %v192 = vpack.c.b16 %v165, %v162
  %v193 = vpack.c.b16 %v166, %v163
  %v194 = vpack.c.b16 %v170, %v167
  %v195 = vpack.c.b16 %v171, %v168
  %v196 = vpack.c.b16 %v172, %v169
  %v249 = vunpack.c.l.b16 %v50
  %v250 = vunpack.c.l.b16 %v51
  %v251 = vunpack.c.l.b16 %v52
  %v252 = vunpack.c.l.b16 %v53
  %v253 = vunpack.c.l.b16 %v54
  %v254 = vunpack.c.l.b16 %v55
  %v255 = vunpack.c.l.b16 %v56
  %v256 = vunpack.c.l.b16 %v57
  %v257 = vunpack.c.l.b16 %v58
  %v258 = vunpack.c.l.b16 %v59
  %v259 = vunpack.c.l.b16 %v60
  %v260 = vunpack.c.l.b16 %v61
  %v261 = vunpack.c.l.b16 %v62
  %v262 = vunpack.c.l.b16 %v63
  %v263 = vunpack.c.l.b16 %v64
  %v264 = vunpack.c.l.b16 %v65
  %v265 = vunpack.c.l.b16 %v66
  %v266 = vunpack.c.l.b16 %v67
  %v267 = vunpack.c.l.b16 %v68
  %v268 = vunpack.c.l.b16 %v69
  %v269 = vunpack.c.l.b16 %v70
  %v270 = vunpack.c.l.b16 %v71
  %v271 = vunpack.c.l.b16 %v72
  %v272 = vunpack.c.l.b16 %v73
  %v273 = vunpack.c.l.b16 %v74
  %v274 = vunpack.c.l.b16 %v75
  %v275 = vunpack.c.l.b16 %v76
  %v276 = vunpack.c.l.b16 %v77
  %v277 = vunpack.c.l.b16 %v78
  %v278 = vunpack.c.l.b16 %v79
  %v279 = vunpack.c.l.b16 %v80
  %v280 = vunpack.c.l.b16 %v81
  %v281 = vunpack.c.l.b16 %v82
  %v282 = vunpack.c.l.b16 %v83
  %v283 = vunpack.c.l.b16 %v84
  %v284 = vunpack.c.l.b16 %v85
  %v285 = vpack.c.b16 %v250, %v249
  %v286 = vpack.c.b16 %v252, %v251
  %v287 = vpack.c.b16 %v254, %v253
  %v288 = vpack.c.b16 %v256, %v255
  %v289 = vpack.c.b16 %v258, %v257
  %v290 = vpack.c.b16 %v260, %v259
  %v291 = vpack.c.b16 %v262, %v261
  %v292 = vpack.c.b16 %v264, %v263
  %v293 = vpack.c.b16 %v266, %v265
  %v294 = vpack.c.b16 %v268, %v267
  %v295 = vpack.c.b16 %v270, %v269
  %v296 = vpack.c.b16 %v272, %v271
  %v297 = vpack.c.b16 %v274, %v273
  %v298 = vpack.c.b16 %v276, %v275
  %v299 = vpack.c.b16 %v278, %v277
  %v300 = vpack.c.b16 %v280, %v279
  %v301 = vpack.c.b16 %v282, %v281
  %v302 = vpack.c.b16 %v284, %v283
  %vm321 = vcmask 261120
  %v323 = vsel %vm321, %v175, 0
  %v326 = vsel %vm321, %v178, 0
  %v329 = vsel %vm321, %v181, 0
  %v332 = vsel %vm321, %v184, 0
  %v335 = vsel %vm321, %v187, 0
  %v338 = vsel %vm321, %v190, 0
  %v341 = vsel %vm321, %v193, 0
  %v344 = vsel %vm321, %v196, 0
  %346 = vmatprep.subr.bf16.mxu0 0
  %347 = vmatpush1.bf16.msra.mxu0 %v285
  %348 = vmatprep.subr.bf16.mxu0 0
  %349 = vmatpush1.bf16.msra.mxu0 %v286
  %350 = vmatprep.subr.bf16.mxu0 0
  %351 = vmatpush1.bf16.msra.mxu0 %v287
  %352 = vmatprep.subr.bf16.mxu0 0
  %353 = vmatpush1.bf16.msra.mxu0 %v288
  %354 = vmatprep.subr.bf16.mxu0 0
  %355 = vmatpush1.bf16.msra.mxu0 %v289
  %356 = vmatprep.subr.bf16.mxu0 0
  %357 = vmatpush1.bf16.msra.mxu0 %v290
  %358 = vmatprep.subr.bf16.mxu0 0
  %359 = vmatpush1.bf16.msra.mxu0 %v291
  %360 = vmatprep.subr.bf16.mxu0 0
  %361 = vmatpush1.bf16.msra.mxu0 %v292
  %362 = vmatprep.subr.bf16.mxu0 0
  %363 = vmatpush1.bf16.msra.mxu0 %v293
  %364 = vmatprep.subr.bf16.mxu0 0
  %365 = vmatpush1.bf16.msra.mxu0 %v294
  %366 = vmatprep.subr.bf16.mxu0 0
  %367 = vmatpush1.bf16.msra.mxu0 %v295
  %368 = vmatprep.subr.bf16.mxu0 0
  %369 = vmatpush1.bf16.msra.mxu0 %v296
  %370 = vmatprep.subr.bf16.mxu0 0
  %371 = vmatpush1.bf16.msra.mxu0 %v297
  %372 = vmatprep.subr.bf16.mxu0 0
  %373 = vmatpush1.bf16.msra.mxu0 %v298
  %374 = vmatprep.subr.bf16.mxu0 0
  %375 = vmatpush1.bf16.msra.mxu0 %v299
  %376 = vmatprep.subr.bf16.mxu0 0
  %377 = vmatpush1.bf16.msra.mxu0 %v300
  %378 = vmatprep.mubr.bf16.mxu0 %v174
  %379 = vmatmul.mubr.bf16.gmra.mrb[0].mxu0 %v173
  %v380 = vpop.f32.mrb[0].mxu0
  %v381 = vadd.f32 %v91, %v380
  %v382 = vpop.f32.mrb[0].mxu0
  %v383 = vpop.f32.mrb[0].mxu0
  %v384 = vadd.f32 %v91, %v383
  %v385 = vpop.f32.mrb[0].mxu0
  %386 = vmatprep.mubr.bf16.mxu0 %v177
  %387 = vmatmul.mubr.bf16.gmra.mrb[0].mxu0 %v176
  %v388 = vpop.f32.mrb[0].mxu0
  %v389 = vadd.f32 %v91, %v388
  %v390 = vpop.f32.mrb[0].mxu0
  %v391 = vpop.f32.mrb[0].mxu0
  %v392 = vadd.f32 %v91, %v391
  %v393 = vpop.f32.mrb[0].mxu0
  %394 = vmatprep.mubr.bf16.mxu0 %v180
  %395 = vmatmul.mubr.bf16.gmra.mrb[0].mxu0 %v179
  %v396 = vpop.f32.mrb[0].mxu0
  %v397 = vadd.f32 %v91, %v396
  %v398 = vpop.f32.mrb[0].mxu0
  %v399 = vpop.f32.mrb[0].mxu0
  %v400 = vadd.f32 %v91, %v399
  %v401 = vpop.f32.mrb[0].mxu0
  %402 = vmatprep.mubr.bf16.mxu0 %v183
  %403 = vmatmul.mubr.bf16.gmra.mrb[0].mxu0 %v182
  %v404 = vpop.f32.mrb[0].mxu0
  %v405 = vadd.f32 %v91, %v404
  %v406 = vpop.f32.mrb[0].mxu0
  %v407 = vpop.f32.mrb[0].mxu0
  %v408 = vadd.f32 %v91, %v407
  %v409 = vpop.f32.mrb[0].mxu0
  %410 = vmatprep.mubr.bf16.mxu0 %v186
  %411 = vmatmul.mubr.bf16.gmra.mrb[0].mxu0 %v185
  %v412 = vpop.f32.mrb[0].mxu0
  %v413 = vadd.f32 %v91, %v412
  %v414 = vpop.f32.mrb[0].mxu0
  %v415 = vpop.f32.mrb[0].mxu0
  %v416 = vadd.f32 %v91, %v415
  %v417 = vpop.f32.mrb[0].mxu0
  %418 = vmatprep.mubr.bf16.mxu0 %v189
  %419 = vmatmul.mubr.bf16.gmra.mrb[0].mxu0 %v188
  %v420 = vpop.f32.mrb[0].mxu0
  %v421 = vadd.f32 %v91, %v420
  %v422 = vpop.f32.mrb[0].mxu0
  %v423 = vpop.f32.mrb[0].mxu0
  %v424 = vadd.f32 %v91, %v423
  %v425 = vpop.f32.mrb[0].mxu0
  %426 = vmatprep.mubr.bf16.mxu0 %v192
  %427 = vmatmul.mubr.bf16.gmra.mrb[0].mxu0 %v191
  %v428 = vpop.f32.mrb[0].mxu0
  %v429 = vadd.f32 %v91, %v428
  %v430 = vpop.f32.mrb[0].mxu0
  %v431 = vpop.f32.mrb[0].mxu0
  %v432 = vadd.f32 %v91, %v431
  %v433 = vpop.f32.mrb[0].mxu0
  %434 = vmatprep.mubr.bf16.mxu0 %v195
  %435 = vmatmul.mubr.bf16.gmra.mrb[0].mxu0 %v194
  %v436 = vpop.f32.mrb[0].mxu0
  %v437 = vadd.f32 %v91, %v436
  %v438 = vpop.f32.mrb[0].mxu0
  %v439 = vpop.f32.mrb[0].mxu0
  %v440 = vadd.f32 %v91, %v439
  %v441 = vpop.f32.mrb[0].mxu0
  %442 = vdwg.mxu0
  %443 = vmatprep.subr.bf16.mxu0 0
  %444 = vmatpush1.bf16.msra.mxu0 %v301
  %445 = vmatprep.subr.bf16.mxu0 0
  %446 = vmatpush1.bf16.msra.mxu0 %v302
  %447 = vmatprep.subr.bf16.mxu0 0
  %448 = vmatpush1.bf16.msra.mxu0 0
  %449 = vmatprep.subr.bf16.mxu0 0
  %450 = vmatpush1.bf16.msra.mxu0 0
  %451 = vmatprep.subr.bf16.mxu0 0
  %452 = vmatpush1.bf16.msra.mxu0 0
  %453 = vmatprep.subr.bf16.mxu0 0
  %454 = vmatpush1.bf16.msra.mxu0 0
  %455 = vmatprep.subr.bf16.mxu0 0
  %456 = vmatpush1.bf16.msra.mxu0 0
  %457 = vmatprep.subr.bf16.mxu0 0
  %458 = vmatpush1.bf16.msra.mxu0 0
  %459 = vmatprep.subr.bf16.mxu0 0
  %460 = vmatpush1.bf16.msra.mxu0 0
  %461 = vmatprep.subr.bf16.mxu0 0
  %462 = vmatpush1.bf16.msra.mxu0 0
  %463 = vmatprep.subr.bf16.mxu0 0
  %464 = vmatpush1.bf16.msra.mxu0 0
  %465 = vmatprep.subr.bf16.mxu0 0
  %466 = vmatpush1.bf16.msra.mxu0 0
  %467 = vmatprep.subr.bf16.mxu0 0
  %468 = vmatpush1.bf16.msra.mxu0 0
  %469 = vmatprep.subr.bf16.mxu0 0
  %470 = vmatpush1.bf16.msra.mxu0 0
  %471 = vmatprep.subr.bf16.mxu0 0
  %472 = vmatpush1.bf16.msra.mxu0 0
  %473 = vmatprep.subr.bf16.mxu0 0
  %474 = vmatpush1.bf16.msra.mxu0 0
  %475 = vmatprep.mubr.bf16.mxu0 0
  %476 = vmatmul.mubr.bf16.gmra.mrb[0].mxu0 %v323
  %v477 = vpop.f32.mrb[0].mxu0
  %v478 = vadd.f32 %v381, %v477
  %v479 = vpop.f32.mrb[0].mxu0
  %v480 = vpop.f32.mrb[0].mxu0
  %v481 = vadd.f32 %v384, %v480
  %v482 = vpop.f32.mrb[0].mxu0
  %483 = vmatprep.mubr.bf16.mxu0 0
  %484 = vmatmul.mubr.bf16.gmra.mrb[0].mxu0 %v326
  %v485 = vpop.f32.mrb[0].mxu0
  %v486 = vadd.f32 %v389, %v485
  %v487 = vpop.f32.mrb[0].mxu0
  %v488 = vpop.f32.mrb[0].mxu0
  %v489 = vadd.f32 %v392, %v488
  %v490 = vpop.f32.mrb[0].mxu0
  %491 = vmatprep.mubr.bf16.mxu0 0
  %492 = vmatmul.mubr.bf16.gmra.mrb[0].mxu0 %v329
  %v493 = vpop.f32.mrb[0].mxu0
  %v494 = vadd.f32 %v397, %v493
  %v495 = vpop.f32.mrb[0].mxu0
  %v496 = vpop.f32.mrb[0].mxu0
  %v497 = vadd.f32 %v400, %v496
  %v498 = vpop.f32.mrb[0].mxu0
  %499 = vmatprep.mubr.bf16.mxu0 0
  %500 = vmatmul.mubr.bf16.gmra.mrb[0].mxu0 %v332
  %v501 = vpop.f32.mrb[0].mxu0
  %v502 = vadd.f32 %v405, %v501
  %v503 = vpop.f32.mrb[0].mxu0
  %v504 = vpop.f32.mrb[0].mxu0
  %v505 = vadd.f32 %v408, %v504
  %v506 = vpop.f32.mrb[0].mxu0
  %507 = vmatprep.mubr.bf16.mxu0 0
  %508 = vmatmul.mubr.bf16.gmra.mrb[0].mxu0 %v335
  %v509 = vpop.f32.mrb[0].mxu0
  %v510 = vadd.f32 %v413, %v509
  %v511 = vpop.f32.mrb[0].mxu0
  %v512 = vpop.f32.mrb[0].mxu0
  %v513 = vadd.f32 %v416, %v512
  %v514 = vpop.f32.mrb[0].mxu0
  %515 = vmatprep.mubr.bf16.mxu0 0
  %516 = vmatmul.mubr.bf16.gmra.mrb[0].mxu0 %v338
  %v517 = vpop.f32.mrb[0].mxu0
  %v518 = vadd.f32 %v421, %v517
  %v519 = vpop.f32.mrb[0].mxu0
  %v520 = vpop.f32.mrb[0].mxu0
  %v521 = vadd.f32 %v424, %v520
  %v522 = vpop.f32.mrb[0].mxu0
  %523 = vmatprep.mubr.bf16.mxu0 0
  %524 = vmatmul.mubr.bf16.gmra.mrb[0].mxu0 %v341
  %v525 = vpop.f32.mrb[0].mxu0
  %v526 = vadd.f32 %v429, %v525
  %v527 = vpop.f32.mrb[0].mxu0
  %v528 = vpop.f32.mrb[0].mxu0
  %v529 = vadd.f32 %v432, %v528
  %v530 = vpop.f32.mrb[0].mxu0
  %531 = vmatprep.mubr.bf16.mxu0 0
  %532 = vmatmul.mubr.bf16.gmra.mrb[0].mxu0 %v344
  %v533 = vpop.f32.mrb[0].mxu0
  %v534 = vadd.f32 %v437, %v533
  %v535 = vpop.f32.mrb[0].mxu0
  %v536 = vpop.f32.mrb[0].mxu0
  %v537 = vadd.f32 %v440, %v536
  %v538 = vpop.f32.mrb[0].mxu0
  %539 = vdwg.mxu0
  %v540 = vld [vmem:[%s3] sm:$0xf]
  %v541 = vld [vmem:[%s3 + $0x4] sm:$0xf]
  %v542 = vld [vmem:[%s3 + $0x8] sm:$0xf]
  %v543 = vld [vmem:[%s3 + $0xc] sm:$0xf]
  %v544 = vld [vmem:[%s3 + $0x10] sm:$0xf]
  %v545 = vld [vmem:[%s3 + $0x14] sm:$0xf]
  %v546 = vld [vmem:[%s3 + $0x18] sm:$0xf]
  %v547 = vld [vmem:[%s3 + $0x1c] sm:$0xf]
  %v548 = vld [vmem:[%s3 + $0x20] sm:$0xf]
  %v549 = vld [vmem:[%s3 + $0x24] sm:$0xf]
  %v550 = vld [vmem:[%s3 + $0x28] sm:$0xf]
  %v551 = vld [vmem:[%s3 + $0x2c] sm:$0xf]
  %v552 = vld [vmem:[%s3 + $0x30] sm:$0xf]
  %v553 = vld [vmem:[%s3 + $0x34] sm:$0xf]
  %v554 = vld [vmem:[%s3 + $0x38] sm:$0xf]
  %v555 = vld [vmem:[%s3 + $0x3c] sm:$0xf]
  %v556 = vunpack.c.l.bf16 %v540
  %v557 = vunpack.c.l.bf16 %v541
  %v558 = vunpack.c.l.bf16 %v542
  %v559 = vunpack.c.l.bf16 %v543
  %v560 = vunpack.c.l.bf16 %v544
  %v561 = vunpack.c.l.bf16 %v545
  %v562 = vunpack.c.l.bf16 %v546
  %v563 = vunpack.c.l.bf16 %v547
  %v564 = vunpack.c.l.bf16 %v548
  %v565 = vunpack.c.l.bf16 %v549
  %v566 = vunpack.c.l.bf16 %v550
  %v567 = vunpack.c.l.bf16 %v551
  %v568 = vunpack.c.l.bf16 %v552
  %v569 = vunpack.c.l.bf16 %v553
  %v570 = vunpack.c.l.bf16 %v554
  %v571 = vunpack.c.l.bf16 %v555
  %v572 = vadd.f32 %v478, %v556
  %v573 = vadd.f32 %v481, %v557
  %v574 = vadd.f32 %v486, %v558
  %v575 = vadd.f32 %v489, %v559
  %v576 = vadd.f32 %v494, %v560
  %v577 = vadd.f32 %v497, %v561
  %v578 = vadd.f32 %v502, %v562
  %v579 = vadd.f32 %v505, %v563
  %v580 = vadd.f32 %v510, %v564
  %v581 = vadd.f32 %v513, %v565
  %v582 = vadd.f32 %v518, %v566
  %v583 = vadd.f32 %v521, %v567
  %v584 = vadd.f32 %v526, %v568
  %v585 = vadd.f32 %v529, %v569
  %v586 = vadd.f32 %v534, %v570
  %v587 = vadd.f32 %v537, %v571
  %v588 = vmax.f32 %v572, 0.0
  %v589 = vmax.f32 %v573, 0.0
  %v590 = vmax.f32 %v574, 0.0
  %v591 = vmax.f32 %v575, 0.0
  %v592 = vmax.f32 %v576, 0.0
  %v593 = vmax.f32 %v577, 0.0
  %v594 = vmax.f32 %v578, 0.0
  %v595 = vmax.f32 %v579, 0.0
  %v596 = vmax.f32 %v580, 0.0
  %v597 = vmax.f32 %v581, 0.0
  %v598 = vmax.f32 %v582, 0.0
  %v599 = vmax.f32 %v583, 0.0
  %v600 = vmax.f32 %v584, 0.0
  %v601 = vmax.f32 %v585, 0.0
  %v602 = vmax.f32 %v586, 0.0
  %v603 = vmax.f32 %v587, 0.0
  %v604 = vpack.c.bf16 %v589, %v588
  %v605 = vpack.c.bf16 %v591, %v590
  %v606 = vpack.c.bf16 %v593, %v592
  %v607 = vpack.c.bf16 %v595, %v594
  %v608 = vpack.c.bf16 %v597, %v596
  %v609 = vpack.c.bf16 %v599, %v598
  %v610 = vpack.c.bf16 %v601, %v600
  %v611 = vpack.c.bf16 %v603, %v602
  %v620 = vunpack.c.l.b16 %v604
  %v621 = vunpack.c.h.b16 %v604
  %v622 = vunpack.c.l.b16 %v605
  %v623 = vunpack.c.h.b16 %v605
  %v624 = vunpack.c.l.b16 %v606
  %v625 = vunpack.c.h.b16 %v606
  %v626 = vunpack.c.l.b16 %v607
  %v627 = vunpack.c.h.b16 %v607
  %v628 = vunpack.c.l.b16 %v608
  %v629 = vunpack.c.h.b16 %v608
  %v630 = vunpack.c.l.b16 %v609
  %v631 = vunpack.c.h.b16 %v609
  %v632 = vunpack.c.l.b16 %v610
  %v633 = vunpack.c.h.b16 %v610
  %v634 = vunpack.c.l.b16 %v611
  %v635 = vunpack.c.h.b16 %v611
  %v636 = vpack.c.b16 %v620, %v620
  %v637 = vpack.c.b16 %v621, %v621
  %v638 = vpack.c.b16 %v622, %v622
  %v639 = vpack.c.b16 %v623, %v623
  %v640 = vpack.c.b16 %v624, %v624
  %v641 = vpack.c.b16 %v625, %v625
  %v642 = vpack.c.b16 %v626, %v626
  %v643 = vpack.c.b16 %v627, %v627
  %v644 = vpack.c.b16 %v628, %v628
  %v645 = vpack.c.b16 %v629, %v629
  %v646 = vpack.c.b16 %v630, %v630
  %v647 = vpack.c.b16 %v631, %v631
  %v648 = vpack.c.b16 %v632, %v632
  %v649 = vpack.c.b16 %v633, %v633
  %v650 = vpack.c.b16 %v634, %v634
  %v651 = vpack.c.b16 %v635, %v635
  %vm668 = vcmask 257024
  %669 = vst.msk [vmem:[%s4] sm:$0xf] %vm668, %v636
  %670 = vst.msk [vmem:[%s4 + $0x4] sm:$0xf] %vm668, %v637
  %671 = vst.msk [vmem:[%s4 + $0x8] sm:$0xf] %vm668, %v638
  %672 = vst.msk [vmem:[%s4 + $0xc] sm:$0xf] %vm668, %v639
  %673 = vst.msk [vmem:[%s4 + $0x10] sm:$0xf] %vm668, %v640
  %674 = vst.msk [vmem:[%s4 + $0x14] sm:$0xf] %vm668, %v641
  %675 = vst.msk [vmem:[%s4 + $0x18] sm:$0xf] %vm668, %v642
  %676 = vst.msk [vmem:[%s4 + $0x1c] sm:$0xf] %vm668, %v643
  %677 = vst.msk [vmem:[%s4 + $0x20] sm:$0xf] %vm668, %v644
  %678 = vst.msk [vmem:[%s4 + $0x24] sm:$0xf] %vm668, %v645
  %679 = vst.msk [vmem:[%s4 + $0x28] sm:$0xf] %vm668, %v646
  %680 = vst.msk [vmem:[%s4 + $0x2c] sm:$0xf] %vm668, %v647
  %681 = vst.msk [vmem:[%s4 + $0x30] sm:$0xf] %vm668, %v648
  %682 = vst.msk [vmem:[%s4 + $0x34] sm:$0xf] %vm668, %v649
  %683 = vst.msk [vmem:[%s4 + $0x38] sm:$0xf] %vm668, %v650
  %684 = vst.msk [vmem:[%s4 + $0x3c] sm:$0xf] %vm668, %v651
  // Predicated region
  $region18: #{resnet_forward.30} parent=0 // pred_check
    _
  $region19: #{resnet_forward.30} parent=0 // pred_check_branch
    %686 = sbr.rel (0) target = $region21
  $region20: #{resnet_forward.30} parent=0 // pred_region
    _
  $region21: #{resnet_forward.30} parent=0 // pred_fallthru
    _
  // Predicated region
  $region22: #{resnet_forward.30} parent=0 // pred_check
    _
  $region23: #{resnet_forward.30} parent=0 // pred_check_branch
    %688 = sbr.rel (0) target = $region25
  $region24: #{resnet_forward.30} parent=0 // pred_region
    _
  $region25: #{resnet_forward.30} parent=0 // pred_fallthru
    _

// kernel: resnet_forward.31
$region0: #{resnet_forward.31}
  #allocation0 [shape = 'u32[]', space=smem, size = 0x4, offset = 0x4, fixed_abs, tag = 'smem constant byte address 0x4 - core index']
  #allocation1 [shape = 'u32[144,128]{1,0:T(1,128)}', space=vmem, size = 0x12000, scoped, tag = 'internal scratch']
  %s0 = inlined_call_operand.vmem [shape: bf16[32,288], index: 0, kind: input, shape index: {}]
  %s1 = inlined_call_operand.vmem [shape: bf16[288,64], index: 1, kind: input, shape index: {}]
  %s2 = inlined_call_operand.vmem [shape: f32[1,64], index: 2, kind: input, shape index: {}]
  %s3 = inlined_call_operand.vmem [shape: bf16[32,64], index: 3, kind: output, shape index: {}]
  %s4 = sld [smem:[#allocation0]]
  $region22: #{resnet_forward.31} parent=0
    _
  %s6 = ssub.s32 1, %s4
  %s7 = scalar_select 0, %s6, %s4
  // Predicated region
  $region2: #{resnet_forward.31} parent=0 // pred_check
    _
  $region3: #{resnet_forward.31} parent=0 // pred_check_branch
    %9 = sbr.rel (0) target = $region5
  $region4: #{resnet_forward.31} parent=0 // pred_region
    _
  $region5: #{resnet_forward.31} parent=0 // pred_fallthru
    _
  // Predicated region
  $region6: #{resnet_forward.31} parent=0 // pred_check
    _
  $region7: #{resnet_forward.31} parent=0 // pred_check_branch
    %11 = sbr.rel (0) target = $region9
  $region8: #{resnet_forward.31} parent=0 // pred_region
    _
  $region9: #{resnet_forward.31} parent=0 // pred_fallthru
    _
  // Predicated region
  $region10: #{resnet_forward.31} parent=0 // pred_check
    _
  $region11: #{resnet_forward.31} parent=0 // pred_check_branch
    %13 = sbr.rel (0) target = $region13
  $region12: #{resnet_forward.31} parent=0 // pred_region
    _
  $region13: #{resnet_forward.31} parent=0 // pred_fallthru
    _
  %v15 = vld [vmem:[%s0] sm:$0xff]
  %v16 = vld [vmem:[%s0 + $0x8] sm:$0xf]
  %v17 = vld [vmem:[%s0 + $0xc] sm:$0xff]
  %v18 = vld [vmem:[%s0 + $0x14] sm:$0xf]
  %v19 = vld [vmem:[%s0 + $0x18] sm:$0xff]
  %v20 = vld [vmem:[%s0 + $0x20] sm:$0xf]
  %v21 = vld [vmem:[%s0 + $0x24] sm:$0xff]
  %v22 = vld [vmem:[%s0 + $0x2c] sm:$0xf]
  %v23 = vld [vmem:[%s1] sm:$0xf]
  %v24 = vld [vmem:[%s1 + $0x4] sm:$0xf]
  %v25 = vld [vmem:[%s1 + $0x8] sm:$0xf]
  %v26 = vld [vmem:[%s1 + $0xc] sm:$0xf]
  %v27 = vld [vmem:[%s1 + $0x10] sm:$0xf]
  %v28 = vld [vmem:[%s1 + $0x14] sm:$0xf]
  %v29 = vld [vmem:[%s1 + $0x18] sm:$0xf]
  %v30 = vld [vmem:[%s1 + $0x1c] sm:$0xf]
  %v31 = vld [vmem:[%s1 + $0x20] sm:$0xf]
  %v32 = vld [vmem:[%s1 + $0x24] sm:$0xf]
  %v33 = vld [vmem:[%s1 + $0x28] sm:$0xf]
  %v34 = vld [vmem:[%s1 + $0x2c] sm:$0xf]
  %v35 = vld [vmem:[%s1 + $0x30] sm:$0xf]
  %v36 = vld [vmem:[%s1 + $0x34] sm:$0xf]
  %v37 = vld [vmem:[%s1 + $0x38] sm:$0xf]
  %v38 = vld [vmem:[%s1 + $0x3c] sm:$0xf]
  %v39 = vld [vmem:[%s1 + $0x40] sm:$0xf]
  %v40 = vld [vmem:[%s1 + $0x44] sm:$0xf]
  %v41 = vld [vmem:[%s1 + $0x48] sm:$0xf]
  %v42 = vld [vmem:[%s1 + $0x4c] sm:$0xf]
  %v43 = vld [vmem:[%s1 + $0x50] sm:$0xf]
  %v44 = vld [vmem:[%s1 + $0x54] sm:$0xf]
  %v45 = vld [vmem:[%s1 + $0x58] sm:$0xf]
  %v46 = vld [vmem:[%s1 + $0x5c] sm:$0xf]
  %v47 = vld [vmem:[%s1 + $0x60] sm:$0xf]
  %v48 = vld [vmem:[%s1 + $0x64] sm:$0xf]
  %v49 = vld [vmem:[%s1 + $0x68] sm:$0xf]
  %v50 = vld [vmem:[%s1 + $0x6c] sm:$0xf]
  %v51 = vld [vmem:[%s1 + $0x70] sm:$0xf]
  %v52 = vld [vmem:[%s1 + $0x74] sm:$0xf]
  %v53 = vld [vmem:[%s1 + $0x78] sm:$0xf]
  %v54 = vld [vmem:[%s1 + $0x7c] sm:$0xf]
  %v55 = vld [vmem:[%s1 + $0x80] sm:$0xf]
  %v56 = vld [vmem:[%s1 + $0x84] sm:$0xf]
  %v57 = vld [vmem:[%s1 + $0x88] sm:$0xf]
  %v58 = vld [vmem:[%s1 + $0x8c] sm:$0xf]
  %v59 = vld [vmem:[%s2] sm:$0x1]
  %v61 = vlaneseq
  %v62 = vshrl.u32 %v61, 7
  %v63 = vsub.s32 0, %v62
  %v64 = vrot.slane %v59, %v63
  %v74 = vunpack.c.l.b16 %v15
  %v75 = vunpack.c.h.b16 %v15
  %v76 = vunpack.c.l.b16 %v16
  %v77 = vunpack.c.l.b16 %v17
  %v78 = vunpack.c.h.b16 %v17
  %v79 = vunpack.c.l.b16 %v18
  %v80 = vunpack.c.l.b16 %v19
  %v81 = vunpack.c.h.b16 %v19
  %v82 = vunpack.c.l.b16 %v20
  %v83 = vunpack.c.l.b16 %v21
  %v84 = vunpack.c.h.b16 %v21
  %v85 = vunpack.c.l.b16 %v22
  %v86 = vpack.c.b16 %v77, %v74
  %v87 = vpack.c.b16 %v78, %v75
  %v88 = vpack.c.b16 %v79, %v76
  %v89 = vpack.c.b16 %v83, %v80
  %v90 = vpack.c.b16 %v84, %v81
  %v91 = vpack.c.b16 %v85, %v82
  %v132 = vunpack.c.l.b16 %v23
  %v133 = vunpack.c.l.b16 %v24
  %v134 = vunpack.c.l.b16 %v25
  %v135 = vunpack.c.l.b16 %v26
  %v136 = vunpack.c.l.b16 %v27
  %v137 = vunpack.c.l.b16 %v28
  %v138 = vunpack.c.l.b16 %v29
  %v139 = vunpack.c.l.b16 %v30
  %v140 = vunpack.c.l.b16 %v31
  %v141 = vunpack.c.l.b16 %v32
  %v142 = vunpack.c.l.b16 %v33
  %v143 = vunpack.c.l.b16 %v34
  %v144 = vunpack.c.l.b16 %v35
  %v145 = vunpack.c.l.b16 %v36
  %v146 = vunpack.c.l.b16 %v37
  %v147 = vunpack.c.l.b16 %v38
  %v148 = vunpack.c.l.b16 %v39
  %v149 = vunpack.c.l.b16 %v40
  %v150 = vunpack.c.l.b16 %v41
  %v151 = vunpack.c.l.b16 %v42
  %v152 = vunpack.c.l.b16 %v43
  %v153 = vunpack.c.l.b16 %v44
  %v154 = vunpack.c.l.b16 %v45
  %v155 = vunpack.c.l.b16 %v46
  %v156 = vunpack.c.l.b16 %v47
  %v157 = vunpack.c.l.b16 %v48
  %v158 = vunpack.c.l.b16 %v49
  %v159 = vunpack.c.l.b16 %v50
  %v160 = vunpack.c.l.b16 %v51
  %v161 = vunpack.c.l.b16 %v52
  %v162 = vunpack.c.l.b16 %v53
  %v163 = vunpack.c.l.b16 %v54
  %v164 = vunpack.c.l.b16 %v55
  %v165 = vunpack.c.l.b16 %v56
  %v166 = vunpack.c.l.b16 %v57
  %v167 = vunpack.c.l.b16 %v58
  %v168 = vpack.c.b16 %v133, %v132
  %v169 = vpack.c.b16 %v135, %v134
  %v170 = vpack.c.b16 %v137, %v136
  %v171 = vpack.c.b16 %v139, %v138
  %v172 = vpack.c.b16 %v141, %v140
  %v173 = vpack.c.b16 %v143, %v142
  %v174 = vpack.c.b16 %v145, %v144
  %v175 = vpack.c.b16 %v147, %v146
  %v176 = vpack.c.b16 %v149, %v148
  %v177 = vpack.c.b16 %v151, %v150
  %v178 = vpack.c.b16 %v153, %v152
  %v179 = vpack.c.b16 %v155, %v154
  %v180 = vpack.c.b16 %v157, %v156
  %v181 = vpack.c.b16 %v159, %v158
  %v182 = vpack.c.b16 %v161, %v160
  %v183 = vpack.c.b16 %v163, %v162
  %v184 = vpack.c.b16 %v165, %v164
  %v185 = vpack.c.b16 %v167, %v166
  %vm204 = vcmask 261120
  %v206 = vsel %vm204, %v88, 0
  %v209 = vsel %vm204, %v91, 0
  %211 = vmatprep.subr.bf16.mxu0 0
  %212 = vmatpush1.bf16.msra.mxu0 %v168
  %213 = vmatprep.subr.bf16.mxu0 0
  %214 = vmatpush1.bf16.msra.mxu0 %v169
  %215 = vmatprep.subr.bf16.mxu0 0
  %216 = vmatpush1.bf16.msra.mxu0 %v170
  %217 = vmatprep.subr.bf16.mxu0 0
  %218 = vmatpush1.bf16.msra.mxu0 %v171
  %219 = vmatprep.subr.bf16.mxu0 0
  %220 = vmatpush1.bf16.msra.mxu0 %v172
  %221 = vmatprep.subr.bf16.mxu0 0
  %222 = vmatpush1.bf16.msra.mxu0 %v173
  %223 = vmatprep.subr.bf16.mxu0 0
  %224 = vmatpush1.bf16.msra.mxu0 %v174
  %225 = vmatprep.subr.bf16.mxu0 0
  %226 = vmatpush1.bf16.msra.mxu0 %v175
  %227 = vmatprep.subr.bf16.mxu0 0
  %228 = vmatpush1.bf16.msra.mxu0 %v176
  %229 = vmatprep.subr.bf16.mxu0 0
  %230 = vmatpush1.bf16.msra.mxu0 %v177
  %231 = vmatprep.subr.bf16.mxu0 0
  %232 = vmatpush1.bf16.msra.mxu0 %v178
  %233 = vmatprep.subr.bf16.mxu0 0
  %234 = vmatpush1.bf16.msra.mxu0 %v179
  %235 = vmatprep.subr.bf16.mxu0 0
  %236 = vmatpush1.bf16.msra.mxu0 %v180
  %237 = vmatprep.subr.bf16.mxu0 0
  %238 = vmatpush1.bf16.msra.mxu0 %v181
  %239 = vmatprep.subr.bf16.mxu0 0
  %240 = vmatpush1.bf16.msra.mxu0 %v182
  %241 = vmatprep.subr.bf16.mxu0 0
  %242 = vmatpush1.bf16.msra.mxu0 %v183
  %243 = vmatprep.mubr.bf16.mxu0 %v87
  %244 = vmatmul.mubr.bf16.gmra.mrb[0].mxu0 %v86
  %v245 = vpop.f32.mrb[0].mxu0
  %v246 = vadd.f32 %v64, %v245
  %v247 = vpop.f32.mrb[0].mxu0
  %v248 = vpop.f32.mrb[0].mxu0
  %v249 = vadd.f32 %v64, %v248
  %v250 = vpop.f32.mrb[0].mxu0
  %251 = vmatprep.mubr.bf16.mxu0 %v90
  %252 = vmatmul.mubr.bf16.gmra.mrb[0].mxu0 %v89
  %v253 = vpop.f32.mrb[0].mxu0
  %v254 = vadd.f32 %v64, %v253
  %v255 = vpop.f32.mrb[0].mxu0
  %v256 = vpop.f32.mrb[0].mxu0
  %v257 = vadd.f32 %v64, %v256
  %v258 = vpop.f32.mrb[0].mxu0
  %259 = vdwg.mxu0
  %260 = vmatprep.subr.bf16.mxu0 0
  %261 = vmatpush1.bf16.msra.mxu0 %v184
  %262 = vmatprep.subr.bf16.mxu0 0
  %263 = vmatpush1.bf16.msra.mxu0 %v185
  %264 = vmatprep.subr.bf16.mxu0 0
  %265 = vmatpush1.bf16.msra.mxu0 0
  %266 = vmatprep.subr.bf16.mxu0 0
  %267 = vmatpush1.bf16.msra.mxu0 0
  %268 = vmatprep.subr.bf16.mxu0 0
  %269 = vmatpush1.bf16.msra.mxu0 0
  %270 = vmatprep.subr.bf16.mxu0 0
  %271 = vmatpush1.bf16.msra.mxu0 0
  %272 = vmatprep.subr.bf16.mxu0 0
  %273 = vmatpush1.bf16.msra.mxu0 0
  %274 = vmatprep.subr.bf16.mxu0 0
  %275 = vmatpush1.bf16.msra.mxu0 0
  %276 = vmatprep.subr.bf16.mxu0 0
  %277 = vmatpush1.bf16.msra.mxu0 0
  %278 = vmatprep.subr.bf16.mxu0 0
  %279 = vmatpush1.bf16.msra.mxu0 0
  %280 = vmatprep.subr.bf16.mxu0 0
  %281 = vmatpush1.bf16.msra.mxu0 0
  %282 = vmatprep.subr.bf16.mxu0 0
  %283 = vmatpush1.bf16.msra.mxu0 0
  %284 = vmatprep.subr.bf16.mxu0 0
  %285 = vmatpush1.bf16.msra.mxu0 0
  %286 = vmatprep.subr.bf16.mxu0 0
  %287 = vmatpush1.bf16.msra.mxu0 0
  %288 = vmatprep.subr.bf16.mxu0 0
  %289 = vmatpush1.bf16.msra.mxu0 0
  %290 = vmatprep.subr.bf16.mxu0 0
  %291 = vmatpush1.bf16.msra.mxu0 0
  %292 = vmatprep.mubr.bf16.mxu0 0
  %293 = vmatmul.mubr.bf16.gmra.mrb[0].mxu0 %v206
  %v294 = vpop.f32.mrb[0].mxu0
  %v295 = vadd.f32 %v246, %v294
  %v296 = vpop.f32.mrb[0].mxu0
  %v297 = vpop.f32.mrb[0].mxu0
  %v298 = vadd.f32 %v249, %v297
  %v299 = vpop.f32.mrb[0].mxu0
  %300 = vmatprep.mubr.bf16.mxu0 0
  %301 = vmatmul.mubr.bf16.gmra.mrb[0].mxu0 %v209
  %v302 = vpop.f32.mrb[0].mxu0
  %v303 = vadd.f32 %v254, %v302
  %v304 = vpop.f32.mrb[0].mxu0
  %v305 = vpop.f32.mrb[0].mxu0
  %v306 = vadd.f32 %v257, %v305
  %v307 = vpop.f32.mrb[0].mxu0
  %308 = vdwg.mxu0
  %v309 = vmax.f32 %v295, 0.0
  %v310 = vmax.f32 %v298, 0.0
  %v311 = vmax.f32 %v303, 0.0
  %v312 = vmax.f32 %v306, 0.0
  %v313 = vpack.c.bf16 %v310, %v309
  %v314 = vpack.c.bf16 %v312, %v311
  %v317 = vunpack.c.l.b16 %v313
  %v318 = vunpack.c.h.b16 %v313
  %v319 = vunpack.c.l.b16 %v314
  %v320 = vunpack.c.h.b16 %v314
  %v321 = vpack.c.b16 %v317, %v317
  %v322 = vpack.c.b16 %v318, %v318
  %v323 = vpack.c.b16 %v319, %v319
  %v324 = vpack.c.b16 %v320, %v320
  %vm329 = vcmask 519168
  %330 = vst.msk [vmem:[%s3] sm:$0xf] %vm329, %v321
  %331 = vst.msk [vmem:[%s3 + $0x4] sm:$0xf] %vm329, %v322
  %332 = vst.msk [vmem:[%s3 + $0x8] sm:$0xf] %vm329, %v323
  %333 = vst.msk [vmem:[%s3 + $0xc] sm:$0xf] %vm329, %v324
  // Predicated region
  $region14: #{resnet_forward.31} parent=0 // pred_check
    _
  $region15: #{resnet_forward.31} parent=0 // pred_check_branch
    %335 = sbr.rel (0) target = $region17
  $region16: #{resnet_forward.31} parent=0 // pred_region
    _
  $region17: #{resnet_forward.31} parent=0 // pred_fallthru
    _
  // Predicated region
  $region18: #{resnet_forward.31} parent=0 // pred_check
    _
  $region19: #{resnet_forward.31} parent=0 // pred_check_branch
    %337 = sbr.rel (0) target = $region21
  $region20: #{resnet_forward.31} parent=0 // pred_region
    _
  $region21: #{resnet_forward.31} parent=0 // pred_fallthru
    _

// kernel: resnet_forward.32
$region0: #{resnet_forward.32}
  #allocation0 [shape = 'u32[]', space=smem, size = 0x4, offset = 0x4, fixed_abs, tag = 'smem constant byte address 0x4 - core index']
  #allocation1 [shape = 'u32[144,128]{1,0:T(1,128)}', space=vmem, size = 0x12000, scoped, tag = 'internal scratch']
  %s0 = inlined_call_operand.vmem [shape: bf16[32,608], index: 0, kind: input, shape index: {}]
  %s1 = inlined_call_operand.vmem [shape: bf16[608,64], index: 1, kind: input, shape index: {}]
  %s2 = inlined_call_operand.vmem [shape: f32[1,64], index: 2, kind: input, shape index: {}]
  %s3 = inlined_call_operand.vmem [shape: bf16[32,64], index: 3, kind: output, shape index: {}]
  %s4 = sld [smem:[#allocation0]]
  $region22: #{resnet_forward.32} parent=0
    _
  %s6 = ssub.s32 1, %s4
  %s7 = scalar_select 0, %s6, %s4
  // Predicated region
  $region2: #{resnet_forward.32} parent=0 // pred_check
    _
  $region3: #{resnet_forward.32} parent=0 // pred_check_branch
    %9 = sbr.rel (0) target = $region5
  $region4: #{resnet_forward.32} parent=0 // pred_region
    _
  $region5: #{resnet_forward.32} parent=0 // pred_fallthru
    _
  // Predicated region
  $region6: #{resnet_forward.32} parent=0 // pred_check
    _
  $region7: #{resnet_forward.32} parent=0 // pred_check_branch
    %11 = sbr.rel (0) target = $region9
  $region8: #{resnet_forward.32} parent=0 // pred_region
    _
  $region9: #{resnet_forward.32} parent=0 // pred_fallthru
    _
  // Predicated region
  $region10: #{resnet_forward.32} parent=0 // pred_check
    _
  $region11: #{resnet_forward.32} parent=0 // pred_check_branch
    %13 = sbr.rel (0) target = $region13
  $region12: #{resnet_forward.32} parent=0 // pred_region
    _
  $region13: #{resnet_forward.32} parent=0 // pred_fallthru
    _
  %v15 = vld [vmem:[%s0] sm:$0xff]
  %v16 = vld [vmem:[%s0 + $0x8] sm:$0xff]
  %v17 = vld [vmem:[%s0 + $0x10] sm:$0xf]
  %v18 = vld [vmem:[%s0 + $0x14] sm:$0xff]
  %v19 = vld [vmem:[%s0 + $0x1c] sm:$0xff]
  %v20 = vld [vmem:[%s0 + $0x24] sm:$0xf]
  %v21 = vld [vmem:[%s0 + $0x28] sm:$0xff]
  %v22 = vld [vmem:[%s0 + $0x30] sm:$0xff]
  %v23 = vld [vmem:[%s0 + $0x38] sm:$0xf]
  %v24 = vld [vmem:[%s0 + $0x3c] sm:$0xff]
  %v25 = vld [vmem:[%s0 + $0x44] sm:$0xff]
  %v26 = vld [vmem:[%s0 + $0x4c] sm:$0xf]
  %v27 = vld [vmem:[%s1] sm:$0xf]
  %v28 = vld [vmem:[%s1 + $0x4] sm:$0xf]
  %v29 = vld [vmem:[%s1 + $0x8] sm:$0xf]
  %v30 = vld [vmem:[%s1 + $0xc] sm:$0xf]
  %v31 = vld [vmem:[%s1 + $0x10] sm:$0xf]
  %v32 = vld [vmem:[%s1 + $0x14] sm:$0xf]
  %v33 = vld [vmem:[%s1 + $0x18] sm:$0xf]
  %v34 = vld [vmem:[%s1 + $0x1c] sm:$0xf]
  %v35 = vld [vmem:[%s1 + $0x20] sm:$0xf]
  %v36 = vld [vmem:[%s1 + $0x24] sm:$0xf]
  %v37 = vld [vmem:[%s1 + $0x28] sm:$0xf]
  %v38 = vld [vmem:[%s1 + $0x2c] sm:$0xf]
  %v39 = vld [vmem:[%s1 + $0x30] sm:$0xf]
  %v40 = vld [vmem:[%s1 + $0x34] sm:$0xf]
  %v41 = vld [vmem:[%s1 + $0x38] sm:$0xf]
  %v42 = vld [vmem:[%s1 + $0x3c] sm:$0xf]
  %v43 = vld [vmem:[%s1 + $0x40] sm:$0xf]
  %v44 = vld [vmem:[%s1 + $0x44] sm:$0xf]
  %v45 = vld [vmem:[%s1 + $0x48] sm:$0xf]
  %v46 = vld [vmem:[%s1 + $0x4c] sm:$0xf]
  %v47 = vld [vmem:[%s1 + $0x50] sm:$0xf]
  %v48 = vld [vmem:[%s1 + $0x54] sm:$0xf]
  %v49 = vld [vmem:[%s1 + $0x58] sm:$0xf]
  %v50 = vld [vmem:[%s1 + $0x5c] sm:$0xf]
  %v51 = vld [vmem:[%s1 + $0x60] sm:$0xf]
  %v52 = vld [vmem:[%s1 + $0x64] sm:$0xf]
  %v53 = vld [vmem:[%s1 + $0x68] sm:$0xf]
  %v54 = vld [vmem:[%s1 + $0x6c] sm:$0xf]
  %v55 = vld [vmem:[%s1 + $0x70] sm:$0xf]
  %v56 = vld [vmem:[%s1 + $0x74] sm:$0xf]
  %v57 = vld [vmem:[%s1 + $0x78] sm:$0xf]
  %v58 = vld [vmem:[%s1 + $0x7c] sm:$0xf]
  %v59 = vld [vmem:[%s1 + $0x80] sm:$0xf]
  %v60 = vld [vmem:[%s1 + $0x84] sm:$0xf]
  %v61 = vld [vmem:[%s1 + $0x88] sm:$0xf]
  %v62 = vld [vmem:[%s1 + $0x8c] sm:$0xf]
  %v63 = vld [vmem:[%s1 + $0x90] sm:$0xf]
  %v64 = vld [vmem:[%s1 + $0x94] sm:$0xf]
  %v65 = vld [vmem:[%s1 + $0x98] sm:$0xf]
  %v66 = vld [vmem:[%s1 + $0x9c] sm:$0xf]
  %v67 = vld [vmem:[%s1 + $0xa0] sm:$0xf]
  %v68 = vld [vmem:[%s1 + $0xa4] sm:$0xf]
  %v69 = vld [vmem:[%s1 + $0xa8] sm:$0xf]
  %v70 = vld [vmem:[%s1 + $0xac] sm:$0xf]
  %v71 = vld [vmem:[%s1 + $0xb0] sm:$0xf]
  %v72 = vld [vmem:[%s1 + $0xb4] sm:$0xf]
  %v73 = vld [vmem:[%s1 + $0xb8] sm:$0xf]
  %v74 = vld [vmem:[%s1 + $0xbc] sm:$0xf]
  %v75 = vld [vmem:[%s1 + $0xc0] sm:$0xf]
  %v76 = vld [vmem:[%s1 + $0xc4] sm:$0xf]
  %v77 = vld [vmem:[%s1 + $0xc8] sm:$0xf]
  %v78 = vld [vmem:[%s1 + $0xcc] sm:$0xf]
  %v79 = vld [vmem:[%s1 + $0xd0] sm:$0xf]
  %v80 = vld [vmem:[%s1 + $0xd4] sm:$0xf]
  %v81 = vld [vmem:[%s1 + $0xd8] sm:$0xf]
  %v82 = vld [vmem:[%s1 + $0xdc] sm:$0xf]
  %v83 = vld [vmem:[%s1 + $0xe0] sm:$0xf]
  %v84 = vld [vmem:[%s1 + $0xe4] sm:$0xf]
  %v85 = vld [vmem:[%s1 + $0xe8] sm:$0xf]
  %v86 = vld [vmem:[%s1 + $0xec] sm:$0xf]
  %v87 = vld [vmem:[%s1 + $0xf0] sm:$0xf]
  %v88 = vld [vmem:[%s1 + $0xf4] sm:$0xf]
  %v89 = vld [vmem:[%s1 + $0xf8] sm:$0xf]
  %v90 = vld [vmem:[%s1 + $0xfc] sm:$0xf]
  %v91 = vld [vmem:[%s1 + $0x100] sm:$0xf]
  %v92 = vld [vmem:[%s1 + $0x104] sm:$0xf]
  %v93 = vld [vmem:[%s1 + $0x108] sm:$0xf]
  %v94 = vld [vmem:[%s1 + $0x10c] sm:$0xf]
  %v95 = vld [vmem:[%s1 + $0x110] sm:$0xf]
  %v96 = vld [vmem:[%s1 + $0x114] sm:$0xf]
  %v97 = vld [vmem:[%s1 + $0x118] sm:$0xf]
  %v98 = vld [vmem:[%s1 + $0x11c] sm:$0xf]
  %v99 = vld [vmem:[%s1 + $0x120] sm:$0xf]
  %v100 = vld [vmem:[%s1 + $0x124] sm:$0xf]
  %v101 = vld [vmem:[%s1 + $0x128] sm:$0xf]
  %v102 = vld [vmem:[%s1 + $0x12c] sm:$0xf]
  %v103 = vld [vmem:[%s2] sm:$0x1]
  %v105 = vlaneseq
  %v106 = vshrl.u32 %v105, 7
  %v107 = vsub.s32 0, %v106
  %v108 = vrot.slane %v103, %v107
  %v122 = vunpack.c.l.b16 %v15
  %v123 = vunpack.c.h.b16 %v15
  %v124 = vunpack.c.l.b16 %v16
  %v125 = vunpack.c.h.b16 %v16
  %v126 = vunpack.c.l.b16 %v17
  %v127 = vunpack.c.l.b16 %v18
  %v128 = vunpack.c.h.b16 %v18
  %v129 = vunpack.c.l.b16 %v19
  %v130 = vunpack.c.h.b16 %v19
  %v131 = vunpack.c.l.b16 %v20
  %v132 = vunpack.c.l.b16 %v21
  %v133 = vunpack.c.h.b16 %v21
  %v134 = vunpack.c.l.b16 %v22
  %v135 = vunpack.c.h.b16 %v22
  %v136 = vunpack.c.l.b16 %v23
  %v137 = vunpack.c.l.b16 %v24
  %v138 = vunpack.c.h.b16 %v24
  %v139 = vunpack.c.l.b16 %v25
  %v140 = vunpack.c.h.b16 %v25
  %v141 = vunpack.c.l.b16 %v26
  %v142 = vpack.c.b16 %v127, %v122
  %v143 = vpack.c.b16 %v128, %v123
  %v144 = vpack.c.b16 %v129, %v124
  %v145 = vpack.c.b16 %v130, %v125
  %v146 = vpack.c.b16 %v131, %v126
  %v147 = vpack.c.b16 %v137, %v132
  %v148 = vpack.c.b16 %v138, %v133
  %v149 = vpack.c.b16 %v139, %v134
  %v150 = vpack.c.b16 %v140, %v135
  %v151 = vpack.c.b16 %v141, %v136
  %v236 = vunpack.c.l.b16 %v27
  %v237 = vunpack.c.l.b16 %v28
  %v238 = vunpack.c.l.b16 %v29
  %v239 = vunpack.c.l.b16 %v30
  %v240 = vunpack.c.l.b16 %v31
  %v241 = vunpack.c.l.b16 %v32
  %v242 = vunpack.c.l.b16 %v33
  %v243 = vunpack.c.l.b16 %v34
  %v244 = vunpack.c.l.b16 %v35
  %v245 = vunpack.c.l.b16 %v36
  %v246 = vunpack.c.l.b16 %v37
  %v247 = vunpack.c.l.b16 %v38
  %v248 = vunpack.c.l.b16 %v39
  %v249 = vunpack.c.l.b16 %v40
  %v250 = vunpack.c.l.b16 %v41
  %v251 = vunpack.c.l.b16 %v42
  %v252 = vunpack.c.l.b16 %v43
  %v253 = vunpack.c.l.b16 %v44
  %v254 = vunpack.c.l.b16 %v45
  %v255 = vunpack.c.l.b16 %v46
  %v256 = vunpack.c.l.b16 %v47
  %v257 = vunpack.c.l.b16 %v48
  %v258 = vunpack.c.l.b16 %v49
  %v259 = vunpack.c.l.b16 %v50
  %v260 = vunpack.c.l.b16 %v51
  %v261 = vunpack.c.l.b16 %v52
  %v262 = vunpack.c.l.b16 %v53
  %v263 = vunpack.c.l.b16 %v54
  %v264 = vunpack.c.l.b16 %v55
  %v265 = vunpack.c.l.b16 %v56
  %v266 = vunpack.c.l.b16 %v57
  %v267 = vunpack.c.l.b16 %v58
  %v268 = vunpack.c.l.b16 %v59
  %v269 = vunpack.c.l.b16 %v60
  %v270 = vunpack.c.l.b16 %v61
  %v271 = vunpack.c.l.b16 %v62
  %v272 = vunpack.c.l.b16 %v63
  %v273 = vunpack.c.l.b16 %v64
  %v274 = vunpack.c.l.b16 %v65
  %v275 = vunpack.c.l.b16 %v66
  %v276 = vunpack.c.l.b16 %v67
  %v277 = vunpack.c.l.b16 %v68
  %v278 = vunpack.c.l.b16 %v69
  %v279 = vunpack.c.l.b16 %v70
  %v280 = vunpack.c.l.b16 %v71
  %v281 = vunpack.c.l.b16 %v72
  %v282 = vunpack.c.l.b16 %v73
  %v283 = vunpack.c.l.b16 %v74
  %v284 = vunpack.c.l.b16 %v75
  %v285 = vunpack.c.l.b16 %v76
  %v286 = vunpack.c.l.b16 %v77
  %v287 = vunpack.c.l.b16 %v78
  %v288 = vunpack.c.l.b16 %v79
  %v289 = vunpack.c.l.b16 %v80
  %v290 = vunpack.c.l.b16 %v81
  %v291 = vunpack.c.l.b16 %v82
  %v292 = vunpack.c.l.b16 %v83
  %v293 = vunpack.c.l.b16 %v84
  %v294 = vunpack.c.l.b16 %v85
  %v295 = vunpack.c.l.b16 %v86
  %v296 = vunpack.c.l.b16 %v87
  %v297 = vunpack.c.l.b16 %v88
  %v298 = vunpack.c.l.b16 %v89
  %v299 = vunpack.c.l.b16 %v90
  %v300 = vunpack.c.l.b16 %v91
  %v301 = vunpack.c.l.b16 %v92
  %v302 = vunpack.c.l.b16 %v93
  %v303 = vunpack.c.l.b16 %v94
  %v304 = vunpack.c.l.b16 %v95
  %v305 = vunpack.c.l.b16 %v96
  %v306 = vunpack.c.l.b16 %v97
  %v307 = vunpack.c.l.b16 %v98
  %v308 = vunpack.c.l.b16 %v99
  %v309 = vunpack.c.l.b16 %v100
  %v310 = vunpack.c.l.b16 %v101
  %v311 = vunpack.c.l.b16 %v102
  %v312 = vpack.c.b16 %v237, %v236
  %v313 = vpack.c.b16 %v239, %v238
  %v314 = vpack.c.b16 %v241, %v240
  %v315 = vpack.c.b16 %v243, %v242
  %v316 = vpack.c.b16 %v245, %v244
  %v317 = vpack.c.b16 %v247, %v246
  %v318 = vpack.c.b16 %v249, %v248
  %v319 = vpack.c.b16 %v251, %v250
  %v320 = vpack.c.b16 %v253, %v252
  %v321 = vpack.c.b16 %v255, %v254
  %v322 = vpack.c.b16 %v257, %v256
  %v323 = vpack.c.b16 %v259, %v258
  %v324 = vpack.c.b16 %v261, %v260
  %v325 = vpack.c.b16 %v263, %v262
  %v326 = vpack.c.b16 %v265, %v264
  %v327 = vpack.c.b16 %v267, %v266
  %v328 = vpack.c.b16 %v269, %v268
  %v329 = vpack.c.b16 %v271, %v270
  %v330 = vpack.c.b16 %v273, %v272
  %v331 = vpack.c.b16 %v275, %v274
  %v332 = vpack.c.b16 %v277, %v276
  %v333 = vpack.c.b16 %v279, %v278
  %v334 = vpack.c.b16 %v281, %v280
  %v335 = vpack.c.b16 %v283, %v282
  %v336 = vpack.c.b16 %v285, %v284
  %v337 = vpack.c.b16 %v287, %v286
  %v338 = vpack.c.b16 %v289, %v288
  %v339 = vpack.c.b16 %v291, %v290
  %v340 = vpack.c.b16 %v293, %v292
  %v341 = vpack.c.b16 %v295, %v294
  %v342 = vpack.c.b16 %v297, %v296
  %v343 = vpack.c.b16 %v299, %v298
  %v344 = vpack.c.b16 %v301, %v300
  %v345 = vpack.c.b16 %v303, %v302
  %v346 = vpack.c.b16 %v305, %v304
  %v347 = vpack.c.b16 %v307, %v306
  %v348 = vpack.c.b16 %v309, %v308
  %v349 = vpack.c.b16 %v311, %v310
  %vm388 = vcmask 785408
  %v390 = vsel %vm388, %v146, 0
  %v393 = vsel %vm388, %v151, 0
  %395 = vmatprep.subr.bf16.mxu0 0
  %396 = vmatpush1.bf16.msra.mxu0 %v312
  %397 = vmatprep.subr.bf16.mxu0 0
  %398 = vmatpush1.bf16.msra.mxu0 %v313
  %399 = vmatprep.subr.bf16.mxu0 0
  %400 = vmatpush1.bf16.msra.mxu0 %v314
  %401 = vmatprep.subr.bf16.mxu0 0
  %402 = vmatpush1.bf16.msra.mxu0 %v315
  %403 = vmatprep.subr.bf16.mxu0 0
  %404 = vmatpush1.bf16.msra.mxu0 %v316
  %405 = vmatprep.subr.bf16.mxu0 0
  %406 = vmatpush1.bf16.msra.mxu0 %v317
  %407 = vmatprep.subr.bf16.mxu0 0
  %408 = vmatpush1.bf16.msra.mxu0 %v318
  %409 = vmatprep.subr.bf16.mxu0 0
  %410 = vmatpush1.bf16.msra.mxu0 %v319
  %411 = vmatprep.subr.bf16.mxu0 0
  %412 = vmatpush1.bf16.msra.mxu0 %v320
  %413 = vmatprep.subr.bf16.mxu0 0
  %414 = vmatpush1.bf16.msra.mxu0 %v321
  %415 = vmatprep.subr.bf16.mxu0 0
  %416 = vmatpush1.bf16.msra.mxu0 %v322
  %417 = vmatprep.subr.bf16.mxu0 0
  %418 = vmatpush1.bf16.msra.mxu0 %v323
  %419 = vmatprep.subr.bf16.mxu0 0
  %420 = vmatpush1.bf16.msra.mxu0 %v324
  %421 = vmatprep.subr.bf16.mxu0 0
  %422 = vmatpush1.bf16.msra.mxu0 %v325
  %423 = vmatprep.subr.bf16.mxu0 0
  %424 = vmatpush1.bf16.msra.mxu0 %v326
  %425 = vmatprep.subr.bf16.mxu0 0
  %426 = vmatpush1.bf16.msra.mxu0 %v327
  %427 = vmatprep.mubr.bf16.mxu0 %v143
  %428 = vmatmul.mubr.bf16.gmra.mrb[0].mxu0 %v142
  %v429 = vpop.f32.mrb[0].mxu0
  %v430 = vadd.f32 %v108, %v429
  %v431 = vpop.f32.mrb[0].mxu0
  %v432 = vpop.f32.mrb[0].mxu0
  %v433 = vadd.f32 %v108, %v432
  %v434 = vpop.f32.mrb[0].mxu0
  %435 = vmatprep.mubr.bf16.mxu0 %v148
  %436 = vmatmul.mubr.bf16.gmra.mrb[0].mxu0 %v147
  %v437 = vpop.f32.mrb[0].mxu0
  %v438 = vadd.f32 %v108, %v437
  %v439 = vpop.f32.mrb[0].mxu0
  %v440 = vpop.f32.mrb[0].mxu0
  %v441 = vadd.f32 %v108, %v440
  %v442 = vpop.f32.mrb[0].mxu0
  %443 = vdwg.mxu0
  %444 = vmatprep.subr.bf16.mxu0 0
  %445 = vmatpush1.bf16.msra.mxu0 %v328
  %446 = vmatprep.subr.bf16.mxu0 0
  %447 = vmatpush1.bf16.msra.mxu0 %v329
  %448 = vmatprep.subr.bf16.mxu0 0
  %449 = vmatpush1.bf16.msra.mxu0 %v330
  %450 = vmatprep.subr.bf16.mxu0 0
  %451 = vmatpush1.bf16.msra.mxu0 %v331
  %452 = vmatprep.subr.bf16.mxu0 0
  %453 = vmatpush1.bf16.msra.mxu0 %v332
  %454 = vmatprep.subr.bf16.mxu0 0
  %455 = vmatpush1.bf16.msra.mxu0 %v333
  %456 = vmatprep.subr.bf16.mxu0 0
  %457 = vmatpush1.bf16.msra.mxu0 %v334
  %458 = vmatprep.subr.bf16.mxu0 0
  %459 = vmatpush1.bf16.msra.mxu0 %v335
  %460 = vmatprep.subr.bf16.mxu0 0
  %461 = vmatpush1.bf16.msra.mxu0 %v336
  %462 = vmatprep.subr.bf16.mxu0 0
  %463 = vmatpush1.bf16.msra.mxu0 %v337
  %464 = vmatprep.subr.bf16.mxu0 0
  %465 = vmatpush1.bf16.msra.mxu0 %v338
  %466 = vmatprep.subr.bf16.mxu0 0
  %467 = vmatpush1.bf16.msra.mxu0 %v339
  %468 = vmatprep.subr.bf16.mxu0 0
  %469 = vmatpush1.bf16.msra.mxu0 %v340
  %470 = vmatprep.subr.bf16.mxu0 0
  %471 = vmatpush1.bf16.msra.mxu0 %v341
  %472 = vmatprep.subr.bf16.mxu0 0
  %473 = vmatpush1.bf16.msra.mxu0 %v342
  %474 = vmatprep.subr.bf16.mxu0 0
  %475 = vmatpush1.bf16.msra.mxu0 %v343
  %476 = vmatprep.mubr.bf16.mxu0 %v145
  %477 = vmatmul.mubr.bf16.gmra.mrb[0].mxu0 %v144
  %v478 = vpop.f32.mrb[0].mxu0
  %v479 = vadd.f32 %v430, %v478
  %v480 = vpop.f32.mrb[0].mxu0
  %v481 = vpop.f32.mrb[0].mxu0
  %v482 = vadd.f32 %v433, %v481
  %v483 = vpop.f32.mrb[0].mxu0
  %484 = vmatprep.mubr.bf16.mxu0 %v150
  %485 = vmatmul.mubr.bf16.gmra.mrb[0].mxu0 %v149
  %v486 = vpop.f32.mrb[0].mxu0
  %v487 = vadd.f32 %v438, %v486
  %v488 = vpop.f32.mrb[0].mxu0
  %v489 = vpop.f32.mrb[0].mxu0
  %v490 = vadd.f32 %v441, %v489
  %v491 = vpop.f32.mrb[0].mxu0
  %492 = vdwg.mxu0
  %493 = vmatprep.subr.bf16.mxu0 0
  %494 = vmatpush1.bf16.msra.mxu0 %v344
  %495 = vmatprep.subr.bf16.mxu0 0
  %496 = vmatpush1.bf16.msra.mxu0 %v345
  %497 = vmatprep.subr.bf16.mxu0 0
  %498 = vmatpush1.bf16.msra.mxu0 %v346
  %499 = vmatprep.subr.bf16.mxu0 0
  %500 = vmatpush1.bf16.msra.mxu0 %v347
  %501 = vmatprep.subr.bf16.mxu0 0
  %502 = vmatpush1.bf16.msra.mxu0 %v348
  %503 = vmatprep.subr.bf16.mxu0 0
  %504 = vmatpush1.bf16.msra.mxu0 %v349
  %505 = vmatprep.subr.bf16.mxu0 0
  %506 = vmatpush1.bf16.msra.mxu0 0
  %507 = vmatprep.subr.bf16.mxu0 0
  %508 = vmatpush1.bf16.msra.mxu0 0
  %509 = vmatprep.subr.bf16.mxu0 0
  %510 = vmatpush1.bf16.msra.mxu0 0
  %511 = vmatprep.subr.bf16.mxu0 0
  %512 = vmatpush1.bf16.msra.mxu0 0
  %513 = vmatprep.subr.bf16.mxu0 0
  %514 = vmatpush1.bf16.msra.mxu0 0
  %515 = vmatprep.subr.bf16.mxu0 0
  %516 = vmatpush1.bf16.msra.mxu0 0
  %517 = vmatprep.subr.bf16.mxu0 0
  %518 = vmatpush1.bf16.msra.mxu0 0
  %519 = vmatprep.subr.bf16.mxu0 0
  %520 = vmatpush1.bf16.msra.mxu0 0
  %521 = vmatprep.subr.bf16.mxu0 0
  %522 = vmatpush1.bf16.msra.mxu0 0
  %523 = vmatprep.subr.bf16.mxu0 0
  %524 = vmatpush1.bf16.msra.mxu0 0
  %525 = vmatprep.mubr.bf16.mxu0 0
  %526 = vmatmul.mubr.bf16.gmra.mrb[0].mxu0 %v390
  %v527 = vpop.f32.mrb[0].mxu0
  %v528 = vadd.f32 %v479, %v527
  %v529 = vpop.f32.mrb[0].mxu0
  %v530 = vpop.f32.mrb[0].mxu0
  %v531 = vadd.f32 %v482, %v530
  %v532 = vpop.f32.mrb[0].mxu0
  %533 = vmatprep.mubr.bf16.mxu0 0
  %534 = vmatmul.mubr.bf16.gmra.mrb[0].mxu0 %v393
  %v535 = vpop.f32.mrb[0].mxu0
  %v536 = vadd.f32 %v487, %v535
  %v537 = vpop.f32.mrb[0].mxu0
  %v538 = vpop.f32.mrb[0].mxu0
  %v539 = vadd.f32 %v490, %v538
  %v540 = vpop.f32.mrb[0].mxu0
  %541 = vdwg.mxu0
  %v542 = vmax.f32 %v528, 0.0
  %v543 = vmax.f32 %v531, 0.0
  %v544 = vmax.f32 %v536, 0.0
  %v545 = vmax.f32 %v539, 0.0
  %v546 = vpack.c.bf16 %v543, %v542
  %v547 = vpack.c.bf16 %v545, %v544
  %v550 = vunpack.c.l.b16 %v546
  %v551 = vunpack.c.h.b16 %v546
  %v552 = vunpack.c.l.b16 %v547
  %v553 = vunpack.c.h.b16 %v547
  %v554 = vpack.c.b16 %v550, %v550
  %v555 = vpack.c.b16 %v551, %v551
  %v556 = vpack.c.b16 %v552, %v552
  %v557 = vpack.c.b16 %v553, %v553
  %vm562 = vcmask 519168
  %563 = vst.msk [vmem:[%s3] sm:$0xf] %vm562, %v554
  %564 = vst.msk [vmem:[%s3 + $0x4] sm:$0xf] %vm562, %v555
  %565 = vst.msk [vmem:[%s3 + $0x8] sm:$0xf] %vm562, %v556
  %566 = vst.msk [vmem:[%s3 + $0xc] sm:$0xf] %vm562, %v557
  // Predicated region
  $region14: #{resnet_forward.32} parent=0 // pred_check
    _
  $region15: #{resnet_forward.32} parent=0 // pred_check_branch
    %568 = sbr.rel (0) target = $region17
  $region16: #{resnet_forward.32} parent=0 // pred_region
    _
  $region17: #{resnet_forward.32} parent=0 // pred_fallthru
    _
  // Predicated region
  $region18: #{resnet_forward.32} parent=0 // pred_check
    _
  $region19: #{resnet_forward.32} parent=0 // pred_check_branch
    %570 = sbr.rel (0) target = $region21
  $region20: #{resnet_forward.32} parent=0 // pred_region
    _
  $region21: #{resnet_forward.32} parent=0 // pred_fallthru
    _

// kernel: resnet_forward.34
$region0: #{resnet_forward.34}
  #allocation0 [shape = 'u32[]', space=smem, size = 0x4, offset = 0x4, fixed_abs, tag = 'smem constant byte address 0x4 - core index']
  #allocation1 [shape = 'u32[144,128]{1,0:T(1,128)}', space=vmem, size = 0x12000, scoped, tag = 'internal scratch']
  %s0 = inlined_call_operand.vmem [shape: bf16[32,576], index: 0, kind: input, shape index: {}]
  %s1 = inlined_call_operand.vmem [shape: bf16[576,64], index: 1, kind: input, shape index: {}]
  %s2 = inlined_call_operand.vmem [shape: f32[1,64], index: 2, kind: input, shape index: {}]
  %s3 = inlined_call_operand.vmem [shape: bf16[32,64], index: 3, kind: input, shape index: {}]
  %s4 = inlined_call_operand.vmem [shape: bf16[32,64], index: 4, kind: output, shape index: {}]
  %s5 = sld [smem:[#allocation0]]
  $region26: #{resnet_forward.34} parent=0
    _
  %s7 = ssub.s32 1, %s5
  %s8 = scalar_select 0, %s7, %s5
  // Predicated region
  $region2: #{resnet_forward.34} parent=0 // pred_check
    _
  $region3: #{resnet_forward.34} parent=0 // pred_check_branch
    %10 = sbr.rel (0) target = $region5
  $region4: #{resnet_forward.34} parent=0 // pred_region
    _
  $region5: #{resnet_forward.34} parent=0 // pred_fallthru
    _
  // Predicated region
  $region6: #{resnet_forward.34} parent=0 // pred_check
    _
  $region7: #{resnet_forward.34} parent=0 // pred_check_branch
    %12 = sbr.rel (0) target = $region9
  $region8: #{resnet_forward.34} parent=0 // pred_region
    _
  $region9: #{resnet_forward.34} parent=0 // pred_fallthru
    _
  // Predicated region
  $region10: #{resnet_forward.34} parent=0 // pred_check
    _
  $region11: #{resnet_forward.34} parent=0 // pred_check_branch
    %14 = sbr.rel (0) target = $region13
  $region12: #{resnet_forward.34} parent=0 // pred_region
    _
  $region13: #{resnet_forward.34} parent=0 // pred_fallthru
    _
  // Predicated region
  $region14: #{resnet_forward.34} parent=0 // pred_check
    _
  $region15: #{resnet_forward.34} parent=0 // pred_check_branch
    %16 = sbr.rel (0) target = $region17
  $region16: #{resnet_forward.34} parent=0 // pred_region
    _
  $region17: #{resnet_forward.34} parent=0 // pred_fallthru
    _
  %v18 = vld [vmem:[%s0] sm:$0xff]
  %v19 = vld [vmem:[%s0 + $0x8] sm:$0xff]
  %v20 = vld [vmem:[%s0 + $0x10] sm:$0xf]
  %v21 = vld [vmem:[%s0 + $0x14] sm:$0xff]
  %v22 = vld [vmem:[%s0 + $0x1c] sm:$0xff]
  %v23 = vld [vmem:[%s0 + $0x24] sm:$0xf]
  %v24 = vld [vmem:[%s0 + $0x28] sm:$0xff]
  %v25 = vld [vmem:[%s0 + $0x30] sm:$0xff]
  %v26 = vld [vmem:[%s0 + $0x38] sm:$0xf]
  %v27 = vld [vmem:[%s0 + $0x3c] sm:$0xff]
  %v28 = vld [vmem:[%s0 + $0x44] sm:$0xff]
  %v29 = vld [vmem:[%s0 + $0x4c] sm:$0xf]
  %v30 = vld [vmem:[%s1] sm:$0xf]
  %v31 = vld [vmem:[%s1 + $0x4] sm:$0xf]
  %v32 = vld [vmem:[%s1 + $0x8] sm:$0xf]
  %v33 = vld [vmem:[%s1 + $0xc] sm:$0xf]
  %v34 = vld [vmem:[%s1 + $0x10] sm:$0xf]
  %v35 = vld [vmem:[%s1 + $0x14] sm:$0xf]
  %v36 = vld [vmem:[%s1 + $0x18] sm:$0xf]
  %v37 = vld [vmem:[%s1 + $0x1c] sm:$0xf]
  %v38 = vld [vmem:[%s1 + $0x20] sm:$0xf]
  %v39 = vld [vmem:[%s1 + $0x24] sm:$0xf]
  %v40 = vld [vmem:[%s1 + $0x28] sm:$0xf]
  %v41 = vld [vmem:[%s1 + $0x2c] sm:$0xf]
  %v42 = vld [vmem:[%s1 + $0x30] sm:$0xf]
  %v43 = vld [vmem:[%s1 + $0x34] sm:$0xf]
  %v44 = vld [vmem:[%s1 + $0x38] sm:$0xf]
  %v45 = vld [vmem:[%s1 + $0x3c] sm:$0xf]
  %v46 = vld [vmem:[%s1 + $0x40] sm:$0xf]
  %v47 = vld [vmem:[%s1 + $0x44] sm:$0xf]
  %v48 = vld [vmem:[%s1 + $0x48] sm:$0xf]
  %v49 = vld [vmem:[%s1 + $0x4c] sm:$0xf]
  %v50 = vld [vmem:[%s1 + $0x50] sm:$0xf]
  %v51 = vld [vmem:[%s1 + $0x54] sm:$0xf]
  %v52 = vld [vmem:[%s1 + $0x58] sm:$0xf]
  %v53 = vld [vmem:[%s1 + $0x5c] sm:$0xf]
  %v54 = vld [vmem:[%s1 + $0x60] sm:$0xf]
  %v55 = vld [vmem:[%s1 + $0x64] sm:$0xf]
  %v56 = vld [vmem:[%s1 + $0x68] sm:$0xf]
  %v57 = vld [vmem:[%s1 + $0x6c] sm:$0xf]
  %v58 = vld [vmem:[%s1 + $0x70] sm:$0xf]
  %v59 = vld [vmem:[%s1 + $0x74] sm:$0xf]
  %v60 = vld [vmem:[%s1 + $0x78] sm:$0xf]
  %v61 = vld [vmem:[%s1 + $0x7c] sm:$0xf]
  %v62 = vld [vmem:[%s1 + $0x80] sm:$0xf]
  %v63 = vld [vmem:[%s1 + $0x84] sm:$0xf]
  %v64 = vld [vmem:[%s1 + $0x88] sm:$0xf]
  %v65 = vld [vmem:[%s1 + $0x8c] sm:$0xf]
  %v66 = vld [vmem:[%s1 + $0x90] sm:$0xf]
  %v67 = vld [vmem:[%s1 + $0x94] sm:$0xf]
  %v68 = vld [vmem:[%s1 + $0x98] sm:$0xf]
  %v69 = vld [vmem:[%s1 + $0x9c] sm:$0xf]
  %v70 = vld [vmem:[%s1 + $0xa0] sm:$0xf]
  %v71 = vld [vmem:[%s1 + $0xa4] sm:$0xf]
  %v72 = vld [vmem:[%s1 + $0xa8] sm:$0xf]
  %v73 = vld [vmem:[%s1 + $0xac] sm:$0xf]
  %v74 = vld [vmem:[%s1 + $0xb0] sm:$0xf]
  %v75 = vld [vmem:[%s1 + $0xb4] sm:$0xf]
  %v76 = vld [vmem:[%s1 + $0xb8] sm:$0xf]
  %v77 = vld [vmem:[%s1 + $0xbc] sm:$0xf]
  %v78 = vld [vmem:[%s1 + $0xc0] sm:$0xf]
  %v79 = vld [vmem:[%s1 + $0xc4] sm:$0xf]
  %v80 = vld [vmem:[%s1 + $0xc8] sm:$0xf]
  %v81 = vld [vmem:[%s1 + $0xcc] sm:$0xf]
  %v82 = vld [vmem:[%s1 + $0xd0] sm:$0xf]
  %v83 = vld [vmem:[%s1 + $0xd4] sm:$0xf]
  %v84 = vld [vmem:[%s1 + $0xd8] sm:$0xf]
  %v85 = vld [vmem:[%s1 + $0xdc] sm:$0xf]
  %v86 = vld [vmem:[%s1 + $0xe0] sm:$0xf]
  %v87 = vld [vmem:[%s1 + $0xe4] sm:$0xf]
  %v88 = vld [vmem:[%s1 + $0xe8] sm:$0xf]
  %v89 = vld [vmem:[%s1 + $0xec] sm:$0xf]
  %v90 = vld [vmem:[%s1 + $0xf0] sm:$0xf]
  %v91 = vld [vmem:[%s1 + $0xf4] sm:$0xf]
  %v92 = vld [vmem:[%s1 + $0xf8] sm:$0xf]
  %v93 = vld [vmem:[%s1 + $0xfc] sm:$0xf]
  %v94 = vld [vmem:[%s1 + $0x100] sm:$0xf]
  %v95 = vld [vmem:[%s1 + $0x104] sm:$0xf]
  %v96 = vld [vmem:[%s1 + $0x108] sm:$0xf]
  %v97 = vld [vmem:[%s1 + $0x10c] sm:$0xf]
  %v98 = vld [vmem:[%s1 + $0x110] sm:$0xf]
  %v99 = vld [vmem:[%s1 + $0x114] sm:$0xf]
  %v100 = vld [vmem:[%s1 + $0x118] sm:$0xf]
  %v101 = vld [vmem:[%s1 + $0x11c] sm:$0xf]
  %v102 = vld [vmem:[%s2] sm:$0x1]
  %v104 = vlaneseq
  %v105 = vshrl.u32 %v104, 7
  %v106 = vsub.s32 0, %v105
  %v107 = vrot.slane %v102, %v106
  %v121 = vunpack.c.l.b16 %v18
  %v122 = vunpack.c.h.b16 %v18
  %v123 = vunpack.c.l.b16 %v19
  %v124 = vunpack.c.h.b16 %v19
  %v125 = vunpack.c.l.b16 %v20
  %v126 = vunpack.c.l.b16 %v21
  %v127 = vunpack.c.h.b16 %v21
  %v128 = vunpack.c.l.b16 %v22
  %v129 = vunpack.c.h.b16 %v22
  %v130 = vunpack.c.l.b16 %v23
  %v131 = vunpack.c.l.b16 %v24
  %v132 = vunpack.c.h.b16 %v24
  %v133 = vunpack.c.l.b16 %v25
  %v134 = vunpack.c.h.b16 %v25
  %v135 = vunpack.c.l.b16 %v26
  %v136 = vunpack.c.l.b16 %v27
  %v137 = vunpack.c.h.b16 %v27
  %v138 = vunpack.c.l.b16 %v28
  %v139 = vunpack.c.h.b16 %v28
  %v140 = vunpack.c.l.b16 %v29
  %v141 = vpack.c.b16 %v126, %v121
  %v142 = vpack.c.b16 %v127, %v122
  %v143 = vpack.c.b16 %v128, %v123
  %v144 = vpack.c.b16 %v129, %v124
  %v145 = vpack.c.b16 %v130, %v125
  %v146 = vpack.c.b16 %v136, %v131
  %v147 = vpack.c.b16 %v137, %v132
  %v148 = vpack.c.b16 %v138, %v133
  %v149 = vpack.c.b16 %v139, %v134
  %v150 = vpack.c.b16 %v140, %v135
  %v231 = vunpack.c.l.b16 %v30
  %v232 = vunpack.c.l.b16 %v31
  %v233 = vunpack.c.l.b16 %v32
  %v234 = vunpack.c.l.b16 %v33
  %v235 = vunpack.c.l.b16 %v34
  %v236 = vunpack.c.l.b16 %v35
  %v237 = vunpack.c.l.b16 %v36
  %v238 = vunpack.c.l.b16 %v37
  %v239 = vunpack.c.l.b16 %v38
  %v240 = vunpack.c.l.b16 %v39
  %v241 = vunpack.c.l.b16 %v40
  %v242 = vunpack.c.l.b16 %v41
  %v243 = vunpack.c.l.b16 %v42
  %v244 = vunpack.c.l.b16 %v43
  %v245 = vunpack.c.l.b16 %v44
  %v246 = vunpack.c.l.b16 %v45
  %v247 = vunpack.c.l.b16 %v46
  %v248 = vunpack.c.l.b16 %v47
  %v249 = vunpack.c.l.b16 %v48
  %v250 = vunpack.c.l.b16 %v49
  %v251 = vunpack.c.l.b16 %v50
  %v252 = vunpack.c.l.b16 %v51
  %v253 = vunpack.c.l.b16 %v52
  %v254 = vunpack.c.l.b16 %v53
  %v255 = vunpack.c.l.b16 %v54
  %v256 = vunpack.c.l.b16 %v55
  %v257 = vunpack.c.l.b16 %v56
  %v258 = vunpack.c.l.b16 %v57
  %v259 = vunpack.c.l.b16 %v58
  %v260 = vunpack.c.l.b16 %v59
  %v261 = vunpack.c.l.b16 %v60
  %v262 = vunpack.c.l.b16 %v61
  %v263 = vunpack.c.l.b16 %v62
  %v264 = vunpack.c.l.b16 %v63
  %v265 = vunpack.c.l.b16 %v64
  %v266 = vunpack.c.l.b16 %v65
  %v267 = vunpack.c.l.b16 %v66
  %v268 = vunpack.c.l.b16 %v67
  %v269 = vunpack.c.l.b16 %v68
  %v270 = vunpack.c.l.b16 %v69
  %v271 = vunpack.c.l.b16 %v70
  %v272 = vunpack.c.l.b16 %v71
  %v273 = vunpack.c.l.b16 %v72
  %v274 = vunpack.c.l.b16 %v73
  %v275 = vunpack.c.l.b16 %v74
  %v276 = vunpack.c.l.b16 %v75
  %v277 = vunpack.c.l.b16 %v76
  %v278 = vunpack.c.l.b16 %v77
  %v279 = vunpack.c.l.b16 %v78
  %v280 = vunpack.c.l.b16 %v79
  %v281 = vunpack.c.l.b16 %v80
  %v282 = vunpack.c.l.b16 %v81
  %v283 = vunpack.c.l.b16 %v82
  %v284 = vunpack.c.l.b16 %v83
  %v285 = vunpack.c.l.b16 %v84
  %v286 = vunpack.c.l.b16 %v85
  %v287 = vunpack.c.l.b16 %v86
  %v288 = vunpack.c.l.b16 %v87
  %v289 = vunpack.c.l.b16 %v88
  %v290 = vunpack.c.l.b16 %v89
  %v291 = vunpack.c.l.b16 %v90
  %v292 = vunpack.c.l.b16 %v91
  %v293 = vunpack.c.l.b16 %v92
  %v294 = vunpack.c.l.b16 %v93
  %v295 = vunpack.c.l.b16 %v94
  %v296 = vunpack.c.l.b16 %v95
  %v297 = vunpack.c.l.b16 %v96
  %v298 = vunpack.c.l.b16 %v97
  %v299 = vunpack.c.l.b16 %v98
  %v300 = vunpack.c.l.b16 %v99
  %v301 = vunpack.c.l.b16 %v100
  %v302 = vunpack.c.l.b16 %v101
  %v303 = vpack.c.b16 %v232, %v231
  %v304 = vpack.c.b16 %v234, %v233
  %v305 = vpack.c.b16 %v236, %v235
  %v306 = vpack.c.b16 %v238, %v237
  %v307 = vpack.c.b16 %v240, %v239
  %v308 = vpack.c.b16 %v242, %v241
  %v309 = vpack.c.b16 %v244, %v243
  %v310 = vpack.c.b16 %v246, %v245
  %v311 = vpack.c.b16 %v248, %v247
  %v312 = vpack.c.b16 %v250, %v249
  %v313 = vpack.c.b16 %v252, %v251
  %v314 = vpack.c.b16 %v254, %v253
  %v315 = vpack.c.b16 %v256, %v255
  %v316 = vpack.c.b16 %v258, %v257
  %v317 = vpack.c.b16 %v260, %v259
  %v318 = vpack.c.b16 %v262, %v261
  %v319 = vpack.c.b16 %v264, %v263
  %v320 = vpack.c.b16 %v266, %v265
  %v321 = vpack.c.b16 %v268, %v267
  %v322 = vpack.c.b16 %v270, %v269
  %v323 = vpack.c.b16 %v272, %v271
  %v324 = vpack.c.b16 %v274, %v273
  %v325 = vpack.c.b16 %v276, %v275
  %v326 = vpack.c.b16 %v278, %v277
  %v327 = vpack.c.b16 %v280, %v279
  %v328 = vpack.c.b16 %v282, %v281
  %v329 = vpack.c.b16 %v284, %v283
  %v330 = vpack.c.b16 %v286, %v285
  %v331 = vpack.c.b16 %v288, %v287
  %v332 = vpack.c.b16 %v290, %v289
  %v333 = vpack.c.b16 %v292, %v291
  %v334 = vpack.c.b16 %v294, %v293
  %v335 = vpack.c.b16 %v296, %v295
  %v336 = vpack.c.b16 %v298, %v297
  %v337 = vpack.c.b16 %v300, %v299
  %v338 = vpack.c.b16 %v302, %v301
  %vm375 = vcmask 523264
  %v377 = vsel %vm375, %v145, 0
  %v380 = vsel %vm375, %v150, 0
  %382 = vmatprep.subr.bf16.mxu0 0
  %383 = vmatpush1.bf16.msra.mxu0 %v303
  %384 = vmatprep.subr.bf16.mxu0 0
  %385 = vmatpush1.bf16.msra.mxu0 %v304
  %386 = vmatprep.subr.bf16.mxu0 0
  %387 = vmatpush1.bf16.msra.mxu0 %v305
  %388 = vmatprep.subr.bf16.mxu0 0
  %389 = vmatpush1.bf16.msra.mxu0 %v306
  %390 = vmatprep.subr.bf16.mxu0 0
  %391 = vmatpush1.bf16.msra.mxu0 %v307
  %392 = vmatprep.subr.bf16.mxu0 0
  %393 = vmatpush1.bf16.msra.mxu0 %v308
  %394 = vmatprep.subr.bf16.mxu0 0
  %395 = vmatpush1.bf16.msra.mxu0 %v309
  %396 = vmatprep.subr.bf16.mxu0 0
  %397 = vmatpush1.bf16.msra.mxu0 %v310
  %398 = vmatprep.subr.bf16.mxu0 0
  %399 = vmatpush1.bf16.msra.mxu0 %v311
  %400 = vmatprep.subr.bf16.mxu0 0
  %401 = vmatpush1.bf16.msra.mxu0 %v312
  %402 = vmatprep.subr.bf16.mxu0 0
  %403 = vmatpush1.bf16.msra.mxu0 %v313
  %404 = vmatprep.subr.bf16.mxu0 0
  %405 = vmatpush1.bf16.msra.mxu0 %v314
  %406 = vmatprep.subr.bf16.mxu0 0
  %407 = vmatpush1.bf16.msra.mxu0 %v315
  %408 = vmatprep.subr.bf16.mxu0 0
  %409 = vmatpush1.bf16.msra.mxu0 %v316
  %410 = vmatprep.subr.bf16.mxu0 0
  %411 = vmatpush1.bf16.msra.mxu0 %v317
  %412 = vmatprep.subr.bf16.mxu0 0
  %413 = vmatpush1.bf16.msra.mxu0 %v318
  %414 = vmatprep.mubr.bf16.mxu0 %v142
  %415 = vmatmul.mubr.bf16.gmra.mrb[0].mxu0 %v141
  %v416 = vpop.f32.mrb[0].mxu0
  %v417 = vadd.f32 %v107, %v416
  %v418 = vpop.f32.mrb[0].mxu0
  %v419 = vpop.f32.mrb[0].mxu0
  %v420 = vadd.f32 %v107, %v419
  %v421 = vpop.f32.mrb[0].mxu0
  %422 = vmatprep.mubr.bf16.mxu0 %v147
  %423 = vmatmul.mubr.bf16.gmra.mrb[0].mxu0 %v146
  %v424 = vpop.f32.mrb[0].mxu0
  %v425 = vadd.f32 %v107, %v424
  %v426 = vpop.f32.mrb[0].mxu0
  %v427 = vpop.f32.mrb[0].mxu0
  %v428 = vadd.f32 %v107, %v427
  %v429 = vpop.f32.mrb[0].mxu0
  %430 = vdwg.mxu0
  %431 = vmatprep.subr.bf16.mxu0 0
  %432 = vmatpush1.bf16.msra.mxu0 %v319
  %433 = vmatprep.subr.bf16.mxu0 0
  %434 = vmatpush1.bf16.msra.mxu0 %v320
  %435 = vmatprep.subr.bf16.mxu0 0
  %436 = vmatpush1.bf16.msra.mxu0 %v321
  %437 = vmatprep.subr.bf16.mxu0 0
  %438 = vmatpush1.bf16.msra.mxu0 %v322
  %439 = vmatprep.subr.bf16.mxu0 0
  %440 = vmatpush1.bf16.msra.mxu0 %v323
  %441 = vmatprep.subr.bf16.mxu0 0
  %442 = vmatpush1.bf16.msra.mxu0 %v324
  %443 = vmatprep.subr.bf16.mxu0 0
  %444 = vmatpush1.bf16.msra.mxu0 %v325
  %445 = vmatprep.subr.bf16.mxu0 0
  %446 = vmatpush1.bf16.msra.mxu0 %v326
  %447 = vmatprep.subr.bf16.mxu0 0
  %448 = vmatpush1.bf16.msra.mxu0 %v327
  %449 = vmatprep.subr.bf16.mxu0 0
  %450 = vmatpush1.bf16.msra.mxu0 %v328
  %451 = vmatprep.subr.bf16.mxu0 0
  %452 = vmatpush1.bf16.msra.mxu0 %v329
  %453 = vmatprep.subr.bf16.mxu0 0
  %454 = vmatpush1.bf16.msra.mxu0 %v330
  %455 = vmatprep.subr.bf16.mxu0 0
  %456 = vmatpush1.bf16.msra.mxu0 %v331
  %457 = vmatprep.subr.bf16.mxu0 0
  %458 = vmatpush1.bf16.msra.mxu0 %v332
  %459 = vmatprep.subr.bf16.mxu0 0
  %460 = vmatpush1.bf16.msra.mxu0 %v333
  %461 = vmatprep.subr.bf16.mxu0 0
  %462 = vmatpush1.bf16.msra.mxu0 %v334
  %463 = vmatprep.mubr.bf16.mxu0 %v144
  %464 = vmatmul.mubr.bf16.gmra.mrb[0].mxu0 %v143
  %v465 = vpop.f32.mrb[0].mxu0
  %v466 = vadd.f32 %v417, %v465
  %v467 = vpop.f32.mrb[0].mxu0
  %v468 = vpop.f32.mrb[0].mxu0
  %v469 = vadd.f32 %v420, %v468
  %v470 = vpop.f32.mrb[0].mxu0
  %471 = vmatprep.mubr.bf16.mxu0 %v149
  %472 = vmatmul.mubr.bf16.gmra.mrb[0].mxu0 %v148
  %v473 = vpop.f32.mrb[0].mxu0
  %v474 = vadd.f32 %v425, %v473
  %v475 = vpop.f32.mrb[0].mxu0
  %v476 = vpop.f32.mrb[0].mxu0
  %v477 = vadd.f32 %v428, %v476
  %v478 = vpop.f32.mrb[0].mxu0
  %479 = vdwg.mxu0
  %480 = vmatprep.subr.bf16.mxu0 0
  %481 = vmatpush1.bf16.msra.mxu0 %v335
  %482 = vmatprep.subr.bf16.mxu0 0
  %483 = vmatpush1.bf16.msra.mxu0 %v336
  %484 = vmatprep.subr.bf16.mxu0 0
  %485 = vmatpush1.bf16.msra.mxu0 %v337
  %486 = vmatprep.subr.bf16.mxu0 0
  %487 = vmatpush1.bf16.msra.mxu0 %v338
  %488 = vmatprep.subr.bf16.mxu0 0
  %489 = vmatpush1.bf16.msra.mxu0 0
  %490 = vmatprep.subr.bf16.mxu0 0
  %491 = vmatpush1.bf16.msra.mxu0 0
  %492 = vmatprep.subr.bf16.mxu0 0
  %493 = vmatpush1.bf16.msra.mxu0 0
  %494 = vmatprep.subr.bf16.mxu0 0
  %495 = vmatpush1.bf16.msra.mxu0 0
  %496 = vmatprep.subr.bf16.mxu0 0
  %497 = vmatpush1.bf16.msra.mxu0 0
  %498 = vmatprep.subr.bf16.mxu0 0
  %499 = vmatpush1.bf16.msra.mxu0 0
  %500 = vmatprep.subr.bf16.mxu0 0
  %501 = vmatpush1.bf16.msra.mxu0 0
  %502 = vmatprep.subr.bf16.mxu0 0
  %503 = vmatpush1.bf16.msra.mxu0 0
  %504 = vmatprep.subr.bf16.mxu0 0
  %505 = vmatpush1.bf16.msra.mxu0 0
  %506 = vmatprep.subr.bf16.mxu0 0
  %507 = vmatpush1.bf16.msra.mxu0 0
  %508 = vmatprep.subr.bf16.mxu0 0
  %509 = vmatpush1.bf16.msra.mxu0 0
  %510 = vmatprep.subr.bf16.mxu0 0
  %511 = vmatpush1.bf16.msra.mxu0 0
  %512 = vmatprep.mubr.bf16.mxu0 0
  %513 = vmatmul.mubr.bf16.gmra.mrb[0].mxu0 %v377
  %v514 = vpop.f32.mrb[0].mxu0
  %v515 = vadd.f32 %v466, %v514
  %v516 = vpop.f32.mrb[0].mxu0
  %v517 = vpop.f32.mrb[0].mxu0
  %v518 = vadd.f32 %v469, %v517
  %v519 = vpop.f32.mrb[0].mxu0
  %520 = vmatprep.mubr.bf16.mxu0 0
  %521 = vmatmul.mubr.bf16.gmra.mrb[0].mxu0 %v380
  %v522 = vpop.f32.mrb[0].mxu0
  %v523 = vadd.f32 %v474, %v522
  %v524 = vpop.f32.mrb[0].mxu0
  %v525 = vpop.f32.mrb[0].mxu0
  %v526 = vadd.f32 %v477, %v525
  %v527 = vpop.f32.mrb[0].mxu0
  %528 = vdwg.mxu0
  %v529 = vld [vmem:[%s3] sm:$0xf]
  %v530 = vld [vmem:[%s3 + $0x4] sm:$0xf]
  %v531 = vld [vmem:[%s3 + $0x8] sm:$0xf]
  %v532 = vld [vmem:[%s3 + $0xc] sm:$0xf]
  %v533 = vunpack.c.l.bf16 %v529
  %v534 = vunpack.c.l.bf16 %v530
  %v535 = vunpack.c.l.bf16 %v531
  %v536 = vunpack.c.l.bf16 %v532
  %v537 = vadd.f32 %v515, %v533
  %v538 = vadd.f32 %v518, %v534
  %v539 = vadd.f32 %v523, %v535
  %v540 = vadd.f32 %v526, %v536
  %v541 = vmax.f32 %v537, 0.0
  %v542 = vmax.f32 %v538, 0.0
  %v543 = vmax.f32 %v539, 0.0
  %v544 = vmax.f32 %v540, 0.0
  %v545 = vpack.c.bf16 %v542, %v541
  %v546 = vpack.c.bf16 %v544, %v543
  %v549 = vunpack.c.l.b16 %v545
  %v550 = vunpack.c.h.b16 %v545
  %v551 = vunpack.c.l.b16 %v546
  %v552 = vunpack.c.h.b16 %v546
  %v553 = vpack.c.b16 %v549, %v549
  %v554 = vpack.c.b16 %v550, %v550
  %v555 = vpack.c.b16 %v551, %v551
  %v556 = vpack.c.b16 %v552, %v552
  %vm561 = vcmask 519168
  %562 = vst.msk [vmem:[%s4] sm:$0xf] %vm561, %v553
  %563 = vst.msk [vmem:[%s4 + $0x4] sm:$0xf] %vm561, %v554
  %564 = vst.msk [vmem:[%s4 + $0x8] sm:$0xf] %vm561, %v555
  %565 = vst.msk [vmem:[%s4 + $0xc] sm:$0xf] %vm561, %v556
  // Predicated region
  $region18: #{resnet_forward.34} parent=0 // pred_check
    _
  $region19: #{resnet_forward.34} parent=0 // pred_check_branch
    %567 = sbr.rel (0) target = $region21
  $region20: #{resnet_forward.34} parent=0 // pred_region
    _
  $region21: #{resnet_forward.34} parent=0 // pred_fallthru
    _
  // Predicated region
  $region22: #{resnet_forward.34} parent=0 // pred_check
    _
  $region23: #{resnet_forward.34} parent=0 // pred_check_branch
    %569 = sbr.rel (0) target = $region25
  $region24: #{resnet_forward.34} parent=0 // pred_region
    _
  $region25: #{resnet_forward.34} parent=0 // pred_fallthru
    _

// kernel: resnet_forward.33
$region0: #{resnet_forward.33}
  #allocation0 [shape = 'u32[]', space=smem, size = 0x4, offset = 0x4, fixed_abs, tag = 'smem constant byte address 0x4 - core index']
  #allocation1 [shape = 'u32[144,128]{1,0:T(1,128)}', space=vmem, size = 0x12000, scoped, tag = 'internal scratch']
  %s0 = inlined_call_operand.vmem [shape: bf16[32,576], index: 0, kind: input, shape index: {}]
  %s1 = inlined_call_operand.vmem [shape: bf16[576,64], index: 1, kind: input, shape index: {}]
  %s2 = inlined_call_operand.vmem [shape: f32[1,64], index: 2, kind: input, shape index: {}]
  %s3 = inlined_call_operand.vmem [shape: bf16[32,64], index: 3, kind: output, shape index: {}]
  %s4 = sld [smem:[#allocation0]]
  $region22: #{resnet_forward.33} parent=0
    _
  %s6 = ssub.s32 1, %s4
  %s7 = scalar_select 0, %s6, %s4
  // Predicated region
  $region2: #{resnet_forward.33} parent=0 // pred_check
    _
  $region3: #{resnet_forward.33} parent=0 // pred_check_branch
    %9 = sbr.rel (0) target = $region5
  $region4: #{resnet_forward.33} parent=0 // pred_region
    _
  $region5: #{resnet_forward.33} parent=0 // pred_fallthru
    _
  // Predicated region
  $region6: #{resnet_forward.33} parent=0 // pred_check
    _
  $region7: #{resnet_forward.33} parent=0 // pred_check_branch
    %11 = sbr.rel (0) target = $region9
  $region8: #{resnet_forward.33} parent=0 // pred_region
    _
  $region9: #{resnet_forward.33} parent=0 // pred_fallthru
    _
  // Predicated region
  $region10: #{resnet_forward.33} parent=0 // pred_check
    _
  $region11: #{resnet_forward.33} parent=0 // pred_check_branch
    %13 = sbr.rel (0) target = $region13
  $region12: #{resnet_forward.33} parent=0 // pred_region
    _
  $region13: #{resnet_forward.33} parent=0 // pred_fallthru
    _
  %v15 = vld [vmem:[%s0] sm:$0xff]
  %v16 = vld [vmem:[%s0 + $0x8] sm:$0xff]
  %v17 = vld [vmem:[%s0 + $0x10] sm:$0xf]
  %v18 = vld [vmem:[%s0 + $0x14] sm:$0xff]
  %v19 = vld [vmem:[%s0 + $0x1c] sm:$0xff]
  %v20 = vld [vmem:[%s0 + $0x24] sm:$0xf]
  %v21 = vld [vmem:[%s0 + $0x28] sm:$0xff]
  %v22 = vld [vmem:[%s0 + $0x30] sm:$0xff]
  %v23 = vld [vmem:[%s0 + $0x38] sm:$0xf]
  %v24 = vld [vmem:[%s0 + $0x3c] sm:$0xff]
  %v25 = vld [vmem:[%s0 + $0x44] sm:$0xff]
  %v26 = vld [vmem:[%s0 + $0x4c] sm:$0xf]
  %v27 = vld [vmem:[%s1] sm:$0xf]
  %v28 = vld [vmem:[%s1 + $0x4] sm:$0xf]
  %v29 = vld [vmem:[%s1 + $0x8] sm:$0xf]
  %v30 = vld [vmem:[%s1 + $0xc] sm:$0xf]
  %v31 = vld [vmem:[%s1 + $0x10] sm:$0xf]
  %v32 = vld [vmem:[%s1 + $0x14] sm:$0xf]
  %v33 = vld [vmem:[%s1 + $0x18] sm:$0xf]
  %v34 = vld [vmem:[%s1 + $0x1c] sm:$0xf]
  %v35 = vld [vmem:[%s1 + $0x20] sm:$0xf]
  %v36 = vld [vmem:[%s1 + $0x24] sm:$0xf]
  %v37 = vld [vmem:[%s1 + $0x28] sm:$0xf]
  %v38 = vld [vmem:[%s1 + $0x2c] sm:$0xf]
  %v39 = vld [vmem:[%s1 + $0x30] sm:$0xf]
  %v40 = vld [vmem:[%s1 + $0x34] sm:$0xf]
  %v41 = vld [vmem:[%s1 + $0x38] sm:$0xf]
  %v42 = vld [vmem:[%s1 + $0x3c] sm:$0xf]
  %v43 = vld [vmem:[%s1 + $0x40] sm:$0xf]
  %v44 = vld [vmem:[%s1 + $0x44] sm:$0xf]
  %v45 = vld [vmem:[%s1 + $0x48] sm:$0xf]
  %v46 = vld [vmem:[%s1 + $0x4c] sm:$0xf]
  %v47 = vld [vmem:[%s1 + $0x50] sm:$0xf]
  %v48 = vld [vmem:[%s1 + $0x54] sm:$0xf]
  %v49 = vld [vmem:[%s1 + $0x58] sm:$0xf]
  %v50 = vld [vmem:[%s1 + $0x5c] sm:$0xf]
  %v51 = vld [vmem:[%s1 + $0x60] sm:$0xf]
  %v52 = vld [vmem:[%s1 + $0x64] sm:$0xf]
  %v53 = vld [vmem:[%s1 + $0x68] sm:$0xf]
  %v54 = vld [vmem:[%s1 + $0x6c] sm:$0xf]
  %v55 = vld [vmem:[%s1 + $0x70] sm:$0xf]
  %v56 = vld [vmem:[%s1 + $0x74] sm:$0xf]
  %v57 = vld [vmem:[%s1 + $0x78] sm:$0xf]
  %v58 = vld [vmem:[%s1 + $0x7c] sm:$0xf]
  %v59 = vld [vmem:[%s1 + $0x80] sm:$0xf]
  %v60 = vld [vmem:[%s1 + $0x84] sm:$0xf]
  %v61 = vld [vmem:[%s1 + $0x88] sm:$0xf]
  %v62 = vld [vmem:[%s1 + $0x8c] sm:$0xf]
  %v63 = vld [vmem:[%s1 + $0x90] sm:$0xf]
  %v64 = vld [vmem:[%s1 + $0x94] sm:$0xf]
  %v65 = vld [vmem:[%s1 + $0x98] sm:$0xf]
  %v66 = vld [vmem:[%s1 + $0x9c] sm:$0xf]
  %v67 = vld [vmem:[%s1 + $0xa0] sm:$0xf]
  %v68 = vld [vmem:[%s1 + $0xa4] sm:$0xf]
  %v69 = vld [vmem:[%s1 + $0xa8] sm:$0xf]
  %v70 = vld [vmem:[%s1 + $0xac] sm:$0xf]
  %v71 = vld [vmem:[%s1 + $0xb0] sm:$0xf]
  %v72 = vld [vmem:[%s1 + $0xb4] sm:$0xf]
  %v73 = vld [vmem:[%s1 + $0xb8] sm:$0xf]
  %v74 = vld [vmem:[%s1 + $0xbc] sm:$0xf]
  %v75 = vld [vmem:[%s1 + $0xc0] sm:$0xf]
  %v76 = vld [vmem:[%s1 + $0xc4] sm:$0xf]
  %v77 = vld [vmem:[%s1 + $0xc8] sm:$0xf]
  %v78 = vld [vmem:[%s1 + $0xcc] sm:$0xf]
  %v79 = vld [vmem:[%s1 + $0xd0] sm:$0xf]
  %v80 = vld [vmem:[%s1 + $0xd4] sm:$0xf]
  %v81 = vld [vmem:[%s1 + $0xd8] sm:$0xf]
  %v82 = vld [vmem:[%s1 + $0xdc] sm:$0xf]
  %v83 = vld [vmem:[%s1 + $0xe0] sm:$0xf]
  %v84 = vld [vmem:[%s1 + $0xe4] sm:$0xf]
  %v85 = vld [vmem:[%s1 + $0xe8] sm:$0xf]
  %v86 = vld [vmem:[%s1 + $0xec] sm:$0xf]
  %v87 = vld [vmem:[%s1 + $0xf0] sm:$0xf]
  %v88 = vld [vmem:[%s1 + $0xf4] sm:$0xf]
  %v89 = vld [vmem:[%s1 + $0xf8] sm:$0xf]
  %v90 = vld [vmem:[%s1 + $0xfc] sm:$0xf]
  %v91 = vld [vmem:[%s1 + $0x100] sm:$0xf]
  %v92 = vld [vmem:[%s1 + $0x104] sm:$0xf]
  %v93 = vld [vmem:[%s1 + $0x108] sm:$0xf]
  %v94 = vld [vmem:[%s1 + $0x10c] sm:$0xf]
  %v95 = vld [vmem:[%s1 + $0x110] sm:$0xf]
  %v96 = vld [vmem:[%s1 + $0x114] sm:$0xf]
  %v97 = vld [vmem:[%s1 + $0x118] sm:$0xf]
  %v98 = vld [vmem:[%s1 + $0x11c] sm:$0xf]
  %v99 = vld [vmem:[%s2] sm:$0x1]
  %v101 = vlaneseq
  %v102 = vshrl.u32 %v101, 7
  %v103 = vsub.s32 0, %v102
  %v104 = vrot.slane %v99, %v103
  %v118 = vunpack.c.l.b16 %v15
  %v119 = vunpack.c.h.b16 %v15
  %v120 = vunpack.c.l.b16 %v16
  %v121 = vunpack.c.h.b16 %v16
  %v122 = vunpack.c.l.b16 %v17
  %v123 = vunpack.c.l.b16 %v18
  %v124 = vunpack.c.h.b16 %v18
  %v125 = vunpack.c.l.b16 %v19
  %v126 = vunpack.c.h.b16 %v19
  %v127 = vunpack.c.l.b16 %v20
  %v128 = vunpack.c.l.b16 %v21
  %v129 = vunpack.c.h.b16 %v21
  %v130 = vunpack.c.l.b16 %v22
  %v131 = vunpack.c.h.b16 %v22
  %v132 = vunpack.c.l.b16 %v23
  %v133 = vunpack.c.l.b16 %v24
  %v134 = vunpack.c.h.b16 %v24
  %v135 = vunpack.c.l.b16 %v25
  %v136 = vunpack.c.h.b16 %v25
  %v137 = vunpack.c.l.b16 %v26
  %v138 = vpack.c.b16 %v123, %v118
  %v139 = vpack.c.b16 %v124, %v119
  %v140 = vpack.c.b16 %v125, %v120
  %v141 = vpack.c.b16 %v126, %v121
  %v142 = vpack.c.b16 %v127, %v122
  %v143 = vpack.c.b16 %v133, %v128
  %v144 = vpack.c.b16 %v134, %v129
  %v145 = vpack.c.b16 %v135, %v130
  %v146 = vpack.c.b16 %v136, %v131
  %v147 = vpack.c.b16 %v137, %v132
  %v228 = vunpack.c.l.b16 %v27
  %v229 = vunpack.c.l.b16 %v28
  %v230 = vunpack.c.l.b16 %v29
  %v231 = vunpack.c.l.b16 %v30
  %v232 = vunpack.c.l.b16 %v31
  %v233 = vunpack.c.l.b16 %v32
  %v234 = vunpack.c.l.b16 %v33
  %v235 = vunpack.c.l.b16 %v34
  %v236 = vunpack.c.l.b16 %v35
  %v237 = vunpack.c.l.b16 %v36
  %v238 = vunpack.c.l.b16 %v37
  %v239 = vunpack.c.l.b16 %v38
  %v240 = vunpack.c.l.b16 %v39
  %v241 = vunpack.c.l.b16 %v40
  %v242 = vunpack.c.l.b16 %v41
  %v243 = vunpack.c.l.b16 %v42
  %v244 = vunpack.c.l.b16 %v43
  %v245 = vunpack.c.l.b16 %v44
  %v246 = vunpack.c.l.b16 %v45
  %v247 = vunpack.c.l.b16 %v46
  %v248 = vunpack.c.l.b16 %v47
  %v249 = vunpack.c.l.b16 %v48
  %v250 = vunpack.c.l.b16 %v49
  %v251 = vunpack.c.l.b16 %v50
  %v252 = vunpack.c.l.b16 %v51
  %v253 = vunpack.c.l.b16 %v52
  %v254 = vunpack.c.l.b16 %v53
  %v255 = vunpack.c.l.b16 %v54
  %v256 = vunpack.c.l.b16 %v55
  %v257 = vunpack.c.l.b16 %v56
  %v258 = vunpack.c.l.b16 %v57
  %v259 = vunpack.c.l.b16 %v58
  %v260 = vunpack.c.l.b16 %v59
  %v261 = vunpack.c.l.b16 %v60
  %v262 = vunpack.c.l.b16 %v61
  %v263 = vunpack.c.l.b16 %v62
  %v264 = vunpack.c.l.b16 %v63
  %v265 = vunpack.c.l.b16 %v64
  %v266 = vunpack.c.l.b16 %v65
  %v267 = vunpack.c.l.b16 %v66
  %v268 = vunpack.c.l.b16 %v67
  %v269 = vunpack.c.l.b16 %v68
  %v270 = vunpack.c.l.b16 %v69
  %v271 = vunpack.c.l.b16 %v70
  %v272 = vunpack.c.l.b16 %v71
  %v273 = vunpack.c.l.b16 %v72
  %v274 = vunpack.c.l.b16 %v73
  %v275 = vunpack.c.l.b16 %v74
  %v276 = vunpack.c.l.b16 %v75
  %v277 = vunpack.c.l.b16 %v76
  %v278 = vunpack.c.l.b16 %v77
  %v279 = vunpack.c.l.b16 %v78
  %v280 = vunpack.c.l.b16 %v79
  %v281 = vunpack.c.l.b16 %v80
  %v282 = vunpack.c.l.b16 %v81
  %v283 = vunpack.c.l.b16 %v82
  %v284 = vunpack.c.l.b16 %v83
  %v285 = vunpack.c.l.b16 %v84
  %v286 = vunpack.c.l.b16 %v85
  %v287 = vunpack.c.l.b16 %v86
  %v288 = vunpack.c.l.b16 %v87
  %v289 = vunpack.c.l.b16 %v88
  %v290 = vunpack.c.l.b16 %v89
  %v291 = vunpack.c.l.b16 %v90
  %v292 = vunpack.c.l.b16 %v91
  %v293 = vunpack.c.l.b16 %v92
  %v294 = vunpack.c.l.b16 %v93
  %v295 = vunpack.c.l.b16 %v94
  %v296 = vunpack.c.l.b16 %v95
  %v297 = vunpack.c.l.b16 %v96
  %v298 = vunpack.c.l.b16 %v97
  %v299 = vunpack.c.l.b16 %v98
  %v300 = vpack.c.b16 %v229, %v228
  %v301 = vpack.c.b16 %v231, %v230
  %v302 = vpack.c.b16 %v233, %v232
  %v303 = vpack.c.b16 %v235, %v234
  %v304 = vpack.c.b16 %v237, %v236
  %v305 = vpack.c.b16 %v239, %v238
  %v306 = vpack.c.b16 %v241, %v240
  %v307 = vpack.c.b16 %v243, %v242
  %v308 = vpack.c.b16 %v245, %v244
  %v309 = vpack.c.b16 %v247, %v246
  %v310 = vpack.c.b16 %v249, %v248
  %v311 = vpack.c.b16 %v251, %v250
  %v312 = vpack.c.b16 %v253, %v252
  %v313 = vpack.c.b16 %v255, %v254
  %v314 = vpack.c.b16 %v257, %v256
  %v315 = vpack.c.b16 %v259, %v258
  %v316 = vpack.c.b16 %v261, %v260
  %v317 = vpack.c.b16 %v263, %v262
  %v318 = vpack.c.b16 %v265, %v264
  %v319 = vpack.c.b16 %v267, %v266
  %v320 = vpack.c.b16 %v269, %v268
  %v321 = vpack.c.b16 %v271, %v270
  %v322 = vpack.c.b16 %v273, %v272
  %v323 = vpack.c.b16 %v275, %v274
  %v324 = vpack.c.b16 %v277, %v276
  %v325 = vpack.c.b16 %v279, %v278
  %v326 = vpack.c.b16 %v281, %v280
  %v327 = vpack.c.b16 %v283, %v282
  %v328 = vpack.c.b16 %v285, %v284
  %v329 = vpack.c.b16 %v287, %v286
  %v330 = vpack.c.b16 %v289, %v288
  %v331 = vpack.c.b16 %v291, %v290
  %v332 = vpack.c.b16 %v293, %v292
  %v333 = vpack.c.b16 %v295, %v294
  %v334 = vpack.c.b16 %v297, %v296
  %v335 = vpack.c.b16 %v299, %v298
  %vm372 = vcmask 523264
  %v374 = vsel %vm372, %v142, 0
  %v377 = vsel %vm372, %v147, 0
  %379 = vmatprep.subr.bf16.mxu0 0
  %380 = vmatpush1.bf16.msra.mxu0 %v300
  %381 = vmatprep.subr.bf16.mxu0 0
  %382 = vmatpush1.bf16.msra.mxu0 %v301
  %383 = vmatprep.subr.bf16.mxu0 0
  %384 = vmatpush1.bf16.msra.mxu0 %v302
  %385 = vmatprep.subr.bf16.mxu0 0
  %386 = vmatpush1.bf16.msra.mxu0 %v303
  %387 = vmatprep.subr.bf16.mxu0 0
  %388 = vmatpush1.bf16.msra.mxu0 %v304
  %389 = vmatprep.subr.bf16.mxu0 0
  %390 = vmatpush1.bf16.msra.mxu0 %v305
  %391 = vmatprep.subr.bf16.mxu0 0
  %392 = vmatpush1.bf16.msra.mxu0 %v306
  %393 = vmatprep.subr.bf16.mxu0 0
  %394 = vmatpush1.bf16.msra.mxu0 %v307
  %395 = vmatprep.subr.bf16.mxu0 0
  %396 = vmatpush1.bf16.msra.mxu0 %v308
  %397 = vmatprep.subr.bf16.mxu0 0
  %398 = vmatpush1.bf16.msra.mxu0 %v309
  %399 = vmatprep.subr.bf16.mxu0 0
  %400 = vmatpush1.bf16.msra.mxu0 %v310
  %401 = vmatprep.subr.bf16.mxu0 0
  %402 = vmatpush1.bf16.msra.mxu0 %v311
  %403 = vmatprep.subr.bf16.mxu0 0
  %404 = vmatpush1.bf16.msra.mxu0 %v312
  %405 = vmatprep.subr.bf16.mxu0 0
  %406 = vmatpush1.bf16.msra.mxu0 %v313
  %407 = vmatprep.subr.bf16.mxu0 0
  %408 = vmatpush1.bf16.msra.mxu0 %v314
  %409 = vmatprep.subr.bf16.mxu0 0
  %410 = vmatpush1.bf16.msra.mxu0 %v315
  %411 = vmatprep.mubr.bf16.mxu0 %v139
  %412 = vmatmul.mubr.bf16.gmra.mrb[0].mxu0 %v138
  %v413 = vpop.f32.mrb[0].mxu0
  %v414 = vadd.f32 %v104, %v413
  %v415 = vpop.f32.mrb[0].mxu0
  %v416 = vpop.f32.mrb[0].mxu0
  %v417 = vadd.f32 %v104, %v416
  %v418 = vpop.f32.mrb[0].mxu0
  %419 = vmatprep.mubr.bf16.mxu0 %v144
  %420 = vmatmul.mubr.bf16.gmra.mrb[0].mxu0 %v143
  %v421 = vpop.f32.mrb[0].mxu0
  %v422 = vadd.f32 %v104, %v421
  %v423 = vpop.f32.mrb[0].mxu0
  %v424 = vpop.f32.mrb[0].mxu0
  %v425 = vadd.f32 %v104, %v424
  %v426 = vpop.f32.mrb[0].mxu0
  %427 = vdwg.mxu0
  %428 = vmatprep.subr.bf16.mxu0 0
  %429 = vmatpush1.bf16.msra.mxu0 %v316
  %430 = vmatprep.subr.bf16.mxu0 0
  %431 = vmatpush1.bf16.msra.mxu0 %v317
  %432 = vmatprep.subr.bf16.mxu0 0
  %433 = vmatpush1.bf16.msra.mxu0 %v318
  %434 = vmatprep.subr.bf16.mxu0 0
  %435 = vmatpush1.bf16.msra.mxu0 %v319
  %436 = vmatprep.subr.bf16.mxu0 0
  %437 = vmatpush1.bf16.msra.mxu0 %v320
  %438 = vmatprep.subr.bf16.mxu0 0
  %439 = vmatpush1.bf16.msra.mxu0 %v321
  %440 = vmatprep.subr.bf16.mxu0 0
  %441 = vmatpush1.bf16.msra.mxu0 %v322
  %442 = vmatprep.subr.bf16.mxu0 0
  %443 = vmatpush1.bf16.msra.mxu0 %v323
  %444 = vmatprep.subr.bf16.mxu0 0
  %445 = vmatpush1.bf16.msra.mxu0 %v324
  %446 = vmatprep.subr.bf16.mxu0 0
  %447 = vmatpush1.bf16.msra.mxu0 %v325
  %448 = vmatprep.subr.bf16.mxu0 0
  %449 = vmatpush1.bf16.msra.mxu0 %v326
  %450 = vmatprep.subr.bf16.mxu0 0
  %451 = vmatpush1.bf16.msra.mxu0 %v327
  %452 = vmatprep.subr.bf16.mxu0 0
  %453 = vmatpush1.bf16.msra.mxu0 %v328
  %454 = vmatprep.subr.bf16.mxu0 0
  %455 = vmatpush1.bf16.msra.mxu0 %v329
  %456 = vmatprep.subr.bf16.mxu0 0
  %457 = vmatpush1.bf16.msra.mxu0 %v330
  %458 = vmatprep.subr.bf16.mxu0 0
  %459 = vmatpush1.bf16.msra.mxu0 %v331
  %460 = vmatprep.mubr.bf16.mxu0 %v141
  %461 = vmatmul.mubr.bf16.gmra.mrb[0].mxu0 %v140
  %v462 = vpop.f32.mrb[0].mxu0
  %v463 = vadd.f32 %v414, %v462
  %v464 = vpop.f32.mrb[0].mxu0
  %v465 = vpop.f32.mrb[0].mxu0
  %v466 = vadd.f32 %v417, %v465
  %v467 = vpop.f32.mrb[0].mxu0
  %468 = vmatprep.mubr.bf16.mxu0 %v146
  %469 = vmatmul.mubr.bf16.gmra.mrb[0].mxu0 %v145
  %v470 = vpop.f32.mrb[0].mxu0
  %v471 = vadd.f32 %v422, %v470
  %v472 = vpop.f32.mrb[0].mxu0
  %v473 = vpop.f32.mrb[0].mxu0
  %v474 = vadd.f32 %v425, %v473
  %v475 = vpop.f32.mrb[0].mxu0
  %476 = vdwg.mxu0
  %477 = vmatprep.subr.bf16.mxu0 0
  %478 = vmatpush1.bf16.msra.mxu0 %v332
  %479 = vmatprep.subr.bf16.mxu0 0
  %480 = vmatpush1.bf16.msra.mxu0 %v333
  %481 = vmatprep.subr.bf16.mxu0 0
  %482 = vmatpush1.bf16.msra.mxu0 %v334
  %483 = vmatprep.subr.bf16.mxu0 0
  %484 = vmatpush1.bf16.msra.mxu0 %v335
  %485 = vmatprep.subr.bf16.mxu0 0
  %486 = vmatpush1.bf16.msra.mxu0 0
  %487 = vmatprep.subr.bf16.mxu0 0
  %488 = vmatpush1.bf16.msra.mxu0 0
  %489 = vmatprep.subr.bf16.mxu0 0
  %490 = vmatpush1.bf16.msra.mxu0 0
  %491 = vmatprep.subr.bf16.mxu0 0
  %492 = vmatpush1.bf16.msra.mxu0 0
  %493 = vmatprep.subr.bf16.mxu0 0
  %494 = vmatpush1.bf16.msra.mxu0 0
  %495 = vmatprep.subr.bf16.mxu0 0
  %496 = vmatpush1.bf16.msra.mxu0 0
  %497 = vmatprep.subr.bf16.mxu0 0
  %498 = vmatpush1.bf16.msra.mxu0 0
  %499 = vmatprep.subr.bf16.mxu0 0
  %500 = vmatpush1.bf16.msra.mxu0 0
  %501 = vmatprep.subr.bf16.mxu0 0
  %502 = vmatpush1.bf16.msra.mxu0 0
  %503 = vmatprep.subr.bf16.mxu0 0
  %504 = vmatpush1.bf16.msra.mxu0 0
  %505 = vmatprep.subr.bf16.mxu0 0
  %506 = vmatpush1.bf16.msra.mxu0 0
  %507 = vmatprep.subr.bf16.mxu0 0
  %508 = vmatpush1.bf16.msra.mxu0 0
  %509 = vmatprep.mubr.bf16.mxu0 0
  %510 = vmatmul.mubr.bf16.gmra.mrb[0].mxu0 %v374
  %v511 = vpop.f32.mrb[0].mxu0
  %v512 = vadd.f32 %v463, %v511
  %v513 = vpop.f32.mrb[0].mxu0
  %v514 = vpop.f32.mrb[0].mxu0
  %v515 = vadd.f32 %v466, %v514
  %v516 = vpop.f32.mrb[0].mxu0
  %517 = vmatprep.mubr.bf16.mxu0 0
  %518 = vmatmul.mubr.bf16.gmra.mrb[0].mxu0 %v377
  %v519 = vpop.f32.mrb[0].mxu0
  %v520 = vadd.f32 %v471, %v519
  %v521 = vpop.f32.mrb[0].mxu0
  %v522 = vpop.f32.mrb[0].mxu0
  %v523 = vadd.f32 %v474, %v522
  %v524 = vpop.f32.mrb[0].mxu0
  %525 = vdwg.mxu0
  %v526 = vmax.f32 %v512, 0.0
  %v527 = vmax.f32 %v515, 0.0
  %v528 = vmax.f32 %v520, 0.0
  %v529 = vmax.f32 %v523, 0.0
  %v530 = vpack.c.bf16 %v527, %v526
  %v531 = vpack.c.bf16 %v529, %v528
  %v534 = vunpack.c.l.b16 %v530
  %v535 = vunpack.c.h.b16 %v530
  %v536 = vunpack.c.l.b16 %v531
  %v537 = vunpack.c.h.b16 %v531
  %v538 = vpack.c.b16 %v534, %v534
  %v539 = vpack.c.b16 %v535, %v535
  %v540 = vpack.c.b16 %v536, %v536
  %v541 = vpack.c.b16 %v537, %v537
  %vm546 = vcmask 519168
  %547 = vst.msk [vmem:[%s3] sm:$0xf] %vm546, %v538
  %548 = vst.msk [vmem:[%s3 + $0x4] sm:$0xf] %vm546, %v539
  %549 = vst.msk [vmem:[%s3 + $0x8] sm:$0xf] %vm546, %v540
  %550 = vst.msk [vmem:[%s3 + $0xc] sm:$0xf] %vm546, %v541
  // Predicated region
  $region14: #{resnet_forward.33} parent=0 // pred_check
    _
  $region15: #{resnet_forward.33} parent=0 // pred_check_branch
    %552 = sbr.rel (0) target = $region17
  $region16: #{resnet_forward.33} parent=0 // pred_region
    _
  $region17: #{resnet_forward.33} parent=0 // pred_fallthru
    _
  // Predicated region
  $region18: #{resnet_forward.33} parent=0 // pred_check
    _
  $region19: #{resnet_forward.33} parent=0 // pred_check_branch
    %554 = sbr.rel (0) target = $region21
  $region20: #{resnet_forward.33} parent=0 // pred_region
    _
  $region21: #{resnet_forward.33} parent=0 // pred_fallthru
    _

// kernel: resnet_forward.35
$region0: #{resnet_forward.35}
  #allocation0 [shape = 'u32[]', space=smem, size = 0x4, offset = 0x4, fixed_abs, tag = 'smem constant byte address 0x4 - core index']
  #allocation1 [shape = 'u32[144,128]{1,0:T(1,128)}', space=vmem, size = 0x12000, scoped, tag = 'internal scratch']
  %s0 = inlined_call_operand.vmem [shape: bf16[8,576], index: 0, kind: input, shape index: {}]
  %s1 = inlined_call_operand.vmem [shape: bf16[576,128], index: 1, kind: input, shape index: {}]
  %s2 = inlined_call_operand.vmem [shape: f32[1,128], index: 2, kind: input, shape index: {}]
  %s3 = inlined_call_operand.vmem [shape: bf16[8,128], index: 3, kind: output, shape index: {}]
  %s4 = sld [smem:[#allocation0]]
  $region22: #{resnet_forward.35} parent=0
    _
  %s6 = ssub.s32 1, %s4
  %s7 = scalar_select 0, %s6, %s4
  // Predicated region
  $region2: #{resnet_forward.35} parent=0 // pred_check
    _
  $region3: #{resnet_forward.35} parent=0 // pred_check_branch
    %9 = sbr.rel (0) target = $region5
  $region4: #{resnet_forward.35} parent=0 // pred_region
    _
  $region5: #{resnet_forward.35} parent=0 // pred_fallthru
    _
  // Predicated region
  $region6: #{resnet_forward.35} parent=0 // pred_check
    _
  $region7: #{resnet_forward.35} parent=0 // pred_check_branch
    %11 = sbr.rel (0) target = $region9
  $region8: #{resnet_forward.35} parent=0 // pred_region
    _
  $region9: #{resnet_forward.35} parent=0 // pred_fallthru
    _
  // Predicated region
  $region10: #{resnet_forward.35} parent=0 // pred_check
    _
  $region11: #{resnet_forward.35} parent=0 // pred_check_branch
    %13 = sbr.rel (0) target = $region13
  $region12: #{resnet_forward.35} parent=0 // pred_region
    _
  $region13: #{resnet_forward.35} parent=0 // pred_fallthru
    _
  %v15 = vld [vmem:[%s0] sm:$0xff]
  %v16 = vld [vmem:[%s0 + $0x8] sm:$0xff]
  %v17 = vld [vmem:[%s0 + $0x10] sm:$0xf]
  %v18 = vld [vmem:[%s1] sm:$0xf]
  %v19 = vld [vmem:[%s1 + $0x4] sm:$0xf]
  %v20 = vld [vmem:[%s1 + $0x8] sm:$0xf]
  %v21 = vld [vmem:[%s1 + $0xc] sm:$0xf]
  %v22 = vld [vmem:[%s1 + $0x10] sm:$0xf]
  %v23 = vld [vmem:[%s1 + $0x14] sm:$0xf]
  %v24 = vld [vmem:[%s1 + $0x18] sm:$0xf]
  %v25 = vld [vmem:[%s1 + $0x1c] sm:$0xf]
  %v26 = vld [vmem:[%s1 + $0x20] sm:$0xf]
  %v27 = vld [vmem:[%s1 + $0x24] sm:$0xf]
  %v28 = vld [vmem:[%s1 + $0x28] sm:$0xf]
  %v29 = vld [vmem:[%s1 + $0x2c] sm:$0xf]
  %v30 = vld [vmem:[%s1 + $0x30] sm:$0xf]
  %v31 = vld [vmem:[%s1 + $0x34] sm:$0xf]
  %v32 = vld [vmem:[%s1 + $0x38] sm:$0xf]
  %v33 = vld [vmem:[%s1 + $0x3c] sm:$0xf]
  %v34 = vld [vmem:[%s1 + $0x40] sm:$0xf]
  %v35 = vld [vmem:[%s1 + $0x44] sm:$0xf]
  %v36 = vld [vmem:[%s1 + $0x48] sm:$0xf]
  %v37 = vld [vmem:[%s1 + $0x4c] sm:$0xf]
  %v38 = vld [vmem:[%s1 + $0x50] sm:$0xf]
  %v39 = vld [vmem:[%s1 + $0x54] sm:$0xf]
  %v40 = vld [vmem:[%s1 + $0x58] sm:$0xf]
  %v41 = vld [vmem:[%s1 + $0x5c] sm:$0xf]
  %v42 = vld [vmem:[%s1 + $0x60] sm:$0xf]
  %v43 = vld [vmem:[%s1 + $0x64] sm:$0xf]
  %v44 = vld [vmem:[%s1 + $0x68] sm:$0xf]
  %v45 = vld [vmem:[%s1 + $0x6c] sm:$0xf]
  %v46 = vld [vmem:[%s1 + $0x70] sm:$0xf]
  %v47 = vld [vmem:[%s1 + $0x74] sm:$0xf]
  %v48 = vld [vmem:[%s1 + $0x78] sm:$0xf]
  %v49 = vld [vmem:[%s1 + $0x7c] sm:$0xf]
  %v50 = vld [vmem:[%s1 + $0x80] sm:$0xf]
  %v51 = vld [vmem:[%s1 + $0x84] sm:$0xf]
  %v52 = vld [vmem:[%s1 + $0x88] sm:$0xf]
  %v53 = vld [vmem:[%s1 + $0x8c] sm:$0xf]
  %v54 = vld [vmem:[%s1 + $0x90] sm:$0xf]
  %v55 = vld [vmem:[%s1 + $0x94] sm:$0xf]
  %v56 = vld [vmem:[%s1 + $0x98] sm:$0xf]
  %v57 = vld [vmem:[%s1 + $0x9c] sm:$0xf]
  %v58 = vld [vmem:[%s1 + $0xa0] sm:$0xf]
  %v59 = vld [vmem:[%s1 + $0xa4] sm:$0xf]
  %v60 = vld [vmem:[%s1 + $0xa8] sm:$0xf]
  %v61 = vld [vmem:[%s1 + $0xac] sm:$0xf]
  %v62 = vld [vmem:[%s1 + $0xb0] sm:$0xf]
  %v63 = vld [vmem:[%s1 + $0xb4] sm:$0xf]
  %v64 = vld [vmem:[%s1 + $0xb8] sm:$0xf]
  %v65 = vld [vmem:[%s1 + $0xbc] sm:$0xf]
  %v66 = vld [vmem:[%s1 + $0xc0] sm:$0xf]
  %v67 = vld [vmem:[%s1 + $0xc4] sm:$0xf]
  %v68 = vld [vmem:[%s1 + $0xc8] sm:$0xf]
  %v69 = vld [vmem:[%s1 + $0xcc] sm:$0xf]
  %v70 = vld [vmem:[%s1 + $0xd0] sm:$0xf]
  %v71 = vld [vmem:[%s1 + $0xd4] sm:$0xf]
  %v72 = vld [vmem:[%s1 + $0xd8] sm:$0xf]
  %v73 = vld [vmem:[%s1 + $0xdc] sm:$0xf]
  %v74 = vld [vmem:[%s1 + $0xe0] sm:$0xf]
  %v75 = vld [vmem:[%s1 + $0xe4] sm:$0xf]
  %v76 = vld [vmem:[%s1 + $0xe8] sm:$0xf]
  %v77 = vld [vmem:[%s1 + $0xec] sm:$0xf]
  %v78 = vld [vmem:[%s1 + $0xf0] sm:$0xf]
  %v79 = vld [vmem:[%s1 + $0xf4] sm:$0xf]
  %v80 = vld [vmem:[%s1 + $0xf8] sm:$0xf]
  %v81 = vld [vmem:[%s1 + $0xfc] sm:$0xf]
  %v82 = vld [vmem:[%s1 + $0x100] sm:$0xf]
  %v83 = vld [vmem:[%s1 + $0x104] sm:$0xf]
  %v84 = vld [vmem:[%s1 + $0x108] sm:$0xf]
  %v85 = vld [vmem:[%s1 + $0x10c] sm:$0xf]
  %v86 = vld [vmem:[%s1 + $0x110] sm:$0xf]
  %v87 = vld [vmem:[%s1 + $0x114] sm:$0xf]
  %v88 = vld [vmem:[%s1 + $0x118] sm:$0xf]
  %v89 = vld [vmem:[%s1 + $0x11c] sm:$0xf]
  %v90 = vld [vmem:[%s2] sm:$0x1]
  %v92 = vlaneseq
  %v93 = vshrl.u32 %v92, 7
  %v94 = vsub.s32 0, %v93
  %v95 = vrot.slane %v90, %v94
  %v100 = vunpack.c.l.b16 %v15
  %v101 = vunpack.c.h.b16 %v15
  %v102 = vunpack.c.l.b16 %v16
  %v103 = vunpack.c.h.b16 %v16
  %v104 = vunpack.c.l.b16 %v17
  %v105 = vpack.c.b16 %v100, %v100
  %v106 = vpack.c.b16 %v101, %v101
  %v107 = vpack.c.b16 %v102, %v102
  %v108 = vpack.c.b16 %v103, %v103
  %v109 = vpack.c.b16 %v104, %v104
  %v186 = vunpack.c.l.b16 %v18
  %v187 = vunpack.c.l.b16 %v19
  %v188 = vunpack.c.l.b16 %v20
  %v189 = vunpack.c.l.b16 %v21
  %v190 = vunpack.c.l.b16 %v22
  %v191 = vunpack.c.l.b16 %v23
  %v192 = vunpack.c.l.b16 %v24
  %v193 = vunpack.c.l.b16 %v25
  %v194 = vunpack.c.l.b16 %v26
  %v195 = vunpack.c.l.b16 %v27
  %v196 = vunpack.c.l.b16 %v28
  %v197 = vunpack.c.l.b16 %v29
  %v198 = vunpack.c.l.b16 %v30
  %v199 = vunpack.c.l.b16 %v31
  %v200 = vunpack.c.l.b16 %v32
  %v201 = vunpack.c.l.b16 %v33
  %v202 = vunpack.c.l.b16 %v34
  %v203 = vunpack.c.l.b16 %v35
  %v204 = vunpack.c.l.b16 %v36
  %v205 = vunpack.c.l.b16 %v37
  %v206 = vunpack.c.l.b16 %v38
  %v207 = vunpack.c.l.b16 %v39
  %v208 = vunpack.c.l.b16 %v40
  %v209 = vunpack.c.l.b16 %v41
  %v210 = vunpack.c.l.b16 %v42
  %v211 = vunpack.c.l.b16 %v43
  %v212 = vunpack.c.l.b16 %v44
  %v213 = vunpack.c.l.b16 %v45
  %v214 = vunpack.c.l.b16 %v46
  %v215 = vunpack.c.l.b16 %v47
  %v216 = vunpack.c.l.b16 %v48
  %v217 = vunpack.c.l.b16 %v49
  %v218 = vunpack.c.l.b16 %v50
  %v219 = vunpack.c.l.b16 %v51
  %v220 = vunpack.c.l.b16 %v52
  %v221 = vunpack.c.l.b16 %v53
  %v222 = vunpack.c.l.b16 %v54
  %v223 = vunpack.c.l.b16 %v55
  %v224 = vunpack.c.l.b16 %v56
  %v225 = vunpack.c.l.b16 %v57
  %v226 = vunpack.c.l.b16 %v58
  %v227 = vunpack.c.l.b16 %v59
  %v228 = vunpack.c.l.b16 %v60
  %v229 = vunpack.c.l.b16 %v61
  %v230 = vunpack.c.l.b16 %v62
  %v231 = vunpack.c.l.b16 %v63
  %v232 = vunpack.c.l.b16 %v64
  %v233 = vunpack.c.l.b16 %v65
  %v234 = vunpack.c.l.b16 %v66
  %v235 = vunpack.c.l.b16 %v67
  %v236 = vunpack.c.l.b16 %v68
  %v237 = vunpack.c.l.b16 %v69
  %v238 = vunpack.c.l.b16 %v70
  %v239 = vunpack.c.l.b16 %v71
  %v240 = vunpack.c.l.b16 %v72
  %v241 = vunpack.c.l.b16 %v73
  %v242 = vunpack.c.l.b16 %v74
  %v243 = vunpack.c.l.b16 %v75
  %v244 = vunpack.c.l.b16 %v76
  %v245 = vunpack.c.l.b16 %v77
  %v246 = vunpack.c.l.b16 %v78
  %v247 = vunpack.c.l.b16 %v79
  %v248 = vunpack.c.l.b16 %v80
  %v249 = vunpack.c.l.b16 %v81
  %v250 = vunpack.c.l.b16 %v82
  %v251 = vunpack.c.l.b16 %v83
  %v252 = vunpack.c.l.b16 %v84
  %v253 = vunpack.c.l.b16 %v85
  %v254 = vunpack.c.l.b16 %v86
  %v255 = vunpack.c.l.b16 %v87
  %v256 = vunpack.c.l.b16 %v88
  %v257 = vunpack.c.l.b16 %v89
  %v258 = vpack.c.b16 %v187, %v186
  %v259 = vpack.c.b16 %v189, %v188
  %v260 = vpack.c.b16 %v191, %v190
  %v261 = vpack.c.b16 %v193, %v192
  %v262 = vpack.c.b16 %v195, %v194
  %v263 = vpack.c.b16 %v197, %v196
  %v264 = vpack.c.b16 %v199, %v198
  %v265 = vpack.c.b16 %v201, %v200
  %v266 = vpack.c.b16 %v203, %v202
  %v267 = vpack.c.b16 %v205, %v204
  %v268 = vpack.c.b16 %v207, %v206
  %v269 = vpack.c.b16 %v209, %v208
  %v270 = vpack.c.b16 %v211, %v210
  %v271 = vpack.c.b16 %v213, %v212
  %v272 = vpack.c.b16 %v215, %v214
  %v273 = vpack.c.b16 %v217, %v216
  %v274 = vpack.c.b16 %v219, %v218
  %v275 = vpack.c.b16 %v221, %v220
  %v276 = vpack.c.b16 %v223, %v222
  %v277 = vpack.c.b16 %v225, %v224
  %v278 = vpack.c.b16 %v227, %v226
  %v279 = vpack.c.b16 %v229, %v228
  %v280 = vpack.c.b16 %v231, %v230
  %v281 = vpack.c.b16 %v233, %v232
  %v282 = vpack.c.b16 %v235, %v234
  %v283 = vpack.c.b16 %v237, %v236
  %v284 = vpack.c.b16 %v239, %v238
  %v285 = vpack.c.b16 %v241, %v240
  %v286 = vpack.c.b16 %v243, %v242
  %v287 = vpack.c.b16 %v245, %v244
  %v288 = vpack.c.b16 %v247, %v246
  %v289 = vpack.c.b16 %v249, %v248
  %v290 = vpack.c.b16 %v251, %v250
  %v291 = vpack.c.b16 %v253, %v252
  %v292 = vpack.c.b16 %v255, %v254
  %v293 = vpack.c.b16 %v257, %v256
  %vm330 = vcmask 523264
  %v332 = vsel %vm330, %v109, 0
  %334 = vmatprep.subr.bf16.mxu0 0
  %335 = vmatpush1.bf16.msra.mxu0 %v258
  %336 = vmatprep.subr.bf16.mxu0 0
  %337 = vmatpush1.bf16.msra.mxu0 %v259
  %338 = vmatprep.subr.bf16.mxu0 0
  %339 = vmatpush1.bf16.msra.mxu0 %v260
  %340 = vmatprep.subr.bf16.mxu0 0
  %341 = vmatpush1.bf16.msra.mxu0 %v261
  %342 = vmatprep.subr.bf16.mxu0 0
  %343 = vmatpush1.bf16.msra.mxu0 %v262
  %344 = vmatprep.subr.bf16.mxu0 0
  %345 = vmatpush1.bf16.msra.mxu0 %v263
  %346 = vmatprep.subr.bf16.mxu0 0
  %347 = vmatpush1.bf16.msra.mxu0 %v264
  %348 = vmatprep.subr.bf16.mxu0 0
  %349 = vmatpush1.bf16.msra.mxu0 %v265
  %350 = vmatprep.subr.bf16.mxu0 0
  %351 = vmatpush1.bf16.msra.mxu0 %v266
  %352 = vmatprep.subr.bf16.mxu0 0
  %353 = vmatpush1.bf16.msra.mxu0 %v267
  %354 = vmatprep.subr.bf16.mxu0 0
  %355 = vmatpush1.bf16.msra.mxu0 %v268
  %356 = vmatprep.subr.bf16.mxu0 0
  %357 = vmatpush1.bf16.msra.mxu0 %v269
  %358 = vmatprep.subr.bf16.mxu0 0
  %359 = vmatpush1.bf16.msra.mxu0 %v270
  %360 = vmatprep.subr.bf16.mxu0 0
  %361 = vmatpush1.bf16.msra.mxu0 %v271
  %362 = vmatprep.subr.bf16.mxu0 0
  %363 = vmatpush1.bf16.msra.mxu0 %v272
  %364 = vmatprep.subr.bf16.mxu0 0
  %365 = vmatpush1.bf16.msra.mxu0 %v273
  %366 = vmatprep.mubr.bf16.mxu0 %v106
  %367 = vmatmul.mubr.bf16.gmra.mrb[0].mxu0 %v105
  %v368 = vpop.f32.mrb[0].mxu0
  %v369 = vadd.f32 %v95, %v368
  %v370 = vpop.f32.mrb[0].mxu0
  %v371 = vpop.f32.mrb[0].mxu0
  %v372 = vpop.f32.mrb[0].mxu0
  %373 = vdwg.mxu0
  %374 = vmatprep.subr.bf16.mxu0 0
  %375 = vmatpush1.bf16.msra.mxu0 %v274
  %376 = vmatprep.subr.bf16.mxu0 0
  %377 = vmatpush1.bf16.msra.mxu0 %v275
  %378 = vmatprep.subr.bf16.mxu0 0
  %379 = vmatpush1.bf16.msra.mxu0 %v276
  %380 = vmatprep.subr.bf16.mxu0 0
  %381 = vmatpush1.bf16.msra.mxu0 %v277
  %382 = vmatprep.subr.bf16.mxu0 0
  %383 = vmatpush1.bf16.msra.mxu0 %v278
  %384 = vmatprep.subr.bf16.mxu0 0
  %385 = vmatpush1.bf16.msra.mxu0 %v279
  %386 = vmatprep.subr.bf16.mxu0 0
  %387 = vmatpush1.bf16.msra.mxu0 %v280
  %388 = vmatprep.subr.bf16.mxu0 0
  %389 = vmatpush1.bf16.msra.mxu0 %v281
  %390 = vmatprep.subr.bf16.mxu0 0
  %391 = vmatpush1.bf16.msra.mxu0 %v282
  %392 = vmatprep.subr.bf16.mxu0 0
  %393 = vmatpush1.bf16.msra.mxu0 %v283
  %394 = vmatprep.subr.bf16.mxu0 0
  %395 = vmatpush1.bf16.msra.mxu0 %v284
  %396 = vmatprep.subr.bf16.mxu0 0
  %397 = vmatpush1.bf16.msra.mxu0 %v285
  %398 = vmatprep.subr.bf16.mxu0 0
  %399 = vmatpush1.bf16.msra.mxu0 %v286
  %400 = vmatprep.subr.bf16.mxu0 0
  %401 = vmatpush1.bf16.msra.mxu0 %v287
  %402 = vmatprep.subr.bf16.mxu0 0
  %403 = vmatpush1.bf16.msra.mxu0 %v288
  %404 = vmatprep.subr.bf16.mxu0 0
  %405 = vmatpush1.bf16.msra.mxu0 %v289
  %406 = vmatprep.mubr.bf16.mxu0 %v108
  %407 = vmatmul.mubr.bf16.gmra.mrb[0].mxu0 %v107
  %v408 = vpop.f32.mrb[0].mxu0
  %v409 = vadd.f32 %v369, %v408
  %v410 = vpop.f32.mrb[0].mxu0
  %v411 = vpop.f32.mrb[0].mxu0
  %v412 = vpop.f32.mrb[0].mxu0
  %413 = vdwg.mxu0
  %414 = vmatprep.subr.bf16.mxu0 0
  %415 = vmatpush1.bf16.msra.mxu0 %v290
  %416 = vmatprep.subr.bf16.mxu0 0
  %417 = vmatpush1.bf16.msra.mxu0 %v291
  %418 = vmatprep.subr.bf16.mxu0 0
  %419 = vmatpush1.bf16.msra.mxu0 %v292
  %420 = vmatprep.subr.bf16.mxu0 0
  %421 = vmatpush1.bf16.msra.mxu0 %v293
  %422 = vmatprep.subr.bf16.mxu0 0
  %423 = vmatpush1.bf16.msra.mxu0 0
  %424 = vmatprep.subr.bf16.mxu0 0
  %425 = vmatpush1.bf16.msra.mxu0 0
  %426 = vmatprep.subr.bf16.mxu0 0
  %427 = vmatpush1.bf16.msra.mxu0 0
  %428 = vmatprep.subr.bf16.mxu0 0
  %429 = vmatpush1.bf16.msra.mxu0 0
  %430 = vmatprep.subr.bf16.mxu0 0
  %431 = vmatpush1.bf16.msra.mxu0 0
  %432 = vmatprep.subr.bf16.mxu0 0
  %433 = vmatpush1.bf16.msra.mxu0 0
  %434 = vmatprep.subr.bf16.mxu0 0
  %435 = vmatpush1.bf16.msra.mxu0 0
  %436 = vmatprep.subr.bf16.mxu0 0
  %437 = vmatpush1.bf16.msra.mxu0 0
  %438 = vmatprep.subr.bf16.mxu0 0
  %439 = vmatpush1.bf16.msra.mxu0 0
  %440 = vmatprep.subr.bf16.mxu0 0
  %441 = vmatpush1.bf16.msra.mxu0 0
  %442 = vmatprep.subr.bf16.mxu0 0
  %443 = vmatpush1.bf16.msra.mxu0 0
  %444 = vmatprep.subr.bf16.mxu0 0
  %445 = vmatpush1.bf16.msra.mxu0 0
  %446 = vmatprep.mubr.bf16.mxu0 0
  %447 = vmatmul.mubr.bf16.gmra.mrb[0].mxu0 %v332
  %v448 = vpop.f32.mrb[0].mxu0
  %v449 = vadd.f32 %v409, %v448
  %v450 = vpop.f32.mrb[0].mxu0
  %v451 = vpop.f32.mrb[0].mxu0
  %v452 = vpop.f32.mrb[0].mxu0
  %453 = vdwg.mxu0
  %v454 = vmax.f32 %v449, 0.0
  %v455 = vpack.c.bf16 %v454, %v454
  %456 = vst [vmem:[%s3] sm:$0xf] %v455
  // Predicated region
  $region14: #{resnet_forward.35} parent=0 // pred_check
    _
  $region15: #{resnet_forward.35} parent=0 // pred_check_branch
    %458 = sbr.rel (0) target = $region17
  $region16: #{resnet_forward.35} parent=0 // pred_region
    _
  $region17: #{resnet_forward.35} parent=0 // pred_fallthru
    _
  // Predicated region
  $region18: #{resnet_forward.35} parent=0 // pred_check
    _
  $region19: #{resnet_forward.35} parent=0 // pred_check_branch
    %460 = sbr.rel (0) target = $region21
  $region20: #{resnet_forward.35} parent=0 // pred_region
    _
  $region21: #{resnet_forward.35} parent=0 // pred_fallthru
    _

// kernel: resnet_forward.36
$region0: #{resnet_forward.36}
  #allocation0 [shape = 'u32[]', space=smem, size = 0x4, offset = 0x4, fixed_abs, tag = 'smem constant byte address 0x4 - core index']
  #allocation1 [shape = 'u32[144,128]{1,0:T(1,128)}', space=vmem, size = 0x12000, scoped, tag = 'internal scratch']
  %s0 = inlined_call_operand.vmem [shape: bf16[8,1216], index: 0, kind: input, shape index: {}]
  %s1 = inlined_call_operand.vmem [shape: bf16[1216,128], index: 1, kind: input, shape index: {}]
  %s2 = inlined_call_operand.vmem [shape: f32[1,128], index: 2, kind: input, shape index: {}]
  %s3 = inlined_call_operand.vmem [shape: bf16[8,128], index: 3, kind: output, shape index: {}]
  %s4 = sld [smem:[#allocation0]]
  $region22: #{resnet_forward.36} parent=0
    _
  %s6 = ssub.s32 1, %s4
  %s7 = scalar_select 0, %s6, %s4
  // Predicated region
  $region2: #{resnet_forward.36} parent=0 // pred_check
    _
  $region3: #{resnet_forward.36} parent=0 // pred_check_branch
    %9 = sbr.rel (0) target = $region5
  $region4: #{resnet_forward.36} parent=0 // pred_region
    _
  $region5: #{resnet_forward.36} parent=0 // pred_fallthru
    _
  // Predicated region
  $region6: #{resnet_forward.36} parent=0 // pred_check
    _
  $region7: #{resnet_forward.36} parent=0 // pred_check_branch
    %11 = sbr.rel (0) target = $region9
  $region8: #{resnet_forward.36} parent=0 // pred_region
    _
  $region9: #{resnet_forward.36} parent=0 // pred_fallthru
    _
  // Predicated region
  $region10: #{resnet_forward.36} parent=0 // pred_check
    _
  $region11: #{resnet_forward.36} parent=0 // pred_check_branch
    %13 = sbr.rel (0) target = $region13
  $region12: #{resnet_forward.36} parent=0 // pred_region
    _
  $region13: #{resnet_forward.36} parent=0 // pred_fallthru
    _
  %v15 = vld [vmem:[%s0] sm:$0xff]
  %v16 = vld [vmem:[%s0 + $0x8] sm:$0xff]
  %v17 = vld [vmem:[%s0 + $0x10] sm:$0xff]
  %v18 = vld [vmem:[%s0 + $0x18] sm:$0xff]
  %v19 = vld [vmem:[%s0 + $0x20] sm:$0xff]
  %v20 = vld [vmem:[%s1] sm:$0xf]
  %v21 = vld [vmem:[%s1 + $0x4] sm:$0xf]
  %v22 = vld [vmem:[%s1 + $0x8] sm:$0xf]
  %v23 = vld [vmem:[%s1 + $0xc] sm:$0xf]
  %v24 = vld [vmem:[%s1 + $0x10] sm:$0xf]
  %v25 = vld [vmem:[%s1 + $0x14] sm:$0xf]
  %v26 = vld [vmem:[%s1 + $0x18] sm:$0xf]
  %v27 = vld [vmem:[%s1 + $0x1c] sm:$0xf]
  %v28 = vld [vmem:[%s1 + $0x20] sm:$0xf]
  %v29 = vld [vmem:[%s1 + $0x24] sm:$0xf]
  %v30 = vld [vmem:[%s1 + $0x28] sm:$0xf]
  %v31 = vld [vmem:[%s1 + $0x2c] sm:$0xf]
  %v32 = vld [vmem:[%s1 + $0x30] sm:$0xf]
  %v33 = vld [vmem:[%s1 + $0x34] sm:$0xf]
  %v34 = vld [vmem:[%s1 + $0x38] sm:$0xf]
  %v35 = vld [vmem:[%s1 + $0x3c] sm:$0xf]
  %v36 = vld [vmem:[%s1 + $0x40] sm:$0xf]
  %v37 = vld [vmem:[%s1 + $0x44] sm:$0xf]
  %v38 = vld [vmem:[%s1 + $0x48] sm:$0xf]
  %v39 = vld [vmem:[%s1 + $0x4c] sm:$0xf]
  %v40 = vld [vmem:[%s1 + $0x50] sm:$0xf]
  %v41 = vld [vmem:[%s1 + $0x54] sm:$0xf]
  %v42 = vld [vmem:[%s1 + $0x58] sm:$0xf]
  %v43 = vld [vmem:[%s1 + $0x5c] sm:$0xf]
  %v44 = vld [vmem:[%s1 + $0x60] sm:$0xf]
  %v45 = vld [vmem:[%s1 + $0x64] sm:$0xf]
  %v46 = vld [vmem:[%s1 + $0x68] sm:$0xf]
  %v47 = vld [vmem:[%s1 + $0x6c] sm:$0xf]
  %v48 = vld [vmem:[%s1 + $0x70] sm:$0xf]
  %v49 = vld [vmem:[%s1 + $0x74] sm:$0xf]
  %v50 = vld [vmem:[%s1 + $0x78] sm:$0xf]
  %v51 = vld [vmem:[%s1 + $0x7c] sm:$0xf]
  %v52 = vld [vmem:[%s1 + $0x80] sm:$0xf]
  %v53 = vld [vmem:[%s1 + $0x84] sm:$0xf]
  %v54 = vld [vmem:[%s1 + $0x88] sm:$0xf]
  %v55 = vld [vmem:[%s1 + $0x8c] sm:$0xf]
  %v56 = vld [vmem:[%s1 + $0x90] sm:$0xf]
  %v57 = vld [vmem:[%s1 + $0x94] sm:$0xf]
  %v58 = vld [vmem:[%s1 + $0x98] sm:$0xf]
  %v59 = vld [vmem:[%s1 + $0x9c] sm:$0xf]
  %v60 = vld [vmem:[%s1 + $0xa0] sm:$0xf]
  %v61 = vld [vmem:[%s1 + $0xa4] sm:$0xf]
  %v62 = vld [vmem:[%s1 + $0xa8] sm:$0xf]
  %v63 = vld [vmem:[%s1 + $0xac] sm:$0xf]
  %v64 = vld [vmem:[%s1 + $0xb0] sm:$0xf]
  %v65 = vld [vmem:[%s1 + $0xb4] sm:$0xf]
  %v66 = vld [vmem:[%s1 + $0xb8] sm:$0xf]
  %v67 = vld [vmem:[%s1 + $0xbc] sm:$0xf]
  %v68 = vld [vmem:[%s1 + $0xc0] sm:$0xf]
  %v69 = vld [vmem:[%s1 + $0xc4] sm:$0xf]
  %v70 = vld [vmem:[%s1 + $0xc8] sm:$0xf]
  %v71 = vld [vmem:[%s1 + $0xcc] sm:$0xf]
  %v72 = vld [vmem:[%s1 + $0xd0] sm:$0xf]
  %v73 = vld [vmem:[%s1 + $0xd4] sm:$0xf]
  %v74 = vld [vmem:[%s1 + $0xd8] sm:$0xf]
  %v75 = vld [vmem:[%s1 + $0xdc] sm:$0xf]
  %v76 = vld [vmem:[%s1 + $0xe0] sm:$0xf]
  %v77 = vld [vmem:[%s1 + $0xe4] sm:$0xf]
  %v78 = vld [vmem:[%s1 + $0xe8] sm:$0xf]
  %v79 = vld [vmem:[%s1 + $0xec] sm:$0xf]
  %v80 = vld [vmem:[%s1 + $0xf0] sm:$0xf]
  %v81 = vld [vmem:[%s1 + $0xf4] sm:$0xf]
  %v82 = vld [vmem:[%s1 + $0xf8] sm:$0xf]
  %v83 = vld [vmem:[%s1 + $0xfc] sm:$0xf]
  %v84 = vld [vmem:[%s1 + $0x100] sm:$0xf]
  %v85 = vld [vmem:[%s1 + $0x104] sm:$0xf]
  %v86 = vld [vmem:[%s1 + $0x108] sm:$0xf]
  %v87 = vld [vmem:[%s1 + $0x10c] sm:$0xf]
  %v88 = vld [vmem:[%s1 + $0x110] sm:$0xf]
  %v89 = vld [vmem:[%s1 + $0x114] sm:$0xf]
  %v90 = vld [vmem:[%s1 + $0x118] sm:$0xf]
  %v91 = vld [vmem:[%s1 + $0x11c] sm:$0xf]
  %v92 = vld [vmem:[%s1 + $0x120] sm:$0xf]
  %v93 = vld [vmem:[%s1 + $0x124] sm:$0xf]
  %v94 = vld [vmem:[%s1 + $0x128] sm:$0xf]
  %v95 = vld [vmem:[%s1 + $0x12c] sm:$0xf]
  %v96 = vld [vmem:[%s1 + $0x130] sm:$0xf]
  %v97 = vld [vmem:[%s1 + $0x134] sm:$0xf]
  %v98 = vld [vmem:[%s1 + $0x138] sm:$0xf]
  %v99 = vld [vmem:[%s1 + $0x13c] sm:$0xf]
  %v100 = vld [vmem:[%s1 + $0x140] sm:$0xf]
  %v101 = vld [vmem:[%s1 + $0x144] sm:$0xf]
  %v102 = vld [vmem:[%s1 + $0x148] sm:$0xf]
  %v103 = vld [vmem:[%s1 + $0x14c] sm:$0xf]
  %v104 = vld [vmem:[%s1 + $0x150] sm:$0xf]
  %v105 = vld [vmem:[%s1 + $0x154] sm:$0xf]
  %v106 = vld [vmem:[%s1 + $0x158] sm:$0xf]
  %v107 = vld [vmem:[%s1 + $0x15c] sm:$0xf]
  %v108 = vld [vmem:[%s1 + $0x160] sm:$0xf]
  %v109 = vld [vmem:[%s1 + $0x164] sm:$0xf]
  %v110 = vld [vmem:[%s1 + $0x168] sm:$0xf]
  %v111 = vld [vmem:[%s1 + $0x16c] sm:$0xf]
  %v112 = vld [vmem:[%s1 + $0x170] sm:$0xf]
  %v113 = vld [vmem:[%s1 + $0x174] sm:$0xf]
  %v114 = vld [vmem:[%s1 + $0x178] sm:$0xf]
  %v115 = vld [vmem:[%s1 + $0x17c] sm:$0xf]
  %v116 = vld [vmem:[%s1 + $0x180] sm:$0xf]
  %v117 = vld [vmem:[%s1 + $0x184] sm:$0xf]
  %v118 = vld [vmem:[%s1 + $0x188] sm:$0xf]
  %v119 = vld [vmem:[%s1 + $0x18c] sm:$0xf]
  %v120 = vld [vmem:[%s1 + $0x190] sm:$0xf]
  %v121 = vld [vmem:[%s1 + $0x194] sm:$0xf]
  %v122 = vld [vmem:[%s1 + $0x198] sm:$0xf]
  %v123 = vld [vmem:[%s1 + $0x19c] sm:$0xf]
  %v124 = vld [vmem:[%s1 + $0x1a0] sm:$0xf]
  %v125 = vld [vmem:[%s1 + $0x1a4] sm:$0xf]
  %v126 = vld [vmem:[%s1 + $0x1a8] sm:$0xf]
  %v127 = vld [vmem:[%s1 + $0x1ac] sm:$0xf]
  %v128 = vld [vmem:[%s1 + $0x1b0] sm:$0xf]
  %v129 = vld [vmem:[%s1 + $0x1b4] sm:$0xf]
  %v130 = vld [vmem:[%s1 + $0x1b8] sm:$0xf]
  %v131 = vld [vmem:[%s1 + $0x1bc] sm:$0xf]
  %v132 = vld [vmem:[%s1 + $0x1c0] sm:$0xf]
  %v133 = vld [vmem:[%s1 + $0x1c4] sm:$0xf]
  %v134 = vld [vmem:[%s1 + $0x1c8] sm:$0xf]
  %v135 = vld [vmem:[%s1 + $0x1cc] sm:$0xf]
  %v136 = vld [vmem:[%s1 + $0x1d0] sm:$0xf]
  %v137 = vld [vmem:[%s1 + $0x1d4] sm:$0xf]
  %v138 = vld [vmem:[%s1 + $0x1d8] sm:$0xf]
  %v139 = vld [vmem:[%s1 + $0x1dc] sm:$0xf]
  %v140 = vld [vmem:[%s1 + $0x1e0] sm:$0xf]
  %v141 = vld [vmem:[%s1 + $0x1e4] sm:$0xf]
  %v142 = vld [vmem:[%s1 + $0x1e8] sm:$0xf]
  %v143 = vld [vmem:[%s1 + $0x1ec] sm:$0xf]
  %v144 = vld [vmem:[%s1 + $0x1f0] sm:$0xf]
  %v145 = vld [vmem:[%s1 + $0x1f4] sm:$0xf]
  %v146 = vld [vmem:[%s1 + $0x1f8] sm:$0xf]
  %v147 = vld [vmem:[%s1 + $0x1fc] sm:$0xf]
  %v148 = vld [vmem:[%s1 + $0x200] sm:$0xf]
  %v149 = vld [vmem:[%s1 + $0x204] sm:$0xf]
  %v150 = vld [vmem:[%s1 + $0x208] sm:$0xf]
  %v151 = vld [vmem:[%s1 + $0x20c] sm:$0xf]
  %v152 = vld [vmem:[%s1 + $0x210] sm:$0xf]
  %v153 = vld [vmem:[%s1 + $0x214] sm:$0xf]
  %v154 = vld [vmem:[%s1 + $0x218] sm:$0xf]
  %v155 = vld [vmem:[%s1 + $0x21c] sm:$0xf]
  %v156 = vld [vmem:[%s1 + $0x220] sm:$0xf]
  %v157 = vld [vmem:[%s1 + $0x224] sm:$0xf]
  %v158 = vld [vmem:[%s1 + $0x228] sm:$0xf]
  %v159 = vld [vmem:[%s1 + $0x22c] sm:$0xf]
  %v160 = vld [vmem:[%s1 + $0x230] sm:$0xf]
  %v161 = vld [vmem:[%s1 + $0x234] sm:$0xf]
  %v162 = vld [vmem:[%s1 + $0x238] sm:$0xf]
  %v163 = vld [vmem:[%s1 + $0x23c] sm:$0xf]
  %v164 = vld [vmem:[%s1 + $0x240] sm:$0xf]
  %v165 = vld [vmem:[%s1 + $0x244] sm:$0xf]
  %v166 = vld [vmem:[%s1 + $0x248] sm:$0xf]
  %v167 = vld [vmem:[%s1 + $0x24c] sm:$0xf]
  %v168 = vld [vmem:[%s1 + $0x250] sm:$0xf]
  %v169 = vld [vmem:[%s1 + $0x254] sm:$0xf]
  %v170 = vld [vmem:[%s1 + $0x258] sm:$0xf]
  %v171 = vld [vmem:[%s1 + $0x25c] sm:$0xf]
  %v172 = vld [vmem:[%s2] sm:$0x1]
  %v174 = vlaneseq
  %v175 = vshrl.u32 %v174, 7
  %v176 = vsub.s32 0, %v175
  %v177 = vrot.slane %v172, %v176
  %v184 = vunpack.c.l.b16 %v15
  %v185 = vunpack.c.h.b16 %v15
  %v186 = vunpack.c.l.b16 %v16
  %v187 = vunpack.c.h.b16 %v16
  %v188 = vunpack.c.l.b16 %v17
  %v189 = vunpack.c.h.b16 %v17
  %v190 = vunpack.c.l.b16 %v18
  %v191 = vunpack.c.h.b16 %v18
  %v192 = vunpack.c.l.b16 %v19
  %v193 = vunpack.c.h.b16 %v19
  %v194 = vpack.c.b16 %v184, %v184
  %v195 = vpack.c.b16 %v185, %v185
  %v196 = vpack.c.b16 %v186, %v186
  %v197 = vpack.c.b16 %v187, %v187
  %v198 = vpack.c.b16 %v188, %v188
  %v199 = vpack.c.b16 %v189, %v189
  %v200 = vpack.c.b16 %v190, %v190
  %v201 = vpack.c.b16 %v191, %v191
  %v202 = vpack.c.b16 %v192, %v192
  %v203 = vpack.c.b16 %v193, %v193
  %v365 = vunpack.c.l.b16 %v20
  %v366 = vunpack.c.l.b16 %v21
  %v367 = vunpack.c.l.b16 %v22
  %v368 = vunpack.c.l.b16 %v23
  %v369 = vunpack.c.l.b16 %v24
  %v370 = vunpack.c.l.b16 %v25
  %v371 = vunpack.c.l.b16 %v26
  %v372 = vunpack.c.l.b16 %v27
  %v373 = vunpack.c.l.b16 %v28
  %v374 = vunpack.c.l.b16 %v29
  %v375 = vunpack.c.l.b16 %v30
  %v376 = vunpack.c.l.b16 %v31
  %v377 = vunpack.c.l.b16 %v32
  %v378 = vunpack.c.l.b16 %v33
  %v379 = vunpack.c.l.b16 %v34
  %v380 = vunpack.c.l.b16 %v35
  %v381 = vunpack.c.l.b16 %v36
  %v382 = vunpack.c.l.b16 %v37
  %v383 = vunpack.c.l.b16 %v38
  %v384 = vunpack.c.l.b16 %v39
  %v385 = vunpack.c.l.b16 %v40
  %v386 = vunpack.c.l.b16 %v41
  %v387 = vunpack.c.l.b16 %v42
  %v388 = vunpack.c.l.b16 %v43
  %v389 = vunpack.c.l.b16 %v44
  %v390 = vunpack.c.l.b16 %v45
  %v391 = vunpack.c.l.b16 %v46
  %v392 = vunpack.c.l.b16 %v47
  %v393 = vunpack.c.l.b16 %v48
  %v394 = vunpack.c.l.b16 %v49
  %v395 = vunpack.c.l.b16 %v50
  %v396 = vunpack.c.l.b16 %v51
  %v397 = vunpack.c.l.b16 %v52
  %v398 = vunpack.c.l.b16 %v53
  %v399 = vunpack.c.l.b16 %v54
  %v400 = vunpack.c.l.b16 %v55
  %v401 = vunpack.c.l.b16 %v56
  %v402 = vunpack.c.l.b16 %v57
  %v403 = vunpack.c.l.b16 %v58
  %v404 = vunpack.c.l.b16 %v59
  %v405 = vunpack.c.l.b16 %v60
  %v406 = vunpack.c.l.b16 %v61
  %v407 = vunpack.c.l.b16 %v62
  %v408 = vunpack.c.l.b16 %v63
  %v409 = vunpack.c.l.b16 %v64
  %v410 = vunpack.c.l.b16 %v65
  %v411 = vunpack.c.l.b16 %v66
  %v412 = vunpack.c.l.b16 %v67
  %v413 = vunpack.c.l.b16 %v68
  %v414 = vunpack.c.l.b16 %v69
  %v415 = vunpack.c.l.b16 %v70
  %v416 = vunpack.c.l.b16 %v71
  %v417 = vunpack.c.l.b16 %v72
  %v418 = vunpack.c.l.b16 %v73
  %v419 = vunpack.c.l.b16 %v74
  %v420 = vunpack.c.l.b16 %v75
  %v421 = vunpack.c.l.b16 %v76
  %v422 = vunpack.c.l.b16 %v77
  %v423 = vunpack.c.l.b16 %v78
  %v424 = vunpack.c.l.b16 %v79
  %v425 = vunpack.c.l.b16 %v80
  %v426 = vunpack.c.l.b16 %v81
  %v427 = vunpack.c.l.b16 %v82
  %v428 = vunpack.c.l.b16 %v83
  %v429 = vunpack.c.l.b16 %v84
  %v430 = vunpack.c.l.b16 %v85
  %v431 = vunpack.c.l.b16 %v86
  %v432 = vunpack.c.l.b16 %v87
  %v433 = vunpack.c.l.b16 %v88
  %v434 = vunpack.c.l.b16 %v89
  %v435 = vunpack.c.l.b16 %v90
  %v436 = vunpack.c.l.b16 %v91
  %v437 = vunpack.c.l.b16 %v92
  %v438 = vunpack.c.l.b16 %v93
  %v439 = vunpack.c.l.b16 %v94
  %v440 = vunpack.c.l.b16 %v95
  %v441 = vunpack.c.l.b16 %v96
  %v442 = vunpack.c.l.b16 %v97
  %v443 = vunpack.c.l.b16 %v98
  %v444 = vunpack.c.l.b16 %v99
  %v445 = vunpack.c.l.b16 %v100
  %v446 = vunpack.c.l.b16 %v101
  %v447 = vunpack.c.l.b16 %v102
  %v448 = vunpack.c.l.b16 %v103
  %v449 = vunpack.c.l.b16 %v104
  %v450 = vunpack.c.l.b16 %v105
  %v451 = vunpack.c.l.b16 %v106
  %v452 = vunpack.c.l.b16 %v107
  %v453 = vunpack.c.l.b16 %v108
  %v454 = vunpack.c.l.b16 %v109
  %v455 = vunpack.c.l.b16 %v110
  %v456 = vunpack.c.l.b16 %v111
  %v457 = vunpack.c.l.b16 %v112
  %v458 = vunpack.c.l.b16 %v113
  %v459 = vunpack.c.l.b16 %v114
  %v460 = vunpack.c.l.b16 %v115
  %v461 = vunpack.c.l.b16 %v116
  %v462 = vunpack.c.l.b16 %v117
  %v463 = vunpack.c.l.b16 %v118
  %v464 = vunpack.c.l.b16 %v119
  %v465 = vunpack.c.l.b16 %v120
  %v466 = vunpack.c.l.b16 %v121
  %v467 = vunpack.c.l.b16 %v122
  %v468 = vunpack.c.l.b16 %v123
  %v469 = vunpack.c.l.b16 %v124
  %v470 = vunpack.c.l.b16 %v125
  %v471 = vunpack.c.l.b16 %v126
  %v472 = vunpack.c.l.b16 %v127
  %v473 = vunpack.c.l.b16 %v128
  %v474 = vunpack.c.l.b16 %v129
  %v475 = vunpack.c.l.b16 %v130
  %v476 = vunpack.c.l.b16 %v131
  %v477 = vunpack.c.l.b16 %v132
  %v478 = vunpack.c.l.b16 %v133
  %v479 = vunpack.c.l.b16 %v134
  %v480 = vunpack.c.l.b16 %v135
  %v481 = vunpack.c.l.b16 %v136
  %v482 = vunpack.c.l.b16 %v137
  %v483 = vunpack.c.l.b16 %v138
  %v484 = vunpack.c.l.b16 %v139
  %v485 = vunpack.c.l.b16 %v140
  %v486 = vunpack.c.l.b16 %v141
  %v487 = vunpack.c.l.b16 %v142
  %v488 = vunpack.c.l.b16 %v143
  %v489 = vunpack.c.l.b16 %v144
  %v490 = vunpack.c.l.b16 %v145
  %v491 = vunpack.c.l.b16 %v146
  %v492 = vunpack.c.l.b16 %v147
  %v493 = vunpack.c.l.b16 %v148
  %v494 = vunpack.c.l.b16 %v149
  %v495 = vunpack.c.l.b16 %v150
  %v496 = vunpack.c.l.b16 %v151
  %v497 = vunpack.c.l.b16 %v152
  %v498 = vunpack.c.l.b16 %v153
  %v499 = vunpack.c.l.b16 %v154
  %v500 = vunpack.c.l.b16 %v155
  %v501 = vunpack.c.l.b16 %v156
  %v502 = vunpack.c.l.b16 %v157
  %v503 = vunpack.c.l.b16 %v158
  %v504 = vunpack.c.l.b16 %v159
  %v505 = vunpack.c.l.b16 %v160
  %v506 = vunpack.c.l.b16 %v161
  %v507 = vunpack.c.l.b16 %v162
  %v508 = vunpack.c.l.b16 %v163
  %v509 = vunpack.c.l.b16 %v164
  %v510 = vunpack.c.l.b16 %v165
  %v511 = vunpack.c.l.b16 %v166
  %v512 = vunpack.c.l.b16 %v167
  %v513 = vunpack.c.l.b16 %v168
  %v514 = vunpack.c.l.b16 %v169
  %v515 = vunpack.c.l.b16 %v170
  %v516 = vunpack.c.l.b16 %v171
  %v517 = vpack.c.b16 %v366, %v365
  %v518 = vpack.c.b16 %v368, %v367
  %v519 = vpack.c.b16 %v370, %v369
  %v520 = vpack.c.b16 %v372, %v371
  %v521 = vpack.c.b16 %v374, %v373
  %v522 = vpack.c.b16 %v376, %v375
  %v523 = vpack.c.b16 %v378, %v377
  %v524 = vpack.c.b16 %v380, %v379
  %v525 = vpack.c.b16 %v382, %v381
  %v526 = vpack.c.b16 %v384, %v383
  %v527 = vpack.c.b16 %v386, %v385
  %v528 = vpack.c.b16 %v388, %v387
  %v529 = vpack.c.b16 %v390, %v389
  %v530 = vpack.c.b16 %v392, %v391
  %v531 = vpack.c.b16 %v394, %v393
  %v532 = vpack.c.b16 %v396, %v395
  %v533 = vpack.c.b16 %v398, %v397
  %v534 = vpack.c.b16 %v400, %v399
  %v535 = vpack.c.b16 %v402, %v401
  %v536 = vpack.c.b16 %v404, %v403
  %v537 = vpack.c.b16 %v406, %v405
  %v538 = vpack.c.b16 %v408, %v407
  %v539 = vpack.c.b16 %v410, %v409
  %v540 = vpack.c.b16 %v412, %v411
  %v541 = vpack.c.b16 %v414, %v413
  %v542 = vpack.c.b16 %v416, %v415
  %v543 = vpack.c.b16 %v418, %v417
  %v544 = vpack.c.b16 %v420, %v419
  %v545 = vpack.c.b16 %v422, %v421
  %v546 = vpack.c.b16 %v424, %v423
  %v547 = vpack.c.b16 %v426, %v425
  %v548 = vpack.c.b16 %v428, %v427
  %v549 = vpack.c.b16 %v430, %v429
  %v550 = vpack.c.b16 %v432, %v431
  %v551 = vpack.c.b16 %v434, %v433
  %v552 = vpack.c.b16 %v436, %v435
  %v553 = vpack.c.b16 %v438, %v437
  %v554 = vpack.c.b16 %v440, %v439
  %v555 = vpack.c.b16 %v442, %v441
  %v556 = vpack.c.b16 %v444, %v443
  %v557 = vpack.c.b16 %v446, %v445
  %v558 = vpack.c.b16 %v448, %v447
  %v559 = vpack.c.b16 %v450, %v449
  %v560 = vpack.c.b16 %v452, %v451
  %v561 = vpack.c.b16 %v454, %v453
  %v562 = vpack.c.b16 %v456, %v455
  %v563 = vpack.c.b16 %v458, %v457
  %v564 = vpack.c.b16 %v460, %v459
  %v565 = vpack.c.b16 %v462, %v461
  %v566 = vpack.c.b16 %v464, %v463
  %v567 = vpack.c.b16 %v466, %v465
  %v568 = vpack.c.b16 %v468, %v467
  %v569 = vpack.c.b16 %v470, %v469
  %v570 = vpack.c.b16 %v472, %v471
  %v571 = vpack.c.b16 %v474, %v473
  %v572 = vpack.c.b16 %v476, %v475
  %v573 = vpack.c.b16 %v478, %v477
  %v574 = vpack.c.b16 %v480, %v479
  %v575 = vpack.c.b16 %v482, %v481
  %v576 = vpack.c.b16 %v484, %v483
  %v577 = vpack.c.b16 %v486, %v485
  %v578 = vpack.c.b16 %v488, %v487
  %v579 = vpack.c.b16 %v490, %v489
  %v580 = vpack.c.b16 %v492, %v491
  %v581 = vpack.c.b16 %v494, %v493
  %v582 = vpack.c.b16 %v496, %v495
  %v583 = vpack.c.b16 %v498, %v497
  %v584 = vpack.c.b16 %v500, %v499
  %v585 = vpack.c.b16 %v502, %v501
  %v586 = vpack.c.b16 %v504, %v503
  %v587 = vpack.c.b16 %v506, %v505
  %v588 = vpack.c.b16 %v508, %v507
  %v589 = vpack.c.b16 %v510, %v509
  %v590 = vpack.c.b16 %v512, %v511
  %v591 = vpack.c.b16 %v514, %v513
  %v592 = vpack.c.b16 %v516, %v515
  %vm669 = vcmask 523264
  %v671 = vsel %vm669, %v203, 0
  %673 = vmatprep.subr.bf16.mxu0 0
  %674 = vmatpush1.bf16.msra.mxu0 %v517
  %675 = vmatprep.subr.bf16.mxu0 0
  %676 = vmatpush1.bf16.msra.mxu0 %v518
  %677 = vmatprep.subr.bf16.mxu0 0
  %678 = vmatpush1.bf16.msra.mxu0 %v519
  %679 = vmatprep.subr.bf16.mxu0 0
  %680 = vmatpush1.bf16.msra.mxu0 %v520
  %681 = vmatprep.subr.bf16.mxu0 0
  %682 = vmatpush1.bf16.msra.mxu0 %v521
  %683 = vmatprep.subr.bf16.mxu0 0
  %684 = vmatpush1.bf16.msra.mxu0 %v522
  %685 = vmatprep.subr.bf16.mxu0 0
  %686 = vmatpush1.bf16.msra.mxu0 %v523
  %687 = vmatprep.subr.bf16.mxu0 0
  %688 = vmatpush1.bf16.msra.mxu0 %v524
  %689 = vmatprep.subr.bf16.mxu0 0
  %690 = vmatpush1.bf16.msra.mxu0 %v525
  %691 = vmatprep.subr.bf16.mxu0 0
  %692 = vmatpush1.bf16.msra.mxu0 %v526
  %693 = vmatprep.subr.bf16.mxu0 0
  %694 = vmatpush1.bf16.msra.mxu0 %v527
  %695 = vmatprep.subr.bf16.mxu0 0
  %696 = vmatpush1.bf16.msra.mxu0 %v528
  %697 = vmatprep.subr.bf16.mxu0 0
  %698 = vmatpush1.bf16.msra.mxu0 %v529
  %699 = vmatprep.subr.bf16.mxu0 0
  %700 = vmatpush1.bf16.msra.mxu0 %v530
  %701 = vmatprep.subr.bf16.mxu0 0
  %702 = vmatpush1.bf16.msra.mxu0 %v531
  %703 = vmatprep.subr.bf16.mxu0 0
  %704 = vmatpush1.bf16.msra.mxu0 %v532
  %705 = vmatprep.mubr.bf16.mxu0 %v195
  %706 = vmatmul.mubr.bf16.gmra.mrb[0].mxu0 %v194
  %v707 = vpop.f32.mrb[0].mxu0
  %v708 = vadd.f32 %v177, %v707
  %v709 = vpop.f32.mrb[0].mxu0
  %v710 = vpop.f32.mrb[0].mxu0
  %v711 = vpop.f32.mrb[0].mxu0
  %712 = vdwg.mxu0
  %713 = vmatprep.subr.bf16.mxu0 0
  %714 = vmatpush1.bf16.msra.mxu0 %v533
  %715 = vmatprep.subr.bf16.mxu0 0
  %716 = vmatpush1.bf16.msra.mxu0 %v534
  %717 = vmatprep.subr.bf16.mxu0 0
  %718 = vmatpush1.bf16.msra.mxu0 %v535
  %719 = vmatprep.subr.bf16.mxu0 0
  %720 = vmatpush1.bf16.msra.mxu0 %v536
  %721 = vmatprep.subr.bf16.mxu0 0
  %722 = vmatpush1.bf16.msra.mxu0 %v537
  %723 = vmatprep.subr.bf16.mxu0 0
  %724 = vmatpush1.bf16.msra.mxu0 %v538
  %725 = vmatprep.subr.bf16.mxu0 0
  %726 = vmatpush1.bf16.msra.mxu0 %v539
  %727 = vmatprep.subr.bf16.mxu0 0
  %728 = vmatpush1.bf16.msra.mxu0 %v540
  %729 = vmatprep.subr.bf16.mxu0 0
  %730 = vmatpush1.bf16.msra.mxu0 %v541
  %731 = vmatprep.subr.bf16.mxu0 0
  %732 = vmatpush1.bf16.msra.mxu0 %v542
  %733 = vmatprep.subr.bf16.mxu0 0
  %734 = vmatpush1.bf16.msra.mxu0 %v543
  %735 = vmatprep.subr.bf16.mxu0 0
  %736 = vmatpush1.bf16.msra.mxu0 %v544
  %737 = vmatprep.subr.bf16.mxu0 0
  %738 = vmatpush1.bf16.msra.mxu0 %v545
  %739 = vmatprep.subr.bf16.mxu0 0
  %740 = vmatpush1.bf16.msra.mxu0 %v546
  %741 = vmatprep.subr.bf16.mxu0 0
  %742 = vmatpush1.bf16.msra.mxu0 %v547
  %743 = vmatprep.subr.bf16.mxu0 0
  %744 = vmatpush1.bf16.msra.mxu0 %v548
  %745 = vmatprep.mubr.bf16.mxu0 %v197
  %746 = vmatmul.mubr.bf16.gmra.mrb[0].mxu0 %v196
  %v747 = vpop.f32.mrb[0].mxu0
  %v748 = vadd.f32 %v708, %v747
  %v749 = vpop.f32.mrb[0].mxu0
  %v750 = vpop.f32.mrb[0].mxu0
  %v751 = vpop.f32.mrb[0].mxu0
  %752 = vdwg.mxu0
  %753 = vmatprep.subr.bf16.mxu0 0
  %754 = vmatpush1.bf16.msra.mxu0 %v549
  %755 = vmatprep.subr.bf16.mxu0 0
  %756 = vmatpush1.bf16.msra.mxu0 %v550
  %757 = vmatprep.subr.bf16.mxu0 0
  %758 = vmatpush1.bf16.msra.mxu0 %v551
  %759 = vmatprep.subr.bf16.mxu0 0
  %760 = vmatpush1.bf16.msra.mxu0 %v552
  %761 = vmatprep.subr.bf16.mxu0 0
  %762 = vmatpush1.bf16.msra.mxu0 %v553
  %763 = vmatprep.subr.bf16.mxu0 0
  %764 = vmatpush1.bf16.msra.mxu0 %v554
  %765 = vmatprep.subr.bf16.mxu0 0
  %766 = vmatpush1.bf16.msra.mxu0 %v555
  %767 = vmatprep.subr.bf16.mxu0 0
  %768 = vmatpush1.bf16.msra.mxu0 %v556
  %769 = vmatprep.subr.bf16.mxu0 0
  %770 = vmatpush1.bf16.msra.mxu0 %v557
  %771 = vmatprep.subr.bf16.mxu0 0
  %772 = vmatpush1.bf16.msra.mxu0 %v558
  %773 = vmatprep.subr.bf16.mxu0 0
  %774 = vmatpush1.bf16.msra.mxu0 %v559
  %775 = vmatprep.subr.bf16.mxu0 0
  %776 = vmatpush1.bf16.msra.mxu0 %v560
  %777 = vmatprep.subr.bf16.mxu0 0
  %778 = vmatpush1.bf16.msra.mxu0 %v561
  %779 = vmatprep.subr.bf16.mxu0 0
  %780 = vmatpush1.bf16.msra.mxu0 %v562
  %781 = vmatprep.subr.bf16.mxu0 0
  %782 = vmatpush1.bf16.msra.mxu0 %v563
  %783 = vmatprep.subr.bf16.mxu0 0
  %784 = vmatpush1.bf16.msra.mxu0 %v564
  %785 = vmatprep.mubr.bf16.mxu0 %v199
  %786 = vmatmul.mubr.bf16.gmra.mrb[0].mxu0 %v198
  %v787 = vpop.f32.mrb[0].mxu0
  %v788 = vadd.f32 %v748, %v787
  %v789 = vpop.f32.mrb[0].mxu0
  %v790 = vpop.f32.mrb[0].mxu0
  %v791 = vpop.f32.mrb[0].mxu0
  %792 = vdwg.mxu0
  %793 = vmatprep.subr.bf16.mxu0 0
  %794 = vmatpush1.bf16.msra.mxu0 %v565
  %795 = vmatprep.subr.bf16.mxu0 0
  %796 = vmatpush1.bf16.msra.mxu0 %v566
  %797 = vmatprep.subr.bf16.mxu0 0
  %798 = vmatpush1.bf16.msra.mxu0 %v567
  %799 = vmatprep.subr.bf16.mxu0 0
  %800 = vmatpush1.bf16.msra.mxu0 %v568
  %801 = vmatprep.subr.bf16.mxu0 0
  %802 = vmatpush1.bf16.msra.mxu0 %v569
  %803 = vmatprep.subr.bf16.mxu0 0
  %804 = vmatpush1.bf16.msra.mxu0 %v570
  %805 = vmatprep.subr.bf16.mxu0 0
  %806 = vmatpush1.bf16.msra.mxu0 %v571
  %807 = vmatprep.subr.bf16.mxu0 0
  %808 = vmatpush1.bf16.msra.mxu0 %v572
  %809 = vmatprep.subr.bf16.mxu0 0
  %810 = vmatpush1.bf16.msra.mxu0 %v573
  %811 = vmatprep.subr.bf16.mxu0 0
  %812 = vmatpush1.bf16.msra.mxu0 %v574
  %813 = vmatprep.subr.bf16.mxu0 0
  %814 = vmatpush1.bf16.msra.mxu0 %v575
  %815 = vmatprep.subr.bf16.mxu0 0
  %816 = vmatpush1.bf16.msra.mxu0 %v576
  %817 = vmatprep.subr.bf16.mxu0 0
  %818 = vmatpush1.bf16.msra.mxu0 %v577
  %819 = vmatprep.subr.bf16.mxu0 0
  %820 = vmatpush1.bf16.msra.mxu0 %v578
  %821 = vmatprep.subr.bf16.mxu0 0
  %822 = vmatpush1.bf16.msra.mxu0 %v579
  %823 = vmatprep.subr.bf16.mxu0 0
  %824 = vmatpush1.bf16.msra.mxu0 %v580
  %825 = vmatprep.mubr.bf16.mxu0 %v201
  %826 = vmatmul.mubr.bf16.gmra.mrb[0].mxu0 %v200
  %v827 = vpop.f32.mrb[0].mxu0
  %v828 = vadd.f32 %v788, %v827
  %v829 = vpop.f32.mrb[0].mxu0
  %v830 = vpop.f32.mrb[0].mxu0
  %v831 = vpop.f32.mrb[0].mxu0
  %832 = vdwg.mxu0
  %833 = vmatprep.subr.bf16.mxu0 0
  %834 = vmatpush1.bf16.msra.mxu0 %v581
  %835 = vmatprep.subr.bf16.mxu0 0
  %836 = vmatpush1.bf16.msra.mxu0 %v582
  %837 = vmatprep.subr.bf16.mxu0 0
  %838 = vmatpush1.bf16.msra.mxu0 %v583
  %839 = vmatprep.subr.bf16.mxu0 0
  %840 = vmatpush1.bf16.msra.mxu0 %v584
  %841 = vmatprep.subr.bf16.mxu0 0
  %842 = vmatpush1.bf16.msra.mxu0 %v585
  %843 = vmatprep.subr.bf16.mxu0 0
  %844 = vmatpush1.bf16.msra.mxu0 %v586
  %845 = vmatprep.subr.bf16.mxu0 0
  %846 = vmatpush1.bf16.msra.mxu0 %v587
  %847 = vmatprep.subr.bf16.mxu0 0
  %848 = vmatpush1.bf16.msra.mxu0 %v588
  %849 = vmatprep.subr.bf16.mxu0 0
  %850 = vmatpush1.bf16.msra.mxu0 %v589
  %851 = vmatprep.subr.bf16.mxu0 0
  %852 = vmatpush1.bf16.msra.mxu0 %v590
  %853 = vmatprep.subr.bf16.mxu0 0
  %854 = vmatpush1.bf16.msra.mxu0 %v591
  %855 = vmatprep.subr.bf16.mxu0 0
  %856 = vmatpush1.bf16.msra.mxu0 %v592
  %857 = vmatprep.subr.bf16.mxu0 0
  %858 = vmatpush1.bf16.msra.mxu0 0
  %859 = vmatprep.subr.bf16.mxu0 0
  %860 = vmatpush1.bf16.msra.mxu0 0
  %861 = vmatprep.subr.bf16.mxu0 0
  %862 = vmatpush1.bf16.msra.mxu0 0
  %863 = vmatprep.subr.bf16.mxu0 0
  %864 = vmatpush1.bf16.msra.mxu0 0
  %865 = vmatprep.mubr.bf16.mxu0 %v671
  %866 = vmatmul.mubr.bf16.gmra.mrb[0].mxu0 %v202
  %v867 = vpop.f32.mrb[0].mxu0
  %v868 = vadd.f32 %v828, %v867
  %v869 = vpop.f32.mrb[0].mxu0
  %v870 = vpop.f32.mrb[0].mxu0
  %v871 = vpop.f32.mrb[0].mxu0
  %872 = vdwg.mxu0
  %v873 = vmax.f32 %v868, 0.0
  %v874 = vpack.c.bf16 %v873, %v873
  %875 = vst [vmem:[%s3] sm:$0xf] %v874
  // Predicated region
  $region14: #{resnet_forward.36} parent=0 // pred_check
    _
  $region15: #{resnet_forward.36} parent=0 // pred_check_branch
    %877 = sbr.rel (0) target = $region17
  $region16: #{resnet_forward.36} parent=0 // pred_region
    _
  $region17: #{resnet_forward.36} parent=0 // pred_fallthru
    _
  // Predicated region
  $region18: #{resnet_forward.36} parent=0 // pred_check
    _
  $region19: #{resnet_forward.36} parent=0 // pred_check_branch
    %879 = sbr.rel (0) target = $region21
  $region20: #{resnet_forward.36} parent=0 // pred_region
    _
  $region21: #{resnet_forward.36} parent=0 // pred_fallthru
    _

// kernel: resnet_forward.38
$region0: #{resnet_forward.38}
  #allocation0 [shape = 'u32[]', space=smem, size = 0x4, offset = 0x4, fixed_abs, tag = 'smem constant byte address 0x4 - core index']
  #allocation1 [shape = 'u32[144,128]{1,0:T(1,128)}', space=vmem, size = 0x12000, scoped, tag = 'internal scratch']
  %s0 = inlined_call_operand.vmem [shape: bf16[8,1152], index: 0, kind: input, shape index: {}]
  %s1 = inlined_call_operand.vmem [shape: bf16[1152,128], index: 1, kind: input, shape index: {}]
  %s2 = inlined_call_operand.vmem [shape: f32[1,128], index: 2, kind: input, shape index: {}]
  %s3 = inlined_call_operand.vmem [shape: bf16[8,128], index: 3, kind: input, shape index: {}]
  %s4 = inlined_call_operand.vmem [shape: bf16[8,128], index: 4, kind: output, shape index: {}]
  %s5 = sld [smem:[#allocation0]]
  $region26: #{resnet_forward.38} parent=0
    _
  %s7 = ssub.s32 1, %s5
  %s8 = scalar_select 0, %s7, %s5
  // Predicated region
  $region2: #{resnet_forward.38} parent=0 // pred_check
    _
  $region3: #{resnet_forward.38} parent=0 // pred_check_branch
    %10 = sbr.rel (0) target = $region5
  $region4: #{resnet_forward.38} parent=0 // pred_region
    _
  $region5: #{resnet_forward.38} parent=0 // pred_fallthru
    _
  // Predicated region
  $region6: #{resnet_forward.38} parent=0 // pred_check
    _
  $region7: #{resnet_forward.38} parent=0 // pred_check_branch
    %12 = sbr.rel (0) target = $region9
  $region8: #{resnet_forward.38} parent=0 // pred_region
    _
  $region9: #{resnet_forward.38} parent=0 // pred_fallthru
    _
  // Predicated region
  $region10: #{resnet_forward.38} parent=0 // pred_check
    _
  $region11: #{resnet_forward.38} parent=0 // pred_check_branch
    %14 = sbr.rel (0) target = $region13
  $region12: #{resnet_forward.38} parent=0 // pred_region
    _
  $region13: #{resnet_forward.38} parent=0 // pred_fallthru
    _
  // Predicated region
  $region14: #{resnet_forward.38} parent=0 // pred_check
    _
  $region15: #{resnet_forward.38} parent=0 // pred_check_branch
    %16 = sbr.rel (0) target = $region17
  $region16: #{resnet_forward.38} parent=0 // pred_region
    _
  $region17: #{resnet_forward.38} parent=0 // pred_fallthru
    _
  %v18 = vld [vmem:[%s0] sm:$0xff]
  %v19 = vld [vmem:[%s0 + $0x8] sm:$0xff]
  %v20 = vld [vmem:[%s0 + $0x10] sm:$0xff]
  %v21 = vld [vmem:[%s0 + $0x18] sm:$0xff]
  %v22 = vld [vmem:[%s0 + $0x20] sm:$0xf]
  %v23 = vld [vmem:[%s1] sm:$0xf]
  %v24 = vld [vmem:[%s1 + $0x4] sm:$0xf]
  %v25 = vld [vmem:[%s1 + $0x8] sm:$0xf]
  %v26 = vld [vmem:[%s1 + $0xc] sm:$0xf]
  %v27 = vld [vmem:[%s1 + $0x10] sm:$0xf]
  %v28 = vld [vmem:[%s1 + $0x14] sm:$0xf]
  %v29 = vld [vmem:[%s1 + $0x18] sm:$0xf]
  %v30 = vld [vmem:[%s1 + $0x1c] sm:$0xf]
  %v31 = vld [vmem:[%s1 + $0x20] sm:$0xf]
  %v32 = vld [vmem:[%s1 + $0x24] sm:$0xf]
  %v33 = vld [vmem:[%s1 + $0x28] sm:$0xf]
  %v34 = vld [vmem:[%s1 + $0x2c] sm:$0xf]
  %v35 = vld [vmem:[%s1 + $0x30] sm:$0xf]
  %v36 = vld [vmem:[%s1 + $0x34] sm:$0xf]
  %v37 = vld [vmem:[%s1 + $0x38] sm:$0xf]
  %v38 = vld [vmem:[%s1 + $0x3c] sm:$0xf]
  %v39 = vld [vmem:[%s1 + $0x40] sm:$0xf]
  %v40 = vld [vmem:[%s1 + $0x44] sm:$0xf]
  %v41 = vld [vmem:[%s1 + $0x48] sm:$0xf]
  %v42 = vld [vmem:[%s1 + $0x4c] sm:$0xf]
  %v43 = vld [vmem:[%s1 + $0x50] sm:$0xf]
  %v44 = vld [vmem:[%s1 + $0x54] sm:$0xf]
  %v45 = vld [vmem:[%s1 + $0x58] sm:$0xf]
  %v46 = vld [vmem:[%s1 + $0x5c] sm:$0xf]
  %v47 = vld [vmem:[%s1 + $0x60] sm:$0xf]
  %v48 = vld [vmem:[%s1 + $0x64] sm:$0xf]
  %v49 = vld [vmem:[%s1 + $0x68] sm:$0xf]
  %v50 = vld [vmem:[%s1 + $0x6c] sm:$0xf]
  %v51 = vld [vmem:[%s1 + $0x70] sm:$0xf]
  %v52 = vld [vmem:[%s1 + $0x74] sm:$0xf]
  %v53 = vld [vmem:[%s1 + $0x78] sm:$0xf]
  %v54 = vld [vmem:[%s1 + $0x7c] sm:$0xf]
  %v55 = vld [vmem:[%s1 + $0x80] sm:$0xf]
  %v56 = vld [vmem:[%s1 + $0x84] sm:$0xf]
  %v57 = vld [vmem:[%s1 + $0x88] sm:$0xf]
  %v58 = vld [vmem:[%s1 + $0x8c] sm:$0xf]
  %v59 = vld [vmem:[%s1 + $0x90] sm:$0xf]
  %v60 = vld [vmem:[%s1 + $0x94] sm:$0xf]
  %v61 = vld [vmem:[%s1 + $0x98] sm:$0xf]
  %v62 = vld [vmem:[%s1 + $0x9c] sm:$0xf]
  %v63 = vld [vmem:[%s1 + $0xa0] sm:$0xf]
  %v64 = vld [vmem:[%s1 + $0xa4] sm:$0xf]
  %v65 = vld [vmem:[%s1 + $0xa8] sm:$0xf]
  %v66 = vld [vmem:[%s1 + $0xac] sm:$0xf]
  %v67 = vld [vmem:[%s1 + $0xb0] sm:$0xf]
  %v68 = vld [vmem:[%s1 + $0xb4] sm:$0xf]
  %v69 = vld [vmem:[%s1 + $0xb8] sm:$0xf]
  %v70 = vld [vmem:[%s1 + $0xbc] sm:$0xf]
  %v71 = vld [vmem:[%s1 + $0xc0] sm:$0xf]
  %v72 = vld [vmem:[%s1 + $0xc4] sm:$0xf]
  %v73 = vld [vmem:[%s1 + $0xc8] sm:$0xf]
  %v74 = vld [vmem:[%s1 + $0xcc] sm:$0xf]
  %v75 = vld [vmem:[%s1 + $0xd0] sm:$0xf]
  %v76 = vld [vmem:[%s1 + $0xd4] sm:$0xf]
  %v77 = vld [vmem:[%s1 + $0xd8] sm:$0xf]
  %v78 = vld [vmem:[%s1 + $0xdc] sm:$0xf]
  %v79 = vld [vmem:[%s1 + $0xe0] sm:$0xf]
  %v80 = vld [vmem:[%s1 + $0xe4] sm:$0xf]
  %v81 = vld [vmem:[%s1 + $0xe8] sm:$0xf]
  %v82 = vld [vmem:[%s1 + $0xec] sm:$0xf]
  %v83 = vld [vmem:[%s1 + $0xf0] sm:$0xf]
  %v84 = vld [vmem:[%s1 + $0xf4] sm:$0xf]
  %v85 = vld [vmem:[%s1 + $0xf8] sm:$0xf]
  %v86 = vld [vmem:[%s1 + $0xfc] sm:$0xf]
  %v87 = vld [vmem:[%s1 + $0x100] sm:$0xf]
  %v88 = vld [vmem:[%s1 + $0x104] sm:$0xf]
  %v89 = vld [vmem:[%s1 + $0x108] sm:$0xf]
  %v90 = vld [vmem:[%s1 + $0x10c] sm:$0xf]
  %v91 = vld [vmem:[%s1 + $0x110] sm:$0xf]
  %v92 = vld [vmem:[%s1 + $0x114] sm:$0xf]
  %v93 = vld [vmem:[%s1 + $0x118] sm:$0xf]
  %v94 = vld [vmem:[%s1 + $0x11c] sm:$0xf]
  %v95 = vld [vmem:[%s1 + $0x120] sm:$0xf]
  %v96 = vld [vmem:[%s1 + $0x124] sm:$0xf]
  %v97 = vld [vmem:[%s1 + $0x128] sm:$0xf]
  %v98 = vld [vmem:[%s1 + $0x12c] sm:$0xf]
  %v99 = vld [vmem:[%s1 + $0x130] sm:$0xf]
  %v100 = vld [vmem:[%s1 + $0x134] sm:$0xf]
  %v101 = vld [vmem:[%s1 + $0x138] sm:$0xf]
  %v102 = vld [vmem:[%s1 + $0x13c] sm:$0xf]
  %v103 = vld [vmem:[%s1 + $0x140] sm:$0xf]
  %v104 = vld [vmem:[%s1 + $0x144] sm:$0xf]
  %v105 = vld [vmem:[%s1 + $0x148] sm:$0xf]
  %v106 = vld [vmem:[%s1 + $0x14c] sm:$0xf]
  %v107 = vld [vmem:[%s1 + $0x150] sm:$0xf]
  %v108 = vld [vmem:[%s1 + $0x154] sm:$0xf]
  %v109 = vld [vmem:[%s1 + $0x158] sm:$0xf]
  %v110 = vld [vmem:[%s1 + $0x15c] sm:$0xf]
  %v111 = vld [vmem:[%s1 + $0x160] sm:$0xf]
  %v112 = vld [vmem:[%s1 + $0x164] sm:$0xf]
  %v113 = vld [vmem:[%s1 + $0x168] sm:$0xf]
  %v114 = vld [vmem:[%s1 + $0x16c] sm:$0xf]
  %v115 = vld [vmem:[%s1 + $0x170] sm:$0xf]
  %v116 = vld [vmem:[%s1 + $0x174] sm:$0xf]
  %v117 = vld [vmem:[%s1 + $0x178] sm:$0xf]
  %v118 = vld [vmem:[%s1 + $0x17c] sm:$0xf]
  %v119 = vld [vmem:[%s1 + $0x180] sm:$0xf]
  %v120 = vld [vmem:[%s1 + $0x184] sm:$0xf]
  %v121 = vld [vmem:[%s1 + $0x188] sm:$0xf]
  %v122 = vld [vmem:[%s1 + $0x18c] sm:$0xf]
  %v123 = vld [vmem:[%s1 + $0x190] sm:$0xf]
  %v124 = vld [vmem:[%s1 + $0x194] sm:$0xf]
  %v125 = vld [vmem:[%s1 + $0x198] sm:$0xf]
  %v126 = vld [vmem:[%s1 + $0x19c] sm:$0xf]
  %v127 = vld [vmem:[%s1 + $0x1a0] sm:$0xf]
  %v128 = vld [vmem:[%s1 + $0x1a4] sm:$0xf]
  %v129 = vld [vmem:[%s1 + $0x1a8] sm:$0xf]
  %v130 = vld [vmem:[%s1 + $0x1ac] sm:$0xf]
  %v131 = vld [vmem:[%s1 + $0x1b0] sm:$0xf]
  %v132 = vld [vmem:[%s1 + $0x1b4] sm:$0xf]
  %v133 = vld [vmem:[%s1 + $0x1b8] sm:$0xf]
  %v134 = vld [vmem:[%s1 + $0x1bc] sm:$0xf]
  %v135 = vld [vmem:[%s1 + $0x1c0] sm:$0xf]
  %v136 = vld [vmem:[%s1 + $0x1c4] sm:$0xf]
  %v137 = vld [vmem:[%s1 + $0x1c8] sm:$0xf]
  %v138 = vld [vmem:[%s1 + $0x1cc] sm:$0xf]
  %v139 = vld [vmem:[%s1 + $0x1d0] sm:$0xf]
  %v140 = vld [vmem:[%s1 + $0x1d4] sm:$0xf]
  %v141 = vld [vmem:[%s1 + $0x1d8] sm:$0xf]
  %v142 = vld [vmem:[%s1 + $0x1dc] sm:$0xf]
  %v143 = vld [vmem:[%s1 + $0x1e0] sm:$0xf]
  %v144 = vld [vmem:[%s1 + $0x1e4] sm:$0xf]
  %v145 = vld [vmem:[%s1 + $0x1e8] sm:$0xf]
  %v146 = vld [vmem:[%s1 + $0x1ec] sm:$0xf]
  %v147 = vld [vmem:[%s1 + $0x1f0] sm:$0xf]
  %v148 = vld [vmem:[%s1 + $0x1f4] sm:$0xf]
  %v149 = vld [vmem:[%s1 + $0x1f8] sm:$0xf]
  %v150 = vld [vmem:[%s1 + $0x1fc] sm:$0xf]
  %v151 = vld [vmem:[%s1 + $0x200] sm:$0xf]
  %v152 = vld [vmem:[%s1 + $0x204] sm:$0xf]
  %v153 = vld [vmem:[%s1 + $0x208] sm:$0xf]
  %v154 = vld [vmem:[%s1 + $0x20c] sm:$0xf]
  %v155 = vld [vmem:[%s1 + $0x210] sm:$0xf]
  %v156 = vld [vmem:[%s1 + $0x214] sm:$0xf]
  %v157 = vld [vmem:[%s1 + $0x218] sm:$0xf]
  %v158 = vld [vmem:[%s1 + $0x21c] sm:$0xf]
  %v159 = vld [vmem:[%s1 + $0x220] sm:$0xf]
  %v160 = vld [vmem:[%s1 + $0x224] sm:$0xf]
  %v161 = vld [vmem:[%s1 + $0x228] sm:$0xf]
  %v162 = vld [vmem:[%s1 + $0x22c] sm:$0xf]
  %v163 = vld [vmem:[%s1 + $0x230] sm:$0xf]
  %v164 = vld [vmem:[%s1 + $0x234] sm:$0xf]
  %v165 = vld [vmem:[%s1 + $0x238] sm:$0xf]
  %v166 = vld [vmem:[%s1 + $0x23c] sm:$0xf]
  %v167 = vld [vmem:[%s2] sm:$0x1]
  %v169 = vlaneseq
  %v170 = vshrl.u32 %v169, 7
  %v171 = vsub.s32 0, %v170
  %v172 = vrot.slane %v167, %v171
  %v179 = vunpack.c.l.b16 %v18
  %v180 = vunpack.c.h.b16 %v18
  %v181 = vunpack.c.l.b16 %v19
  %v182 = vunpack.c.h.b16 %v19
  %v183 = vunpack.c.l.b16 %v20
  %v184 = vunpack.c.h.b16 %v20
  %v185 = vunpack.c.l.b16 %v21
  %v186 = vunpack.c.h.b16 %v21
  %v187 = vunpack.c.l.b16 %v22
  %v188 = vpack.c.b16 %v179, %v179
  %v189 = vpack.c.b16 %v180, %v180
  %v190 = vpack.c.b16 %v181, %v181
  %v191 = vpack.c.b16 %v182, %v182
  %v192 = vpack.c.b16 %v183, %v183
  %v193 = vpack.c.b16 %v184, %v184
  %v194 = vpack.c.b16 %v185, %v185
  %v195 = vpack.c.b16 %v186, %v186
  %v196 = vpack.c.b16 %v187, %v187
  %v350 = vunpack.c.l.b16 %v23
  %v351 = vunpack.c.l.b16 %v24
  %v352 = vunpack.c.l.b16 %v25
  %v353 = vunpack.c.l.b16 %v26
  %v354 = vunpack.c.l.b16 %v27
  %v355 = vunpack.c.l.b16 %v28
  %v356 = vunpack.c.l.b16 %v29
  %v357 = vunpack.c.l.b16 %v30
  %v358 = vunpack.c.l.b16 %v31
  %v359 = vunpack.c.l.b16 %v32
  %v360 = vunpack.c.l.b16 %v33
  %v361 = vunpack.c.l.b16 %v34
  %v362 = vunpack.c.l.b16 %v35
  %v363 = vunpack.c.l.b16 %v36
  %v364 = vunpack.c.l.b16 %v37
  %v365 = vunpack.c.l.b16 %v38
  %v366 = vunpack.c.l.b16 %v39
  %v367 = vunpack.c.l.b16 %v40
  %v368 = vunpack.c.l.b16 %v41
  %v369 = vunpack.c.l.b16 %v42
  %v370 = vunpack.c.l.b16 %v43
  %v371 = vunpack.c.l.b16 %v44
  %v372 = vunpack.c.l.b16 %v45
  %v373 = vunpack.c.l.b16 %v46
  %v374 = vunpack.c.l.b16 %v47
  %v375 = vunpack.c.l.b16 %v48
  %v376 = vunpack.c.l.b16 %v49
  %v377 = vunpack.c.l.b16 %v50
  %v378 = vunpack.c.l.b16 %v51
  %v379 = vunpack.c.l.b16 %v52
  %v380 = vunpack.c.l.b16 %v53
  %v381 = vunpack.c.l.b16 %v54
  %v382 = vunpack.c.l.b16 %v55
  %v383 = vunpack.c.l.b16 %v56
  %v384 = vunpack.c.l.b16 %v57
  %v385 = vunpack.c.l.b16 %v58
  %v386 = vunpack.c.l.b16 %v59
  %v387 = vunpack.c.l.b16 %v60
  %v388 = vunpack.c.l.b16 %v61
  %v389 = vunpack.c.l.b16 %v62
  %v390 = vunpack.c.l.b16 %v63
  %v391 = vunpack.c.l.b16 %v64
  %v392 = vunpack.c.l.b16 %v65
  %v393 = vunpack.c.l.b16 %v66
  %v394 = vunpack.c.l.b16 %v67
  %v395 = vunpack.c.l.b16 %v68
  %v396 = vunpack.c.l.b16 %v69
  %v397 = vunpack.c.l.b16 %v70
  %v398 = vunpack.c.l.b16 %v71
  %v399 = vunpack.c.l.b16 %v72
  %v400 = vunpack.c.l.b16 %v73
  %v401 = vunpack.c.l.b16 %v74
  %v402 = vunpack.c.l.b16 %v75
  %v403 = vunpack.c.l.b16 %v76
  %v404 = vunpack.c.l.b16 %v77
  %v405 = vunpack.c.l.b16 %v78
  %v406 = vunpack.c.l.b16 %v79
  %v407 = vunpack.c.l.b16 %v80
  %v408 = vunpack.c.l.b16 %v81
  %v409 = vunpack.c.l.b16 %v82
  %v410 = vunpack.c.l.b16 %v83
  %v411 = vunpack.c.l.b16 %v84
  %v412 = vunpack.c.l.b16 %v85
  %v413 = vunpack.c.l.b16 %v86
  %v414 = vunpack.c.l.b16 %v87
  %v415 = vunpack.c.l.b16 %v88
  %v416 = vunpack.c.l.b16 %v89
  %v417 = vunpack.c.l.b16 %v90
  %v418 = vunpack.c.l.b16 %v91
  %v419 = vunpack.c.l.b16 %v92
  %v420 = vunpack.c.l.b16 %v93
  %v421 = vunpack.c.l.b16 %v94
  %v422 = vunpack.c.l.b16 %v95
  %v423 = vunpack.c.l.b16 %v96
  %v424 = vunpack.c.l.b16 %v97
  %v425 = vunpack.c.l.b16 %v98
  %v426 = vunpack.c.l.b16 %v99
  %v427 = vunpack.c.l.b16 %v100
  %v428 = vunpack.c.l.b16 %v101
  %v429 = vunpack.c.l.b16 %v102
  %v430 = vunpack.c.l.b16 %v103
  %v431 = vunpack.c.l.b16 %v104
  %v432 = vunpack.c.l.b16 %v105
  %v433 = vunpack.c.l.b16 %v106
  %v434 = vunpack.c.l.b16 %v107
  %v435 = vunpack.c.l.b16 %v108
  %v436 = vunpack.c.l.b16 %v109
  %v437 = vunpack.c.l.b16 %v110
  %v438 = vunpack.c.l.b16 %v111
  %v439 = vunpack.c.l.b16 %v112
  %v440 = vunpack.c.l.b16 %v113
  %v441 = vunpack.c.l.b16 %v114
  %v442 = vunpack.c.l.b16 %v115
  %v443 = vunpack.c.l.b16 %v116
  %v444 = vunpack.c.l.b16 %v117
  %v445 = vunpack.c.l.b16 %v118
  %v446 = vunpack.c.l.b16 %v119
  %v447 = vunpack.c.l.b16 %v120
  %v448 = vunpack.c.l.b16 %v121
  %v449 = vunpack.c.l.b16 %v122
  %v450 = vunpack.c.l.b16 %v123
  %v451 = vunpack.c.l.b16 %v124
  %v452 = vunpack.c.l.b16 %v125
  %v453 = vunpack.c.l.b16 %v126
  %v454 = vunpack.c.l.b16 %v127
  %v455 = vunpack.c.l.b16 %v128
  %v456 = vunpack.c.l.b16 %v129
  %v457 = vunpack.c.l.b16 %v130
  %v458 = vunpack.c.l.b16 %v131
  %v459 = vunpack.c.l.b16 %v132
  %v460 = vunpack.c.l.b16 %v133
  %v461 = vunpack.c.l.b16 %v134
  %v462 = vunpack.c.l.b16 %v135
  %v463 = vunpack.c.l.b16 %v136
  %v464 = vunpack.c.l.b16 %v137
  %v465 = vunpack.c.l.b16 %v138
  %v466 = vunpack.c.l.b16 %v139
  %v467 = vunpack.c.l.b16 %v140
  %v468 = vunpack.c.l.b16 %v141
  %v469 = vunpack.c.l.b16 %v142
  %v470 = vunpack.c.l.b16 %v143
  %v471 = vunpack.c.l.b16 %v144
  %v472 = vunpack.c.l.b16 %v145
  %v473 = vunpack.c.l.b16 %v146
  %v474 = vunpack.c.l.b16 %v147
  %v475 = vunpack.c.l.b16 %v148
  %v476 = vunpack.c.l.b16 %v149
  %v477 = vunpack.c.l.b16 %v150
  %v478 = vunpack.c.l.b16 %v151
  %v479 = vunpack.c.l.b16 %v152
  %v480 = vunpack.c.l.b16 %v153
  %v481 = vunpack.c.l.b16 %v154
  %v482 = vunpack.c.l.b16 %v155
  %v483 = vunpack.c.l.b16 %v156
  %v484 = vunpack.c.l.b16 %v157
  %v485 = vunpack.c.l.b16 %v158
  %v486 = vunpack.c.l.b16 %v159
  %v487 = vunpack.c.l.b16 %v160
  %v488 = vunpack.c.l.b16 %v161
  %v489 = vunpack.c.l.b16 %v162
  %v490 = vunpack.c.l.b16 %v163
  %v491 = vunpack.c.l.b16 %v164
  %v492 = vunpack.c.l.b16 %v165
  %v493 = vunpack.c.l.b16 %v166
  %v494 = vpack.c.b16 %v351, %v350
  %v495 = vpack.c.b16 %v353, %v352
  %v496 = vpack.c.b16 %v355, %v354
  %v497 = vpack.c.b16 %v357, %v356
  %v498 = vpack.c.b16 %v359, %v358
  %v499 = vpack.c.b16 %v361, %v360
  %v500 = vpack.c.b16 %v363, %v362
  %v501 = vpack.c.b16 %v365, %v364
  %v502 = vpack.c.b16 %v367, %v366
  %v503 = vpack.c.b16 %v369, %v368
  %v504 = vpack.c.b16 %v371, %v370
  %v505 = vpack.c.b16 %v373, %v372
  %v506 = vpack.c.b16 %v375, %v374
  %v507 = vpack.c.b16 %v377, %v376
  %v508 = vpack.c.b16 %v379, %v378
  %v509 = vpack.c.b16 %v381, %v380
  %v510 = vpack.c.b16 %v383, %v382
  %v511 = vpack.c.b16 %v385, %v384
  %v512 = vpack.c.b16 %v387, %v386
  %v513 = vpack.c.b16 %v389, %v388
  %v514 = vpack.c.b16 %v391, %v390
  %v515 = vpack.c.b16 %v393, %v392
  %v516 = vpack.c.b16 %v395, %v394
  %v517 = vpack.c.b16 %v397, %v396
  %v518 = vpack.c.b16 %v399, %v398
  %v519 = vpack.c.b16 %v401, %v400
  %v520 = vpack.c.b16 %v403, %v402
  %v521 = vpack.c.b16 %v405, %v404
  %v522 = vpack.c.b16 %v407, %v406
  %v523 = vpack.c.b16 %v409, %v408
  %v524 = vpack.c.b16 %v411, %v410
  %v525 = vpack.c.b16 %v413, %v412
  %v526 = vpack.c.b16 %v415, %v414
  %v527 = vpack.c.b16 %v417, %v416
  %v528 = vpack.c.b16 %v419, %v418
  %v529 = vpack.c.b16 %v421, %v420
  %v530 = vpack.c.b16 %v423, %v422
  %v531 = vpack.c.b16 %v425, %v424
  %v532 = vpack.c.b16 %v427, %v426
  %v533 = vpack.c.b16 %v429, %v428
  %v534 = vpack.c.b16 %v431, %v430
  %v535 = vpack.c.b16 %v433, %v432
  %v536 = vpack.c.b16 %v435, %v434
  %v537 = vpack.c.b16 %v437, %v436
  %v538 = vpack.c.b16 %v439, %v438
  %v539 = vpack.c.b16 %v441, %v440
  %v540 = vpack.c.b16 %v443, %v442
  %v541 = vpack.c.b16 %v445, %v444
  %v542 = vpack.c.b16 %v447, %v446
  %v543 = vpack.c.b16 %v449, %v448
  %v544 = vpack.c.b16 %v451, %v450
  %v545 = vpack.c.b16 %v453, %v452
  %v546 = vpack.c.b16 %v455, %v454
  %v547 = vpack.c.b16 %v457, %v456
  %v548 = vpack.c.b16 %v459, %v458
  %v549 = vpack.c.b16 %v461, %v460
  %v550 = vpack.c.b16 %v463, %v462
  %v551 = vpack.c.b16 %v465, %v464
  %v552 = vpack.c.b16 %v467, %v466
  %v553 = vpack.c.b16 %v469, %v468
  %v554 = vpack.c.b16 %v471, %v470
  %v555 = vpack.c.b16 %v473, %v472
  %v556 = vpack.c.b16 %v475, %v474
  %v557 = vpack.c.b16 %v477, %v476
  %v558 = vpack.c.b16 %v479, %v478
  %v559 = vpack.c.b16 %v481, %v480
  %v560 = vpack.c.b16 %v483, %v482
  %v561 = vpack.c.b16 %v485, %v484
  %v562 = vpack.c.b16 %v487, %v486
  %v563 = vpack.c.b16 %v489, %v488
  %v564 = vpack.c.b16 %v491, %v490
  %v565 = vpack.c.b16 %v493, %v492
  %638 = vmatprep.subr.bf16.mxu0 0
  %639 = vmatpush1.bf16.msra.mxu0 %v494
  %640 = vmatprep.subr.bf16.mxu0 0
  %641 = vmatpush1.bf16.msra.mxu0 %v495
  %642 = vmatprep.subr.bf16.mxu0 0
  %643 = vmatpush1.bf16.msra.mxu0 %v496
  %644 = vmatprep.subr.bf16.mxu0 0
  %645 = vmatpush1.bf16.msra.mxu0 %v497
  %646 = vmatprep.subr.bf16.mxu0 0
  %647 = vmatpush1.bf16.msra.mxu0 %v498
  %648 = vmatprep.subr.bf16.mxu0 0
  %649 = vmatpush1.bf16.msra.mxu0 %v499
  %650 = vmatprep.subr.bf16.mxu0 0
  %651 = vmatpush1.bf16.msra.mxu0 %v500
  %652 = vmatprep.subr.bf16.mxu0 0
  %653 = vmatpush1.bf16.msra.mxu0 %v501
  %654 = vmatprep.subr.bf16.mxu0 0
  %655 = vmatpush1.bf16.msra.mxu0 %v502
  %656 = vmatprep.subr.bf16.mxu0 0
  %657 = vmatpush1.bf16.msra.mxu0 %v503
  %658 = vmatprep.subr.bf16.mxu0 0
  %659 = vmatpush1.bf16.msra.mxu0 %v504
  %660 = vmatprep.subr.bf16.mxu0 0
  %661 = vmatpush1.bf16.msra.mxu0 %v505
  %662 = vmatprep.subr.bf16.mxu0 0
  %663 = vmatpush1.bf16.msra.mxu0 %v506
  %664 = vmatprep.subr.bf16.mxu0 0
  %665 = vmatpush1.bf16.msra.mxu0 %v507
  %666 = vmatprep.subr.bf16.mxu0 0
  %667 = vmatpush1.bf16.msra.mxu0 %v508
  %668 = vmatprep.subr.bf16.mxu0 0
  %669 = vmatpush1.bf16.msra.mxu0 %v509
  %670 = vmatprep.mubr.bf16.mxu0 %v189
  %671 = vmatmul.mubr.bf16.gmra.mrb[0].mxu0 %v188
  %v672 = vpop.f32.mrb[0].mxu0
  %v673 = vadd.f32 %v172, %v672
  %v674 = vpop.f32.mrb[0].mxu0
  %v675 = vpop.f32.mrb[0].mxu0
  %v676 = vpop.f32.mrb[0].mxu0
  %677 = vdwg.mxu0
  %678 = vmatprep.subr.bf16.mxu0 0
  %679 = vmatpush1.bf16.msra.mxu0 %v510
  %680 = vmatprep.subr.bf16.mxu0 0
  %681 = vmatpush1.bf16.msra.mxu0 %v511
  %682 = vmatprep.subr.bf16.mxu0 0
  %683 = vmatpush1.bf16.msra.mxu0 %v512
  %684 = vmatprep.subr.bf16.mxu0 0
  %685 = vmatpush1.bf16.msra.mxu0 %v513
  %686 = vmatprep.subr.bf16.mxu0 0
  %687 = vmatpush1.bf16.msra.mxu0 %v514
  %688 = vmatprep.subr.bf16.mxu0 0
  %689 = vmatpush1.bf16.msra.mxu0 %v515
  %690 = vmatprep.subr.bf16.mxu0 0
  %691 = vmatpush1.bf16.msra.mxu0 %v516
  %692 = vmatprep.subr.bf16.mxu0 0
  %693 = vmatpush1.bf16.msra.mxu0 %v517
  %694 = vmatprep.subr.bf16.mxu0 0
  %695 = vmatpush1.bf16.msra.mxu0 %v518
  %696 = vmatprep.subr.bf16.mxu0 0
  %697 = vmatpush1.bf16.msra.mxu0 %v519
  %698 = vmatprep.subr.bf16.mxu0 0
  %699 = vmatpush1.bf16.msra.mxu0 %v520
  %700 = vmatprep.subr.bf16.mxu0 0
  %701 = vmatpush1.bf16.msra.mxu0 %v521
  %702 = vmatprep.subr.bf16.mxu0 0
  %703 = vmatpush1.bf16.msra.mxu0 %v522
  %704 = vmatprep.subr.bf16.mxu0 0
  %705 = vmatpush1.bf16.msra.mxu0 %v523
  %706 = vmatprep.subr.bf16.mxu0 0
  %707 = vmatpush1.bf16.msra.mxu0 %v524
  %708 = vmatprep.subr.bf16.mxu0 0
  %709 = vmatpush1.bf16.msra.mxu0 %v525
  %710 = vmatprep.mubr.bf16.mxu0 %v191
  %711 = vmatmul.mubr.bf16.gmra.mrb[0].mxu0 %v190
  %v712 = vpop.f32.mrb[0].mxu0
  %v713 = vadd.f32 %v673, %v712
  %v714 = vpop.f32.mrb[0].mxu0
  %v715 = vpop.f32.mrb[0].mxu0
  %v716 = vpop.f32.mrb[0].mxu0
  %717 = vdwg.mxu0
  %718 = vmatprep.subr.bf16.mxu0 0
  %719 = vmatpush1.bf16.msra.mxu0 %v526
  %720 = vmatprep.subr.bf16.mxu0 0
  %721 = vmatpush1.bf16.msra.mxu0 %v527
  %722 = vmatprep.subr.bf16.mxu0 0
  %723 = vmatpush1.bf16.msra.mxu0 %v528
  %724 = vmatprep.subr.bf16.mxu0 0
  %725 = vmatpush1.bf16.msra.mxu0 %v529
  %726 = vmatprep.subr.bf16.mxu0 0
  %727 = vmatpush1.bf16.msra.mxu0 %v530
  %728 = vmatprep.subr.bf16.mxu0 0
  %729 = vmatpush1.bf16.msra.mxu0 %v531
  %730 = vmatprep.subr.bf16.mxu0 0
  %731 = vmatpush1.bf16.msra.mxu0 %v532
  %732 = vmatprep.subr.bf16.mxu0 0
  %733 = vmatpush1.bf16.msra.mxu0 %v533
  %734 = vmatprep.subr.bf16.mxu0 0
  %735 = vmatpush1.bf16.msra.mxu0 %v534
  %736 = vmatprep.subr.bf16.mxu0 0
  %737 = vmatpush1.bf16.msra.mxu0 %v535
  %738 = vmatprep.subr.bf16.mxu0 0
  %739 = vmatpush1.bf16.msra.mxu0 %v536
  %740 = vmatprep.subr.bf16.mxu0 0
  %741 = vmatpush1.bf16.msra.mxu0 %v537
  %742 = vmatprep.subr.bf16.mxu0 0
  %743 = vmatpush1.bf16.msra.mxu0 %v538
  %744 = vmatprep.subr.bf16.mxu0 0
  %745 = vmatpush1.bf16.msra.mxu0 %v539
  %746 = vmatprep.subr.bf16.mxu0 0
  %747 = vmatpush1.bf16.msra.mxu0 %v540
  %748 = vmatprep.subr.bf16.mxu0 0
  %749 = vmatpush1.bf16.msra.mxu0 %v541
  %750 = vmatprep.mubr.bf16.mxu0 %v193
  %751 = vmatmul.mubr.bf16.gmra.mrb[0].mxu0 %v192
  %v752 = vpop.f32.mrb[0].mxu0
  %v753 = vadd.f32 %v713, %v752
  %v754 = vpop.f32.mrb[0].mxu0
  %v755 = vpop.f32.mrb[0].mxu0
  %v756 = vpop.f32.mrb[0].mxu0
  %757 = vdwg.mxu0
  %758 = vmatprep.subr.bf16.mxu0 0
  %759 = vmatpush1.bf16.msra.mxu0 %v542
  %760 = vmatprep.subr.bf16.mxu0 0
  %761 = vmatpush1.bf16.msra.mxu0 %v543
  %762 = vmatprep.subr.bf16.mxu0 0
  %763 = vmatpush1.bf16.msra.mxu0 %v544
  %764 = vmatprep.subr.bf16.mxu0 0
  %765 = vmatpush1.bf16.msra.mxu0 %v545
  %766 = vmatprep.subr.bf16.mxu0 0
  %767 = vmatpush1.bf16.msra.mxu0 %v546
  %768 = vmatprep.subr.bf16.mxu0 0
  %769 = vmatpush1.bf16.msra.mxu0 %v547
  %770 = vmatprep.subr.bf16.mxu0 0
  %771 = vmatpush1.bf16.msra.mxu0 %v548
  %772 = vmatprep.subr.bf16.mxu0 0
  %773 = vmatpush1.bf16.msra.mxu0 %v549
  %774 = vmatprep.subr.bf16.mxu0 0
  %775 = vmatpush1.bf16.msra.mxu0 %v550
  %776 = vmatprep.subr.bf16.mxu0 0
  %777 = vmatpush1.bf16.msra.mxu0 %v551
  %778 = vmatprep.subr.bf16.mxu0 0
  %779 = vmatpush1.bf16.msra.mxu0 %v552
  %780 = vmatprep.subr.bf16.mxu0 0
  %781 = vmatpush1.bf16.msra.mxu0 %v553
  %782 = vmatprep.subr.bf16.mxu0 0
  %783 = vmatpush1.bf16.msra.mxu0 %v554
  %784 = vmatprep.subr.bf16.mxu0 0
  %785 = vmatpush1.bf16.msra.mxu0 %v555
  %786 = vmatprep.subr.bf16.mxu0 0
  %787 = vmatpush1.bf16.msra.mxu0 %v556
  %788 = vmatprep.subr.bf16.mxu0 0
  %789 = vmatpush1.bf16.msra.mxu0 %v557
  %790 = vmatprep.mubr.bf16.mxu0 %v195
  %791 = vmatmul.mubr.bf16.gmra.mrb[0].mxu0 %v194
  %v792 = vpop.f32.mrb[0].mxu0
  %v793 = vadd.f32 %v753, %v792
  %v794 = vpop.f32.mrb[0].mxu0
  %v795 = vpop.f32.mrb[0].mxu0
  %v796 = vpop.f32.mrb[0].mxu0
  %797 = vdwg.mxu0
  %798 = vmatprep.subr.bf16.mxu0 0
  %799 = vmatpush1.bf16.msra.mxu0 %v558
  %800 = vmatprep.subr.bf16.mxu0 0
  %801 = vmatpush1.bf16.msra.mxu0 %v559
  %802 = vmatprep.subr.bf16.mxu0 0
  %803 = vmatpush1.bf16.msra.mxu0 %v560
  %804 = vmatprep.subr.bf16.mxu0 0
  %805 = vmatpush1.bf16.msra.mxu0 %v561
  %806 = vmatprep.subr.bf16.mxu0 0
  %807 = vmatpush1.bf16.msra.mxu0 %v562
  %808 = vmatprep.subr.bf16.mxu0 0
  %809 = vmatpush1.bf16.msra.mxu0 %v563
  %810 = vmatprep.subr.bf16.mxu0 0
  %811 = vmatpush1.bf16.msra.mxu0 %v564
  %812 = vmatprep.subr.bf16.mxu0 0
  %813 = vmatpush1.bf16.msra.mxu0 %v565
  %814 = vmatprep.subr.bf16.mxu0 0
  %815 = vmatpush1.bf16.msra.mxu0 0
  %816 = vmatprep.subr.bf16.mxu0 0
  %817 = vmatpush1.bf16.msra.mxu0 0
  %818 = vmatprep.subr.bf16.mxu0 0
  %819 = vmatpush1.bf16.msra.mxu0 0
  %820 = vmatprep.subr.bf16.mxu0 0
  %821 = vmatpush1.bf16.msra.mxu0 0
  %822 = vmatprep.subr.bf16.mxu0 0
  %823 = vmatpush1.bf16.msra.mxu0 0
  %824 = vmatprep.subr.bf16.mxu0 0
  %825 = vmatpush1.bf16.msra.mxu0 0
  %826 = vmatprep.subr.bf16.mxu0 0
  %827 = vmatpush1.bf16.msra.mxu0 0
  %828 = vmatprep.subr.bf16.mxu0 0
  %829 = vmatpush1.bf16.msra.mxu0 0
  %830 = vmatprep.mubr.bf16.mxu0 0
  %831 = vmatmul.mubr.bf16.gmra.mrb[0].mxu0 %v196
  %v832 = vpop.f32.mrb[0].mxu0
  %v833 = vadd.f32 %v793, %v832
  %v834 = vpop.f32.mrb[0].mxu0
  %v835 = vpop.f32.mrb[0].mxu0
  %v836 = vpop.f32.mrb[0].mxu0
  %837 = vdwg.mxu0
  %v838 = vld [vmem:[%s3] sm:$0xf]
  %v839 = vunpack.c.l.bf16 %v838
  %v840 = vadd.f32 %v833, %v839
  %v841 = vmax.f32 %v840, 0.0
  %v842 = vpack.c.bf16 %v841, %v841
  %843 = vst [vmem:[%s4] sm:$0xf] %v842
  // Predicated region
  $region18: #{resnet_forward.38} parent=0 // pred_check
    _
  $region19: #{resnet_forward.38} parent=0 // pred_check_branch
    %845 = sbr.rel (0) target = $region21
  $region20: #{resnet_forward.38} parent=0 // pred_region
    _
  $region21: #{resnet_forward.38} parent=0 // pred_fallthru
    _
  // Predicated region
  $region22: #{resnet_forward.38} parent=0 // pred_check
    _
  $region23: #{resnet_forward.38} parent=0 // pred_check_branch
    %847 = sbr.rel (0) target = $region25
  $region24: #{resnet_forward.38} parent=0 // pred_region
    _
  $region25: #{resnet_forward.38} parent=0 // pred_fallthru
    _

// kernel: resnet_forward.37
$region0: #{resnet_forward.37}
  #allocation0 [shape = 'u32[]', space=smem, size = 0x4, offset = 0x4, fixed_abs, tag = 'smem constant byte address 0x4 - core index']
  #allocation1 [shape = 'u32[144,128]{1,0:T(1,128)}', space=vmem, size = 0x12000, scoped, tag = 'internal scratch']
  %s0 = inlined_call_operand.vmem [shape: bf16[8,1152], index: 0, kind: input, shape index: {}]
  %s1 = inlined_call_operand.vmem [shape: bf16[1152,128], index: 1, kind: input, shape index: {}]
  %s2 = inlined_call_operand.vmem [shape: f32[1,128], index: 2, kind: input, shape index: {}]
  %s3 = inlined_call_operand.vmem [shape: bf16[8,128], index: 3, kind: output, shape index: {}]
  %s4 = sld [smem:[#allocation0]]
  $region22: #{resnet_forward.37} parent=0
    _
  %s6 = ssub.s32 1, %s4
  %s7 = scalar_select 0, %s6, %s4
  // Predicated region
  $region2: #{resnet_forward.37} parent=0 // pred_check
    _
  $region3: #{resnet_forward.37} parent=0 // pred_check_branch
    %9 = sbr.rel (0) target = $region5
  $region4: #{resnet_forward.37} parent=0 // pred_region
    _
  $region5: #{resnet_forward.37} parent=0 // pred_fallthru
    _
  // Predicated region
  $region6: #{resnet_forward.37} parent=0 // pred_check
    _
  $region7: #{resnet_forward.37} parent=0 // pred_check_branch
    %11 = sbr.rel (0) target = $region9
  $region8: #{resnet_forward.37} parent=0 // pred_region
    _
  $region9: #{resnet_forward.37} parent=0 // pred_fallthru
    _
  // Predicated region
  $region10: #{resnet_forward.37} parent=0 // pred_check
    _
  $region11: #{resnet_forward.37} parent=0 // pred_check_branch
    %13 = sbr.rel (0) target = $region13
  $region12: #{resnet_forward.37} parent=0 // pred_region
    _
  $region13: #{resnet_forward.37} parent=0 // pred_fallthru
    _
  %v15 = vld [vmem:[%s0] sm:$0xff]
  %v16 = vld [vmem:[%s0 + $0x8] sm:$0xff]
  %v17 = vld [vmem:[%s0 + $0x10] sm:$0xff]
  %v18 = vld [vmem:[%s0 + $0x18] sm:$0xff]
  %v19 = vld [vmem:[%s0 + $0x20] sm:$0xf]
  %v20 = vld [vmem:[%s1] sm:$0xf]
  %v21 = vld [vmem:[%s1 + $0x4] sm:$0xf]
  %v22 = vld [vmem:[%s1 + $0x8] sm:$0xf]
  %v23 = vld [vmem:[%s1 + $0xc] sm:$0xf]
  %v24 = vld [vmem:[%s1 + $0x10] sm:$0xf]
  %v25 = vld [vmem:[%s1 + $0x14] sm:$0xf]
  %v26 = vld [vmem:[%s1 + $0x18] sm:$0xf]
  %v27 = vld [vmem:[%s1 + $0x1c] sm:$0xf]
  %v28 = vld [vmem:[%s1 + $0x20] sm:$0xf]
  %v29 = vld [vmem:[%s1 + $0x24] sm:$0xf]
  %v30 = vld [vmem:[%s1 + $0x28] sm:$0xf]
  %v31 = vld [vmem:[%s1 + $0x2c] sm:$0xf]
  %v32 = vld [vmem:[%s1 + $0x30] sm:$0xf]
  %v33 = vld [vmem:[%s1 + $0x34] sm:$0xf]
  %v34 = vld [vmem:[%s1 + $0x38] sm:$0xf]
  %v35 = vld [vmem:[%s1 + $0x3c] sm:$0xf]
  %v36 = vld [vmem:[%s1 + $0x40] sm:$0xf]
  %v37 = vld [vmem:[%s1 + $0x44] sm:$0xf]
  %v38 = vld [vmem:[%s1 + $0x48] sm:$0xf]
  %v39 = vld [vmem:[%s1 + $0x4c] sm:$0xf]
  %v40 = vld [vmem:[%s1 + $0x50] sm:$0xf]
  %v41 = vld [vmem:[%s1 + $0x54] sm:$0xf]
  %v42 = vld [vmem:[%s1 + $0x58] sm:$0xf]
  %v43 = vld [vmem:[%s1 + $0x5c] sm:$0xf]
  %v44 = vld [vmem:[%s1 + $0x60] sm:$0xf]
  %v45 = vld [vmem:[%s1 + $0x64] sm:$0xf]
  %v46 = vld [vmem:[%s1 + $0x68] sm:$0xf]
  %v47 = vld [vmem:[%s1 + $0x6c] sm:$0xf]
  %v48 = vld [vmem:[%s1 + $0x70] sm:$0xf]
  %v49 = vld [vmem:[%s1 + $0x74] sm:$0xf]
  %v50 = vld [vmem:[%s1 + $0x78] sm:$0xf]
  %v51 = vld [vmem:[%s1 + $0x7c] sm:$0xf]
  %v52 = vld [vmem:[%s1 + $0x80] sm:$0xf]
  %v53 = vld [vmem:[%s1 + $0x84] sm:$0xf]
  %v54 = vld [vmem:[%s1 + $0x88] sm:$0xf]
  %v55 = vld [vmem:[%s1 + $0x8c] sm:$0xf]
  %v56 = vld [vmem:[%s1 + $0x90] sm:$0xf]
  %v57 = vld [vmem:[%s1 + $0x94] sm:$0xf]
  %v58 = vld [vmem:[%s1 + $0x98] sm:$0xf]
  %v59 = vld [vmem:[%s1 + $0x9c] sm:$0xf]
  %v60 = vld [vmem:[%s1 + $0xa0] sm:$0xf]
  %v61 = vld [vmem:[%s1 + $0xa4] sm:$0xf]
  %v62 = vld [vmem:[%s1 + $0xa8] sm:$0xf]
  %v63 = vld [vmem:[%s1 + $0xac] sm:$0xf]
  %v64 = vld [vmem:[%s1 + $0xb0] sm:$0xf]
  %v65 = vld [vmem:[%s1 + $0xb4] sm:$0xf]
  %v66 = vld [vmem:[%s1 + $0xb8] sm:$0xf]
  %v67 = vld [vmem:[%s1 + $0xbc] sm:$0xf]
  %v68 = vld [vmem:[%s1 + $0xc0] sm:$0xf]
  %v69 = vld [vmem:[%s1 + $0xc4] sm:$0xf]
  %v70 = vld [vmem:[%s1 + $0xc8] sm:$0xf]
  %v71 = vld [vmem:[%s1 + $0xcc] sm:$0xf]
  %v72 = vld [vmem:[%s1 + $0xd0] sm:$0xf]
  %v73 = vld [vmem:[%s1 + $0xd4] sm:$0xf]
  %v74 = vld [vmem:[%s1 + $0xd8] sm:$0xf]
  %v75 = vld [vmem:[%s1 + $0xdc] sm:$0xf]
  %v76 = vld [vmem:[%s1 + $0xe0] sm:$0xf]
  %v77 = vld [vmem:[%s1 + $0xe4] sm:$0xf]
  %v78 = vld [vmem:[%s1 + $0xe8] sm:$0xf]
  %v79 = vld [vmem:[%s1 + $0xec] sm:$0xf]
  %v80 = vld [vmem:[%s1 + $0xf0] sm:$0xf]
  %v81 = vld [vmem:[%s1 + $0xf4] sm:$0xf]
  %v82 = vld [vmem:[%s1 + $0xf8] sm:$0xf]
  %v83 = vld [vmem:[%s1 + $0xfc] sm:$0xf]
  %v84 = vld [vmem:[%s1 + $0x100] sm:$0xf]
  %v85 = vld [vmem:[%s1 + $0x104] sm:$0xf]
  %v86 = vld [vmem:[%s1 + $0x108] sm:$0xf]
  %v87 = vld [vmem:[%s1 + $0x10c] sm:$0xf]
  %v88 = vld [vmem:[%s1 + $0x110] sm:$0xf]
  %v89 = vld [vmem:[%s1 + $0x114] sm:$0xf]
  %v90 = vld [vmem:[%s1 + $0x118] sm:$0xf]
  %v91 = vld [vmem:[%s1 + $0x11c] sm:$0xf]
  %v92 = vld [vmem:[%s1 + $0x120] sm:$0xf]
  %v93 = vld [vmem:[%s1 + $0x124] sm:$0xf]
  %v94 = vld [vmem:[%s1 + $0x128] sm:$0xf]
  %v95 = vld [vmem:[%s1 + $0x12c] sm:$0xf]
  %v96 = vld [vmem:[%s1 + $0x130] sm:$0xf]
  %v97 = vld [vmem:[%s1 + $0x134] sm:$0xf]
  %v98 = vld [vmem:[%s1 + $0x138] sm:$0xf]
  %v99 = vld [vmem:[%s1 + $0x13c] sm:$0xf]
  %v100 = vld [vmem:[%s1 + $0x140] sm:$0xf]
  %v101 = vld [vmem:[%s1 + $0x144] sm:$0xf]
  %v102 = vld [vmem:[%s1 + $0x148] sm:$0xf]
  %v103 = vld [vmem:[%s1 + $0x14c] sm:$0xf]
  %v104 = vld [vmem:[%s1 + $0x150] sm:$0xf]
  %v105 = vld [vmem:[%s1 + $0x154] sm:$0xf]
  %v106 = vld [vmem:[%s1 + $0x158] sm:$0xf]
  %v107 = vld [vmem:[%s1 + $0x15c] sm:$0xf]
  %v108 = vld [vmem:[%s1 + $0x160] sm:$0xf]
  %v109 = vld [vmem:[%s1 + $0x164] sm:$0xf]
  %v110 = vld [vmem:[%s1 + $0x168] sm:$0xf]
  %v111 = vld [vmem:[%s1 + $0x16c] sm:$0xf]
  %v112 = vld [vmem:[%s1 + $0x170] sm:$0xf]
  %v113 = vld [vmem:[%s1 + $0x174] sm:$0xf]
  %v114 = vld [vmem:[%s1 + $0x178] sm:$0xf]
  %v115 = vld [vmem:[%s1 + $0x17c] sm:$0xf]
  %v116 = vld [vmem:[%s1 + $0x180] sm:$0xf]
  %v117 = vld [vmem:[%s1 + $0x184] sm:$0xf]
  %v118 = vld [vmem:[%s1 + $0x188] sm:$0xf]
  %v119 = vld [vmem:[%s1 + $0x18c] sm:$0xf]
  %v120 = vld [vmem:[%s1 + $0x190] sm:$0xf]
  %v121 = vld [vmem:[%s1 + $0x194] sm:$0xf]
  %v122 = vld [vmem:[%s1 + $0x198] sm:$0xf]
  %v123 = vld [vmem:[%s1 + $0x19c] sm:$0xf]
  %v124 = vld [vmem:[%s1 + $0x1a0] sm:$0xf]
  %v125 = vld [vmem:[%s1 + $0x1a4] sm:$0xf]
  %v126 = vld [vmem:[%s1 + $0x1a8] sm:$0xf]
  %v127 = vld [vmem:[%s1 + $0x1ac] sm:$0xf]
  %v128 = vld [vmem:[%s1 + $0x1b0] sm:$0xf]
  %v129 = vld [vmem:[%s1 + $0x1b4] sm:$0xf]
  %v130 = vld [vmem:[%s1 + $0x1b8] sm:$0xf]
  %v131 = vld [vmem:[%s1 + $0x1bc] sm:$0xf]
  %v132 = vld [vmem:[%s1 + $0x1c0] sm:$0xf]
  %v133 = vld [vmem:[%s1 + $0x1c4] sm:$0xf]
  %v134 = vld [vmem:[%s1 + $0x1c8] sm:$0xf]
  %v135 = vld [vmem:[%s1 + $0x1cc] sm:$0xf]
  %v136 = vld [vmem:[%s1 + $0x1d0] sm:$0xf]
  %v137 = vld [vmem:[%s1 + $0x1d4] sm:$0xf]
  %v138 = vld [vmem:[%s1 + $0x1d8] sm:$0xf]
  %v139 = vld [vmem:[%s1 + $0x1dc] sm:$0xf]
  %v140 = vld [vmem:[%s1 + $0x1e0] sm:$0xf]
  %v141 = vld [vmem:[%s1 + $0x1e4] sm:$0xf]
  %v142 = vld [vmem:[%s1 + $0x1e8] sm:$0xf]
  %v143 = vld [vmem:[%s1 + $0x1ec] sm:$0xf]
  %v144 = vld [vmem:[%s1 + $0x1f0] sm:$0xf]
  %v145 = vld [vmem:[%s1 + $0x1f4] sm:$0xf]
  %v146 = vld [vmem:[%s1 + $0x1f8] sm:$0xf]
  %v147 = vld [vmem:[%s1 + $0x1fc] sm:$0xf]
  %v148 = vld [vmem:[%s1 + $0x200] sm:$0xf]
  %v149 = vld [vmem:[%s1 + $0x204] sm:$0xf]
  %v150 = vld [vmem:[%s1 + $0x208] sm:$0xf]
  %v151 = vld [vmem:[%s1 + $0x20c] sm:$0xf]
  %v152 = vld [vmem:[%s1 + $0x210] sm:$0xf]
  %v153 = vld [vmem:[%s1 + $0x214] sm:$0xf]
  %v154 = vld [vmem:[%s1 + $0x218] sm:$0xf]
  %v155 = vld [vmem:[%s1 + $0x21c] sm:$0xf]
  %v156 = vld [vmem:[%s1 + $0x220] sm:$0xf]
  %v157 = vld [vmem:[%s1 + $0x224] sm:$0xf]
  %v158 = vld [vmem:[%s1 + $0x228] sm:$0xf]
  %v159 = vld [vmem:[%s1 + $0x22c] sm:$0xf]
  %v160 = vld [vmem:[%s1 + $0x230] sm:$0xf]
  %v161 = vld [vmem:[%s1 + $0x234] sm:$0xf]
  %v162 = vld [vmem:[%s1 + $0x238] sm:$0xf]
  %v163 = vld [vmem:[%s1 + $0x23c] sm:$0xf]
  %v164 = vld [vmem:[%s2] sm:$0x1]
  %v166 = vlaneseq
  %v167 = vshrl.u32 %v166, 7
  %v168 = vsub.s32 0, %v167
  %v169 = vrot.slane %v164, %v168
  %v176 = vunpack.c.l.b16 %v15
  %v177 = vunpack.c.h.b16 %v15
  %v178 = vunpack.c.l.b16 %v16
  %v179 = vunpack.c.h.b16 %v16
  %v180 = vunpack.c.l.b16 %v17
  %v181 = vunpack.c.h.b16 %v17
  %v182 = vunpack.c.l.b16 %v18
  %v183 = vunpack.c.h.b16 %v18
  %v184 = vunpack.c.l.b16 %v19
  %v185 = vpack.c.b16 %v176, %v176
  %v186 = vpack.c.b16 %v177, %v177
  %v187 = vpack.c.b16 %v178, %v178
  %v188 = vpack.c.b16 %v179, %v179
  %v189 = vpack.c.b16 %v180, %v180
  %v190 = vpack.c.b16 %v181, %v181
  %v191 = vpack.c.b16 %v182, %v182
  %v192 = vpack.c.b16 %v183, %v183
  %v193 = vpack.c.b16 %v184, %v184
  %v347 = vunpack.c.l.b16 %v20
  %v348 = vunpack.c.l.b16 %v21
  %v349 = vunpack.c.l.b16 %v22
  %v350 = vunpack.c.l.b16 %v23
  %v351 = vunpack.c.l.b16 %v24
  %v352 = vunpack.c.l.b16 %v25
  %v353 = vunpack.c.l.b16 %v26
  %v354 = vunpack.c.l.b16 %v27
  %v355 = vunpack.c.l.b16 %v28
  %v356 = vunpack.c.l.b16 %v29
  %v357 = vunpack.c.l.b16 %v30
  %v358 = vunpack.c.l.b16 %v31
  %v359 = vunpack.c.l.b16 %v32
  %v360 = vunpack.c.l.b16 %v33
  %v361 = vunpack.c.l.b16 %v34
  %v362 = vunpack.c.l.b16 %v35
  %v363 = vunpack.c.l.b16 %v36
  %v364 = vunpack.c.l.b16 %v37
  %v365 = vunpack.c.l.b16 %v38
  %v366 = vunpack.c.l.b16 %v39
  %v367 = vunpack.c.l.b16 %v40
  %v368 = vunpack.c.l.b16 %v41
  %v369 = vunpack.c.l.b16 %v42
  %v370 = vunpack.c.l.b16 %v43
  %v371 = vunpack.c.l.b16 %v44
  %v372 = vunpack.c.l.b16 %v45
  %v373 = vunpack.c.l.b16 %v46
  %v374 = vunpack.c.l.b16 %v47
  %v375 = vunpack.c.l.b16 %v48
  %v376 = vunpack.c.l.b16 %v49
  %v377 = vunpack.c.l.b16 %v50
  %v378 = vunpack.c.l.b16 %v51
  %v379 = vunpack.c.l.b16 %v52
  %v380 = vunpack.c.l.b16 %v53
  %v381 = vunpack.c.l.b16 %v54
  %v382 = vunpack.c.l.b16 %v55
  %v383 = vunpack.c.l.b16 %v56
  %v384 = vunpack.c.l.b16 %v57
  %v385 = vunpack.c.l.b16 %v58
  %v386 = vunpack.c.l.b16 %v59
  %v387 = vunpack.c.l.b16 %v60
  %v388 = vunpack.c.l.b16 %v61
  %v389 = vunpack.c.l.b16 %v62
  %v390 = vunpack.c.l.b16 %v63
  %v391 = vunpack.c.l.b16 %v64
  %v392 = vunpack.c.l.b16 %v65
  %v393 = vunpack.c.l.b16 %v66
  %v394 = vunpack.c.l.b16 %v67
  %v395 = vunpack.c.l.b16 %v68
  %v396 = vunpack.c.l.b16 %v69
  %v397 = vunpack.c.l.b16 %v70
  %v398 = vunpack.c.l.b16 %v71
  %v399 = vunpack.c.l.b16 %v72
  %v400 = vunpack.c.l.b16 %v73
  %v401 = vunpack.c.l.b16 %v74
  %v402 = vunpack.c.l.b16 %v75
  %v403 = vunpack.c.l.b16 %v76
  %v404 = vunpack.c.l.b16 %v77
  %v405 = vunpack.c.l.b16 %v78
  %v406 = vunpack.c.l.b16 %v79
  %v407 = vunpack.c.l.b16 %v80
  %v408 = vunpack.c.l.b16 %v81
  %v409 = vunpack.c.l.b16 %v82
  %v410 = vunpack.c.l.b16 %v83
  %v411 = vunpack.c.l.b16 %v84
  %v412 = vunpack.c.l.b16 %v85
  %v413 = vunpack.c.l.b16 %v86
  %v414 = vunpack.c.l.b16 %v87
  %v415 = vunpack.c.l.b16 %v88
  %v416 = vunpack.c.l.b16 %v89
  %v417 = vunpack.c.l.b16 %v90
  %v418 = vunpack.c.l.b16 %v91
  %v419 = vunpack.c.l.b16 %v92
  %v420 = vunpack.c.l.b16 %v93
  %v421 = vunpack.c.l.b16 %v94
  %v422 = vunpack.c.l.b16 %v95
  %v423 = vunpack.c.l.b16 %v96
  %v424 = vunpack.c.l.b16 %v97
  %v425 = vunpack.c.l.b16 %v98
  %v426 = vunpack.c.l.b16 %v99
  %v427 = vunpack.c.l.b16 %v100
  %v428 = vunpack.c.l.b16 %v101
  %v429 = vunpack.c.l.b16 %v102
  %v430 = vunpack.c.l.b16 %v103
  %v431 = vunpack.c.l.b16 %v104
  %v432 = vunpack.c.l.b16 %v105
  %v433 = vunpack.c.l.b16 %v106
  %v434 = vunpack.c.l.b16 %v107
  %v435 = vunpack.c.l.b16 %v108
  %v436 = vunpack.c.l.b16 %v109
  %v437 = vunpack.c.l.b16 %v110
  %v438 = vunpack.c.l.b16 %v111
  %v439 = vunpack.c.l.b16 %v112
  %v440 = vunpack.c.l.b16 %v113
  %v441 = vunpack.c.l.b16 %v114
  %v442 = vunpack.c.l.b16 %v115
  %v443 = vunpack.c.l.b16 %v116
  %v444 = vunpack.c.l.b16 %v117
  %v445 = vunpack.c.l.b16 %v118
  %v446 = vunpack.c.l.b16 %v119
  %v447 = vunpack.c.l.b16 %v120
  %v448 = vunpack.c.l.b16 %v121
  %v449 = vunpack.c.l.b16 %v122
  %v450 = vunpack.c.l.b16 %v123
  %v451 = vunpack.c.l.b16 %v124
  %v452 = vunpack.c.l.b16 %v125
  %v453 = vunpack.c.l.b16 %v126
  %v454 = vunpack.c.l.b16 %v127
  %v455 = vunpack.c.l.b16 %v128
  %v456 = vunpack.c.l.b16 %v129
  %v457 = vunpack.c.l.b16 %v130
  %v458 = vunpack.c.l.b16 %v131
  %v459 = vunpack.c.l.b16 %v132
  %v460 = vunpack.c.l.b16 %v133
  %v461 = vunpack.c.l.b16 %v134
  %v462 = vunpack.c.l.b16 %v135
  %v463 = vunpack.c.l.b16 %v136
  %v464 = vunpack.c.l.b16 %v137
  %v465 = vunpack.c.l.b16 %v138
  %v466 = vunpack.c.l.b16 %v139
  %v467 = vunpack.c.l.b16 %v140
  %v468 = vunpack.c.l.b16 %v141
  %v469 = vunpack.c.l.b16 %v142
  %v470 = vunpack.c.l.b16 %v143
  %v471 = vunpack.c.l.b16 %v144
  %v472 = vunpack.c.l.b16 %v145
  %v473 = vunpack.c.l.b16 %v146
  %v474 = vunpack.c.l.b16 %v147
  %v475 = vunpack.c.l.b16 %v148
  %v476 = vunpack.c.l.b16 %v149
  %v477 = vunpack.c.l.b16 %v150
  %v478 = vunpack.c.l.b16 %v151
  %v479 = vunpack.c.l.b16 %v152
  %v480 = vunpack.c.l.b16 %v153
  %v481 = vunpack.c.l.b16 %v154
  %v482 = vunpack.c.l.b16 %v155
  %v483 = vunpack.c.l.b16 %v156
  %v484 = vunpack.c.l.b16 %v157
  %v485 = vunpack.c.l.b16 %v158
  %v486 = vunpack.c.l.b16 %v159
  %v487 = vunpack.c.l.b16 %v160
  %v488 = vunpack.c.l.b16 %v161
  %v489 = vunpack.c.l.b16 %v162
  %v490 = vunpack.c.l.b16 %v163
  %v491 = vpack.c.b16 %v348, %v347
  %v492 = vpack.c.b16 %v350, %v349
  %v493 = vpack.c.b16 %v352, %v351
  %v494 = vpack.c.b16 %v354, %v353
  %v495 = vpack.c.b16 %v356, %v355
  %v496 = vpack.c.b16 %v358, %v357
  %v497 = vpack.c.b16 %v360, %v359
  %v498 = vpack.c.b16 %v362, %v361
  %v499 = vpack.c.b16 %v364, %v363
  %v500 = vpack.c.b16 %v366, %v365
  %v501 = vpack.c.b16 %v368, %v367
  %v502 = vpack.c.b16 %v370, %v369
  %v503 = vpack.c.b16 %v372, %v371
  %v504 = vpack.c.b16 %v374, %v373
  %v505 = vpack.c.b16 %v376, %v375
  %v506 = vpack.c.b16 %v378, %v377
  %v507 = vpack.c.b16 %v380, %v379
  %v508 = vpack.c.b16 %v382, %v381
  %v509 = vpack.c.b16 %v384, %v383
  %v510 = vpack.c.b16 %v386, %v385
  %v511 = vpack.c.b16 %v388, %v387
  %v512 = vpack.c.b16 %v390, %v389
  %v513 = vpack.c.b16 %v392, %v391
  %v514 = vpack.c.b16 %v394, %v393
  %v515 = vpack.c.b16 %v396, %v395
  %v516 = vpack.c.b16 %v398, %v397
  %v517 = vpack.c.b16 %v400, %v399
  %v518 = vpack.c.b16 %v402, %v401
  %v519 = vpack.c.b16 %v404, %v403
  %v520 = vpack.c.b16 %v406, %v405
  %v521 = vpack.c.b16 %v408, %v407
  %v522 = vpack.c.b16 %v410, %v409
  %v523 = vpack.c.b16 %v412, %v411
  %v524 = vpack.c.b16 %v414, %v413
  %v525 = vpack.c.b16 %v416, %v415
  %v526 = vpack.c.b16 %v418, %v417
  %v527 = vpack.c.b16 %v420, %v419
  %v528 = vpack.c.b16 %v422, %v421
  %v529 = vpack.c.b16 %v424, %v423
  %v530 = vpack.c.b16 %v426, %v425
  %v531 = vpack.c.b16 %v428, %v427
  %v532 = vpack.c.b16 %v430, %v429
  %v533 = vpack.c.b16 %v432, %v431
  %v534 = vpack.c.b16 %v434, %v433
  %v535 = vpack.c.b16 %v436, %v435
  %v536 = vpack.c.b16 %v438, %v437
  %v537 = vpack.c.b16 %v440, %v439
  %v538 = vpack.c.b16 %v442, %v441
  %v539 = vpack.c.b16 %v444, %v443
  %v540 = vpack.c.b16 %v446, %v445
  %v541 = vpack.c.b16 %v448, %v447
  %v542 = vpack.c.b16 %v450, %v449
  %v543 = vpack.c.b16 %v452, %v451
  %v544 = vpack.c.b16 %v454, %v453
  %v545 = vpack.c.b16 %v456, %v455
  %v546 = vpack.c.b16 %v458, %v457
  %v547 = vpack.c.b16 %v460, %v459
  %v548 = vpack.c.b16 %v462, %v461
  %v549 = vpack.c.b16 %v464, %v463
  %v550 = vpack.c.b16 %v466, %v465
  %v551 = vpack.c.b16 %v468, %v467
  %v552 = vpack.c.b16 %v470, %v469
  %v553 = vpack.c.b16 %v472, %v471
  %v554 = vpack.c.b16 %v474, %v473
  %v555 = vpack.c.b16 %v476, %v475
  %v556 = vpack.c.b16 %v478, %v477
  %v557 = vpack.c.b16 %v480, %v479
  %v558 = vpack.c.b16 %v482, %v481
  %v559 = vpack.c.b16 %v484, %v483
  %v560 = vpack.c.b16 %v486, %v485
  %v561 = vpack.c.b16 %v488, %v487
  %v562 = vpack.c.b16 %v490, %v489
  %635 = vmatprep.subr.bf16.mxu0 0
  %636 = vmatpush1.bf16.msra.mxu0 %v491
  %637 = vmatprep.subr.bf16.mxu0 0
  %638 = vmatpush1.bf16.msra.mxu0 %v492
  %639 = vmatprep.subr.bf16.mxu0 0
  %640 = vmatpush1.bf16.msra.mxu0 %v493
  %641 = vmatprep.subr.bf16.mxu0 0
  %642 = vmatpush1.bf16.msra.mxu0 %v494
  %643 = vmatprep.subr.bf16.mxu0 0
  %644 = vmatpush1.bf16.msra.mxu0 %v495
  %645 = vmatprep.subr.bf16.mxu0 0
  %646 = vmatpush1.bf16.msra.mxu0 %v496
  %647 = vmatprep.subr.bf16.mxu0 0
  %648 = vmatpush1.bf16.msra.mxu0 %v497
  %649 = vmatprep.subr.bf16.mxu0 0
  %650 = vmatpush1.bf16.msra.mxu0 %v498
  %651 = vmatprep.subr.bf16.mxu0 0
  %652 = vmatpush1.bf16.msra.mxu0 %v499
  %653 = vmatprep.subr.bf16.mxu0 0
  %654 = vmatpush1.bf16.msra.mxu0 %v500
  %655 = vmatprep.subr.bf16.mxu0 0
  %656 = vmatpush1.bf16.msra.mxu0 %v501
  %657 = vmatprep.subr.bf16.mxu0 0
  %658 = vmatpush1.bf16.msra.mxu0 %v502
  %659 = vmatprep.subr.bf16.mxu0 0
  %660 = vmatpush1.bf16.msra.mxu0 %v503
  %661 = vmatprep.subr.bf16.mxu0 0
  %662 = vmatpush1.bf16.msra.mxu0 %v504
  %663 = vmatprep.subr.bf16.mxu0 0
  %664 = vmatpush1.bf16.msra.mxu0 %v505
  %665 = vmatprep.subr.bf16.mxu0 0
  %666 = vmatpush1.bf16.msra.mxu0 %v506
  %667 = vmatprep.mubr.bf16.mxu0 %v186
  %668 = vmatmul.mubr.bf16.gmra.mrb[0].mxu0 %v185
  %v669 = vpop.f32.mrb[0].mxu0
  %v670 = vadd.f32 %v169, %v669
  %v671 = vpop.f32.mrb[0].mxu0
  %v672 = vpop.f32.mrb[0].mxu0
  %v673 = vpop.f32.mrb[0].mxu0
  %674 = vdwg.mxu0
  %675 = vmatprep.subr.bf16.mxu0 0
  %676 = vmatpush1.bf16.msra.mxu0 %v507
  %677 = vmatprep.subr.bf16.mxu0 0
  %678 = vmatpush1.bf16.msra.mxu0 %v508
  %679 = vmatprep.subr.bf16.mxu0 0
  %680 = vmatpush1.bf16.msra.mxu0 %v509
  %681 = vmatprep.subr.bf16.mxu0 0
  %682 = vmatpush1.bf16.msra.mxu0 %v510
  %683 = vmatprep.subr.bf16.mxu0 0
  %684 = vmatpush1.bf16.msra.mxu0 %v511
  %685 = vmatprep.subr.bf16.mxu0 0
  %686 = vmatpush1.bf16.msra.mxu0 %v512
  %687 = vmatprep.subr.bf16.mxu0 0
  %688 = vmatpush1.bf16.msra.mxu0 %v513
  %689 = vmatprep.subr.bf16.mxu0 0
  %690 = vmatpush1.bf16.msra.mxu0 %v514
  %691 = vmatprep.subr.bf16.mxu0 0
  %692 = vmatpush1.bf16.msra.mxu0 %v515
  %693 = vmatprep.subr.bf16.mxu0 0
  %694 = vmatpush1.bf16.msra.mxu0 %v516
  %695 = vmatprep.subr.bf16.mxu0 0
  %696 = vmatpush1.bf16.msra.mxu0 %v517
  %697 = vmatprep.subr.bf16.mxu0 0
  %698 = vmatpush1.bf16.msra.mxu0 %v518
  %699 = vmatprep.subr.bf16.mxu0 0
  %700 = vmatpush1.bf16.msra.mxu0 %v519
  %701 = vmatprep.subr.bf16.mxu0 0
  %702 = vmatpush1.bf16.msra.mxu0 %v520
  %703 = vmatprep.subr.bf16.mxu0 0
  %704 = vmatpush1.bf16.msra.mxu0 %v521
  %705 = vmatprep.subr.bf16.mxu0 0
  %706 = vmatpush1.bf16.msra.mxu0 %v522
  %707 = vmatprep.mubr.bf16.mxu0 %v188
  %708 = vmatmul.mubr.bf16.gmra.mrb[0].mxu0 %v187
  %v709 = vpop.f32.mrb[0].mxu0
  %v710 = vadd.f32 %v670, %v709
  %v711 = vpop.f32.mrb[0].mxu0
  %v712 = vpop.f32.mrb[0].mxu0
  %v713 = vpop.f32.mrb[0].mxu0
  %714 = vdwg.mxu0
  %715 = vmatprep.subr.bf16.mxu0 0
  %716 = vmatpush1.bf16.msra.mxu0 %v523
  %717 = vmatprep.subr.bf16.mxu0 0
  %718 = vmatpush1.bf16.msra.mxu0 %v524
  %719 = vmatprep.subr.bf16.mxu0 0
  %720 = vmatpush1.bf16.msra.mxu0 %v525
  %721 = vmatprep.subr.bf16.mxu0 0
  %722 = vmatpush1.bf16.msra.mxu0 %v526
  %723 = vmatprep.subr.bf16.mxu0 0
  %724 = vmatpush1.bf16.msra.mxu0 %v527
  %725 = vmatprep.subr.bf16.mxu0 0
  %726 = vmatpush1.bf16.msra.mxu0 %v528
  %727 = vmatprep.subr.bf16.mxu0 0
  %728 = vmatpush1.bf16.msra.mxu0 %v529
  %729 = vmatprep.subr.bf16.mxu0 0
  %730 = vmatpush1.bf16.msra.mxu0 %v530
  %731 = vmatprep.subr.bf16.mxu0 0
  %732 = vmatpush1.bf16.msra.mxu0 %v531
  %733 = vmatprep.subr.bf16.mxu0 0
  %734 = vmatpush1.bf16.msra.mxu0 %v532
  %735 = vmatprep.subr.bf16.mxu0 0
  %736 = vmatpush1.bf16.msra.mxu0 %v533
  %737 = vmatprep.subr.bf16.mxu0 0
  %738 = vmatpush1.bf16.msra.mxu0 %v534
  %739 = vmatprep.subr.bf16.mxu0 0
  %740 = vmatpush1.bf16.msra.mxu0 %v535
  %741 = vmatprep.subr.bf16.mxu0 0
  %742 = vmatpush1.bf16.msra.mxu0 %v536
  %743 = vmatprep.subr.bf16.mxu0 0
  %744 = vmatpush1.bf16.msra.mxu0 %v537
  %745 = vmatprep.subr.bf16.mxu0 0
  %746 = vmatpush1.bf16.msra.mxu0 %v538
  %747 = vmatprep.mubr.bf16.mxu0 %v190
  %748 = vmatmul.mubr.bf16.gmra.mrb[0].mxu0 %v189
  %v749 = vpop.f32.mrb[0].mxu0
  %v750 = vadd.f32 %v710, %v749
  %v751 = vpop.f32.mrb[0].mxu0
  %v752 = vpop.f32.mrb[0].mxu0
  %v753 = vpop.f32.mrb[0].mxu0
  %754 = vdwg.mxu0
  %755 = vmatprep.subr.bf16.mxu0 0
  %756 = vmatpush1.bf16.msra.mxu0 %v539
  %757 = vmatprep.subr.bf16.mxu0 0
  %758 = vmatpush1.bf16.msra.mxu0 %v540
  %759 = vmatprep.subr.bf16.mxu0 0
  %760 = vmatpush1.bf16.msra.mxu0 %v541
  %761 = vmatprep.subr.bf16.mxu0 0
  %762 = vmatpush1.bf16.msra.mxu0 %v542
  %763 = vmatprep.subr.bf16.mxu0 0
  %764 = vmatpush1.bf16.msra.mxu0 %v543
  %765 = vmatprep.subr.bf16.mxu0 0
  %766 = vmatpush1.bf16.msra.mxu0 %v544
  %767 = vmatprep.subr.bf16.mxu0 0
  %768 = vmatpush1.bf16.msra.mxu0 %v545
  %769 = vmatprep.subr.bf16.mxu0 0
  %770 = vmatpush1.bf16.msra.mxu0 %v546
  %771 = vmatprep.subr.bf16.mxu0 0
  %772 = vmatpush1.bf16.msra.mxu0 %v547
  %773 = vmatprep.subr.bf16.mxu0 0
  %774 = vmatpush1.bf16.msra.mxu0 %v548
  %775 = vmatprep.subr.bf16.mxu0 0
  %776 = vmatpush1.bf16.msra.mxu0 %v549
  %777 = vmatprep.subr.bf16.mxu0 0
  %778 = vmatpush1.bf16.msra.mxu0 %v550
  %779 = vmatprep.subr.bf16.mxu0 0
  %780 = vmatpush1.bf16.msra.mxu0 %v551
  %781 = vmatprep.subr.bf16.mxu0 0
  %782 = vmatpush1.bf16.msra.mxu0 %v552
  %783 = vmatprep.subr.bf16.mxu0 0
  %784 = vmatpush1.bf16.msra.mxu0 %v553
  %785 = vmatprep.subr.bf16.mxu0 0
  %786 = vmatpush1.bf16.msra.mxu0 %v554
  %787 = vmatprep.mubr.bf16.mxu0 %v192
  %788 = vmatmul.mubr.bf16.gmra.mrb[0].mxu0 %v191
  %v789 = vpop.f32.mrb[0].mxu0
  %v790 = vadd.f32 %v750, %v789
  %v791 = vpop.f32.mrb[0].mxu0
  %v792 = vpop.f32.mrb[0].mxu0
  %v793 = vpop.f32.mrb[0].mxu0
  %794 = vdwg.mxu0
  %795 = vmatprep.subr.bf16.mxu0 0
  %796 = vmatpush1.bf16.msra.mxu0 %v555
  %797 = vmatprep.subr.bf16.mxu0 0
  %798 = vmatpush1.bf16.msra.mxu0 %v556
  %799 = vmatprep.subr.bf16.mxu0 0
  %800 = vmatpush1.bf16.msra.mxu0 %v557
  %801 = vmatprep.subr.bf16.mxu0 0
  %802 = vmatpush1.bf16.msra.mxu0 %v558
  %803 = vmatprep.subr.bf16.mxu0 0
  %804 = vmatpush1.bf16.msra.mxu0 %v559
  %805 = vmatprep.subr.bf16.mxu0 0
  %806 = vmatpush1.bf16.msra.mxu0 %v560
  %807 = vmatprep.subr.bf16.mxu0 0
  %808 = vmatpush1.bf16.msra.mxu0 %v561
  %809 = vmatprep.subr.bf16.mxu0 0
  %810 = vmatpush1.bf16.msra.mxu0 %v562
  %811 = vmatprep.subr.bf16.mxu0 0
  %812 = vmatpush1.bf16.msra.mxu0 0
  %813 = vmatprep.subr.bf16.mxu0 0
  %814 = vmatpush1.bf16.msra.mxu0 0
  %815 = vmatprep.subr.bf16.mxu0 0
  %816 = vmatpush1.bf16.msra.mxu0 0
  %817 = vmatprep.subr.bf16.mxu0 0
  %818 = vmatpush1.bf16.msra.mxu0 0
  %819 = vmatprep.subr.bf16.mxu0 0
  %820 = vmatpush1.bf16.msra.mxu0 0
  %821 = vmatprep.subr.bf16.mxu0 0
  %822 = vmatpush1.bf16.msra.mxu0 0
  %823 = vmatprep.subr.bf16.mxu0 0
  %824 = vmatpush1.bf16.msra.mxu0 0
  %825 = vmatprep.subr.bf16.mxu0 0
  %826 = vmatpush1.bf16.msra.mxu0 0
  %827 = vmatprep.mubr.bf16.mxu0 0
  %828 = vmatmul.mubr.bf16.gmra.mrb[0].mxu0 %v193
  %v829 = vpop.f32.mrb[0].mxu0
  %v830 = vadd.f32 %v790, %v829
  %v831 = vpop.f32.mrb[0].mxu0
  %v832 = vpop.f32.mrb[0].mxu0
  %v833 = vpop.f32.mrb[0].mxu0
  %834 = vdwg.mxu0
  %v835 = vmax.f32 %v830, 0.0
  %v836 = vpack.c.bf16 %v835, %v835
  %837 = vst [vmem:[%s3] sm:$0xf] %v836
  // Predicated region
  $region14: #{resnet_forward.37} parent=0 // pred_check
    _
  $region15: #{resnet_forward.37} parent=0 // pred_check_branch
    %839 = sbr.rel (0) target = $region17
  $region16: #{resnet_forward.37} parent=0 // pred_region
    _
  $region17: #{resnet_forward.37} parent=0 // pred_fallthru
    _
  // Predicated region
  $region18: #{resnet_forward.37} parent=0 // pred_check
    _
  $region19: #{resnet_forward.37} parent=0 // pred_check_branch
    %841 = sbr.rel (0) target = $region21
  $region20: #{resnet_forward.37} parent=0 // pred_region
    _
  $region21: #{resnet_forward.37} parent=0 // pred_fallthru
    _

// kernel: resnet_forward.39
$region0: #{resnet_forward.39}
  #allocation0 [shape = 'u32[]', space=smem, size = 0x4, offset = 0x4, fixed_abs, tag = 'smem constant byte address 0x4 - core index']
  #allocation1 [shape = 'u32[144,128]{1,0:T(1,128)}', space=vmem, size = 0x12000, scoped, tag = 'internal scratch']
  %s0 = inlined_call_operand.vmem [shape: bf16[2,4,128], index: 0, kind: input, shape index: {}]
  %s1 = inlined_call_operand.vmem [shape: f32[128,5], index: 1, kind: input, shape index: {}]
  %s2 = inlined_call_operand.vmem [shape: f32[1,5], index: 2, kind: input, shape index: {}]
  %s3 = inlined_call_operand.hbm [shape: f32[2,5], index: 3, kind: output, shape index: {}]
  %s4 = sld [smem:[#allocation0]]
  $region22: #{resnet_forward.39} parent=0
    _
  %s6 = ssub.s32 1, %s4
  %s7 = scalar_select 0, %s6, %s4
  $region1: #{resnet_forward.39} parent=0
    #allocation2 [shape = 'u8[1024]{0}', space=vmem, size = 0x400, scoped, tag = 'output window, operand 0, single buffered']
    #allocation3 [shape = 's32[1]{0}', space=sflag, size = 0x4, scoped, tag = 'scoped memory for resnet_forward.39']
    %8 = vsyncpa [#allocation3], 0
    // Predicated region
    $region2: #{resnet_forward.39} parent=1 // pred_check
      _
    $region3: #{resnet_forward.39} parent=1 // pred_check_branch
      %10 = sbr.rel (0) target = $region5
    $region4: #{resnet_forward.39} parent=1 // pred_region
      _
    $region5: #{resnet_forward.39} parent=1 // pred_fallthru
      _
    // Predicated region
    $region6: #{resnet_forward.39} parent=1 // pred_check
      _
    $region7: #{resnet_forward.39} parent=1 // pred_check_branch
      %12 = sbr.rel (0) target = $region9
    $region8: #{resnet_forward.39} parent=1 // pred_region
      _
    $region9: #{resnet_forward.39} parent=1 // pred_fallthru
      _
    // Predicated region
    $region10: #{resnet_forward.39} parent=1 // pred_check
      _
    $region11: #{resnet_forward.39} parent=1 // pred_check_branch
      %14 = sbr.rel (0) target = $region13
    $region12: #{resnet_forward.39} parent=1 // pred_region
      _
    $region13: #{resnet_forward.39} parent=1 // pred_fallthru
      _
    %v15 = vld [vmem:[%s0] sm:$0x3]
    %v16 = vld [vmem:[%s0 + $0x2] sm:$0x3]
    %v17 = vunpack.c.l.bf16 %v15
    %v18 = vunpack.c.l.bf16 %v16
    %vm19 = vcmask 1043456
    %v20 = vsel %vm19, %v17, 0.0
    %v21 = vrot.slane %v20, 4
    %v22 = vadd.f32 %v20, %v21
    %v23 = vrot.slane %v22, 2
    %v24 = vadd.f32 %v22, %v23
    %v25 = vrot.slane %v24, 1
    %v26 = vadd.f32 %v24, %v25
    %v27 = vsel %vm19, %v18, 0.0
    %v28 = vrot.slane %v27, 4
    %v29 = vadd.f32 %v27, %v28
    %v30 = vrot.slane %v29, 2
    %v31 = vadd.f32 %v29, %v30
    %v32 = vrot.slane %v31, 1
    %v33 = vadd.f32 %v31, %v32
    %v34 = vrcp.pop 4.0
    %v35 = vmul.f32 %v26, %v34
    %v36 = vmul.f32 %v33, %v34
    %v37 = vld [vmem:[%s1] sm:$0xff]
    %v38 = vld [vmem:[%s1 + $0x8] sm:$0xff]
    %v39 = vld [vmem:[%s1 + $0x10] sm:$0xff]
    %v40 = vld [vmem:[%s1 + $0x18] sm:$0xff]
    %v41 = vld [vmem:[%s1 + $0x20] sm:$0xff]
    %v42 = vld [vmem:[%s1 + $0x28] sm:$0xff]
    %v43 = vld [vmem:[%s1 + $0x30] sm:$0xff]
    %v44 = vld [vmem:[%s1 + $0x38] sm:$0xff]
    %v45 = vld [vmem:[%s1 + $0x40] sm:$0xff]
    %v46 = vld [vmem:[%s1 + $0x48] sm:$0xff]
    %v47 = vld [vmem:[%s1 + $0x50] sm:$0xff]
    %v48 = vld [vmem:[%s1 + $0x58] sm:$0xff]
    %v49 = vld [vmem:[%s1 + $0x60] sm:$0xff]
    %v50 = vld [vmem:[%s1 + $0x68] sm:$0xff]
    %v51 = vld [vmem:[%s1 + $0x70] sm:$0xff]
    %v52 = vld [vmem:[%s1 + $0x78] sm:$0xff]
    %v53 = vld [vmem:[%s2] sm:$0x1]
    %v55 = vlaneseq
    %v56 = vshrl.u32 %v55, 7
    %v57 = vsub.s32 0, %v56
    %v58 = vrot.slane %v53, %v57
    %vm62 = vcmask 1041409
    %v63 = vsel %vm62, %v36, %v35
    %65 = vmatprep.subr.mxu0 0.0
    %66 = vmatpush1.msra.mxu0 %v37
    %67 = vmatprep.subr.mxu0 0.0
    %68 = vmatpush1.msra.mxu0 %v38
    %69 = vmatprep.subr.mxu0 0.0
    %70 = vmatpush1.msra.mxu0 %v39
    %71 = vmatprep.subr.mxu0 0.0
    %72 = vmatpush1.msra.mxu0 %v40
    %73 = vmatprep.subr.mxu0 0.0
    %74 = vmatpush1.msra.mxu0 %v41
    %75 = vmatprep.subr.mxu0 0.0
    %76 = vmatpush1.msra.mxu0 %v42
    %77 = vmatprep.subr.mxu0 0.0
    %78 = vmatpush1.msra.mxu0 %v43
    %79 = vmatprep.subr.mxu0 0.0
    %80 = vmatpush1.msra.mxu0 %v44
    %81 = vmatprep.subr.mxu0 0.0
    %82 = vmatpush1.msra.mxu0 %v45
    %83 = vmatprep.subr.mxu0 0.0
    %84 = vmatpush1.msra.mxu0 %v46
    %85 = vmatprep.subr.mxu0 0.0
    %86 = vmatpush1.msra.mxu0 %v47
    %87 = vmatprep.subr.mxu0 0.0
    %88 = vmatpush1.msra.mxu0 %v48
    %89 = vmatprep.subr.mxu0 0.0
    %90 = vmatpush1.msra.mxu0 %v49
    %91 = vmatprep.subr.mxu0 0.0
    %92 = vmatpush1.msra.mxu0 %v50
    %93 = vmatprep.subr.mxu0 0.0
    %94 = vmatpush1.msra.mxu0 %v51
    %95 = vmatprep.subr.mxu0 0.0
    %96 = vmatpush1.msra.mxu0 %v52
    %97 = vmatprep.subr.mxu0 0.0
    %98 = vmatpush1.msra.mxu0 0.0
    %99 = vmatprep.subr.mxu0 0.0
    %100 = vmatpush1.msra.mxu0 0.0
    %101 = vmatprep.subr.mxu0 0.0
    %102 = vmatpush1.msra.mxu0 0.0
    %103 = vmatprep.subr.mxu0 0.0
    %104 = vmatpush1.msra.mxu0 0.0
    %105 = vmatprep.subr.mxu0 0.0
    %106 = vmatpush1.msra.mxu0 0.0
    %107 = vmatprep.subr.mxu0 0.0
    %108 = vmatpush1.msra.mxu0 0.0
    %109 = vmatprep.subr.mxu0 0.0
    %110 = vmatpush1.msra.mxu0 0.0
    %111 = vmatprep.subr.mxu0 0.0
    %112 = vmatpush1.msra.mxu0 0.0
    %113 = vmatprep.subr.mxu0 0.0
    %114 = vmatpush1.msra.mxu0 0.0
    %115 = vmatprep.subr.mxu0 0.0
    %116 = vmatpush1.msra.mxu0 0.0
    %117 = vmatprep.subr.mxu0 0.0
    %118 = vmatpush1.msra.mxu0 0.0
    %119 = vmatprep.subr.mxu0 0.0
    %120 = vmatpush1.msra.mxu0 0.0
    %121 = vmatprep.subr.mxu0 0.0
    %122 = vmatpush1.msra.mxu0 0.0
    %123 = vmatprep.subr.mxu0 0.0
    %124 = vmatpush1.msra.mxu0 0.0
    %125 = vmatprep.subr.mxu0 0.0
    %126 = vmatpush1.msra.mxu0 0.0
    %127 = vmatprep.subr.mxu0 0.0
    %128 = vmatpush1.msra.mxu0 0.0
    %129 = vmatprep.mubr.f32.mxu0 0.0
    %130 = vmatmul.mubr.f32.gmra.mrb[0].mxu0 %v63
    %v131 = vpop.f32.mrb[0].mxu0
    %v132 = vadd.f32 %v58, %v131
    %v133 = vpop.f32.mrb[0].mxu0
    %134 = vdwg.mxu0
    %vm135 = vcmask 33792
    %136 = vst.msk [vmem:[#allocation2] sm:$0x3] %vm135, %v132
    // Predicated region
    $region14: #{resnet_forward.39} parent=1 // pred_check
      _
    $region15: #{resnet_forward.39} parent=1 // pred_check_branch
      %138 = sbr.rel (0) target = $region17
    $region16: #{resnet_forward.39} parent=1 // pred_region
      %s140 = ssub.s32 32, 32
      %141 = vsyncadd [#allocation3], %s140
      %s143 = sshll.u32 [#allocation2], 4
      %s144 = int_to_ptr.vmem [resolvable:$true] %s143
      %146 = dma.vmem_to_hbm [thread:$0]  %s144, 32, %s3, [#allocation3]
    $region17: #{resnet_forward.39} parent=1 // pred_fallthru
      _
    // Predicated region
    $region18: #{resnet_forward.39} parent=1 // pred_check
      _
    $region19: #{resnet_forward.39} parent=1 // pred_check_branch
      %148 = sbr.rel (0) target = $region21
    $region20: #{resnet_forward.39} parent=1 // pred_region
      %149 = dma.done [#allocation3], 32
    $region21: #{resnet_forward.39} parent=1 // pred_fallthru
      _
    %150 = vsyncpa [#allocation3], 1

</llo_original>
